<compile_context>
chip_gen: v7x
topology: tpu7x:2x2x1
jax: 0.10.0
libtpu: 0.0.40
codegen_flags: <defaults>
</compile_context>

<pallas_src>
import numpy as np
import jax
import jax.numpy as jnp
from jax import lax
from jax.experimental import pallas as pl
from jax.experimental.pallas import tpu as pltpu

OBS_DIM = 16          # env.obs_dim (small demo value)
MEM_DIM = 128         # config['policy_memory_dim'] -> lane-dense (multiple of 128)
NUM_LAYERS = 3        # nn.LSTM(..., num_layers=3)
LEAKY_SLOPE = 0.01    # F.leaky_relu default
# TODO(synk): config['policy_lastlayer_tanh'] not provided; modeled as a constant.
LASTLAYER_TANH = True


def _sigmoid(x):
    # logistic(x) == 0.5*tanh(0.5*x) + 0.5 : one EUP transcendental + a VPU fma.
    return 0.5 * jnp.tanh(0.5 * x) + 0.5


def _leaky_relu(x):
    return jnp.where(x >= 0, x, LEAKY_SLOPE * x)


# ----------------------------------------------------------------------------- kernel
def rnn_pg_kernel(x_ref, h0_ref, c0_ref,
                  w_in_ref, b_in_ref,
                  w_ih_ref, w_hh_ref, b_lstm_ref,
                  w_res_ref, b_res_ref,
                  w_out_ref, b_out_ref,
                  y_ref, hN_ref, cN_ref,
                  h_st, c_st, seq_st, gates_st, res_st):
    # x_ref    : (T*B, O) bf16   time-major flattened -> batched matmuls need no reshape
    # h0/c0    : (L, B, H) f32
    # w_in/res : (O, H) bf16; w_out: (H, H) bf16; biases (1, H) f32
    # w_ih/hh  : (L, H, 4H) bf16 stacked, pre-transposed; b_lstm: (L, 1, 4H) = b_ih + b_hh
    # y_ref    : (T*B, H) f32;   hN/cN: (L, B, H) (aliased to h0/c0)
    # seq_st   : (T*B, H)  f32   current layer input/output sequence
    # gates_st : (T*B, 4H) f32   batched i2h gate pre-activations for the current layer
    # res_st   : (T*B, H)  f32   tanh(fc_res(x)) residual path
    L, B, H = h0_ref.shape
    TB = y_ref.shape[0]
    T = TB // B

    # Load initial state into the carried VMEM scratch (safe w.r.t. the h0->hN alias:
    # hN/cN are only written at the very end).
    h_st[...] = h0_ref[...]
    c_st[...] = c0_ref[...]

    x_bf = x_ref[...]                                                   # (T*B, O) bf16

    # ---- Non-recurrent input projections, batched over ALL timesteps ----
    seq_st[...] = _leaky_relu(
        jnp.dot(x_bf, w_in_ref[...], preferred_element_type=jnp.float32)
        + b_in_ref[...])                                                # layer-0 input
    res_st[...] = jnp.tanh(
        jnp.dot(x_bf, w_res_ref[...], preferred_element_type=jnp.float32)
        + b_res_ref[...])

    # ---- LSTM, layer-major: batched i2h, then serial h2h-only recurrence ----
    for l in range(NUM_LAYERS):                                         # static unroll
        seq_bf = seq_st[...].astype(jnp.bfloat16)                       # (T*B, H)
        gates_st[...] = (jnp.dot(seq_bf, w_ih_ref[l],
                                 preferred_element_type=jnp.float32)
                         + b_lstm_ref[l])                               # (T*B, 4H)
        w_hh_l = w_hh_ref[l]                                            # (H, 4H) bf16

        def step(t, carry, l=l, w_hh_l=w_hh_l):
            row = pl.multiple_of(t * B, B)                              # sublane-aligned
            h_prev = h_st[l]                                            # (B, H) f32
            c_prev = c_st[l]
            gates = (gates_st[pl.ds(row, B), :]
                     + jnp.dot(h_prev.astype(jnp.bfloat16), w_hh_l,
                               preferred_element_type=jnp.float32))     # (B, 4H)
            # PyTorch LSTM gate order: i, f, g, o
            i_g = _sigmoid(gates[:, 0 * H:1 * H])
            f_g = _sigmoid(gates[:, 1 * H:2 * H])
            g_g = jnp.tanh(gates[:, 2 * H:3 * H])
            o_g = _sigmoid(gates[:, 3 * H:4 * H])
            c_new = f_g * c_prev + i_g * g_g
            h_new = o_g * jnp.tanh(c_new)
            h_st[l] = h_new
            c_st[l] = c_new
            # this layer's output becomes the next layer's (already-consumed) input slot
            seq_st[pl.ds(row, B), :] = h_new
            return carry

        lax.fori_loop(0, T, step, 0, unroll=True)

    # ---- fc_out, batched over ALL timesteps; single lane-dense (T*B, H) store ----
    out_bf = (res_st[...] + seq_st[...]).astype(jnp.bfloat16)
    y = jnp.dot(out_bf, w_out_ref[...],
                preferred_element_type=jnp.float32) + b_out_ref[...]
    if LASTLAYER_TANH:
        y = jnp.tanh(y)
    y_ref[...] = y
    hN_ref[...] = h_st[...]
    cN_ref[...] = c_st[...]


# ----------------------------------------------------------------------------- wrapper
@jax.jit
def rnn_pg_forward(x, h0, c0, params):
    """x: (B, T, obs_dim) batch_first; h0/c0: (L, B, H). Returns (y, (hN, cN))."""
    B, T, O = x.shape
    H, L = MEM_DIM, NUM_LAYERS
    # time-major, flattened, bf16 LHS for the batched matmuls
    x_flat = jnp.transpose(x, (1, 0, 2)).reshape(T * B, O).astype(jnp.bfloat16)

    vmem = lambda: pl.BlockSpec(memory_space=pltpu.MemorySpace.VMEM)
    y_flat, hN, cN = pl.pallas_call(
        rnn_pg_kernel,
        out_shape=(
            jax.ShapeDtypeStruct((T * B, H), jnp.float32),
            jax.ShapeDtypeStruct((L, B, H), jnp.float32),
            jax.ShapeDtypeStruct((L, B, H), jnp.float32),
        ),
        in_specs=[vmem() for _ in range(12)],
        out_specs=(vmem(), vmem(), vmem()),
        scratch_shapes=[
            pltpu.VMEM((L, B, H), jnp.float32),        # h_st
            pltpu.VMEM((L, B, H), jnp.float32),        # c_st
            pltpu.VMEM((T * B, H), jnp.float32),       # seq_st
            pltpu.VMEM((T * B, 4 * H), jnp.float32),   # gates_st
            pltpu.VMEM((T * B, H), jnp.float32),       # res_st
        ],
        input_output_aliases={1: 1, 2: 2},   # h0->hN, c0->cN (in-place state update)
    )(x_flat, h0, c0,
      params["w_in"], params["b_in"],
      params["w_ih"], params["w_hh"], params["b_lstm"],
      params["w_res"], params["b_res"],
      params["w_out"], params["b_out"])

    y = jnp.transpose(y_flat.reshape(T, B, H), (1, 0, 2))
    return y, (hN, cN)


# -------------------------------------------------------------------- params + reference
def init_params(key):
    """Deterministic params, pre-transposed to (in_dim, out_dim); weights bf16, biases f32."""
    H, O, L = MEM_DIM, OBS_DIM, NUM_LAYERS
    ks = jax.random.split(key, 5)
    bf16 = jnp.bfloat16
    # kaiming(fan_in, leaky_relu) ~ std sqrt(2/fan_in); linear ~ 1/sqrt(fan_in)
    w_in = (jax.random.normal(ks[0], (O, H), jnp.float32)
            * np.float32(np.sqrt(2.0 / O))).astype(bf16)
    b_in = jnp.zeros((1, H), jnp.float32)
    w_res = (jax.random.normal(ks[1], (O, H), jnp.float32)
             * np.float32(1.0 / np.sqrt(O))).astype(bf16)
    b_res = jnp.zeros((1, H), jnp.float32)
    w_out = (jax.random.normal(ks[2], (H, H), jnp.float32)
             * np.float32(1.0 / np.sqrt(H))).astype(bf16)
    b_out = jnp.zeros((1, H), jnp.float32)
    w_ih = (jax.random.normal(ks[3], (L, H, 4 * H), jnp.float32)
            * np.float32(np.sqrt(2.0 / H))).astype(bf16)
    w_hh = (jax.random.normal(ks[4], (L, H, 4 * H), jnp.float32)
            * np.float32(1.0 / np.sqrt(H))).astype(bf16)
    b_lstm = jnp.zeros((L, 1, 4 * H), jnp.float32)   # b_ih + b_hh (both zero-init)
    return dict(w_in=w_in, b_in=b_in, w_res=w_res, b_res=b_res,
                w_out=w_out, b_out=b_out, w_ih=w_ih, w_hh=w_hh, b_lstm=b_lstm)


def rnn_pg_reference(x, h0, c0, params):
    """Pure-JAX f32 reference (same bf16-quantized weight values, f32 activations)."""
    f32 = lambda a: a.astype(jnp.float32)
    w_in, w_res, w_out = f32(params["w_in"]), f32(params["w_res"]), f32(params["w_out"])
    w_ih, w_hh = f32(params["w_ih"]), f32(params["w_hh"])
    b_in, b_res = params["b_in"], params["b_res"]
    b_out, b_lstm = params["b_out"], params["b_lstm"]
    B, T, _ = x.shape
    H, L = MEM_DIM, NUM_LAYERS
    feat = _leaky_relu(x @ w_in + b_in)                            # (B, T, H)
    res = jnp.tanh(x @ w_res + b_res)                              # (B, T, H)
    h = [h0[l] for l in range(L)]
    c = [c0[l] for l in range(L)]
    ys = []
    for t in range(T):
        layer_in = feat[:, t, :]
        for l in range(L):
            gates = layer_in @ w_ih[l] + h[l] @ w_hh[l] + b_lstm[l]
            i_g = _sigmoid(gates[:, 0 * H:1 * H])
            f_g = _sigmoid(gates[:, 1 * H:2 * H])
            g_g = jnp.tanh(gates[:, 2 * H:3 * H])
            o_g = _sigmoid(gates[:, 3 * H:4 * H])
            c[l] = f_g * c[l] + i_g * g_g
            h[l] = o_g * jnp.tanh(c[l])
            layer_in = h[l]
        y_t = (res[:, t, :] + layer_in) @ w_out + b_out
        if LASTLAYER_TANH:
            y_t = jnp.tanh(y_t)
        ys.append(y_t)
    return jnp.stack(ys, axis=1), (jnp.stack(h), jnp.stack(c))


if __name__ == "__main__":
    key = jax.random.PRNGKey(0)
    k_param, k_x, k_h, k_c = jax.random.split(key, 4)

    B, T = 8, 8                       # 8 envs (sublane-dense), 8 timesteps per launch
    params = init_params(k_param)
    x = jax.random.normal(k_x, (B, T, OBS_DIM), jnp.float32)
    h0 = 0.1 * jax.random.normal(k_h, (NUM_LAYERS, B, MEM_DIM), jnp.float32)
    c0 = 0.1 * jax.random.normal(k_c, (NUM_LAYERS, B, MEM_DIM), jnp.float32)

    y, (hN, cN) = rnn_pg_forward(x, h0, c0, params)
    jax.block_until_ready((y, hN, cN))

    y_ref, (hN_ref, cN_ref) = rnn_pg_reference(x, h0, c0, params)

    assert y.shape == (B, T, MEM_DIM)
    assert hN.shape == (NUM_LAYERS, B, MEM_DIM) and cN.shape == (NUM_LAYERS, B, MEM_DIM)
    # bf16 matmul activations vs f32 reference: keep a small tolerance margin.
    np.testing.assert_allclose(np.asarray(y), np.asarray(y_ref), atol=3e-2, rtol=3e-2)
    np.testing.assert_allclose(np.asarray(hN), np.asarray(hN_ref), atol=3e-2, rtol=3e-2)
    np.testing.assert_allclose(np.asarray(cN), np.asarray(cN_ref), atol=8e-2, rtol=8e-2)

    print("KERNEL_OK")
</pallas_src>

<mosaic_0001>
module attributes {stable_mosaic.version = 11 : i64} {
  func.func @rnn_pg_kernel(%arg0: memref<64x16xbf16, #tpu.memory_space<vmem>>, %arg1: memref<3x8x128xf32, #tpu.memory_space<vmem>>, %arg2: memref<3x8x128xf32, #tpu.memory_space<vmem>>, %arg3: memref<16x128xbf16, #tpu.memory_space<vmem>>, %arg4: memref<1x128xf32, #tpu.memory_space<vmem>>, %arg5: memref<3x128x512xbf16, #tpu.memory_space<vmem>>, %arg6: memref<3x128x512xbf16, #tpu.memory_space<vmem>>, %arg7: memref<3x1x512xf32, #tpu.memory_space<vmem>>, %arg8: memref<16x128xbf16, #tpu.memory_space<vmem>>, %arg9: memref<1x128xf32, #tpu.memory_space<vmem>>, %arg10: memref<128x128xbf16, #tpu.memory_space<vmem>>, %arg11: memref<1x128xf32, #tpu.memory_space<vmem>>, %arg12: memref<64x128xf32, #tpu.memory_space<vmem>>, %arg13: memref<3x8x128xf32, #tpu.memory_space<vmem>>, %arg14: memref<3x8x128xf32, #tpu.memory_space<vmem>>, %arg15: memref<3x8x128xf32, #tpu.memory_space<vmem>>, %arg16: memref<3x8x128xf32, #tpu.memory_space<vmem>>, %arg17: memref<64x128xf32, #tpu.memory_space<vmem>>, %arg18: memref<64x512xf32, #tpu.memory_space<vmem>>, %arg19: memref<64x128xf32, #tpu.memory_space<vmem>>) attributes {dimension_semantics = [], scalar_prefetch = 0 : i64, scratch_operands = 5 : i64, tpu.core_type = #tpu.core_type<tc>} {
    %c0 = arith.constant 0 : index
    %c0_0 = arith.constant 0 : index
    %c0_1 = arith.constant 0 : index
    %0 = vector.load %arg1[%c0, %c0_0, %c0_1] : memref<3x8x128xf32, #tpu.memory_space<vmem>>, vector<3x8x128xf32>
    %c0_2 = arith.constant 0 : index
    %c0_3 = arith.constant 0 : index
    %c0_4 = arith.constant 0 : index
    %1 = vector.load %arg15[%c0_2, %c0_3, %c0_4] : memref<3x8x128xf32, #tpu.memory_space<vmem>>, vector<3x8x128xf32>
    tpu.vector_store %arg15[%c0_2, %c0_3, %c0_4], %0 {strides = array<i32>} : memref<3x8x128xf32, #tpu.memory_space<vmem>>, vector<3x8x128xf32>,
    %c0_5 = arith.constant 0 : index
    %c0_6 = arith.constant 0 : index
    %c0_7 = arith.constant 0 : index
    %2 = vector.load %arg2[%c0_5, %c0_6, %c0_7] : memref<3x8x128xf32, #tpu.memory_space<vmem>>, vector<3x8x128xf32>
    %c0_8 = arith.constant 0 : index
    %c0_9 = arith.constant 0 : index
    %c0_10 = arith.constant 0 : index
    %3 = vector.load %arg16[%c0_8, %c0_9, %c0_10] : memref<3x8x128xf32, #tpu.memory_space<vmem>>, vector<3x8x128xf32>
    tpu.vector_store %arg16[%c0_8, %c0_9, %c0_10], %2 {strides = array<i32>} : memref<3x8x128xf32, #tpu.memory_space<vmem>>, vector<3x8x128xf32>,
    %c0_11 = arith.constant 0 : index
    %c0_12 = arith.constant 0 : index
    %4 = vector.load %arg0[%c0_11, %c0_12] : memref<64x16xbf16, #tpu.memory_space<vmem>>, vector<64x16xbf16>
    %c0_13 = arith.constant 0 : index
    %c0_14 = arith.constant 0 : index
    %5 = vector.load %arg3[%c0_13, %c0_14] : memref<16x128xbf16, #tpu.memory_space<vmem>>, vector<16x128xbf16>
    %cst = arith.constant dense<0.000000e+00> : vector<64x128xf32>
    %6 = tpu.matmul %4, %5, %cst {dimension_numbers = #tpu.dot_dimension_numbers<[1], [0], [0], [1], [0, 0, 1, 1], [], []>} : vector<64x16xbf16>, vector<16x128xbf16>, vector<64x128xf32> -> vector<64x128xf32>
    %c0_15 = arith.constant 0 : index
    %c0_16 = arith.constant 0 : index
    %7 = vector.load %arg4[%c0_15, %c0_16] : memref<1x128xf32, #tpu.memory_space<vmem>>, vector<1x128xf32>
    %8 = vector.broadcast %7 : vector<1x128xf32> to vector<64x128xf32>
    %9 = arith.addf %6, %8 : vector<64x128xf32>
    %cst_17 = arith.constant 0.000000e+00 : f32
    %10 = vector.broadcast %cst_17 : f32 to vector<64x128xf32>
    %11 = arith.cmpf oge, %9, %10 : vector<64x128xf32>
    %cst_18 = arith.constant 0.00999999977 : f32
    %12 = vector.broadcast %cst_18 : f32 to vector<64x128xf32>
    %13 = arith.mulf %12, %9 : vector<64x128xf32>
    %14 = arith.select %11, %9, %13 : vector<64x128xi1>, vector<64x128xf32>
    %c0_19 = arith.constant 0 : index
    %c0_20 = arith.constant 0 : index
    %15 = vector.load %arg17[%c0_19, %c0_20] : memref<64x128xf32, #tpu.memory_space<vmem>>, vector<64x128xf32>
    tpu.vector_store %arg17[%c0_19, %c0_20], %14 {strides = array<i32>} : memref<64x128xf32, #tpu.memory_space<vmem>>, vector<64x128xf32>,
    %c0_21 = arith.constant 0 : index
    %c0_22 = arith.constant 0 : index
    %16 = vector.load %arg8[%c0_21, %c0_22] : memref<16x128xbf16, #tpu.memory_space<vmem>>, vector<16x128xbf16>
    %cst_23 = arith.constant dense<0.000000e+00> : vector<64x128xf32>
    %17 = tpu.matmul %4, %16, %cst_23 {dimension_numbers = #tpu.dot_dimension_numbers<[1], [0], [0], [1], [0, 0, 1, 1], [], []>} : vector<64x16xbf16>, vector<16x128xbf16>, vector<64x128xf32> -> vector<64x128xf32>
    %c0_24 = arith.constant 0 : index
    %c0_25 = arith.constant 0 : index
    %18 = vector.load %arg9[%c0_24, %c0_25] : memref<1x128xf32, #tpu.memory_space<vmem>>, vector<1x128xf32>
    %19 = vector.broadcast %18 : vector<1x128xf32> to vector<64x128xf32>
    %20 = arith.addf %17, %19 : vector<64x128xf32>
    %21 = math.tanh %20 : vector<64x128xf32>
    %c0_26 = arith.constant 0 : index
    %c0_27 = arith.constant 0 : index
    %22 = vector.load %arg19[%c0_26, %c0_27] : memref<64x128xf32, #tpu.memory_space<vmem>>, vector<64x128xf32>
    tpu.vector_store %arg19[%c0_26, %c0_27], %21 {strides = array<i32>} : memref<64x128xf32, #tpu.memory_space<vmem>>, vector<64x128xf32>,
    %c0_28 = arith.constant 0 : index
    %c0_29 = arith.constant 0 : index
    %23 = vector.load %arg17[%c0_28, %c0_29] : memref<64x128xf32, #tpu.memory_space<vmem>>, vector<64x128xf32>
    %24 = arith.truncf %23 : vector<64x128xf32> to vector<64x128xbf16>
    %c0_30 = arith.constant 0 : index
    %c0_31 = arith.constant 0 : index
    %c0_32 = arith.constant 0 : index
    %25 = vector.load %arg5[%c0_30, %c0_31, %c0_32] : memref<3x128x512xbf16, #tpu.memory_space<vmem>>, vector<1x128x512xbf16>
    %26 = vector.shape_cast %25 : vector<1x128x512xbf16> to vector<128x512xbf16>
    %cst_33 = arith.constant dense<0.000000e+00> : vector<64x512xf32>
    %27 = tpu.matmul %24, %26, %cst_33 {dimension_numbers = #tpu.dot_dimension_numbers<[1], [0], [0], [1], [0, 0, 1, 1], [], []>} : vector<64x128xbf16>, vector<128x512xbf16>, vector<64x512xf32> -> vector<64x512xf32>
    %c0_34 = arith.constant 0 : index
    %c0_35 = arith.constant 0 : index
    %c0_36 = arith.constant 0 : index
    %28 = vector.load %arg7[%c0_34, %c0_35, %c0_36] : memref<3x1x512xf32, #tpu.memory_space<vmem>>, vector<1x1x512xf32>
    %29 = vector.shape_cast %28 : vector<1x1x512xf32> to vector<1x512xf32>
    %30 = vector.broadcast %29 : vector<1x512xf32> to vector<64x512xf32>
    %31 = arith.addf %27, %30 : vector<64x512xf32>
    %c0_37 = arith.constant 0 : index
    %c0_38 = arith.constant 0 : index
    %32 = vector.load %arg18[%c0_37, %c0_38] : memref<64x512xf32, #tpu.memory_space<vmem>>, vector<64x512xf32>
    tpu.vector_store %arg18[%c0_37, %c0_38], %31 {strides = array<i32>} : memref<64x512xf32, #tpu.memory_space<vmem>>, vector<64x512xf32>,
    %c0_39 = arith.constant 0 : index
    %c0_40 = arith.constant 0 : index
    %c0_41 = arith.constant 0 : index
    %33 = vector.load %arg6[%c0_39, %c0_40, %c0_41] : memref<3x128x512xbf16, #tpu.memory_space<vmem>>, vector<1x128x512xbf16>
    %34 = vector.shape_cast %33 : vector<1x128x512xbf16> to vector<128x512xbf16>
    %c0_i32 = arith.constant 0 : i32
    %c8_i32 = arith.constant 8 : i32
    %35 = arith.muli %c0_i32, %c8_i32 : i32
    %36 = tpu.assume_multiple %35, 8 : i32
    %c0_42 = arith.constant 0 : index
    %c0_43 = arith.constant 0 : index
    %c0_44 = arith.constant 0 : index
    %37 = vector.load %arg15[%c0_42, %c0_43, %c0_44] : memref<3x8x128xf32, #tpu.memory_space<vmem>>, vector<1x8x128xf32>
    %38 = vector.shape_cast %37 : vector<1x8x128xf32> to vector<8x128xf32>
    %c0_45 = arith.constant 0 : index
    %c0_46 = arith.constant 0 : index
    %c0_47 = arith.constant 0 : index
    %39 = vector.load %arg16[%c0_45, %c0_46, %c0_47] : memref<3x8x128xf32, #tpu.memory_space<vmem>>, vector<1x8x128xf32>
    %40 = vector.shape_cast %39 : vector<1x8x128xf32> to vector<8x128xf32>
    %41 = arith.index_cast %36 : i32 to index
    %c0_48 = arith.constant 0 : index
    %42 = vector.load %arg18[%41, %c0_48] : memref<64x512xf32, #tpu.memory_space<vmem>>, vector<8x512xf32>
    %43 = arith.truncf %38 : vector<8x128xf32> to vector<8x128xbf16>
    %cst_49 = arith.constant dense<0.000000e+00> : vector<8x512xf32>
    %44 = tpu.matmul %43, %34, %cst_49 {dimension_numbers = #tpu.dot_dimension_numbers<[1], [0], [0], [1], [0, 0, 1, 1], [], []>} : vector<8x128xbf16>, vector<128x512xbf16>, vector<8x512xf32> -> vector<8x512xf32>
    %45 = arith.addf %42, %44 : vector<8x512xf32>
    %46 = vector.extract_strided_slice %45 {offsets = [0, 0], sizes = [8, 128], strides = [1, 1]} : vector<8x512xf32> to vector<8x128xf32>
    %cst_50 = arith.constant 5.000000e-01 : f32
    %47 = vector.broadcast %cst_50 : f32 to vector<8x128xf32>
    %48 = arith.mulf %47, %46 : vector<8x128xf32>
    %49 = math.tanh %48 : vector<8x128xf32>
    %cst_51 = arith.constant 5.000000e-01 : f32
    %50 = vector.broadcast %cst_51 : f32 to vector<8x128xf32>
    %51 = arith.mulf %50, %49 : vector<8x128xf32>
    %cst_52 = arith.constant 5.000000e-01 : f32
    %52 = vector.broadcast %cst_52 : f32 to vector<8x128xf32>
    %53 = arith.addf %51, %52 : vector<8x128xf32>
    %54 = vector.extract_strided_slice %45 {offsets = [0, 128], sizes = [8, 128], strides = [1, 1]} : vector<8x512xf32> to vector<8x128xf32>
    %cst_53 = arith.constant 5.000000e-01 : f32
    %55 = vector.broadcast %cst_53 : f32 to vector<8x128xf32>
    %56 = arith.mulf %55, %54 : vector<8x128xf32>
    %57 = math.tanh %56 : vector<8x128xf32>
    %cst_54 = arith.constant 5.000000e-01 : f32
    %58 = vector.broadcast %cst_54 : f32 to vector<8x128xf32>
    %59 = arith.mulf %58, %57 : vector<8x128xf32>
    %cst_55 = arith.constant 5.000000e-01 : f32
    %60 = vector.broadcast %cst_55 : f32 to vector<8x128xf32>
    %61 = arith.addf %59, %60 : vector<8x128xf32>
    %62 = vector.extract_strided_slice %45 {offsets = [0, 256], sizes = [8, 128], strides = [1, 1]} : vector<8x512xf32> to vector<8x128xf32>
    %63 = math.tanh %62 : vector<8x128xf32>
    %64 = vector.extract_strided_slice %45 {offsets = [0, 384], sizes = [8, 128], strides = [1, 1]} : vector<8x512xf32> to vector<8x128xf32>
    %cst_56 = arith.constant 5.000000e-01 : f32
    %65 = vector.broadcast %cst_56 : f32 to vector<8x128xf32>
    %66 = arith.mulf %65, %64 : vector<8x128xf32>
    %67 = math.tanh %66 : vector<8x128xf32>
    %cst_57 = arith.constant 5.000000e-01 : f32
    %68 = vector.broadcast %cst_57 : f32 to vector<8x128xf32>
    %69 = arith.mulf %68, %67 : vector<8x128xf32>
    %cst_58 = arith.constant 5.000000e-01 : f32
    %70 = vector.broadcast %cst_58 : f32 to vector<8x128xf32>
    %71 = arith.addf %69, %70 : vector<8x128xf32>
    %72 = arith.mulf %61, %40 : vector<8x128xf32>
    %73 = arith.mulf %53, %63 : vector<8x128xf32>
    %74 = arith.addf %72, %73 : vector<8x128xf32>
    %75 = math.tanh %74 : vector<8x128xf32>
    %76 = arith.mulf %71, %75 : vector<8x128xf32>
    %c0_59 = arith.constant 0 : index
    %c0_60 = arith.constant 0 : index
    %c0_61 = arith.constant 0 : index
    %77 = vector.load %arg15[%c0_59, %c0_60, %c0_61] : memref<3x8x128xf32, #tpu.memory_space<vmem>>, vector<1x8x128xf32>
    %78 = vector.shape_cast %77 : vector<1x8x128xf32> to vector<8x128xf32>
    %79 = vector.shape_cast %76 : vector<8x128xf32> to vector<1x8x128xf32>
    tpu.vector_store %arg15[%c0_59, %c0_60, %c0_61], %79 {strides = array<i32>} : memref<3x8x128xf32, #tpu.memory_space<vmem>>, vector<1x8x128xf32>,
    %c0_62 = arith.constant 0 : index
    %c0_63 = arith.constant 0 : index
    %c0_64 = arith.constant 0 : index
    %80 = vector.load %arg16[%c0_62, %c0_63, %c0_64] : memref<3x8x128xf32, #tpu.memory_space<vmem>>, vector<1x8x128xf32>
    %81 = vector.shape_cast %80 : vector<1x8x128xf32> to vector<8x128xf32>
    %82 = vector.shape_cast %74 : vector<8x128xf32> to vector<1x8x128xf32>
    tpu.vector_store %arg16[%c0_62, %c0_63, %c0_64], %82 {strides = array<i32>} : memref<3x8x128xf32, #tpu.memory_space<vmem>>, vector<1x8x128xf32>,
    %83 = arith.index_cast %36 : i32 to index
    %c0_65 = arith.constant 0 : index
    %84 = vector.load %arg17[%83, %c0_65] : memref<64x128xf32, #tpu.memory_space<vmem>>, vector<8x128xf32>
    tpu.vector_store %arg17[%83, %c0_65], %76 {strides = array<i32>} : memref<64x128xf32, #tpu.memory_space<vmem>>, vector<8x128xf32>,
    %c1_i32 = arith.constant 1 : i32
    %c8_i32_66 = arith.constant 8 : i32
    %85 = arith.muli %c1_i32, %c8_i32_66 : i32
    %86 = tpu.assume_multiple %85, 8 : i32
    %c0_67 = arith.constant 0 : index
    %c0_68 = arith.constant 0 : index
    %c0_69 = arith.constant 0 : index
    %87 = vector.load %arg15[%c0_67, %c0_68, %c0_69] : memref<3x8x128xf32, #tpu.memory_space<vmem>>, vector<1x8x128xf32>
    %88 = vector.shape_cast %87 : vector<1x8x128xf32> to vector<8x128xf32>
    %c0_70 = arith.constant 0 : index
    %c0_71 = arith.constant 0 : index
    %c0_72 = arith.constant 0 : index
    %89 = vector.load %arg16[%c0_70, %c0_71, %c0_72] : memref<3x8x128xf32, #tpu.memory_space<vmem>>, vector<1x8x128xf32>
    %90 = vector.shape_cast %89 : vector<1x8x128xf32> to vector<8x128xf32>
    %91 = arith.index_cast %86 : i32 to index
    %c0_73 = arith.constant 0 : index
    %92 = vector.load %arg18[%91, %c0_73] : memref<64x512xf32, #tpu.memory_space<vmem>>, vector<8x512xf32>
    %93 = arith.truncf %88 : vector<8x128xf32> to vector<8x128xbf16>
    %cst_74 = arith.constant dense<0.000000e+00> : vector<8x512xf32>
    %94 = tpu.matmul %93, %34, %cst_74 {dimension_numbers = #tpu.dot_dimension_numbers<[1], [0], [0], [1], [0, 0, 1, 1], [], []>} : vector<8x128xbf16>, vector<128x512xbf16>, vector<8x512xf32> -> vector<8x512xf32>
    %95 = arith.addf %92, %94 : vector<8x512xf32>
    %96 = vector.extract_strided_slice %95 {offsets = [0, 0], sizes = [8, 128], strides = [1, 1]} : vector<8x512xf32> to vector<8x128xf32>
    %cst_75 = arith.constant 5.000000e-01 : f32
    %97 = vector.broadcast %cst_75 : f32 to vector<8x128xf32>
    %98 = arith.mulf %97, %96 : vector<8x128xf32>
    %99 = math.tanh %98 : vector<8x128xf32>
    %cst_76 = arith.constant 5.000000e-01 : f32
    %100 = vector.broadcast %cst_76 : f32 to vector<8x128xf32>
    %101 = arith.mulf %100, %99 : vector<8x128xf32>
    %cst_77 = arith.constant 5.000000e-01 : f32
    %102 = vector.broadcast %cst_77 : f32 to vector<8x128xf32>
    %103 = arith.addf %101, %102 : vector<8x128xf32>
    %104 = vector.extract_strided_slice %95 {offsets = [0, 128], sizes = [8, 128], strides = [1, 1]} : vector<8x512xf32> to vector<8x128xf32>
    %cst_78 = arith.constant 5.000000e-01 : f32
    %105 = vector.broadcast %cst_78 : f32 to vector<8x128xf32>
    %106 = arith.mulf %105, %104 : vector<8x128xf32>
    %107 = math.tanh %106 : vector<8x128xf32>
    %cst_79 = arith.constant 5.000000e-01 : f32
    %108 = vector.broadcast %cst_79 : f32 to vector<8x128xf32>
    %109 = arith.mulf %108, %107 : vector<8x128xf32>
    %cst_80 = arith.constant 5.000000e-01 : f32
    %110 = vector.broadcast %cst_80 : f32 to vector<8x128xf32>
    %111 = arith.addf %109, %110 : vector<8x128xf32>
    %112 = vector.extract_strided_slice %95 {offsets = [0, 256], sizes = [8, 128], strides = [1, 1]} : vector<8x512xf32> to vector<8x128xf32>
    %113 = math.tanh %112 : vector<8x128xf32>
    %114 = vector.extract_strided_slice %95 {offsets = [0, 384], sizes = [8, 128], strides = [1, 1]} : vector<8x512xf32> to vector<8x128xf32>
    %cst_81 = arith.constant 5.000000e-01 : f32
    %115 = vector.broadcast %cst_81 : f32 to vector<8x128xf32>
    %116 = arith.mulf %115, %114 : vector<8x128xf32>
    %117 = math.tanh %116 : vector<8x128xf32>
    %cst_82 = arith.constant 5.000000e-01 : f32
    %118 = vector.broadcast %cst_82 : f32 to vector<8x128xf32>
    %119 = arith.mulf %118, %117 : vector<8x128xf32>
    %cst_83 = arith.constant 5.000000e-01 : f32
    %120 = vector.broadcast %cst_83 : f32 to vector<8x128xf32>
    %121 = arith.addf %119, %120 : vector<8x128xf32>
    %122 = arith.mulf %111, %90 : vector<8x128xf32>
    %123 = arith.mulf %103, %113 : vector<8x128xf32>
    %124 = arith.addf %122, %123 : vector<8x128xf32>
    %125 = math.tanh %124 : vector<8x128xf32>
    %126 = arith.mulf %121, %125 : vector<8x128xf32>
    %c0_84 = arith.constant 0 : index
    %c0_85 = arith.constant 0 : index
    %c0_86 = arith.constant 0 : index
    %127 = vector.load %arg15[%c0_84, %c0_85, %c0_86] : memref<3x8x128xf32, #tpu.memory_space<vmem>>, vector<1x8x128xf32>
    %128 = vector.shape_cast %127 : vector<1x8x128xf32> to vector<8x128xf32>
    %129 = vector.shape_cast %126 : vector<8x128xf32> to vector<1x8x128xf32>
    tpu.vector_store %arg15[%c0_84, %c0_85, %c0_86], %129 {strides = array<i32>} : memref<3x8x128xf32, #tpu.memory_space<vmem>>, vector<1x8x128xf32>,
    %c0_87 = arith.constant 0 : index
    %c0_88 = arith.constant 0 : index
    %c0_89 = arith.constant 0 : index
    %130 = vector.load %arg16[%c0_87, %c0_88, %c0_89] : memref<3x8x128xf32, #tpu.memory_space<vmem>>, vector<1x8x128xf32>
    %131 = vector.shape_cast %130 : vector<1x8x128xf32> to vector<8x128xf32>
    %132 = vector.shape_cast %124 : vector<8x128xf32> to vector<1x8x128xf32>
    tpu.vector_store %arg16[%c0_87, %c0_88, %c0_89], %132 {strides = array<i32>} : memref<3x8x128xf32, #tpu.memory_space<vmem>>, vector<1x8x128xf32>,
    %133 = arith.index_cast %86 : i32 to index
    %c0_90 = arith.constant 0 : index
    %134 = vector.load %arg17[%133, %c0_90] : memref<64x128xf32, #tpu.memory_space<vmem>>, vector<8x128xf32>
    tpu.vector_store %arg17[%133, %c0_90], %126 {strides = array<i32>} : memref<64x128xf32, #tpu.memory_space<vmem>>, vector<8x128xf32>,
    %c2_i32 = arith.constant 2 : i32
    %c8_i32_91 = arith.constant 8 : i32
    %135 = arith.muli %c2_i32, %c8_i32_91 : i32
    %136 = tpu.assume_multiple %135, 8 : i32
    %c0_92 = arith.constant 0 : index
    %c0_93 = arith.constant 0 : index
    %c0_94 = arith.constant 0 : index
    %137 = vector.load %arg15[%c0_92, %c0_93, %c0_94] : memref<3x8x128xf32, #tpu.memory_space<vmem>>, vector<1x8x128xf32>
    %138 = vector.shape_cast %137 : vector<1x8x128xf32> to vector<8x128xf32>
    %c0_95 = arith.constant 0 : index
    %c0_96 = arith.constant 0 : index
    %c0_97 = arith.constant 0 : index
    %139 = vector.load %arg16[%c0_95, %c0_96, %c0_97] : memref<3x8x128xf32, #tpu.memory_space<vmem>>, vector<1x8x128xf32>
    %140 = vector.shape_cast %139 : vector<1x8x128xf32> to vector<8x128xf32>
    %141 = arith.index_cast %136 : i32 to index
    %c0_98 = arith.constant 0 : index
    %142 = vector.load %arg18[%141, %c0_98] : memref<64x512xf32, #tpu.memory_space<vmem>>, vector<8x512xf32>
    %143 = arith.truncf %138 : vector<8x128xf32> to vector<8x128xbf16>
    %cst_99 = arith.constant dense<0.000000e+00> : vector<8x512xf32>
    %144 = tpu.matmul %143, %34, %cst_99 {dimension_numbers = #tpu.dot_dimension_numbers<[1], [0], [0], [1], [0, 0, 1, 1], [], []>} : vector<8x128xbf16>, vector<128x512xbf16>, vector<8x512xf32> -> vector<8x512xf32>
    %145 = arith.addf %142, %144 : vector<8x512xf32>
    %146 = vector.extract_strided_slice %145 {offsets = [0, 0], sizes = [8, 128], strides = [1, 1]} : vector<8x512xf32> to vector<8x128xf32>
    %cst_100 = arith.constant 5.000000e-01 : f32
    %147 = vector.broadcast %cst_100 : f32 to vector<8x128xf32>
    %148 = arith.mulf %147, %146 : vector<8x128xf32>
    %149 = math.tanh %148 : vector<8x128xf32>
    %cst_101 = arith.constant 5.000000e-01 : f32
    %150 = vector.broadcast %cst_101 : f32 to vector<8x128xf32>
    %151 = arith.mulf %150, %149 : vector<8x128xf32>
    %cst_102 = arith.constant 5.000000e-01 : f32
    %152 = vector.broadcast %cst_102 : f32 to vector<8x128xf32>
    %153 = arith.addf %151, %152 : vector<8x128xf32>
    %154 = vector.extract_strided_slice %145 {offsets = [0, 128], sizes = [8, 128], strides = [1, 1]} : vector<8x512xf32> to vector<8x128xf32>
    %cst_103 = arith.constant 5.000000e-01 : f32
    %155 = vector.broadcast %cst_103 : f32 to vector<8x128xf32>
    %156 = arith.mulf %155, %154 : vector<8x128xf32>
    %157 = math.tanh %156 : vector<8x128xf32>
    %cst_104 = arith.constant 5.000000e-01 : f32
    %158 = vector.broadcast %cst_104 : f32 to vector<8x128xf32>
    %159 = arith.mulf %158, %157 : vector<8x128xf32>
    %cst_105 = arith.constant 5.000000e-01 : f32
    %160 = vector.broadcast %cst_105 : f32 to vector<8x128xf32>
    %161 = arith.addf %159, %160 : vector<8x128xf32>
    %162 = vector.extract_strided_slice %145 {offsets = [0, 256], sizes = [8, 128], strides = [1, 1]} : vector<8x512xf32> to vector<8x128xf32>
    %163 = math.tanh %162 : vector<8x128xf32>
    %164 = vector.extract_strided_slice %145 {offsets = [0, 384], sizes = [8, 128], strides = [1, 1]} : vector<8x512xf32> to vector<8x128xf32>
    %cst_106 = arith.constant 5.000000e-01 : f32
    %165 = vector.broadcast %cst_106 : f32 to vector<8x128xf32>
    %166 = arith.mulf %165, %164 : vector<8x128xf32>
    %167 = math.tanh %166 : vector<8x128xf32>
    %cst_107 = arith.constant 5.000000e-01 : f32
    %168 = vector.broadcast %cst_107 : f32 to vector<8x128xf32>
    %169 = arith.mulf %168, %167 : vector<8x128xf32>
    %cst_108 = arith.constant 5.000000e-01 : f32
    %170 = vector.broadcast %cst_108 : f32 to vector<8x128xf32>
    %171 = arith.addf %169, %170 : vector<8x128xf32>
    %172 = arith.mulf %161, %140 : vector<8x128xf32>
    %173 = arith.mulf %153, %163 : vector<8x128xf32>
    %174 = arith.addf %172, %173 : vector<8x128xf32>
    %175 = math.tanh %174 : vector<8x128xf32>
    %176 = arith.mulf %171, %175 : vector<8x128xf32>
    %c0_109 = arith.constant 0 : index
    %c0_110 = arith.constant 0 : index
    %c0_111 = arith.constant 0 : index
    %177 = vector.load %arg15[%c0_109, %c0_110, %c0_111] : memref<3x8x128xf32, #tpu.memory_space<vmem>>, vector<1x8x128xf32>
    %178 = vector.shape_cast %177 : vector<1x8x128xf32> to vector<8x128xf32>
    %179 = vector.shape_cast %176 : vector<8x128xf32> to vector<1x8x128xf32>
    tpu.vector_store %arg15[%c0_109, %c0_110, %c0_111], %179 {strides = array<i32>} : memref<3x8x128xf32, #tpu.memory_space<vmem>>, vector<1x8x128xf32>,
    %c0_112 = arith.constant 0 : index
    %c0_113 = arith.constant 0 : index
    %c0_114 = arith.constant 0 : index
    %180 = vector.load %arg16[%c0_112, %c0_113, %c0_114] : memref<3x8x128xf32, #tpu.memory_space<vmem>>, vector<1x8x128xf32>
    %181 = vector.shape_cast %180 : vector<1x8x128xf32> to vector<8x128xf32>
    %182 = vector.shape_cast %174 : vector<8x128xf32> to vector<1x8x128xf32>
    tpu.vector_store %arg16[%c0_112, %c0_113, %c0_114], %182 {strides = array<i32>} : memref<3x8x128xf32, #tpu.memory_space<vmem>>, vector<1x8x128xf32>,
    %183 = arith.index_cast %136 : i32 to index
    %c0_115 = arith.constant 0 : index
    %184 = vector.load %arg17[%183, %c0_115] : memref<64x128xf32, #tpu.memory_space<vmem>>, vector<8x128xf32>
    tpu.vector_store %arg17[%183, %c0_115], %176 {strides = array<i32>} : memref<64x128xf32, #tpu.memory_space<vmem>>, vector<8x128xf32>,
    %c3_i32 = arith.constant 3 : i32
    %c8_i32_116 = arith.constant 8 : i32
    %185 = arith.muli %c3_i32, %c8_i32_116 : i32
    %186 = tpu.assume_multiple %185, 8 : i32
    %c0_117 = arith.constant 0 : index
    %c0_118 = arith.constant 0 : index
    %c0_119 = arith.constant 0 : index
    %187 = vector.load %arg15[%c0_117, %c0_118, %c0_119] : memref<3x8x128xf32, #tpu.memory_space<vmem>>, vector<1x8x128xf32>
    %188 = vector.shape_cast %187 : vector<1x8x128xf32> to vector<8x128xf32>
    %c0_120 = arith.constant 0 : index
    %c0_121 = arith.constant 0 : index
    %c0_122 = arith.constant 0 : index
    %189 = vector.load %arg16[%c0_120, %c0_121, %c0_122] : memref<3x8x128xf32, #tpu.memory_space<vmem>>, vector<1x8x128xf32>
    %190 = vector.shape_cast %189 : vector<1x8x128xf32> to vector<8x128xf32>
    %191 = arith.index_cast %186 : i32 to index
    %c0_123 = arith.constant 0 : index
    %192 = vector.load %arg18[%191, %c0_123] : memref<64x512xf32, #tpu.memory_space<vmem>>, vector<8x512xf32>
    %193 = arith.truncf %188 : vector<8x128xf32> to vector<8x128xbf16>
    %cst_124 = arith.constant dense<0.000000e+00> : vector<8x512xf32>
    %194 = tpu.matmul %193, %34, %cst_124 {dimension_numbers = #tpu.dot_dimension_numbers<[1], [0], [0], [1], [0, 0, 1, 1], [], []>} : vector<8x128xbf16>, vector<128x512xbf16>, vector<8x512xf32> -> vector<8x512xf32>
    %195 = arith.addf %192, %194 : vector<8x512xf32>
    %196 = vector.extract_strided_slice %195 {offsets = [0, 0], sizes = [8, 128], strides = [1, 1]} : vector<8x512xf32> to vector<8x128xf32>
    %cst_125 = arith.constant 5.000000e-01 : f32
    %197 = vector.broadcast %cst_125 : f32 to vector<8x128xf32>
    %198 = arith.mulf %197, %196 : vector<8x128xf32>
    %199 = math.tanh %198 : vector<8x128xf32>
    %cst_126 = arith.constant 5.000000e-01 : f32
    %200 = vector.broadcast %cst_126 : f32 to vector<8x128xf32>
    %201 = arith.mulf %200, %199 : vector<8x128xf32>
    %cst_127 = arith.constant 5.000000e-01 : f32
    %202 = vector.broadcast %cst_127 : f32 to vector<8x128xf32>
    %203 = arith.addf %201, %202 : vector<8x128xf32>
    %204 = vector.extract_strided_slice %195 {offsets = [0, 128], sizes = [8, 128], strides = [1, 1]} : vector<8x512xf32> to vector<8x128xf32>
    %cst_128 = arith.constant 5.000000e-01 : f32
    %205 = vector.broadcast %cst_128 : f32 to vector<8x128xf32>
    %206 = arith.mulf %205, %204 : vector<8x128xf32>
    %207 = math.tanh %206 : vector<8x128xf32>
    %cst_129 = arith.constant 5.000000e-01 : f32
    %208 = vector.broadcast %cst_129 : f32 to vector<8x128xf32>
    %209 = arith.mulf %208, %207 : vector<8x128xf32>
    %cst_130 = arith.constant 5.000000e-01 : f32
    %210 = vector.broadcast %cst_130 : f32 to vector<8x128xf32>
    %211 = arith.addf %209, %210 : vector<8x128xf32>
    %212 = vector.extract_strided_slice %195 {offsets = [0, 256], sizes = [8, 128], strides = [1, 1]} : vector<8x512xf32> to vector<8x128xf32>
    %213 = math.tanh %212 : vector<8x128xf32>
    %214 = vector.extract_strided_slice %195 {offsets = [0, 384], sizes = [8, 128], strides = [1, 1]} : vector<8x512xf32> to vector<8x128xf32>
    %cst_131 = arith.constant 5.000000e-01 : f32
    %215 = vector.broadcast %cst_131 : f32 to vector<8x128xf32>
    %216 = arith.mulf %215, %214 : vector<8x128xf32>
    %217 = math.tanh %216 : vector<8x128xf32>
    %cst_132 = arith.constant 5.000000e-01 : f32
    %218 = vector.broadcast %cst_132 : f32 to vector<8x128xf32>
    %219 = arith.mulf %218, %217 : vector<8x128xf32>
    %cst_133 = arith.constant 5.000000e-01 : f32
    %220 = vector.broadcast %cst_133 : f32 to vector<8x128xf32>
    %221 = arith.addf %219, %220 : vector<8x128xf32>
    %222 = arith.mulf %211, %190 : vector<8x128xf32>
    %223 = arith.mulf %203, %213 : vector<8x128xf32>
    %224 = arith.addf %222, %223 : vector<8x128xf32>
    %225 = math.tanh %224 : vector<8x128xf32>
    %226 = arith.mulf %221, %225 : vector<8x128xf32>
    %c0_134 = arith.constant 0 : index
    %c0_135 = arith.constant 0 : index
    %c0_136 = arith.constant 0 : index
    %227 = vector.load %arg15[%c0_134, %c0_135, %c0_136] : memref<3x8x128xf32, #tpu.memory_space<vmem>>, vector<1x8x128xf32>
    %228 = vector.shape_cast %227 : vector<1x8x128xf32> to vector<8x128xf32>
    %229 = vector.shape_cast %226 : vector<8x128xf32> to vector<1x8x128xf32>
    tpu.vector_store %arg15[%c0_134, %c0_135, %c0_136], %229 {strides = array<i32>} : memref<3x8x128xf32, #tpu.memory_space<vmem>>, vector<1x8x128xf32>,
    %c0_137 = arith.constant 0 : index
    %c0_138 = arith.constant 0 : index
    %c0_139 = arith.constant 0 : index
    %230 = vector.load %arg16[%c0_137, %c0_138, %c0_139] : memref<3x8x128xf32, #tpu.memory_space<vmem>>, vector<1x8x128xf32>
    %231 = vector.shape_cast %230 : vector<1x8x128xf32> to vector<8x128xf32>
    %232 = vector.shape_cast %224 : vector<8x128xf32> to vector<1x8x128xf32>
    tpu.vector_store %arg16[%c0_137, %c0_138, %c0_139], %232 {strides = array<i32>} : memref<3x8x128xf32, #tpu.memory_space<vmem>>, vector<1x8x128xf32>,
    %233 = arith.index_cast %186 : i32 to index
    %c0_140 = arith.constant 0 : index
    %234 = vector.load %arg17[%233, %c0_140] : memref<64x128xf32, #tpu.memory_space<vmem>>, vector<8x128xf32>
    tpu.vector_store %arg17[%233, %c0_140], %226 {strides = array<i32>} : memref<64x128xf32, #tpu.memory_space<vmem>>, vector<8x128xf32>,
    %c4_i32 = arith.constant 4 : i32
    %c8_i32_141 = arith.constant 8 : i32
    %235 = arith.muli %c4_i32, %c8_i32_141 : i32
    %236 = tpu.assume_multiple %235, 8 : i32
    %c0_142 = arith.constant 0 : index
    %c0_143 = arith.constant 0 : index
    %c0_144 = arith.constant 0 : index
    %237 = vector.load %arg15[%c0_142, %c0_143, %c0_144] : memref<3x8x128xf32, #tpu.memory_space<vmem>>, vector<1x8x128xf32>
    %238 = vector.shape_cast %237 : vector<1x8x128xf32> to vector<8x128xf32>
    %c0_145 = arith.constant 0 : index
    %c0_146 = arith.constant 0 : index
    %c0_147 = arith.constant 0 : index
    %239 = vector.load %arg16[%c0_145, %c0_146, %c0_147] : memref<3x8x128xf32, #tpu.memory_space<vmem>>, vector<1x8x128xf32>
    %240 = vector.shape_cast %239 : vector<1x8x128xf32> to vector<8x128xf32>
    %241 = arith.index_cast %236 : i32 to index
    %c0_148 = arith.constant 0 : index
    %242 = vector.load %arg18[%241, %c0_148] : memref<64x512xf32, #tpu.memory_space<vmem>>, vector<8x512xf32>
    %243 = arith.truncf %238 : vector<8x128xf32> to vector<8x128xbf16>
    %cst_149 = arith.constant dense<0.000000e+00> : vector<8x512xf32>
    %244 = tpu.matmul %243, %34, %cst_149 {dimension_numbers = #tpu.dot_dimension_numbers<[1], [0], [0], [1], [0, 0, 1, 1], [], []>} : vector<8x128xbf16>, vector<128x512xbf16>, vector<8x512xf32> -> vector<8x512xf32>
    %245 = arith.addf %242, %244 : vector<8x512xf32>
    %246 = vector.extract_strided_slice %245 {offsets = [0, 0], sizes = [8, 128], strides = [1, 1]} : vector<8x512xf32> to vector<8x128xf32>
    %cst_150 = arith.constant 5.000000e-01 : f32
    %247 = vector.broadcast %cst_150 : f32 to vector<8x128xf32>
    %248 = arith.mulf %247, %246 : vector<8x128xf32>
    %249 = math.tanh %248 : vector<8x128xf32>
    %cst_151 = arith.constant 5.000000e-01 : f32
    %250 = vector.broadcast %cst_151 : f32 to vector<8x128xf32>
    %251 = arith.mulf %250, %249 : vector<8x128xf32>
    %cst_152 = arith.constant 5.000000e-01 : f32
    %252 = vector.broadcast %cst_152 : f32 to vector<8x128xf32>
    %253 = arith.addf %251, %252 : vector<8x128xf32>
    %254 = vector.extract_strided_slice %245 {offsets = [0, 128], sizes = [8, 128], strides = [1, 1]} : vector<8x512xf32> to vector<8x128xf32>
    %cst_153 = arith.constant 5.000000e-01 : f32
    %255 = vector.broadcast %cst_153 : f32 to vector<8x128xf32>
    %256 = arith.mulf %255, %254 : vector<8x128xf32>
    %257 = math.tanh %256 : vector<8x128xf32>
    %cst_154 = arith.constant 5.000000e-01 : f32
    %258 = vector.broadcast %cst_154 : f32 to vector<8x128xf32>
    %259 = arith.mulf %258, %257 : vector<8x128xf32>
    %cst_155 = arith.constant 5.000000e-01 : f32
    %260 = vector.broadcast %cst_155 : f32 to vector<8x128xf32>
    %261 = arith.addf %259, %260 : vector<8x128xf32>
    %262 = vector.extract_strided_slice %245 {offsets = [0, 256], sizes = [8, 128], strides = [1, 1]} : vector<8x512xf32> to vector<8x128xf32>
    %263 = math.tanh %262 : vector<8x128xf32>
    %264 = vector.extract_strided_slice %245 {offsets = [0, 384], sizes = [8, 128], strides = [1, 1]} : vector<8x512xf32> to vector<8x128xf32>
    %cst_156 = arith.constant 5.000000e-01 : f32
    %265 = vector.broadcast %cst_156 : f32 to vector<8x128xf32>
    %266 = arith.mulf %265, %264 : vector<8x128xf32>
    %267 = math.tanh %266 : vector<8x128xf32>
    %cst_157 = arith.constant 5.000000e-01 : f32
    %268 = vector.broadcast %cst_157 : f32 to vector<8x128xf32>
    %269 = arith.mulf %268, %267 : vector<8x128xf32>
    %cst_158 = arith.constant 5.000000e-01 : f32
    %270 = vector.broadcast %cst_158 : f32 to vector<8x128xf32>
    %271 = arith.addf %269, %270 : vector<8x128xf32>
    %272 = arith.mulf %261, %240 : vector<8x128xf32>
    %273 = arith.mulf %253, %263 : vector<8x128xf32>
    %274 = arith.addf %272, %273 : vector<8x128xf32>
    %275 = math.tanh %274 : vector<8x128xf32>
    %276 = arith.mulf %271, %275 : vector<8x128xf32>
    %c0_159 = arith.constant 0 : index
    %c0_160 = arith.constant 0 : index
    %c0_161 = arith.constant 0 : index
    %277 = vector.load %arg15[%c0_159, %c0_160, %c0_161] : memref<3x8x128xf32, #tpu.memory_space<vmem>>, vector<1x8x128xf32>
    %278 = vector.shape_cast %277 : vector<1x8x128xf32> to vector<8x128xf32>
    %279 = vector.shape_cast %276 : vector<8x128xf32> to vector<1x8x128xf32>
    tpu.vector_store %arg15[%c0_159, %c0_160, %c0_161], %279 {strides = array<i32>} : memref<3x8x128xf32, #tpu.memory_space<vmem>>, vector<1x8x128xf32>,
    %c0_162 = arith.constant 0 : index
    %c0_163 = arith.constant 0 : index
    %c0_164 = arith.constant 0 : index
    %280 = vector.load %arg16[%c0_162, %c0_163, %c0_164] : memref<3x8x128xf32, #tpu.memory_space<vmem>>, vector<1x8x128xf32>
    %281 = vector.shape_cast %280 : vector<1x8x128xf32> to vector<8x128xf32>
    %282 = vector.shape_cast %274 : vector<8x128xf32> to vector<1x8x128xf32>
    tpu.vector_store %arg16[%c0_162, %c0_163, %c0_164], %282 {strides = array<i32>} : memref<3x8x128xf32, #tpu.memory_space<vmem>>, vector<1x8x128xf32>,
    %283 = arith.index_cast %236 : i32 to index
    %c0_165 = arith.constant 0 : index
    %284 = vector.load %arg17[%283, %c0_165] : memref<64x128xf32, #tpu.memory_space<vmem>>, vector<8x128xf32>
    tpu.vector_store %arg17[%283, %c0_165], %276 {strides = array<i32>} : memref<64x128xf32, #tpu.memory_space<vmem>>, vector<8x128xf32>,
    %c5_i32 = arith.constant 5 : i32
    %c8_i32_166 = arith.constant 8 : i32
    %285 = arith.muli %c5_i32, %c8_i32_166 : i32
    %286 = tpu.assume_multiple %285, 8 : i32
    %c0_167 = arith.constant 0 : index
    %c0_168 = arith.constant 0 : index
    %c0_169 = arith.constant 0 : index
    %287 = vector.load %arg15[%c0_167, %c0_168, %c0_169] : memref<3x8x128xf32, #tpu.memory_space<vmem>>, vector<1x8x128xf32>
    %288 = vector.shape_cast %287 : vector<1x8x128xf32> to vector<8x128xf32>
    %c0_170 = arith.constant 0 : index
    %c0_171 = arith.constant 0 : index
    %c0_172 = arith.constant 0 : index
    %289 = vector.load %arg16[%c0_170, %c0_171, %c0_172] : memref<3x8x128xf32, #tpu.memory_space<vmem>>, vector<1x8x128xf32>
    %290 = vector.shape_cast %289 : vector<1x8x128xf32> to vector<8x128xf32>
    %291 = arith.index_cast %286 : i32 to index
    %c0_173 = arith.constant 0 : index
    %292 = vector.load %arg18[%291, %c0_173] : memref<64x512xf32, #tpu.memory_space<vmem>>, vector<8x512xf32>
    %293 = arith.truncf %288 : vector<8x128xf32> to vector<8x128xbf16>
    %cst_174 = arith.constant dense<0.000000e+00> : vector<8x512xf32>
    %294 = tpu.matmul %293, %34, %cst_174 {dimension_numbers = #tpu.dot_dimension_numbers<[1], [0], [0], [1], [0, 0, 1, 1], [], []>} : vector<8x128xbf16>, vector<128x512xbf16>, vector<8x512xf32> -> vector<8x512xf32>
    %295 = arith.addf %292, %294 : vector<8x512xf32>
    %296 = vector.extract_strided_slice %295 {offsets = [0, 0], sizes = [8, 128], strides = [1, 1]} : vector<8x512xf32> to vector<8x128xf32>
    %cst_175 = arith.constant 5.000000e-01 : f32
    %297 = vector.broadcast %cst_175 : f32 to vector<8x128xf32>
    %298 = arith.mulf %297, %296 : vector<8x128xf32>
    %299 = math.tanh %298 : vector<8x128xf32>
    %cst_176 = arith.constant 5.000000e-01 : f32
    %300 = vector.broadcast %cst_176 : f32 to vector<8x128xf32>
    %301 = arith.mulf %300, %299 : vector<8x128xf32>
    %cst_177 = arith.constant 5.000000e-01 : f32
    %302 = vector.broadcast %cst_177 : f32 to vector<8x128xf32>
    %303 = arith.addf %301, %302 : vector<8x128xf32>
    %304 = vector.extract_strided_slice %295 {offsets = [0, 128], sizes = [8, 128], strides = [1, 1]} : vector<8x512xf32> to vector<8x128xf32>
    %cst_178 = arith.constant 5.000000e-01 : f32
    %305 = vector.broadcast %cst_178 : f32 to vector<8x128xf32>
    %306 = arith.mulf %305, %304 : vector<8x128xf32>
    %307 = math.tanh %306 : vector<8x128xf32>
    %cst_179 = arith.constant 5.000000e-01 : f32
    %308 = vector.broadcast %cst_179 : f32 to vector<8x128xf32>
    %309 = arith.mulf %308, %307 : vector<8x128xf32>
    %cst_180 = arith.constant 5.000000e-01 : f32
    %310 = vector.broadcast %cst_180 : f32 to vector<8x128xf32>
    %311 = arith.addf %309, %310 : vector<8x128xf32>
    %312 = vector.extract_strided_slice %295 {offsets = [0, 256], sizes = [8, 128], strides = [1, 1]} : vector<8x512xf32> to vector<8x128xf32>
    %313 = math.tanh %312 : vector<8x128xf32>
    %314 = vector.extract_strided_slice %295 {offsets = [0, 384], sizes = [8, 128], strides = [1, 1]} : vector<8x512xf32> to vector<8x128xf32>
    %cst_181 = arith.constant 5.000000e-01 : f32
    %315 = vector.broadcast %cst_181 : f32 to vector<8x128xf32>
    %316 = arith.mulf %315, %314 : vector<8x128xf32>
    %317 = math.tanh %316 : vector<8x128xf32>
    %cst_182 = arith.constant 5.000000e-01 : f32
    %318 = vector.broadcast %cst_182 : f32 to vector<8x128xf32>
    %319 = arith.mulf %318, %317 : vector<8x128xf32>
    %cst_183 = arith.constant 5.000000e-01 : f32
    %320 = vector.broadcast %cst_183 : f32 to vector<8x128xf32>
    %321 = arith.addf %319, %320 : vector<8x128xf32>
    %322 = arith.mulf %311, %290 : vector<8x128xf32>
    %323 = arith.mulf %303, %313 : vector<8x128xf32>
    %324 = arith.addf %322, %323 : vector<8x128xf32>
    %325 = math.tanh %324 : vector<8x128xf32>
    %326 = arith.mulf %321, %325 : vector<8x128xf32>
    %c0_184 = arith.constant 0 : index
    %c0_185 = arith.constant 0 : index
    %c0_186 = arith.constant 0 : index
    %327 = vector.load %arg15[%c0_184, %c0_185, %c0_186] : memref<3x8x128xf32, #tpu.memory_space<vmem>>, vector<1x8x128xf32>
    %328 = vector.shape_cast %327 : vector<1x8x128xf32> to vector<8x128xf32>
    %329 = vector.shape_cast %326 : vector<8x128xf32> to vector<1x8x128xf32>
    tpu.vector_store %arg15[%c0_184, %c0_185, %c0_186], %329 {strides = array<i32>} : memref<3x8x128xf32, #tpu.memory_space<vmem>>, vector<1x8x128xf32>,
    %c0_187 = arith.constant 0 : index
    %c0_188 = arith.constant 0 : index
    %c0_189 = arith.constant 0 : index
    %330 = vector.load %arg16[%c0_187, %c0_188, %c0_189] : memref<3x8x128xf32, #tpu.memory_space<vmem>>, vector<1x8x128xf32>
    %331 = vector.shape_cast %330 : vector<1x8x128xf32> to vector<8x128xf32>
    %332 = vector.shape_cast %324 : vector<8x128xf32> to vector<1x8x128xf32>
    tpu.vector_store %arg16[%c0_187, %c0_188, %c0_189], %332 {strides = array<i32>} : memref<3x8x128xf32, #tpu.memory_space<vmem>>, vector<1x8x128xf32>,
    %333 = arith.index_cast %286 : i32 to index
    %c0_190 = arith.constant 0 : index
    %334 = vector.load %arg17[%333, %c0_190] : memref<64x128xf32, #tpu.memory_space<vmem>>, vector<8x128xf32>
    tpu.vector_store %arg17[%333, %c0_190], %326 {strides = array<i32>} : memref<64x128xf32, #tpu.memory_space<vmem>>, vector<8x128xf32>,
    %c6_i32 = arith.constant 6 : i32
    %c8_i32_191 = arith.constant 8 : i32
    %335 = arith.muli %c6_i32, %c8_i32_191 : i32
    %336 = tpu.assume_multiple %335, 8 : i32
    %c0_192 = arith.constant 0 : index
    %c0_193 = arith.constant 0 : index
    %c0_194 = arith.constant 0 : index
    %337 = vector.load %arg15[%c0_192, %c0_193, %c0_194] : memref<3x8x128xf32, #tpu.memory_space<vmem>>, vector<1x8x128xf32>
    %338 = vector.shape_cast %337 : vector<1x8x128xf32> to vector<8x128xf32>
    %c0_195 = arith.constant 0 : index
    %c0_196 = arith.constant 0 : index
    %c0_197 = arith.constant 0 : index
    %339 = vector.load %arg16[%c0_195, %c0_196, %c0_197] : memref<3x8x128xf32, #tpu.memory_space<vmem>>, vector<1x8x128xf32>
    %340 = vector.shape_cast %339 : vector<1x8x128xf32> to vector<8x128xf32>
    %341 = arith.index_cast %336 : i32 to index
    %c0_198 = arith.constant 0 : index
    %342 = vector.load %arg18[%341, %c0_198] : memref<64x512xf32, #tpu.memory_space<vmem>>, vector<8x512xf32>
    %343 = arith.truncf %338 : vector<8x128xf32> to vector<8x128xbf16>
    %cst_199 = arith.constant dense<0.000000e+00> : vector<8x512xf32>
    %344 = tpu.matmul %343, %34, %cst_199 {dimension_numbers = #tpu.dot_dimension_numbers<[1], [0], [0], [1], [0, 0, 1, 1], [], []>} : vector<8x128xbf16>, vector<128x512xbf16>, vector<8x512xf32> -> vector<8x512xf32>
    %345 = arith.addf %342, %344 : vector<8x512xf32>
    %346 = vector.extract_strided_slice %345 {offsets = [0, 0], sizes = [8, 128], strides = [1, 1]} : vector<8x512xf32> to vector<8x128xf32>
    %cst_200 = arith.constant 5.000000e-01 : f32
    %347 = vector.broadcast %cst_200 : f32 to vector<8x128xf32>
    %348 = arith.mulf %347, %346 : vector<8x128xf32>
    %349 = math.tanh %348 : vector<8x128xf32>
    %cst_201 = arith.constant 5.000000e-01 : f32
    %350 = vector.broadcast %cst_201 : f32 to vector<8x128xf32>
    %351 = arith.mulf %350, %349 : vector<8x128xf32>
    %cst_202 = arith.constant 5.000000e-01 : f32
    %352 = vector.broadcast %cst_202 : f32 to vector<8x128xf32>
    %353 = arith.addf %351, %352 : vector<8x128xf32>
    %354 = vector.extract_strided_slice %345 {offsets = [0, 128], sizes = [8, 128], strides = [1, 1]} : vector<8x512xf32> to vector<8x128xf32>
    %cst_203 = arith.constant 5.000000e-01 : f32
    %355 = vector.broadcast %cst_203 : f32 to vector<8x128xf32>
    %356 = arith.mulf %355, %354 : vector<8x128xf32>
    %357 = math.tanh %356 : vector<8x128xf32>
    %cst_204 = arith.constant 5.000000e-01 : f32
    %358 = vector.broadcast %cst_204 : f32 to vector<8x128xf32>
    %359 = arith.mulf %358, %357 : vector<8x128xf32>
    %cst_205 = arith.constant 5.000000e-01 : f32
    %360 = vector.broadcast %cst_205 : f32 to vector<8x128xf32>
    %361 = arith.addf %359, %360 : vector<8x128xf32>
    %362 = vector.extract_strided_slice %345 {offsets = [0, 256], sizes = [8, 128], strides = [1, 1]} : vector<8x512xf32> to vector<8x128xf32>
    %363 = math.tanh %362 : vector<8x128xf32>
    %364 = vector.extract_strided_slice %345 {offsets = [0, 384], sizes = [8, 128], strides = [1, 1]} : vector<8x512xf32> to vector<8x128xf32>
    %cst_206 = arith.constant 5.000000e-01 : f32
    %365 = vector.broadcast %cst_206 : f32 to vector<8x128xf32>
    %366 = arith.mulf %365, %364 : vector<8x128xf32>
    %367 = math.tanh %366 : vector<8x128xf32>
    %cst_207 = arith.constant 5.000000e-01 : f32
    %368 = vector.broadcast %cst_207 : f32 to vector<8x128xf32>
    %369 = arith.mulf %368, %367 : vector<8x128xf32>
    %cst_208 = arith.constant 5.000000e-01 : f32
    %370 = vector.broadcast %cst_208 : f32 to vector<8x128xf32>
    %371 = arith.addf %369, %370 : vector<8x128xf32>
    %372 = arith.mulf %361, %340 : vector<8x128xf32>
    %373 = arith.mulf %353, %363 : vector<8x128xf32>
    %374 = arith.addf %372, %373 : vector<8x128xf32>
    %375 = math.tanh %374 : vector<8x128xf32>
    %376 = arith.mulf %371, %375 : vector<8x128xf32>
    %c0_209 = arith.constant 0 : index
    %c0_210 = arith.constant 0 : index
    %c0_211 = arith.constant 0 : index
    %377 = vector.load %arg15[%c0_209, %c0_210, %c0_211] : memref<3x8x128xf32, #tpu.memory_space<vmem>>, vector<1x8x128xf32>
    %378 = vector.shape_cast %377 : vector<1x8x128xf32> to vector<8x128xf32>
    %379 = vector.shape_cast %376 : vector<8x128xf32> to vector<1x8x128xf32>
    tpu.vector_store %arg15[%c0_209, %c0_210, %c0_211], %379 {strides = array<i32>} : memref<3x8x128xf32, #tpu.memory_space<vmem>>, vector<1x8x128xf32>,
    %c0_212 = arith.constant 0 : index
    %c0_213 = arith.constant 0 : index
    %c0_214 = arith.constant 0 : index
    %380 = vector.load %arg16[%c0_212, %c0_213, %c0_214] : memref<3x8x128xf32, #tpu.memory_space<vmem>>, vector<1x8x128xf32>
    %381 = vector.shape_cast %380 : vector<1x8x128xf32> to vector<8x128xf32>
    %382 = vector.shape_cast %374 : vector<8x128xf32> to vector<1x8x128xf32>
    tpu.vector_store %arg16[%c0_212, %c0_213, %c0_214], %382 {strides = array<i32>} : memref<3x8x128xf32, #tpu.memory_space<vmem>>, vector<1x8x128xf32>,
    %383 = arith.index_cast %336 : i32 to index
    %c0_215 = arith.constant 0 : index
    %384 = vector.load %arg17[%383, %c0_215] : memref<64x128xf32, #tpu.memory_space<vmem>>, vector<8x128xf32>
    tpu.vector_store %arg17[%383, %c0_215], %376 {strides = array<i32>} : memref<64x128xf32, #tpu.memory_space<vmem>>, vector<8x128xf32>,
    %c7_i32 = arith.constant 7 : i32
    %c8_i32_216 = arith.constant 8 : i32
    %385 = arith.muli %c7_i32, %c8_i32_216 : i32
    %386 = tpu.assume_multiple %385, 8 : i32
    %c0_217 = arith.constant 0 : index
    %c0_218 = arith.constant 0 : index
    %c0_219 = arith.constant 0 : index
    %387 = vector.load %arg15[%c0_217, %c0_218, %c0_219] : memref<3x8x128xf32, #tpu.memory_space<vmem>>, vector<1x8x128xf32>
    %388 = vector.shape_cast %387 : vector<1x8x128xf32> to vector<8x128xf32>
    %c0_220 = arith.constant 0 : index
    %c0_221 = arith.constant 0 : index
    %c0_222 = arith.constant 0 : index
    %389 = vector.load %arg16[%c0_220, %c0_221, %c0_222] : memref<3x8x128xf32, #tpu.memory_space<vmem>>, vector<1x8x128xf32>
    %390 = vector.shape_cast %389 : vector<1x8x128xf32> to vector<8x128xf32>
    %391 = arith.index_cast %386 : i32 to index
    %c0_223 = arith.constant 0 : index
    %392 = vector.load %arg18[%391, %c0_223] : memref<64x512xf32, #tpu.memory_space<vmem>>, vector<8x512xf32>
    %393 = arith.truncf %388 : vector<8x128xf32> to vector<8x128xbf16>
    %cst_224 = arith.constant dense<0.000000e+00> : vector<8x512xf32>
    %394 = tpu.matmul %393, %34, %cst_224 {dimension_numbers = #tpu.dot_dimension_numbers<[1], [0], [0], [1], [0, 0, 1, 1], [], []>} : vector<8x128xbf16>, vector<128x512xbf16>, vector<8x512xf32> -> vector<8x512xf32>
    %395 = arith.addf %392, %394 : vector<8x512xf32>
    %396 = vector.extract_strided_slice %395 {offsets = [0, 0], sizes = [8, 128], strides = [1, 1]} : vector<8x512xf32> to vector<8x128xf32>
    %cst_225 = arith.constant 5.000000e-01 : f32
    %397 = vector.broadcast %cst_225 : f32 to vector<8x128xf32>
    %398 = arith.mulf %397, %396 : vector<8x128xf32>
    %399 = math.tanh %398 : vector<8x128xf32>
    %cst_226 = arith.constant 5.000000e-01 : f32
    %400 = vector.broadcast %cst_226 : f32 to vector<8x128xf32>
    %401 = arith.mulf %400, %399 : vector<8x128xf32>
    %cst_227 = arith.constant 5.000000e-01 : f32
    %402 = vector.broadcast %cst_227 : f32 to vector<8x128xf32>
    %403 = arith.addf %401, %402 : vector<8x128xf32>
    %404 = vector.extract_strided_slice %395 {offsets = [0, 128], sizes = [8, 128], strides = [1, 1]} : vector<8x512xf32> to vector<8x128xf32>
    %cst_228 = arith.constant 5.000000e-01 : f32
    %405 = vector.broadcast %cst_228 : f32 to vector<8x128xf32>
    %406 = arith.mulf %405, %404 : vector<8x128xf32>
    %407 = math.tanh %406 : vector<8x128xf32>
    %cst_229 = arith.constant 5.000000e-01 : f32
    %408 = vector.broadcast %cst_229 : f32 to vector<8x128xf32>
    %409 = arith.mulf %408, %407 : vector<8x128xf32>
    %cst_230 = arith.constant 5.000000e-01 : f32
    %410 = vector.broadcast %cst_230 : f32 to vector<8x128xf32>
    %411 = arith.addf %409, %410 : vector<8x128xf32>
    %412 = vector.extract_strided_slice %395 {offsets = [0, 256], sizes = [8, 128], strides = [1, 1]} : vector<8x512xf32> to vector<8x128xf32>
    %413 = math.tanh %412 : vector<8x128xf32>
    %414 = vector.extract_strided_slice %395 {offsets = [0, 384], sizes = [8, 128], strides = [1, 1]} : vector<8x512xf32> to vector<8x128xf32>
    %cst_231 = arith.constant 5.000000e-01 : f32
    %415 = vector.broadcast %cst_231 : f32 to vector<8x128xf32>
    %416 = arith.mulf %415, %414 : vector<8x128xf32>
    %417 = math.tanh %416 : vector<8x128xf32>
    %cst_232 = arith.constant 5.000000e-01 : f32
    %418 = vector.broadcast %cst_232 : f32 to vector<8x128xf32>
    %419 = arith.mulf %418, %417 : vector<8x128xf32>
    %cst_233 = arith.constant 5.000000e-01 : f32
    %420 = vector.broadcast %cst_233 : f32 to vector<8x128xf32>
    %421 = arith.addf %419, %420 : vector<8x128xf32>
    %422 = arith.mulf %411, %390 : vector<8x128xf32>
    %423 = arith.mulf %403, %413 : vector<8x128xf32>
    %424 = arith.addf %422, %423 : vector<8x128xf32>
    %425 = math.tanh %424 : vector<8x128xf32>
    %426 = arith.mulf %421, %425 : vector<8x128xf32>
    %c0_234 = arith.constant 0 : index
    %c0_235 = arith.constant 0 : index
    %c0_236 = arith.constant 0 : index
    %427 = vector.load %arg15[%c0_234, %c0_235, %c0_236] : memref<3x8x128xf32, #tpu.memory_space<vmem>>, vector<1x8x128xf32>
    %428 = vector.shape_cast %427 : vector<1x8x128xf32> to vector<8x128xf32>
    %429 = vector.shape_cast %426 : vector<8x128xf32> to vector<1x8x128xf32>
    tpu.vector_store %arg15[%c0_234, %c0_235, %c0_236], %429 {strides = array<i32>} : memref<3x8x128xf32, #tpu.memory_space<vmem>>, vector<1x8x128xf32>,
    %c0_237 = arith.constant 0 : index
    %c0_238 = arith.constant 0 : index
    %c0_239 = arith.constant 0 : index
    %430 = vector.load %arg16[%c0_237, %c0_238, %c0_239] : memref<3x8x128xf32, #tpu.memory_space<vmem>>, vector<1x8x128xf32>
    %431 = vector.shape_cast %430 : vector<1x8x128xf32> to vector<8x128xf32>
    %432 = vector.shape_cast %424 : vector<8x128xf32> to vector<1x8x128xf32>
    tpu.vector_store %arg16[%c0_237, %c0_238, %c0_239], %432 {strides = array<i32>} : memref<3x8x128xf32, #tpu.memory_space<vmem>>, vector<1x8x128xf32>,
    %433 = arith.index_cast %386 : i32 to index
    %c0_240 = arith.constant 0 : index
    %434 = vector.load %arg17[%433, %c0_240] : memref<64x128xf32, #tpu.memory_space<vmem>>, vector<8x128xf32>
    tpu.vector_store %arg17[%433, %c0_240], %426 {strides = array<i32>} : memref<64x128xf32, #tpu.memory_space<vmem>>, vector<8x128xf32>,
    %c8_i32_241 = arith.constant 8 : i32
    %c0_242 = arith.constant 0 : index
    %c0_243 = arith.constant 0 : index
    %435 = vector.load %arg17[%c0_242, %c0_243] : memref<64x128xf32, #tpu.memory_space<vmem>>, vector<64x128xf32>
    %436 = arith.truncf %435 : vector<64x128xf32> to vector<64x128xbf16>
    %c1 = arith.constant 1 : index
    %c0_244 = arith.constant 0 : index
    %c0_245 = arith.constant 0 : index
    %437 = vector.load %arg5[%c1, %c0_244, %c0_245] : memref<3x128x512xbf16, #tpu.memory_space<vmem>>, vector<1x128x512xbf16>
    %438 = vector.shape_cast %437 : vector<1x128x512xbf16> to vector<128x512xbf16>
    %cst_246 = arith.constant dense<0.000000e+00> : vector<64x512xf32>
    %439 = tpu.matmul %436, %438, %cst_246 {dimension_numbers = #tpu.dot_dimension_numbers<[1], [0], [0], [1], [0, 0, 1, 1], [], []>} : vector<64x128xbf16>, vector<128x512xbf16>, vector<64x512xf32> -> vector<64x512xf32>
    %c1_247 = arith.constant 1 : index
    %c0_248 = arith.constant 0 : index
    %c0_249 = arith.constant 0 : index
    %440 = vector.load %arg7[%c1_247, %c0_248, %c0_249] : memref<3x1x512xf32, #tpu.memory_space<vmem>>, vector<1x1x512xf32>
    %441 = vector.shape_cast %440 : vector<1x1x512xf32> to vector<1x512xf32>
    %442 = vector.broadcast %441 : vector<1x512xf32> to vector<64x512xf32>
    %443 = arith.addf %439, %442 : vector<64x512xf32>
    %c0_250 = arith.constant 0 : index
    %c0_251 = arith.constant 0 : index
    %444 = vector.load %arg18[%c0_250, %c0_251] : memref<64x512xf32, #tpu.memory_space<vmem>>, vector<64x512xf32>
    tpu.vector_store %arg18[%c0_250, %c0_251], %443 {strides = array<i32>} : memref<64x512xf32, #tpu.memory_space<vmem>>, vector<64x512xf32>,
    %c1_252 = arith.constant 1 : index
    %c0_253 = arith.constant 0 : index
    %c0_254 = arith.constant 0 : index
    %445 = vector.load %arg6[%c1_252, %c0_253, %c0_254] : memref<3x128x512xbf16, #tpu.memory_space<vmem>>, vector<1x128x512xbf16>
    %446 = vector.shape_cast %445 : vector<1x128x512xbf16> to vector<128x512xbf16>
    %c0_i32_255 = arith.constant 0 : i32
    %c8_i32_256 = arith.constant 8 : i32
    %447 = arith.muli %c0_i32_255, %c8_i32_256 : i32
    %448 = tpu.assume_multiple %447, 8 : i32
    %c1_257 = arith.constant 1 : index
    %c0_258 = arith.constant 0 : index
    %c0_259 = arith.constant 0 : index
    %449 = vector.load %arg15[%c1_257, %c0_258, %c0_259] : memref<3x8x128xf32, #tpu.memory_space<vmem>>, vector<1x8x128xf32>
    %450 = vector.shape_cast %449 : vector<1x8x128xf32> to vector<8x128xf32>
    %c1_260 = arith.constant 1 : index
    %c0_261 = arith.constant 0 : index
    %c0_262 = arith.constant 0 : index
    %451 = vector.load %arg16[%c1_260, %c0_261, %c0_262] : memref<3x8x128xf32, #tpu.memory_space<vmem>>, vector<1x8x128xf32>
    %452 = vector.shape_cast %451 : vector<1x8x128xf32> to vector<8x128xf32>
    %453 = arith.index_cast %448 : i32 to index
    %c0_263 = arith.constant 0 : index
    %454 = vector.load %arg18[%453, %c0_263] : memref<64x512xf32, #tpu.memory_space<vmem>>, vector<8x512xf32>
    %455 = arith.truncf %450 : vector<8x128xf32> to vector<8x128xbf16>
    %cst_264 = arith.constant dense<0.000000e+00> : vector<8x512xf32>
    %456 = tpu.matmul %455, %446, %cst_264 {dimension_numbers = #tpu.dot_dimension_numbers<[1], [0], [0], [1], [0, 0, 1, 1], [], []>} : vector<8x128xbf16>, vector<128x512xbf16>, vector<8x512xf32> -> vector<8x512xf32>
    %457 = arith.addf %454, %456 : vector<8x512xf32>
    %458 = vector.extract_strided_slice %457 {offsets = [0, 0], sizes = [8, 128], strides = [1, 1]} : vector<8x512xf32> to vector<8x128xf32>
    %cst_265 = arith.constant 5.000000e-01 : f32
    %459 = vector.broadcast %cst_265 : f32 to vector<8x128xf32>
    %460 = arith.mulf %459, %458 : vector<8x128xf32>
    %461 = math.tanh %460 : vector<8x128xf32>
    %cst_266 = arith.constant 5.000000e-01 : f32
    %462 = vector.broadcast %cst_266 : f32 to vector<8x128xf32>
    %463 = arith.mulf %462, %461 : vector<8x128xf32>
    %cst_267 = arith.constant 5.000000e-01 : f32
    %464 = vector.broadcast %cst_267 : f32 to vector<8x128xf32>
    %465 = arith.addf %463, %464 : vector<8x128xf32>
    %466 = vector.extract_strided_slice %457 {offsets = [0, 128], sizes = [8, 128], strides = [1, 1]} : vector<8x512xf32> to vector<8x128xf32>
    %cst_268 = arith.constant 5.000000e-01 : f32
    %467 = vector.broadcast %cst_268 : f32 to vector<8x128xf32>
    %468 = arith.mulf %467, %466 : vector<8x128xf32>
    %469 = math.tanh %468 : vector<8x128xf32>
    %cst_269 = arith.constant 5.000000e-01 : f32
    %470 = vector.broadcast %cst_269 : f32 to vector<8x128xf32>
    %471 = arith.mulf %470, %469 : vector<8x128xf32>
    %cst_270 = arith.constant 5.000000e-01 : f32
    %472 = vector.broadcast %cst_270 : f32 to vector<8x128xf32>
    %473 = arith.addf %471, %472 : vector<8x128xf32>
    %474 = vector.extract_strided_slice %457 {offsets = [0, 256], sizes = [8, 128], strides = [1, 1]} : vector<8x512xf32> to vector<8x128xf32>
    %475 = math.tanh %474 : vector<8x128xf32>
    %476 = vector.extract_strided_slice %457 {offsets = [0, 384], sizes = [8, 128], strides = [1, 1]} : vector<8x512xf32> to vector<8x128xf32>
    %cst_271 = arith.constant 5.000000e-01 : f32
    %477 = vector.broadcast %cst_271 : f32 to vector<8x128xf32>
    %478 = arith.mulf %477, %476 : vector<8x128xf32>
    %479 = math.tanh %478 : vector<8x128xf32>
    %cst_272 = arith.constant 5.000000e-01 : f32
    %480 = vector.broadcast %cst_272 : f32 to vector<8x128xf32>
    %481 = arith.mulf %480, %479 : vector<8x128xf32>
    %cst_273 = arith.constant 5.000000e-01 : f32
    %482 = vector.broadcast %cst_273 : f32 to vector<8x128xf32>
    %483 = arith.addf %481, %482 : vector<8x128xf32>
    %484 = arith.mulf %473, %452 : vector<8x128xf32>
    %485 = arith.mulf %465, %475 : vector<8x128xf32>
    %486 = arith.addf %484, %485 : vector<8x128xf32>
    %487 = math.tanh %486 : vector<8x128xf32>
    %488 = arith.mulf %483, %487 : vector<8x128xf32>
    %c1_274 = arith.constant 1 : index
    %c0_275 = arith.constant 0 : index
    %c0_276 = arith.constant 0 : index
    %489 = vector.load %arg15[%c1_274, %c0_275, %c0_276] : memref<3x8x128xf32, #tpu.memory_space<vmem>>, vector<1x8x128xf32>
    %490 = vector.shape_cast %489 : vector<1x8x128xf32> to vector<8x128xf32>
    %491 = vector.shape_cast %488 : vector<8x128xf32> to vector<1x8x128xf32>
    tpu.vector_store %arg15[%c1_274, %c0_275, %c0_276], %491 {strides = array<i32>} : memref<3x8x128xf32, #tpu.memory_space<vmem>>, vector<1x8x128xf32>,
    %c1_277 = arith.constant 1 : index
    %c0_278 = arith.constant 0 : index
    %c0_279 = arith.constant 0 : index
    %492 = vector.load %arg16[%c1_277, %c0_278, %c0_279] : memref<3x8x128xf32, #tpu.memory_space<vmem>>, vector<1x8x128xf32>
    %493 = vector.shape_cast %492 : vector<1x8x128xf32> to vector<8x128xf32>
    %494 = vector.shape_cast %486 : vector<8x128xf32> to vector<1x8x128xf32>
    tpu.vector_store %arg16[%c1_277, %c0_278, %c0_279], %494 {strides = array<i32>} : memref<3x8x128xf32, #tpu.memory_space<vmem>>, vector<1x8x128xf32>,
    %495 = arith.index_cast %448 : i32 to index
    %c0_280 = arith.constant 0 : index
    %496 = vector.load %arg17[%495, %c0_280] : memref<64x128xf32, #tpu.memory_space<vmem>>, vector<8x128xf32>
    tpu.vector_store %arg17[%495, %c0_280], %488 {strides = array<i32>} : memref<64x128xf32, #tpu.memory_space<vmem>>, vector<8x128xf32>,
    %c1_i32_281 = arith.constant 1 : i32
    %c8_i32_282 = arith.constant 8 : i32
    %497 = arith.muli %c1_i32_281, %c8_i32_282 : i32
    %498 = tpu.assume_multiple %497, 8 : i32
    %c1_283 = arith.constant 1 : index
    %c0_284 = arith.constant 0 : index
    %c0_285 = arith.constant 0 : index
    %499 = vector.load %arg15[%c1_283, %c0_284, %c0_285] : memref<3x8x128xf32, #tpu.memory_space<vmem>>, vector<1x8x128xf32>
    %500 = vector.shape_cast %499 : vector<1x8x128xf32> to vector<8x128xf32>
    %c1_286 = arith.constant 1 : index
    %c0_287 = arith.constant 0 : index
    %c0_288 = arith.constant 0 : index
    %501 = vector.load %arg16[%c1_286, %c0_287, %c0_288] : memref<3x8x128xf32, #tpu.memory_space<vmem>>, vector<1x8x128xf32>
    %502 = vector.shape_cast %501 : vector<1x8x128xf32> to vector<8x128xf32>
    %503 = arith.index_cast %498 : i32 to index
    %c0_289 = arith.constant 0 : index
    %504 = vector.load %arg18[%503, %c0_289] : memref<64x512xf32, #tpu.memory_space<vmem>>, vector<8x512xf32>
    %505 = arith.truncf %500 : vector<8x128xf32> to vector<8x128xbf16>
    %cst_290 = arith.constant dense<0.000000e+00> : vector<8x512xf32>
    %506 = tpu.matmul %505, %446, %cst_290 {dimension_numbers = #tpu.dot_dimension_numbers<[1], [0], [0], [1], [0, 0, 1, 1], [], []>} : vector<8x128xbf16>, vector<128x512xbf16>, vector<8x512xf32> -> vector<8x512xf32>
    %507 = arith.addf %504, %506 : vector<8x512xf32>
    %508 = vector.extract_strided_slice %507 {offsets = [0, 0], sizes = [8, 128], strides = [1, 1]} : vector<8x512xf32> to vector<8x128xf32>
    %cst_291 = arith.constant 5.000000e-01 : f32
    %509 = vector.broadcast %cst_291 : f32 to vector<8x128xf32>
    %510 = arith.mulf %509, %508 : vector<8x128xf32>
    %511 = math.tanh %510 : vector<8x128xf32>
    %cst_292 = arith.constant 5.000000e-01 : f32
    %512 = vector.broadcast %cst_292 : f32 to vector<8x128xf32>
    %513 = arith.mulf %512, %511 : vector<8x128xf32>
    %cst_293 = arith.constant 5.000000e-01 : f32
    %514 = vector.broadcast %cst_293 : f32 to vector<8x128xf32>
    %515 = arith.addf %513, %514 : vector<8x128xf32>
    %516 = vector.extract_strided_slice %507 {offsets = [0, 128], sizes = [8, 128], strides = [1, 1]} : vector<8x512xf32> to vector<8x128xf32>
    %cst_294 = arith.constant 5.000000e-01 : f32
    %517 = vector.broadcast %cst_294 : f32 to vector<8x128xf32>
    %518 = arith.mulf %517, %516 : vector<8x128xf32>
    %519 = math.tanh %518 : vector<8x128xf32>
    %cst_295 = arith.constant 5.000000e-01 : f32
    %520 = vector.broadcast %cst_295 : f32 to vector<8x128xf32>
    %521 = arith.mulf %520, %519 : vector<8x128xf32>
    %cst_296 = arith.constant 5.000000e-01 : f32
    %522 = vector.broadcast %cst_296 : f32 to vector<8x128xf32>
    %523 = arith.addf %521, %522 : vector<8x128xf32>
    %524 = vector.extract_strided_slice %507 {offsets = [0, 256], sizes = [8, 128], strides = [1, 1]} : vector<8x512xf32> to vector<8x128xf32>
    %525 = math.tanh %524 : vector<8x128xf32>
    %526 = vector.extract_strided_slice %507 {offsets = [0, 384], sizes = [8, 128], strides = [1, 1]} : vector<8x512xf32> to vector<8x128xf32>
    %cst_297 = arith.constant 5.000000e-01 : f32
    %527 = vector.broadcast %cst_297 : f32 to vector<8x128xf32>
    %528 = arith.mulf %527, %526 : vector<8x128xf32>
    %529 = math.tanh %528 : vector<8x128xf32>
    %cst_298 = arith.constant 5.000000e-01 : f32
    %530 = vector.broadcast %cst_298 : f32 to vector<8x128xf32>
    %531 = arith.mulf %530, %529 : vector<8x128xf32>
    %cst_299 = arith.constant 5.000000e-01 : f32
    %532 = vector.broadcast %cst_299 : f32 to vector<8x128xf32>
    %533 = arith.addf %531, %532 : vector<8x128xf32>
    %534 = arith.mulf %523, %502 : vector<8x128xf32>
    %535 = arith.mulf %515, %525 : vector<8x128xf32>
    %536 = arith.addf %534, %535 : vector<8x128xf32>
    %537 = math.tanh %536 : vector<8x128xf32>
    %538 = arith.mulf %533, %537 : vector<8x128xf32>
    %c1_300 = arith.constant 1 : index
    %c0_301 = arith.constant 0 : index
    %c0_302 = arith.constant 0 : index
    %539 = vector.load %arg15[%c1_300, %c0_301, %c0_302] : memref<3x8x128xf32, #tpu.memory_space<vmem>>, vector<1x8x128xf32>
    %540 = vector.shape_cast %539 : vector<1x8x128xf32> to vector<8x128xf32>
    %541 = vector.shape_cast %538 : vector<8x128xf32> to vector<1x8x128xf32>
    tpu.vector_store %arg15[%c1_300, %c0_301, %c0_302], %541 {strides = array<i32>} : memref<3x8x128xf32, #tpu.memory_space<vmem>>, vector<1x8x128xf32>,
    %c1_303 = arith.constant 1 : index
    %c0_304 = arith.constant 0 : index
    %c0_305 = arith.constant 0 : index
    %542 = vector.load %arg16[%c1_303, %c0_304, %c0_305] : memref<3x8x128xf32, #tpu.memory_space<vmem>>, vector<1x8x128xf32>
    %543 = vector.shape_cast %542 : vector<1x8x128xf32> to vector<8x128xf32>
    %544 = vector.shape_cast %536 : vector<8x128xf32> to vector<1x8x128xf32>
    tpu.vector_store %arg16[%c1_303, %c0_304, %c0_305], %544 {strides = array<i32>} : memref<3x8x128xf32, #tpu.memory_space<vmem>>, vector<1x8x128xf32>,
    %545 = arith.index_cast %498 : i32 to index
    %c0_306 = arith.constant 0 : index
    %546 = vector.load %arg17[%545, %c0_306] : memref<64x128xf32, #tpu.memory_space<vmem>>, vector<8x128xf32>
    tpu.vector_store %arg17[%545, %c0_306], %538 {strides = array<i32>} : memref<64x128xf32, #tpu.memory_space<vmem>>, vector<8x128xf32>,
    %c2_i32_307 = arith.constant 2 : i32
    %c8_i32_308 = arith.constant 8 : i32
    %547 = arith.muli %c2_i32_307, %c8_i32_308 : i32
    %548 = tpu.assume_multiple %547, 8 : i32
    %c1_309 = arith.constant 1 : index
    %c0_310 = arith.constant 0 : index
    %c0_311 = arith.constant 0 : index
    %549 = vector.load %arg15[%c1_309, %c0_310, %c0_311] : memref<3x8x128xf32, #tpu.memory_space<vmem>>, vector<1x8x128xf32>
    %550 = vector.shape_cast %549 : vector<1x8x128xf32> to vector<8x128xf32>
    %c1_312 = arith.constant 1 : index
    %c0_313 = arith.constant 0 : index
    %c0_314 = arith.constant 0 : index
    %551 = vector.load %arg16[%c1_312, %c0_313, %c0_314] : memref<3x8x128xf32, #tpu.memory_space<vmem>>, vector<1x8x128xf32>
    %552 = vector.shape_cast %551 : vector<1x8x128xf32> to vector<8x128xf32>
    %553 = arith.index_cast %548 : i32 to index
    %c0_315 = arith.constant 0 : index
    %554 = vector.load %arg18[%553, %c0_315] : memref<64x512xf32, #tpu.memory_space<vmem>>, vector<8x512xf32>
    %555 = arith.truncf %550 : vector<8x128xf32> to vector<8x128xbf16>
    %cst_316 = arith.constant dense<0.000000e+00> : vector<8x512xf32>
    %556 = tpu.matmul %555, %446, %cst_316 {dimension_numbers = #tpu.dot_dimension_numbers<[1], [0], [0], [1], [0, 0, 1, 1], [], []>} : vector<8x128xbf16>, vector<128x512xbf16>, vector<8x512xf32> -> vector<8x512xf32>
    %557 = arith.addf %554, %556 : vector<8x512xf32>
    %558 = vector.extract_strided_slice %557 {offsets = [0, 0], sizes = [8, 128], strides = [1, 1]} : vector<8x512xf32> to vector<8x128xf32>
    %cst_317 = arith.constant 5.000000e-01 : f32
    %559 = vector.broadcast %cst_317 : f32 to vector<8x128xf32>
    %560 = arith.mulf %559, %558 : vector<8x128xf32>
    %561 = math.tanh %560 : vector<8x128xf32>
    %cst_318 = arith.constant 5.000000e-01 : f32
    %562 = vector.broadcast %cst_318 : f32 to vector<8x128xf32>
    %563 = arith.mulf %562, %561 : vector<8x128xf32>
    %cst_319 = arith.constant 5.000000e-01 : f32
    %564 = vector.broadcast %cst_319 : f32 to vector<8x128xf32>
    %565 = arith.addf %563, %564 : vector<8x128xf32>
    %566 = vector.extract_strided_slice %557 {offsets = [0, 128], sizes = [8, 128], strides = [1, 1]} : vector<8x512xf32> to vector<8x128xf32>
    %cst_320 = arith.constant 5.000000e-01 : f32
    %567 = vector.broadcast %cst_320 : f32 to vector<8x128xf32>
    %568 = arith.mulf %567, %566 : vector<8x128xf32>
    %569 = math.tanh %568 : vector<8x128xf32>
    %cst_321 = arith.constant 5.000000e-01 : f32
    %570 = vector.broadcast %cst_321 : f32 to vector<8x128xf32>
    %571 = arith.mulf %570, %569 : vector<8x128xf32>
    %cst_322 = arith.constant 5.000000e-01 : f32
    %572 = vector.broadcast %cst_322 : f32 to vector<8x128xf32>
    %573 = arith.addf %571, %572 : vector<8x128xf32>
    %574 = vector.extract_strided_slice %557 {offsets = [0, 256], sizes = [8, 128], strides = [1, 1]} : vector<8x512xf32> to vector<8x128xf32>
    %575 = math.tanh %574 : vector<8x128xf32>
    %576 = vector.extract_strided_slice %557 {offsets = [0, 384], sizes = [8, 128], strides = [1, 1]} : vector<8x512xf32> to vector<8x128xf32>
    %cst_323 = arith.constant 5.000000e-01 : f32
    %577 = vector.broadcast %cst_323 : f32 to vector<8x128xf32>
    %578 = arith.mulf %577, %576 : vector<8x128xf32>
    %579 = math.tanh %578 : vector<8x128xf32>
    %cst_324 = arith.constant 5.000000e-01 : f32
    %580 = vector.broadcast %cst_324 : f32 to vector<8x128xf32>
    %581 = arith.mulf %580, %579 : vector<8x128xf32>
    %cst_325 = arith.constant 5.000000e-01 : f32
    %582 = vector.broadcast %cst_325 : f32 to vector<8x128xf32>
    %583 = arith.addf %581, %582 : vector<8x128xf32>
    %584 = arith.mulf %573, %552 : vector<8x128xf32>
    %585 = arith.mulf %565, %575 : vector<8x128xf32>
    %586 = arith.addf %584, %585 : vector<8x128xf32>
    %587 = math.tanh %586 : vector<8x128xf32>
    %588 = arith.mulf %583, %587 : vector<8x128xf32>
    %c1_326 = arith.constant 1 : index
    %c0_327 = arith.constant 0 : index
    %c0_328 = arith.constant 0 : index
    %589 = vector.load %arg15[%c1_326, %c0_327, %c0_328] : memref<3x8x128xf32, #tpu.memory_space<vmem>>, vector<1x8x128xf32>
    %590 = vector.shape_cast %589 : vector<1x8x128xf32> to vector<8x128xf32>
    %591 = vector.shape_cast %588 : vector<8x128xf32> to vector<1x8x128xf32>
    tpu.vector_store %arg15[%c1_326, %c0_327, %c0_328], %591 {strides = array<i32>} : memref<3x8x128xf32, #tpu.memory_space<vmem>>, vector<1x8x128xf32>,
    %c1_329 = arith.constant 1 : index
    %c0_330 = arith.constant 0 : index
    %c0_331 = arith.constant 0 : index
    %592 = vector.load %arg16[%c1_329, %c0_330, %c0_331] : memref<3x8x128xf32, #tpu.memory_space<vmem>>, vector<1x8x128xf32>
    %593 = vector.shape_cast %592 : vector<1x8x128xf32> to vector<8x128xf32>
    %594 = vector.shape_cast %586 : vector<8x128xf32> to vector<1x8x128xf32>
    tpu.vector_store %arg16[%c1_329, %c0_330, %c0_331], %594 {strides = array<i32>} : memref<3x8x128xf32, #tpu.memory_space<vmem>>, vector<1x8x128xf32>,
    %595 = arith.index_cast %548 : i32 to index
    %c0_332 = arith.constant 0 : index
    %596 = vector.load %arg17[%595, %c0_332] : memref<64x128xf32, #tpu.memory_space<vmem>>, vector<8x128xf32>
    tpu.vector_store %arg17[%595, %c0_332], %588 {strides = array<i32>} : memref<64x128xf32, #tpu.memory_space<vmem>>, vector<8x128xf32>,
    %c3_i32_333 = arith.constant 3 : i32
    %c8_i32_334 = arith.constant 8 : i32
    %597 = arith.muli %c3_i32_333, %c8_i32_334 : i32
    %598 = tpu.assume_multiple %597, 8 : i32
    %c1_335 = arith.constant 1 : index
    %c0_336 = arith.constant 0 : index
    %c0_337 = arith.constant 0 : index
    %599 = vector.load %arg15[%c1_335, %c0_336, %c0_337] : memref<3x8x128xf32, #tpu.memory_space<vmem>>, vector<1x8x128xf32>
    %600 = vector.shape_cast %599 : vector<1x8x128xf32> to vector<8x128xf32>
    %c1_338 = arith.constant 1 : index
    %c0_339 = arith.constant 0 : index
    %c0_340 = arith.constant 0 : index
    %601 = vector.load %arg16[%c1_338, %c0_339, %c0_340] : memref<3x8x128xf32, #tpu.memory_space<vmem>>, vector<1x8x128xf32>
    %602 = vector.shape_cast %601 : vector<1x8x128xf32> to vector<8x128xf32>
    %603 = arith.index_cast %598 : i32 to index
    %c0_341 = arith.constant 0 : index
    %604 = vector.load %arg18[%603, %c0_341] : memref<64x512xf32, #tpu.memory_space<vmem>>, vector<8x512xf32>
    %605 = arith.truncf %600 : vector<8x128xf32> to vector<8x128xbf16>
    %cst_342 = arith.constant dense<0.000000e+00> : vector<8x512xf32>
    %606 = tpu.matmul %605, %446, %cst_342 {dimension_numbers = #tpu.dot_dimension_numbers<[1], [0], [0], [1], [0, 0, 1, 1], [], []>} : vector<8x128xbf16>, vector<128x512xbf16>, vector<8x512xf32> -> vector<8x512xf32>
    %607 = arith.addf %604, %606 : vector<8x512xf32>
    %608 = vector.extract_strided_slice %607 {offsets = [0, 0], sizes = [8, 128], strides = [1, 1]} : vector<8x512xf32> to vector<8x128xf32>
    %cst_343 = arith.constant 5.000000e-01 : f32
    %609 = vector.broadcast %cst_343 : f32 to vector<8x128xf32>
    %610 = arith.mulf %609, %608 : vector<8x128xf32>
    %611 = math.tanh %610 : vector<8x128xf32>
    %cst_344 = arith.constant 5.000000e-01 : f32
    %612 = vector.broadcast %cst_344 : f32 to vector<8x128xf32>
    %613 = arith.mulf %612, %611 : vector<8x128xf32>
    %cst_345 = arith.constant 5.000000e-01 : f32
    %614 = vector.broadcast %cst_345 : f32 to vector<8x128xf32>
    %615 = arith.addf %613, %614 : vector<8x128xf32>
    %616 = vector.extract_strided_slice %607 {offsets = [0, 128], sizes = [8, 128], strides = [1, 1]} : vector<8x512xf32> to vector<8x128xf32>
    %cst_346 = arith.constant 5.000000e-01 : f32
    %617 = vector.broadcast %cst_346 : f32 to vector<8x128xf32>
    %618 = arith.mulf %617, %616 : vector<8x128xf32>
    %619 = math.tanh %618 : vector<8x128xf32>
    %cst_347 = arith.constant 5.000000e-01 : f32
    %620 = vector.broadcast %cst_347 : f32 to vector<8x128xf32>
    %621 = arith.mulf %620, %619 : vector<8x128xf32>
    %cst_348 = arith.constant 5.000000e-01 : f32
    %622 = vector.broadcast %cst_348 : f32 to vector<8x128xf32>
    %623 = arith.addf %621, %622 : vector<8x128xf32>
    %624 = vector.extract_strided_slice %607 {offsets = [0, 256], sizes = [8, 128], strides = [1, 1]} : vector<8x512xf32> to vector<8x128xf32>
    %625 = math.tanh %624 : vector<8x128xf32>
    %626 = vector.extract_strided_slice %607 {offsets = [0, 384], sizes = [8, 128], strides = [1, 1]} : vector<8x512xf32> to vector<8x128xf32>
    %cst_349 = arith.constant 5.000000e-01 : f32
    %627 = vector.broadcast %cst_349 : f32 to vector<8x128xf32>
    %628 = arith.mulf %627, %626 : vector<8x128xf32>
    %629 = math.tanh %628 : vector<8x128xf32>
    %cst_350 = arith.constant 5.000000e-01 : f32
    %630 = vector.broadcast %cst_350 : f32 to vector<8x128xf32>
    %631 = arith.mulf %630, %629 : vector<8x128xf32>
    %cst_351 = arith.constant 5.000000e-01 : f32
    %632 = vector.broadcast %cst_351 : f32 to vector<8x128xf32>
    %633 = arith.addf %631, %632 : vector<8x128xf32>
    %634 = arith.mulf %623, %602 : vector<8x128xf32>
    %635 = arith.mulf %615, %625 : vector<8x128xf32>
    %636 = arith.addf %634, %635 : vector<8x128xf32>
    %637 = math.tanh %636 : vector<8x128xf32>
    %638 = arith.mulf %633, %637 : vector<8x128xf32>
    %c1_352 = arith.constant 1 : index
    %c0_353 = arith.constant 0 : index
    %c0_354 = arith.constant 0 : index
    %639 = vector.load %arg15[%c1_352, %c0_353, %c0_354] : memref<3x8x128xf32, #tpu.memory_space<vmem>>, vector<1x8x128xf32>
    %640 = vector.shape_cast %639 : vector<1x8x128xf32> to vector<8x128xf32>
    %641 = vector.shape_cast %638 : vector<8x128xf32> to vector<1x8x128xf32>
    tpu.vector_store %arg15[%c1_352, %c0_353, %c0_354], %641 {strides = array<i32>} : memref<3x8x128xf32, #tpu.memory_space<vmem>>, vector<1x8x128xf32>,
    %c1_355 = arith.constant 1 : index
    %c0_356 = arith.constant 0 : index
    %c0_357 = arith.constant 0 : index
    %642 = vector.load %arg16[%c1_355, %c0_356, %c0_357] : memref<3x8x128xf32, #tpu.memory_space<vmem>>, vector<1x8x128xf32>
    %643 = vector.shape_cast %642 : vector<1x8x128xf32> to vector<8x128xf32>
    %644 = vector.shape_cast %636 : vector<8x128xf32> to vector<1x8x128xf32>
    tpu.vector_store %arg16[%c1_355, %c0_356, %c0_357], %644 {strides = array<i32>} : memref<3x8x128xf32, #tpu.memory_space<vmem>>, vector<1x8x128xf32>,
    %645 = arith.index_cast %598 : i32 to index
    %c0_358 = arith.constant 0 : index
    %646 = vector.load %arg17[%645, %c0_358] : memref<64x128xf32, #tpu.memory_space<vmem>>, vector<8x128xf32>
    tpu.vector_store %arg17[%645, %c0_358], %638 {strides = array<i32>} : memref<64x128xf32, #tpu.memory_space<vmem>>, vector<8x128xf32>,
    %c4_i32_359 = arith.constant 4 : i32
    %c8_i32_360 = arith.constant 8 : i32
    %647 = arith.muli %c4_i32_359, %c8_i32_360 : i32
    %648 = tpu.assume_multiple %647, 8 : i32
    %c1_361 = arith.constant 1 : index
    %c0_362 = arith.constant 0 : index
    %c0_363 = arith.constant 0 : index
    %649 = vector.load %arg15[%c1_361, %c0_362, %c0_363] : memref<3x8x128xf32, #tpu.memory_space<vmem>>, vector<1x8x128xf32>
    %650 = vector.shape_cast %649 : vector<1x8x128xf32> to vector<8x128xf32>
    %c1_364 = arith.constant 1 : index
    %c0_365 = arith.constant 0 : index
    %c0_366 = arith.constant 0 : index
    %651 = vector.load %arg16[%c1_364, %c0_365, %c0_366] : memref<3x8x128xf32, #tpu.memory_space<vmem>>, vector<1x8x128xf32>
    %652 = vector.shape_cast %651 : vector<1x8x128xf32> to vector<8x128xf32>
    %653 = arith.index_cast %648 : i32 to index
    %c0_367 = arith.constant 0 : index
    %654 = vector.load %arg18[%653, %c0_367] : memref<64x512xf32, #tpu.memory_space<vmem>>, vector<8x512xf32>
    %655 = arith.truncf %650 : vector<8x128xf32> to vector<8x128xbf16>
    %cst_368 = arith.constant dense<0.000000e+00> : vector<8x512xf32>
    %656 = tpu.matmul %655, %446, %cst_368 {dimension_numbers = #tpu.dot_dimension_numbers<[1], [0], [0], [1], [0, 0, 1, 1], [], []>} : vector<8x128xbf16>, vector<128x512xbf16>, vector<8x512xf32> -> vector<8x512xf32>
    %657 = arith.addf %654, %656 : vector<8x512xf32>
    %658 = vector.extract_strided_slice %657 {offsets = [0, 0], sizes = [8, 128], strides = [1, 1]} : vector<8x512xf32> to vector<8x128xf32>
    %cst_369 = arith.constant 5.000000e-01 : f32
    %659 = vector.broadcast %cst_369 : f32 to vector<8x128xf32>
    %660 = arith.mulf %659, %658 : vector<8x128xf32>
    %661 = math.tanh %660 : vector<8x128xf32>
    %cst_370 = arith.constant 5.000000e-01 : f32
    %662 = vector.broadcast %cst_370 : f32 to vector<8x128xf32>
    %663 = arith.mulf %662, %661 : vector<8x128xf32>
    %cst_371 = arith.constant 5.000000e-01 : f32
    %664 = vector.broadcast %cst_371 : f32 to vector<8x128xf32>
    %665 = arith.addf %663, %664 : vector<8x128xf32>
    %666 = vector.extract_strided_slice %657 {offsets = [0, 128], sizes = [8, 128], strides = [1, 1]} : vector<8x512xf32> to vector<8x128xf32>
    %cst_372 = arith.constant 5.000000e-01 : f32
    %667 = vector.broadcast %cst_372 : f32 to vector<8x128xf32>
    %668 = arith.mulf %667, %666 : vector<8x128xf32>
    %669 = math.tanh %668 : vector<8x128xf32>
    %cst_373 = arith.constant 5.000000e-01 : f32
    %670 = vector.broadcast %cst_373 : f32 to vector<8x128xf32>
    %671 = arith.mulf %670, %669 : vector<8x128xf32>
    %cst_374 = arith.constant 5.000000e-01 : f32
    %672 = vector.broadcast %cst_374 : f32 to vector<8x128xf32>
    %673 = arith.addf %671, %672 : vector<8x128xf32>
    %674 = vector.extract_strided_slice %657 {offsets = [0, 256], sizes = [8, 128], strides = [1, 1]} : vector<8x512xf32> to vector<8x128xf32>
    %675 = math.tanh %674 : vector<8x128xf32>
    %676 = vector.extract_strided_slice %657 {offsets = [0, 384], sizes = [8, 128], strides = [1, 1]} : vector<8x512xf32> to vector<8x128xf32>
    %cst_375 = arith.constant 5.000000e-01 : f32
    %677 = vector.broadcast %cst_375 : f32 to vector<8x128xf32>
    %678 = arith.mulf %677, %676 : vector<8x128xf32>
    %679 = math.tanh %678 : vector<8x128xf32>
    %cst_376 = arith.constant 5.000000e-01 : f32
    %680 = vector.broadcast %cst_376 : f32 to vector<8x128xf32>
    %681 = arith.mulf %680, %679 : vector<8x128xf32>
    %cst_377 = arith.constant 5.000000e-01 : f32
    %682 = vector.broadcast %cst_377 : f32 to vector<8x128xf32>
    %683 = arith.addf %681, %682 : vector<8x128xf32>
    %684 = arith.mulf %673, %652 : vector<8x128xf32>
    %685 = arith.mulf %665, %675 : vector<8x128xf32>
    %686 = arith.addf %684, %685 : vector<8x128xf32>
    %687 = math.tanh %686 : vector<8x128xf32>
    %688 = arith.mulf %683, %687 : vector<8x128xf32>
    %c1_378 = arith.constant 1 : index
    %c0_379 = arith.constant 0 : index
    %c0_380 = arith.constant 0 : index
    %689 = vector.load %arg15[%c1_378, %c0_379, %c0_380] : memref<3x8x128xf32, #tpu.memory_space<vmem>>, vector<1x8x128xf32>
    %690 = vector.shape_cast %689 : vector<1x8x128xf32> to vector<8x128xf32>
    %691 = vector.shape_cast %688 : vector<8x128xf32> to vector<1x8x128xf32>
    tpu.vector_store %arg15[%c1_378, %c0_379, %c0_380], %691 {strides = array<i32>} : memref<3x8x128xf32, #tpu.memory_space<vmem>>, vector<1x8x128xf32>,
    %c1_381 = arith.constant 1 : index
    %c0_382 = arith.constant 0 : index
    %c0_383 = arith.constant 0 : index
    %692 = vector.load %arg16[%c1_381, %c0_382, %c0_383] : memref<3x8x128xf32, #tpu.memory_space<vmem>>, vector<1x8x128xf32>
    %693 = vector.shape_cast %692 : vector<1x8x128xf32> to vector<8x128xf32>
    %694 = vector.shape_cast %686 : vector<8x128xf32> to vector<1x8x128xf32>
    tpu.vector_store %arg16[%c1_381, %c0_382, %c0_383], %694 {strides = array<i32>} : memref<3x8x128xf32, #tpu.memory_space<vmem>>, vector<1x8x128xf32>,
    %695 = arith.index_cast %648 : i32 to index
    %c0_384 = arith.constant 0 : index
    %696 = vector.load %arg17[%695, %c0_384] : memref<64x128xf32, #tpu.memory_space<vmem>>, vector<8x128xf32>
    tpu.vector_store %arg17[%695, %c0_384], %688 {strides = array<i32>} : memref<64x128xf32, #tpu.memory_space<vmem>>, vector<8x128xf32>,
    %c5_i32_385 = arith.constant 5 : i32
    %c8_i32_386 = arith.constant 8 : i32
    %697 = arith.muli %c5_i32_385, %c8_i32_386 : i32
    %698 = tpu.assume_multiple %697, 8 : i32
    %c1_387 = arith.constant 1 : index
    %c0_388 = arith.constant 0 : index
    %c0_389 = arith.constant 0 : index
    %699 = vector.load %arg15[%c1_387, %c0_388, %c0_389] : memref<3x8x128xf32, #tpu.memory_space<vmem>>, vector<1x8x128xf32>
    %700 = vector.shape_cast %699 : vector<1x8x128xf32> to vector<8x128xf32>
    %c1_390 = arith.constant 1 : index
    %c0_391 = arith.constant 0 : index
    %c0_392 = arith.constant 0 : index
    %701 = vector.load %arg16[%c1_390, %c0_391, %c0_392] : memref<3x8x128xf32, #tpu.memory_space<vmem>>, vector<1x8x128xf32>
    %702 = vector.shape_cast %701 : vector<1x8x128xf32> to vector<8x128xf32>
    %703 = arith.index_cast %698 : i32 to index
    %c0_393 = arith.constant 0 : index
    %704 = vector.load %arg18[%703, %c0_393] : memref<64x512xf32, #tpu.memory_space<vmem>>, vector<8x512xf32>
    %705 = arith.truncf %700 : vector<8x128xf32> to vector<8x128xbf16>
    %cst_394 = arith.constant dense<0.000000e+00> : vector<8x512xf32>
    %706 = tpu.matmul %705, %446, %cst_394 {dimension_numbers = #tpu.dot_dimension_numbers<[1], [0], [0], [1], [0, 0, 1, 1], [], []>} : vector<8x128xbf16>, vector<128x512xbf16>, vector<8x512xf32> -> vector<8x512xf32>
    %707 = arith.addf %704, %706 : vector<8x512xf32>
    %708 = vector.extract_strided_slice %707 {offsets = [0, 0], sizes = [8, 128], strides = [1, 1]} : vector<8x512xf32> to vector<8x128xf32>
    %cst_395 = arith.constant 5.000000e-01 : f32
    %709 = vector.broadcast %cst_395 : f32 to vector<8x128xf32>
    %710 = arith.mulf %709, %708 : vector<8x128xf32>
    %711 = math.tanh %710 : vector<8x128xf32>
    %cst_396 = arith.constant 5.000000e-01 : f32
    %712 = vector.broadcast %cst_396 : f32 to vector<8x128xf32>
    %713 = arith.mulf %712, %711 : vector<8x128xf32>
    %cst_397 = arith.constant 5.000000e-01 : f32
    %714 = vector.broadcast %cst_397 : f32 to vector<8x128xf32>
    %715 = arith.addf %713, %714 : vector<8x128xf32>
    %716 = vector.extract_strided_slice %707 {offsets = [0, 128], sizes = [8, 128], strides = [1, 1]} : vector<8x512xf32> to vector<8x128xf32>
    %cst_398 = arith.constant 5.000000e-01 : f32
    %717 = vector.broadcast %cst_398 : f32 to vector<8x128xf32>
    %718 = arith.mulf %717, %716 : vector<8x128xf32>
    %719 = math.tanh %718 : vector<8x128xf32>
    %cst_399 = arith.constant 5.000000e-01 : f32
    %720 = vector.broadcast %cst_399 : f32 to vector<8x128xf32>
    %721 = arith.mulf %720, %719 : vector<8x128xf32>
    %cst_400 = arith.constant 5.000000e-01 : f32
    %722 = vector.broadcast %cst_400 : f32 to vector<8x128xf32>
    %723 = arith.addf %721, %722 : vector<8x128xf32>
    %724 = vector.extract_strided_slice %707 {offsets = [0, 256], sizes = [8, 128], strides = [1, 1]} : vector<8x512xf32> to vector<8x128xf32>
    %725 = math.tanh %724 : vector<8x128xf32>
    %726 = vector.extract_strided_slice %707 {offsets = [0, 384], sizes = [8, 128], strides = [1, 1]} : vector<8x512xf32> to vector<8x128xf32>
    %cst_401 = arith.constant 5.000000e-01 : f32
    %727 = vector.broadcast %cst_401 : f32 to vector<8x128xf32>
    %728 = arith.mulf %727, %726 : vector<8x128xf32>
    %729 = math.tanh %728 : vector<8x128xf32>
    %cst_402 = arith.constant 5.000000e-01 : f32
    %730 = vector.broadcast %cst_402 : f32 to vector<8x128xf32>
    %731 = arith.mulf %730, %729 : vector<8x128xf32>
    %cst_403 = arith.constant 5.000000e-01 : f32
    %732 = vector.broadcast %cst_403 : f32 to vector<8x128xf32>
    %733 = arith.addf %731, %732 : vector<8x128xf32>
    %734 = arith.mulf %723, %702 : vector<8x128xf32>
    %735 = arith.mulf %715, %725 : vector<8x128xf32>
    %736 = arith.addf %734, %735 : vector<8x128xf32>
    %737 = math.tanh %736 : vector<8x128xf32>
    %738 = arith.mulf %733, %737 : vector<8x128xf32>
    %c1_404 = arith.constant 1 : index
    %c0_405 = arith.constant 0 : index
    %c0_406 = arith.constant 0 : index
    %739 = vector.load %arg15[%c1_404, %c0_405, %c0_406] : memref<3x8x128xf32, #tpu.memory_space<vmem>>, vector<1x8x128xf32>
    %740 = vector.shape_cast %739 : vector<1x8x128xf32> to vector<8x128xf32>
    %741 = vector.shape_cast %738 : vector<8x128xf32> to vector<1x8x128xf32>
    tpu.vector_store %arg15[%c1_404, %c0_405, %c0_406], %741 {strides = array<i32>} : memref<3x8x128xf32, #tpu.memory_space<vmem>>, vector<1x8x128xf32>,
    %c1_407 = arith.constant 1 : index
    %c0_408 = arith.constant 0 : index
    %c0_409 = arith.constant 0 : index
    %742 = vector.load %arg16[%c1_407, %c0_408, %c0_409] : memref<3x8x128xf32, #tpu.memory_space<vmem>>, vector<1x8x128xf32>
    %743 = vector.shape_cast %742 : vector<1x8x128xf32> to vector<8x128xf32>
    %744 = vector.shape_cast %736 : vector<8x128xf32> to vector<1x8x128xf32>
    tpu.vector_store %arg16[%c1_407, %c0_408, %c0_409], %744 {strides = array<i32>} : memref<3x8x128xf32, #tpu.memory_space<vmem>>, vector<1x8x128xf32>,
    %745 = arith.index_cast %698 : i32 to index
    %c0_410 = arith.constant 0 : index
    %746 = vector.load %arg17[%745, %c0_410] : memref<64x128xf32, #tpu.memory_space<vmem>>, vector<8x128xf32>
    tpu.vector_store %arg17[%745, %c0_410], %738 {strides = array<i32>} : memref<64x128xf32, #tpu.memory_space<vmem>>, vector<8x128xf32>,
    %c6_i32_411 = arith.constant 6 : i32
    %c8_i32_412 = arith.constant 8 : i32
    %747 = arith.muli %c6_i32_411, %c8_i32_412 : i32
    %748 = tpu.assume_multiple %747, 8 : i32
    %c1_413 = arith.constant 1 : index
    %c0_414 = arith.constant 0 : index
    %c0_415 = arith.constant 0 : index
    %749 = vector.load %arg15[%c1_413, %c0_414, %c0_415] : memref<3x8x128xf32, #tpu.memory_space<vmem>>, vector<1x8x128xf32>
    %750 = vector.shape_cast %749 : vector<1x8x128xf32> to vector<8x128xf32>
    %c1_416 = arith.constant 1 : index
    %c0_417 = arith.constant 0 : index
    %c0_418 = arith.constant 0 : index
    %751 = vector.load %arg16[%c1_416, %c0_417, %c0_418] : memref<3x8x128xf32, #tpu.memory_space<vmem>>, vector<1x8x128xf32>
    %752 = vector.shape_cast %751 : vector<1x8x128xf32> to vector<8x128xf32>
    %753 = arith.index_cast %748 : i32 to index
    %c0_419 = arith.constant 0 : index
    %754 = vector.load %arg18[%753, %c0_419] : memref<64x512xf32, #tpu.memory_space<vmem>>, vector<8x512xf32>
    %755 = arith.truncf %750 : vector<8x128xf32> to vector<8x128xbf16>
    %cst_420 = arith.constant dense<0.000000e+00> : vector<8x512xf32>
    %756 = tpu.matmul %755, %446, %cst_420 {dimension_numbers = #tpu.dot_dimension_numbers<[1], [0], [0], [1], [0, 0, 1, 1], [], []>} : vector<8x128xbf16>, vector<128x512xbf16>, vector<8x512xf32> -> vector<8x512xf32>
    %757 = arith.addf %754, %756 : vector<8x512xf32>
    %758 = vector.extract_strided_slice %757 {offsets = [0, 0], sizes = [8, 128], strides = [1, 1]} : vector<8x512xf32> to vector<8x128xf32>
    %cst_421 = arith.constant 5.000000e-01 : f32
    %759 = vector.broadcast %cst_421 : f32 to vector<8x128xf32>
    %760 = arith.mulf %759, %758 : vector<8x128xf32>
    %761 = math.tanh %760 : vector<8x128xf32>
    %cst_422 = arith.constant 5.000000e-01 : f32
    %762 = vector.broadcast %cst_422 : f32 to vector<8x128xf32>
    %763 = arith.mulf %762, %761 : vector<8x128xf32>
    %cst_423 = arith.constant 5.000000e-01 : f32
    %764 = vector.broadcast %cst_423 : f32 to vector<8x128xf32>
    %765 = arith.addf %763, %764 : vector<8x128xf32>
    %766 = vector.extract_strided_slice %757 {offsets = [0, 128], sizes = [8, 128], strides = [1, 1]} : vector<8x512xf32> to vector<8x128xf32>
    %cst_424 = arith.constant 5.000000e-01 : f32
    %767 = vector.broadcast %cst_424 : f32 to vector<8x128xf32>
    %768 = arith.mulf %767, %766 : vector<8x128xf32>
    %769 = math.tanh %768 : vector<8x128xf32>
    %cst_425 = arith.constant 5.000000e-01 : f32
    %770 = vector.broadcast %cst_425 : f32 to vector<8x128xf32>
    %771 = arith.mulf %770, %769 : vector<8x128xf32>
    %cst_426 = arith.constant 5.000000e-01 : f32
    %772 = vector.broadcast %cst_426 : f32 to vector<8x128xf32>
    %773 = arith.addf %771, %772 : vector<8x128xf32>
    %774 = vector.extract_strided_slice %757 {offsets = [0, 256], sizes = [8, 128], strides = [1, 1]} : vector<8x512xf32> to vector<8x128xf32>
    %775 = math.tanh %774 : vector<8x128xf32>
    %776 = vector.extract_strided_slice %757 {offsets = [0, 384], sizes = [8, 128], strides = [1, 1]} : vector<8x512xf32> to vector<8x128xf32>
    %cst_427 = arith.constant 5.000000e-01 : f32
    %777 = vector.broadcast %cst_427 : f32 to vector<8x128xf32>
    %778 = arith.mulf %777, %776 : vector<8x128xf32>
    %779 = math.tanh %778 : vector<8x128xf32>
    %cst_428 = arith.constant 5.000000e-01 : f32
    %780 = vector.broadcast %cst_428 : f32 to vector<8x128xf32>
    %781 = arith.mulf %780, %779 : vector<8x128xf32>
    %cst_429 = arith.constant 5.000000e-01 : f32
    %782 = vector.broadcast %cst_429 : f32 to vector<8x128xf32>
    %783 = arith.addf %781, %782 : vector<8x128xf32>
    %784 = arith.mulf %773, %752 : vector<8x128xf32>
    %785 = arith.mulf %765, %775 : vector<8x128xf32>
    %786 = arith.addf %784, %785 : vector<8x128xf32>
    %787 = math.tanh %786 : vector<8x128xf32>
    %788 = arith.mulf %783, %787 : vector<8x128xf32>
    %c1_430 = arith.constant 1 : index
    %c0_431 = arith.constant 0 : index
    %c0_432 = arith.constant 0 : index
    %789 = vector.load %arg15[%c1_430, %c0_431, %c0_432] : memref<3x8x128xf32, #tpu.memory_space<vmem>>, vector<1x8x128xf32>
    %790 = vector.shape_cast %789 : vector<1x8x128xf32> to vector<8x128xf32>
    %791 = vector.shape_cast %788 : vector<8x128xf32> to vector<1x8x128xf32>
    tpu.vector_store %arg15[%c1_430, %c0_431, %c0_432], %791 {strides = array<i32>} : memref<3x8x128xf32, #tpu.memory_space<vmem>>, vector<1x8x128xf32>,
    %c1_433 = arith.constant 1 : index
    %c0_434 = arith.constant 0 : index
    %c0_435 = arith.constant 0 : index
    %792 = vector.load %arg16[%c1_433, %c0_434, %c0_435] : memref<3x8x128xf32, #tpu.memory_space<vmem>>, vector<1x8x128xf32>
    %793 = vector.shape_cast %792 : vector<1x8x128xf32> to vector<8x128xf32>
    %794 = vector.shape_cast %786 : vector<8x128xf32> to vector<1x8x128xf32>
    tpu.vector_store %arg16[%c1_433, %c0_434, %c0_435], %794 {strides = array<i32>} : memref<3x8x128xf32, #tpu.memory_space<vmem>>, vector<1x8x128xf32>,
    %795 = arith.index_cast %748 : i32 to index
    %c0_436 = arith.constant 0 : index
    %796 = vector.load %arg17[%795, %c0_436] : memref<64x128xf32, #tpu.memory_space<vmem>>, vector<8x128xf32>
    tpu.vector_store %arg17[%795, %c0_436], %788 {strides = array<i32>} : memref<64x128xf32, #tpu.memory_space<vmem>>, vector<8x128xf32>,
    %c7_i32_437 = arith.constant 7 : i32
    %c8_i32_438 = arith.constant 8 : i32
    %797 = arith.muli %c7_i32_437, %c8_i32_438 : i32
    %798 = tpu.assume_multiple %797, 8 : i32
    %c1_439 = arith.constant 1 : index
    %c0_440 = arith.constant 0 : index
    %c0_441 = arith.constant 0 : index
    %799 = vector.load %arg15[%c1_439, %c0_440, %c0_441] : memref<3x8x128xf32, #tpu.memory_space<vmem>>, vector<1x8x128xf32>
    %800 = vector.shape_cast %799 : vector<1x8x128xf32> to vector<8x128xf32>
    %c1_442 = arith.constant 1 : index
    %c0_443 = arith.constant 0 : index
    %c0_444 = arith.constant 0 : index
    %801 = vector.load %arg16[%c1_442, %c0_443, %c0_444] : memref<3x8x128xf32, #tpu.memory_space<vmem>>, vector<1x8x128xf32>
    %802 = vector.shape_cast %801 : vector<1x8x128xf32> to vector<8x128xf32>
    %803 = arith.index_cast %798 : i32 to index
    %c0_445 = arith.constant 0 : index
    %804 = vector.load %arg18[%803, %c0_445] : memref<64x512xf32, #tpu.memory_space<vmem>>, vector<8x512xf32>
    %805 = arith.truncf %800 : vector<8x128xf32> to vector<8x128xbf16>
    %cst_446 = arith.constant dense<0.000000e+00> : vector<8x512xf32>
    %806 = tpu.matmul %805, %446, %cst_446 {dimension_numbers = #tpu.dot_dimension_numbers<[1], [0], [0], [1], [0, 0, 1, 1], [], []>} : vector<8x128xbf16>, vector<128x512xbf16>, vector<8x512xf32> -> vector<8x512xf32>
    %807 = arith.addf %804, %806 : vector<8x512xf32>
    %808 = vector.extract_strided_slice %807 {offsets = [0, 0], sizes = [8, 128], strides = [1, 1]} : vector<8x512xf32> to vector<8x128xf32>
    %cst_447 = arith.constant 5.000000e-01 : f32
    %809 = vector.broadcast %cst_447 : f32 to vector<8x128xf32>
    %810 = arith.mulf %809, %808 : vector<8x128xf32>
    %811 = math.tanh %810 : vector<8x128xf32>
    %cst_448 = arith.constant 5.000000e-01 : f32
    %812 = vector.broadcast %cst_448 : f32 to vector<8x128xf32>
    %813 = arith.mulf %812, %811 : vector<8x128xf32>
    %cst_449 = arith.constant 5.000000e-01 : f32
    %814 = vector.broadcast %cst_449 : f32 to vector<8x128xf32>
    %815 = arith.addf %813, %814 : vector<8x128xf32>
    %816 = vector.extract_strided_slice %807 {offsets = [0, 128], sizes = [8, 128], strides = [1, 1]} : vector<8x512xf32> to vector<8x128xf32>
    %cst_450 = arith.constant 5.000000e-01 : f32
    %817 = vector.broadcast %cst_450 : f32 to vector<8x128xf32>
    %818 = arith.mulf %817, %816 : vector<8x128xf32>
    %819 = math.tanh %818 : vector<8x128xf32>
    %cst_451 = arith.constant 5.000000e-01 : f32
    %820 = vector.broadcast %cst_451 : f32 to vector<8x128xf32>
    %821 = arith.mulf %820, %819 : vector<8x128xf32>
    %cst_452 = arith.constant 5.000000e-01 : f32
    %822 = vector.broadcast %cst_452 : f32 to vector<8x128xf32>
    %823 = arith.addf %821, %822 : vector<8x128xf32>
    %824 = vector.extract_strided_slice %807 {offsets = [0, 256], sizes = [8, 128], strides = [1, 1]} : vector<8x512xf32> to vector<8x128xf32>
    %825 = math.tanh %824 : vector<8x128xf32>
    %826 = vector.extract_strided_slice %807 {offsets = [0, 384], sizes = [8, 128], strides = [1, 1]} : vector<8x512xf32> to vector<8x128xf32>
    %cst_453 = arith.constant 5.000000e-01 : f32
    %827 = vector.broadcast %cst_453 : f32 to vector<8x128xf32>
    %828 = arith.mulf %827, %826 : vector<8x128xf32>
    %829 = math.tanh %828 : vector<8x128xf32>
    %cst_454 = arith.constant 5.000000e-01 : f32
    %830 = vector.broadcast %cst_454 : f32 to vector<8x128xf32>
    %831 = arith.mulf %830, %829 : vector<8x128xf32>
    %cst_455 = arith.constant 5.000000e-01 : f32
    %832 = vector.broadcast %cst_455 : f32 to vector<8x128xf32>
    %833 = arith.addf %831, %832 : vector<8x128xf32>
    %834 = arith.mulf %823, %802 : vector<8x128xf32>
    %835 = arith.mulf %815, %825 : vector<8x128xf32>
    %836 = arith.addf %834, %835 : vector<8x128xf32>
    %837 = math.tanh %836 : vector<8x128xf32>
    %838 = arith.mulf %833, %837 : vector<8x128xf32>
    %c1_456 = arith.constant 1 : index
    %c0_457 = arith.constant 0 : index
    %c0_458 = arith.constant 0 : index
    %839 = vector.load %arg15[%c1_456, %c0_457, %c0_458] : memref<3x8x128xf32, #tpu.memory_space<vmem>>, vector<1x8x128xf32>
    %840 = vector.shape_cast %839 : vector<1x8x128xf32> to vector<8x128xf32>
    %841 = vector.shape_cast %838 : vector<8x128xf32> to vector<1x8x128xf32>
    tpu.vector_store %arg15[%c1_456, %c0_457, %c0_458], %841 {strides = array<i32>} : memref<3x8x128xf32, #tpu.memory_space<vmem>>, vector<1x8x128xf32>,
    %c1_459 = arith.constant 1 : index
    %c0_460 = arith.constant 0 : index
    %c0_461 = arith.constant 0 : index
    %842 = vector.load %arg16[%c1_459, %c0_460, %c0_461] : memref<3x8x128xf32, #tpu.memory_space<vmem>>, vector<1x8x128xf32>
    %843 = vector.shape_cast %842 : vector<1x8x128xf32> to vector<8x128xf32>
    %844 = vector.shape_cast %836 : vector<8x128xf32> to vector<1x8x128xf32>
    tpu.vector_store %arg16[%c1_459, %c0_460, %c0_461], %844 {strides = array<i32>} : memref<3x8x128xf32, #tpu.memory_space<vmem>>, vector<1x8x128xf32>,
    %845 = arith.index_cast %798 : i32 to index
    %c0_462 = arith.constant 0 : index
    %846 = vector.load %arg17[%845, %c0_462] : memref<64x128xf32, #tpu.memory_space<vmem>>, vector<8x128xf32>
    tpu.vector_store %arg17[%845, %c0_462], %838 {strides = array<i32>} : memref<64x128xf32, #tpu.memory_space<vmem>>, vector<8x128xf32>,
    %c8_i32_463 = arith.constant 8 : i32
    %c0_464 = arith.constant 0 : index
    %c0_465 = arith.constant 0 : index
    %847 = vector.load %arg17[%c0_464, %c0_465] : memref<64x128xf32, #tpu.memory_space<vmem>>, vector<64x128xf32>
    %848 = arith.truncf %847 : vector<64x128xf32> to vector<64x128xbf16>
    %c2 = arith.constant 2 : index
    %c0_466 = arith.constant 0 : index
    %c0_467 = arith.constant 0 : index
    %849 = vector.load %arg5[%c2, %c0_466, %c0_467] : memref<3x128x512xbf16, #tpu.memory_space<vmem>>, vector<1x128x512xbf16>
    %850 = vector.shape_cast %849 : vector<1x128x512xbf16> to vector<128x512xbf16>
    %cst_468 = arith.constant dense<0.000000e+00> : vector<64x512xf32>
    %851 = tpu.matmul %848, %850, %cst_468 {dimension_numbers = #tpu.dot_dimension_numbers<[1], [0], [0], [1], [0, 0, 1, 1], [], []>} : vector<64x128xbf16>, vector<128x512xbf16>, vector<64x512xf32> -> vector<64x512xf32>
    %c2_469 = arith.constant 2 : index
    %c0_470 = arith.constant 0 : index
    %c0_471 = arith.constant 0 : index
    %852 = vector.load %arg7[%c2_469, %c0_470, %c0_471] : memref<3x1x512xf32, #tpu.memory_space<vmem>>, vector<1x1x512xf32>
    %853 = vector.shape_cast %852 : vector<1x1x512xf32> to vector<1x512xf32>
    %854 = vector.broadcast %853 : vector<1x512xf32> to vector<64x512xf32>
    %855 = arith.addf %851, %854 : vector<64x512xf32>
    %c0_472 = arith.constant 0 : index
    %c0_473 = arith.constant 0 : index
    %856 = vector.load %arg18[%c0_472, %c0_473] : memref<64x512xf32, #tpu.memory_space<vmem>>, vector<64x512xf32>
    tpu.vector_store %arg18[%c0_472, %c0_473], %855 {strides = array<i32>} : memref<64x512xf32, #tpu.memory_space<vmem>>, vector<64x512xf32>,
    %c2_474 = arith.constant 2 : index
    %c0_475 = arith.constant 0 : index
    %c0_476 = arith.constant 0 : index
    %857 = vector.load %arg6[%c2_474, %c0_475, %c0_476] : memref<3x128x512xbf16, #tpu.memory_space<vmem>>, vector<1x128x512xbf16>
    %858 = vector.shape_cast %857 : vector<1x128x512xbf16> to vector<128x512xbf16>
    %c0_i32_477 = arith.constant 0 : i32
    %c8_i32_478 = arith.constant 8 : i32
    %859 = arith.muli %c0_i32_477, %c8_i32_478 : i32
    %860 = tpu.assume_multiple %859, 8 : i32
    %c2_479 = arith.constant 2 : index
    %c0_480 = arith.constant 0 : index
    %c0_481 = arith.constant 0 : index
    %861 = vector.load %arg15[%c2_479, %c0_480, %c0_481] : memref<3x8x128xf32, #tpu.memory_space<vmem>>, vector<1x8x128xf32>
    %862 = vector.shape_cast %861 : vector<1x8x128xf32> to vector<8x128xf32>
    %c2_482 = arith.constant 2 : index
    %c0_483 = arith.constant 0 : index
    %c0_484 = arith.constant 0 : index
    %863 = vector.load %arg16[%c2_482, %c0_483, %c0_484] : memref<3x8x128xf32, #tpu.memory_space<vmem>>, vector<1x8x128xf32>
    %864 = vector.shape_cast %863 : vector<1x8x128xf32> to vector<8x128xf32>
    %865 = arith.index_cast %860 : i32 to index
    %c0_485 = arith.constant 0 : index
    %866 = vector.load %arg18[%865, %c0_485] : memref<64x512xf32, #tpu.memory_space<vmem>>, vector<8x512xf32>
    %867 = arith.truncf %862 : vector<8x128xf32> to vector<8x128xbf16>
    %cst_486 = arith.constant dense<0.000000e+00> : vector<8x512xf32>
    %868 = tpu.matmul %867, %858, %cst_486 {dimension_numbers = #tpu.dot_dimension_numbers<[1], [0], [0], [1], [0, 0, 1, 1], [], []>} : vector<8x128xbf16>, vector<128x512xbf16>, vector<8x512xf32> -> vector<8x512xf32>
    %869 = arith.addf %866, %868 : vector<8x512xf32>
    %870 = vector.extract_strided_slice %869 {offsets = [0, 0], sizes = [8, 128], strides = [1, 1]} : vector<8x512xf32> to vector<8x128xf32>
    %cst_487 = arith.constant 5.000000e-01 : f32
    %871 = vector.broadcast %cst_487 : f32 to vector<8x128xf32>
    %872 = arith.mulf %871, %870 : vector<8x128xf32>
    %873 = math.tanh %872 : vector<8x128xf32>
    %cst_488 = arith.constant 5.000000e-01 : f32
    %874 = vector.broadcast %cst_488 : f32 to vector<8x128xf32>
    %875 = arith.mulf %874, %873 : vector<8x128xf32>
    %cst_489 = arith.constant 5.000000e-01 : f32
    %876 = vector.broadcast %cst_489 : f32 to vector<8x128xf32>
    %877 = arith.addf %875, %876 : vector<8x128xf32>
    %878 = vector.extract_strided_slice %869 {offsets = [0, 128], sizes = [8, 128], strides = [1, 1]} : vector<8x512xf32> to vector<8x128xf32>
    %cst_490 = arith.constant 5.000000e-01 : f32
    %879 = vector.broadcast %cst_490 : f32 to vector<8x128xf32>
    %880 = arith.mulf %879, %878 : vector<8x128xf32>
    %881 = math.tanh %880 : vector<8x128xf32>
    %cst_491 = arith.constant 5.000000e-01 : f32
    %882 = vector.broadcast %cst_491 : f32 to vector<8x128xf32>
    %883 = arith.mulf %882, %881 : vector<8x128xf32>
    %cst_492 = arith.constant 5.000000e-01 : f32
    %884 = vector.broadcast %cst_492 : f32 to vector<8x128xf32>
    %885 = arith.addf %883, %884 : vector<8x128xf32>
    %886 = vector.extract_strided_slice %869 {offsets = [0, 256], sizes = [8, 128], strides = [1, 1]} : vector<8x512xf32> to vector<8x128xf32>
    %887 = math.tanh %886 : vector<8x128xf32>
    %888 = vector.extract_strided_slice %869 {offsets = [0, 384], sizes = [8, 128], strides = [1, 1]} : vector<8x512xf32> to vector<8x128xf32>
    %cst_493 = arith.constant 5.000000e-01 : f32
    %889 = vector.broadcast %cst_493 : f32 to vector<8x128xf32>
    %890 = arith.mulf %889, %888 : vector<8x128xf32>
    %891 = math.tanh %890 : vector<8x128xf32>
    %cst_494 = arith.constant 5.000000e-01 : f32
    %892 = vector.broadcast %cst_494 : f32 to vector<8x128xf32>
    %893 = arith.mulf %892, %891 : vector<8x128xf32>
    %cst_495 = arith.constant 5.000000e-01 : f32
    %894 = vector.broadcast %cst_495 : f32 to vector<8x128xf32>
    %895 = arith.addf %893, %894 : vector<8x128xf32>
    %896 = arith.mulf %885, %864 : vector<8x128xf32>
    %897 = arith.mulf %877, %887 : vector<8x128xf32>
    %898 = arith.addf %896, %897 : vector<8x128xf32>
    %899 = math.tanh %898 : vector<8x128xf32>
    %900 = arith.mulf %895, %899 : vector<8x128xf32>
    %c2_496 = arith.constant 2 : index
    %c0_497 = arith.constant 0 : index
    %c0_498 = arith.constant 0 : index
    %901 = vector.load %arg15[%c2_496, %c0_497, %c0_498] : memref<3x8x128xf32, #tpu.memory_space<vmem>>, vector<1x8x128xf32>
    %902 = vector.shape_cast %901 : vector<1x8x128xf32> to vector<8x128xf32>
    %903 = vector.shape_cast %900 : vector<8x128xf32> to vector<1x8x128xf32>
    tpu.vector_store %arg15[%c2_496, %c0_497, %c0_498], %903 {strides = array<i32>} : memref<3x8x128xf32, #tpu.memory_space<vmem>>, vector<1x8x128xf32>,
    %c2_499 = arith.constant 2 : index
    %c0_500 = arith.constant 0 : index
    %c0_501 = arith.constant 0 : index
    %904 = vector.load %arg16[%c2_499, %c0_500, %c0_501] : memref<3x8x128xf32, #tpu.memory_space<vmem>>, vector<1x8x128xf32>
    %905 = vector.shape_cast %904 : vector<1x8x128xf32> to vector<8x128xf32>
    %906 = vector.shape_cast %898 : vector<8x128xf32> to vector<1x8x128xf32>
    tpu.vector_store %arg16[%c2_499, %c0_500, %c0_501], %906 {strides = array<i32>} : memref<3x8x128xf32, #tpu.memory_space<vmem>>, vector<1x8x128xf32>,
    %907 = arith.index_cast %860 : i32 to index
    %c0_502 = arith.constant 0 : index
    %908 = vector.load %arg17[%907, %c0_502] : memref<64x128xf32, #tpu.memory_space<vmem>>, vector<8x128xf32>
    tpu.vector_store %arg17[%907, %c0_502], %900 {strides = array<i32>} : memref<64x128xf32, #tpu.memory_space<vmem>>, vector<8x128xf32>,
    %c1_i32_503 = arith.constant 1 : i32
    %c8_i32_504 = arith.constant 8 : i32
    %909 = arith.muli %c1_i32_503, %c8_i32_504 : i32
    %910 = tpu.assume_multiple %909, 8 : i32
    %c2_505 = arith.constant 2 : index
    %c0_506 = arith.constant 0 : index
    %c0_507 = arith.constant 0 : index
    %911 = vector.load %arg15[%c2_505, %c0_506, %c0_507] : memref<3x8x128xf32, #tpu.memory_space<vmem>>, vector<1x8x128xf32>
    %912 = vector.shape_cast %911 : vector<1x8x128xf32> to vector<8x128xf32>
    %c2_508 = arith.constant 2 : index
    %c0_509 = arith.constant 0 : index
    %c0_510 = arith.constant 0 : index
    %913 = vector.load %arg16[%c2_508, %c0_509, %c0_510] : memref<3x8x128xf32, #tpu.memory_space<vmem>>, vector<1x8x128xf32>
    %914 = vector.shape_cast %913 : vector<1x8x128xf32> to vector<8x128xf32>
    %915 = arith.index_cast %910 : i32 to index
    %c0_511 = arith.constant 0 : index
    %916 = vector.load %arg18[%915, %c0_511] : memref<64x512xf32, #tpu.memory_space<vmem>>, vector<8x512xf32>
    %917 = arith.truncf %912 : vector<8x128xf32> to vector<8x128xbf16>
    %cst_512 = arith.constant dense<0.000000e+00> : vector<8x512xf32>
    %918 = tpu.matmul %917, %858, %cst_512 {dimension_numbers = #tpu.dot_dimension_numbers<[1], [0], [0], [1], [0, 0, 1, 1], [], []>} : vector<8x128xbf16>, vector<128x512xbf16>, vector<8x512xf32> -> vector<8x512xf32>
    %919 = arith.addf %916, %918 : vector<8x512xf32>
    %920 = vector.extract_strided_slice %919 {offsets = [0, 0], sizes = [8, 128], strides = [1, 1]} : vector<8x512xf32> to vector<8x128xf32>
    %cst_513 = arith.constant 5.000000e-01 : f32
    %921 = vector.broadcast %cst_513 : f32 to vector<8x128xf32>
    %922 = arith.mulf %921, %920 : vector<8x128xf32>
    %923 = math.tanh %922 : vector<8x128xf32>
    %cst_514 = arith.constant 5.000000e-01 : f32
    %924 = vector.broadcast %cst_514 : f32 to vector<8x128xf32>
    %925 = arith.mulf %924, %923 : vector<8x128xf32>
    %cst_515 = arith.constant 5.000000e-01 : f32
    %926 = vector.broadcast %cst_515 : f32 to vector<8x128xf32>
    %927 = arith.addf %925, %926 : vector<8x128xf32>
    %928 = vector.extract_strided_slice %919 {offsets = [0, 128], sizes = [8, 128], strides = [1, 1]} : vector<8x512xf32> to vector<8x128xf32>
    %cst_516 = arith.constant 5.000000e-01 : f32
    %929 = vector.broadcast %cst_516 : f32 to vector<8x128xf32>
    %930 = arith.mulf %929, %928 : vector<8x128xf32>
    %931 = math.tanh %930 : vector<8x128xf32>
    %cst_517 = arith.constant 5.000000e-01 : f32
    %932 = vector.broadcast %cst_517 : f32 to vector<8x128xf32>
    %933 = arith.mulf %932, %931 : vector<8x128xf32>
    %cst_518 = arith.constant 5.000000e-01 : f32
    %934 = vector.broadcast %cst_518 : f32 to vector<8x128xf32>
    %935 = arith.addf %933, %934 : vector<8x128xf32>
    %936 = vector.extract_strided_slice %919 {offsets = [0, 256], sizes = [8, 128], strides = [1, 1]} : vector<8x512xf32> to vector<8x128xf32>
    %937 = math.tanh %936 : vector<8x128xf32>
    %938 = vector.extract_strided_slice %919 {offsets = [0, 384], sizes = [8, 128], strides = [1, 1]} : vector<8x512xf32> to vector<8x128xf32>
    %cst_519 = arith.constant 5.000000e-01 : f32
    %939 = vector.broadcast %cst_519 : f32 to vector<8x128xf32>
    %940 = arith.mulf %939, %938 : vector<8x128xf32>
    %941 = math.tanh %940 : vector<8x128xf32>
    %cst_520 = arith.constant 5.000000e-01 : f32
    %942 = vector.broadcast %cst_520 : f32 to vector<8x128xf32>
    %943 = arith.mulf %942, %941 : vector<8x128xf32>
    %cst_521 = arith.constant 5.000000e-01 : f32
    %944 = vector.broadcast %cst_521 : f32 to vector<8x128xf32>
    %945 = arith.addf %943, %944 : vector<8x128xf32>
    %946 = arith.mulf %935, %914 : vector<8x128xf32>
    %947 = arith.mulf %927, %937 : vector<8x128xf32>
    %948 = arith.addf %946, %947 : vector<8x128xf32>
    %949 = math.tanh %948 : vector<8x128xf32>
    %950 = arith.mulf %945, %949 : vector<8x128xf32>
    %c2_522 = arith.constant 2 : index
    %c0_523 = arith.constant 0 : index
    %c0_524 = arith.constant 0 : index
    %951 = vector.load %arg15[%c2_522, %c0_523, %c0_524] : memref<3x8x128xf32, #tpu.memory_space<vmem>>, vector<1x8x128xf32>
    %952 = vector.shape_cast %951 : vector<1x8x128xf32> to vector<8x128xf32>
    %953 = vector.shape_cast %950 : vector<8x128xf32> to vector<1x8x128xf32>
    tpu.vector_store %arg15[%c2_522, %c0_523, %c0_524], %953 {strides = array<i32>} : memref<3x8x128xf32, #tpu.memory_space<vmem>>, vector<1x8x128xf32>,
    %c2_525 = arith.constant 2 : index
    %c0_526 = arith.constant 0 : index
    %c0_527 = arith.constant 0 : index
    %954 = vector.load %arg16[%c2_525, %c0_526, %c0_527] : memref<3x8x128xf32, #tpu.memory_space<vmem>>, vector<1x8x128xf32>
    %955 = vector.shape_cast %954 : vector<1x8x128xf32> to vector<8x128xf32>
    %956 = vector.shape_cast %948 : vector<8x128xf32> to vector<1x8x128xf32>
    tpu.vector_store %arg16[%c2_525, %c0_526, %c0_527], %956 {strides = array<i32>} : memref<3x8x128xf32, #tpu.memory_space<vmem>>, vector<1x8x128xf32>,
    %957 = arith.index_cast %910 : i32 to index
    %c0_528 = arith.constant 0 : index
    %958 = vector.load %arg17[%957, %c0_528] : memref<64x128xf32, #tpu.memory_space<vmem>>, vector<8x128xf32>
    tpu.vector_store %arg17[%957, %c0_528], %950 {strides = array<i32>} : memref<64x128xf32, #tpu.memory_space<vmem>>, vector<8x128xf32>,
    %c2_i32_529 = arith.constant 2 : i32
    %c8_i32_530 = arith.constant 8 : i32
    %959 = arith.muli %c2_i32_529, %c8_i32_530 : i32
    %960 = tpu.assume_multiple %959, 8 : i32
    %c2_531 = arith.constant 2 : index
    %c0_532 = arith.constant 0 : index
    %c0_533 = arith.constant 0 : index
    %961 = vector.load %arg15[%c2_531, %c0_532, %c0_533] : memref<3x8x128xf32, #tpu.memory_space<vmem>>, vector<1x8x128xf32>
    %962 = vector.shape_cast %961 : vector<1x8x128xf32> to vector<8x128xf32>
    %c2_534 = arith.constant 2 : index
    %c0_535 = arith.constant 0 : index
    %c0_536 = arith.constant 0 : index
    %963 = vector.load %arg16[%c2_534, %c0_535, %c0_536] : memref<3x8x128xf32, #tpu.memory_space<vmem>>, vector<1x8x128xf32>
    %964 = vector.shape_cast %963 : vector<1x8x128xf32> to vector<8x128xf32>
    %965 = arith.index_cast %960 : i32 to index
    %c0_537 = arith.constant 0 : index
    %966 = vector.load %arg18[%965, %c0_537] : memref<64x512xf32, #tpu.memory_space<vmem>>, vector<8x512xf32>
    %967 = arith.truncf %962 : vector<8x128xf32> to vector<8x128xbf16>
    %cst_538 = arith.constant dense<0.000000e+00> : vector<8x512xf32>
    %968 = tpu.matmul %967, %858, %cst_538 {dimension_numbers = #tpu.dot_dimension_numbers<[1], [0], [0], [1], [0, 0, 1, 1], [], []>} : vector<8x128xbf16>, vector<128x512xbf16>, vector<8x512xf32> -> vector<8x512xf32>
    %969 = arith.addf %966, %968 : vector<8x512xf32>
    %970 = vector.extract_strided_slice %969 {offsets = [0, 0], sizes = [8, 128], strides = [1, 1]} : vector<8x512xf32> to vector<8x128xf32>
    %cst_539 = arith.constant 5.000000e-01 : f32
    %971 = vector.broadcast %cst_539 : f32 to vector<8x128xf32>
    %972 = arith.mulf %971, %970 : vector<8x128xf32>
    %973 = math.tanh %972 : vector<8x128xf32>
    %cst_540 = arith.constant 5.000000e-01 : f32
    %974 = vector.broadcast %cst_540 : f32 to vector<8x128xf32>
    %975 = arith.mulf %974, %973 : vector<8x128xf32>
    %cst_541 = arith.constant 5.000000e-01 : f32
    %976 = vector.broadcast %cst_541 : f32 to vector<8x128xf32>
    %977 = arith.addf %975, %976 : vector<8x128xf32>
    %978 = vector.extract_strided_slice %969 {offsets = [0, 128], sizes = [8, 128], strides = [1, 1]} : vector<8x512xf32> to vector<8x128xf32>
    %cst_542 = arith.constant 5.000000e-01 : f32
    %979 = vector.broadcast %cst_542 : f32 to vector<8x128xf32>
    %980 = arith.mulf %979, %978 : vector<8x128xf32>
    %981 = math.tanh %980 : vector<8x128xf32>
    %cst_543 = arith.constant 5.000000e-01 : f32
    %982 = vector.broadcast %cst_543 : f32 to vector<8x128xf32>
    %983 = arith.mulf %982, %981 : vector<8x128xf32>
    %cst_544 = arith.constant 5.000000e-01 : f32
    %984 = vector.broadcast %cst_544 : f32 to vector<8x128xf32>
    %985 = arith.addf %983, %984 : vector<8x128xf32>
    %986 = vector.extract_strided_slice %969 {offsets = [0, 256], sizes = [8, 128], strides = [1, 1]} : vector<8x512xf32> to vector<8x128xf32>
    %987 = math.tanh %986 : vector<8x128xf32>
    %988 = vector.extract_strided_slice %969 {offsets = [0, 384], sizes = [8, 128], strides = [1, 1]} : vector<8x512xf32> to vector<8x128xf32>
    %cst_545 = arith.constant 5.000000e-01 : f32
    %989 = vector.broadcast %cst_545 : f32 to vector<8x128xf32>
    %990 = arith.mulf %989, %988 : vector<8x128xf32>
    %991 = math.tanh %990 : vector<8x128xf32>
    %cst_546 = arith.constant 5.000000e-01 : f32
    %992 = vector.broadcast %cst_546 : f32 to vector<8x128xf32>
    %993 = arith.mulf %992, %991 : vector<8x128xf32>
    %cst_547 = arith.constant 5.000000e-01 : f32
    %994 = vector.broadcast %cst_547 : f32 to vector<8x128xf32>
    %995 = arith.addf %993, %994 : vector<8x128xf32>
    %996 = arith.mulf %985, %964 : vector<8x128xf32>
    %997 = arith.mulf %977, %987 : vector<8x128xf32>
    %998 = arith.addf %996, %997 : vector<8x128xf32>
    %999 = math.tanh %998 : vector<8x128xf32>
    %1000 = arith.mulf %995, %999 : vector<8x128xf32>
    %c2_548 = arith.constant 2 : index
    %c0_549 = arith.constant 0 : index
    %c0_550 = arith.constant 0 : index
    %1001 = vector.load %arg15[%c2_548, %c0_549, %c0_550] : memref<3x8x128xf32, #tpu.memory_space<vmem>>, vector<1x8x128xf32>
    %1002 = vector.shape_cast %1001 : vector<1x8x128xf32> to vector<8x128xf32>
    %1003 = vector.shape_cast %1000 : vector<8x128xf32> to vector<1x8x128xf32>
    tpu.vector_store %arg15[%c2_548, %c0_549, %c0_550], %1003 {strides = array<i32>} : memref<3x8x128xf32, #tpu.memory_space<vmem>>, vector<1x8x128xf32>,
    %c2_551 = arith.constant 2 : index
    %c0_552 = arith.constant 0 : index
    %c0_553 = arith.constant 0 : index
    %1004 = vector.load %arg16[%c2_551, %c0_552, %c0_553] : memref<3x8x128xf32, #tpu.memory_space<vmem>>, vector<1x8x128xf32>
    %1005 = vector.shape_cast %1004 : vector<1x8x128xf32> to vector<8x128xf32>
    %1006 = vector.shape_cast %998 : vector<8x128xf32> to vector<1x8x128xf32>
    tpu.vector_store %arg16[%c2_551, %c0_552, %c0_553], %1006 {strides = array<i32>} : memref<3x8x128xf32, #tpu.memory_space<vmem>>, vector<1x8x128xf32>,
    %1007 = arith.index_cast %960 : i32 to index
    %c0_554 = arith.constant 0 : index
    %1008 = vector.load %arg17[%1007, %c0_554] : memref<64x128xf32, #tpu.memory_space<vmem>>, vector<8x128xf32>
    tpu.vector_store %arg17[%1007, %c0_554], %1000 {strides = array<i32>} : memref<64x128xf32, #tpu.memory_space<vmem>>, vector<8x128xf32>,
    %c3_i32_555 = arith.constant 3 : i32
    %c8_i32_556 = arith.constant 8 : i32
    %1009 = arith.muli %c3_i32_555, %c8_i32_556 : i32
    %1010 = tpu.assume_multiple %1009, 8 : i32
    %c2_557 = arith.constant 2 : index
    %c0_558 = arith.constant 0 : index
    %c0_559 = arith.constant 0 : index
    %1011 = vector.load %arg15[%c2_557, %c0_558, %c0_559] : memref<3x8x128xf32, #tpu.memory_space<vmem>>, vector<1x8x128xf32>
    %1012 = vector.shape_cast %1011 : vector<1x8x128xf32> to vector<8x128xf32>
    %c2_560 = arith.constant 2 : index
    %c0_561 = arith.constant 0 : index
    %c0_562 = arith.constant 0 : index
    %1013 = vector.load %arg16[%c2_560, %c0_561, %c0_562] : memref<3x8x128xf32, #tpu.memory_space<vmem>>, vector<1x8x128xf32>
    %1014 = vector.shape_cast %1013 : vector<1x8x128xf32> to vector<8x128xf32>
    %1015 = arith.index_cast %1010 : i32 to index
    %c0_563 = arith.constant 0 : index
    %1016 = vector.load %arg18[%1015, %c0_563] : memref<64x512xf32, #tpu.memory_space<vmem>>, vector<8x512xf32>
    %1017 = arith.truncf %1012 : vector<8x128xf32> to vector<8x128xbf16>
    %cst_564 = arith.constant dense<0.000000e+00> : vector<8x512xf32>
    %1018 = tpu.matmul %1017, %858, %cst_564 {dimension_numbers = #tpu.dot_dimension_numbers<[1], [0], [0], [1], [0, 0, 1, 1], [], []>} : vector<8x128xbf16>, vector<128x512xbf16>, vector<8x512xf32> -> vector<8x512xf32>
    %1019 = arith.addf %1016, %1018 : vector<8x512xf32>
    %1020 = vector.extract_strided_slice %1019 {offsets = [0, 0], sizes = [8, 128], strides = [1, 1]} : vector<8x512xf32> to vector<8x128xf32>
    %cst_565 = arith.constant 5.000000e-01 : f32
    %1021 = vector.broadcast %cst_565 : f32 to vector<8x128xf32>
    %1022 = arith.mulf %1021, %1020 : vector<8x128xf32>
    %1023 = math.tanh %1022 : vector<8x128xf32>
    %cst_566 = arith.constant 5.000000e-01 : f32
    %1024 = vector.broadcast %cst_566 : f32 to vector<8x128xf32>
    %1025 = arith.mulf %1024, %1023 : vector<8x128xf32>
    %cst_567 = arith.constant 5.000000e-01 : f32
    %1026 = vector.broadcast %cst_567 : f32 to vector<8x128xf32>
    %1027 = arith.addf %1025, %1026 : vector<8x128xf32>
    %1028 = vector.extract_strided_slice %1019 {offsets = [0, 128], sizes = [8, 128], strides = [1, 1]} : vector<8x512xf32> to vector<8x128xf32>
    %cst_568 = arith.constant 5.000000e-01 : f32
    %1029 = vector.broadcast %cst_568 : f32 to vector<8x128xf32>
    %1030 = arith.mulf %1029, %1028 : vector<8x128xf32>
    %1031 = math.tanh %1030 : vector<8x128xf32>
    %cst_569 = arith.constant 5.000000e-01 : f32
    %1032 = vector.broadcast %cst_569 : f32 to vector<8x128xf32>
    %1033 = arith.mulf %1032, %1031 : vector<8x128xf32>
    %cst_570 = arith.constant 5.000000e-01 : f32
    %1034 = vector.broadcast %cst_570 : f32 to vector<8x128xf32>
    %1035 = arith.addf %1033, %1034 : vector<8x128xf32>
    %1036 = vector.extract_strided_slice %1019 {offsets = [0, 256], sizes = [8, 128], strides = [1, 1]} : vector<8x512xf32> to vector<8x128xf32>
    %1037 = math.tanh %1036 : vector<8x128xf32>
    %1038 = vector.extract_strided_slice %1019 {offsets = [0, 384], sizes = [8, 128], strides = [1, 1]} : vector<8x512xf32> to vector<8x128xf32>
    %cst_571 = arith.constant 5.000000e-01 : f32
    %1039 = vector.broadcast %cst_571 : f32 to vector<8x128xf32>
    %1040 = arith.mulf %1039, %1038 : vector<8x128xf32>
    %1041 = math.tanh %1040 : vector<8x128xf32>
    %cst_572 = arith.constant 5.000000e-01 : f32
    %1042 = vector.broadcast %cst_572 : f32 to vector<8x128xf32>
    %1043 = arith.mulf %1042, %1041 : vector<8x128xf32>
    %cst_573 = arith.constant 5.000000e-01 : f32
    %1044 = vector.broadcast %cst_573 : f32 to vector<8x128xf32>
    %1045 = arith.addf %1043, %1044 : vector<8x128xf32>
    %1046 = arith.mulf %1035, %1014 : vector<8x128xf32>
    %1047 = arith.mulf %1027, %1037 : vector<8x128xf32>
    %1048 = arith.addf %1046, %1047 : vector<8x128xf32>
    %1049 = math.tanh %1048 : vector<8x128xf32>
    %1050 = arith.mulf %1045, %1049 : vector<8x128xf32>
    %c2_574 = arith.constant 2 : index
    %c0_575 = arith.constant 0 : index
    %c0_576 = arith.constant 0 : index
    %1051 = vector.load %arg15[%c2_574, %c0_575, %c0_576] : memref<3x8x128xf32, #tpu.memory_space<vmem>>, vector<1x8x128xf32>
    %1052 = vector.shape_cast %1051 : vector<1x8x128xf32> to vector<8x128xf32>
    %1053 = vector.shape_cast %1050 : vector<8x128xf32> to vector<1x8x128xf32>
    tpu.vector_store %arg15[%c2_574, %c0_575, %c0_576], %1053 {strides = array<i32>} : memref<3x8x128xf32, #tpu.memory_space<vmem>>, vector<1x8x128xf32>,
    %c2_577 = arith.constant 2 : index
    %c0_578 = arith.constant 0 : index
    %c0_579 = arith.constant 0 : index
    %1054 = vector.load %arg16[%c2_577, %c0_578, %c0_579] : memref<3x8x128xf32, #tpu.memory_space<vmem>>, vector<1x8x128xf32>
    %1055 = vector.shape_cast %1054 : vector<1x8x128xf32> to vector<8x128xf32>
    %1056 = vector.shape_cast %1048 : vector<8x128xf32> to vector<1x8x128xf32>
    tpu.vector_store %arg16[%c2_577, %c0_578, %c0_579], %1056 {strides = array<i32>} : memref<3x8x128xf32, #tpu.memory_space<vmem>>, vector<1x8x128xf32>,
    %1057 = arith.index_cast %1010 : i32 to index
    %c0_580 = arith.constant 0 : index
    %1058 = vector.load %arg17[%1057, %c0_580] : memref<64x128xf32, #tpu.memory_space<vmem>>, vector<8x128xf32>
    tpu.vector_store %arg17[%1057, %c0_580], %1050 {strides = array<i32>} : memref<64x128xf32, #tpu.memory_space<vmem>>, vector<8x128xf32>,
    %c4_i32_581 = arith.constant 4 : i32
    %c8_i32_582 = arith.constant 8 : i32
    %1059 = arith.muli %c4_i32_581, %c8_i32_582 : i32
    %1060 = tpu.assume_multiple %1059, 8 : i32
    %c2_583 = arith.constant 2 : index
    %c0_584 = arith.constant 0 : index
    %c0_585 = arith.constant 0 : index
    %1061 = vector.load %arg15[%c2_583, %c0_584, %c0_585] : memref<3x8x128xf32, #tpu.memory_space<vmem>>, vector<1x8x128xf32>
    %1062 = vector.shape_cast %1061 : vector<1x8x128xf32> to vector<8x128xf32>
    %c2_586 = arith.constant 2 : index
    %c0_587 = arith.constant 0 : index
    %c0_588 = arith.constant 0 : index
    %1063 = vector.load %arg16[%c2_586, %c0_587, %c0_588] : memref<3x8x128xf32, #tpu.memory_space<vmem>>, vector<1x8x128xf32>
    %1064 = vector.shape_cast %1063 : vector<1x8x128xf32> to vector<8x128xf32>
    %1065 = arith.index_cast %1060 : i32 to index
    %c0_589 = arith.constant 0 : index
    %1066 = vector.load %arg18[%1065, %c0_589] : memref<64x512xf32, #tpu.memory_space<vmem>>, vector<8x512xf32>
    %1067 = arith.truncf %1062 : vector<8x128xf32> to vector<8x128xbf16>
    %cst_590 = arith.constant dense<0.000000e+00> : vector<8x512xf32>
    %1068 = tpu.matmul %1067, %858, %cst_590 {dimension_numbers = #tpu.dot_dimension_numbers<[1], [0], [0], [1], [0, 0, 1, 1], [], []>} : vector<8x128xbf16>, vector<128x512xbf16>, vector<8x512xf32> -> vector<8x512xf32>
    %1069 = arith.addf %1066, %1068 : vector<8x512xf32>
    %1070 = vector.extract_strided_slice %1069 {offsets = [0, 0], sizes = [8, 128], strides = [1, 1]} : vector<8x512xf32> to vector<8x128xf32>
    %cst_591 = arith.constant 5.000000e-01 : f32
    %1071 = vector.broadcast %cst_591 : f32 to vector<8x128xf32>
    %1072 = arith.mulf %1071, %1070 : vector<8x128xf32>
    %1073 = math.tanh %1072 : vector<8x128xf32>
    %cst_592 = arith.constant 5.000000e-01 : f32
    %1074 = vector.broadcast %cst_592 : f32 to vector<8x128xf32>
    %1075 = arith.mulf %1074, %1073 : vector<8x128xf32>
    %cst_593 = arith.constant 5.000000e-01 : f32
    %1076 = vector.broadcast %cst_593 : f32 to vector<8x128xf32>
    %1077 = arith.addf %1075, %1076 : vector<8x128xf32>
    %1078 = vector.extract_strided_slice %1069 {offsets = [0, 128], sizes = [8, 128], strides = [1, 1]} : vector<8x512xf32> to vector<8x128xf32>
    %cst_594 = arith.constant 5.000000e-01 : f32
    %1079 = vector.broadcast %cst_594 : f32 to vector<8x128xf32>
    %1080 = arith.mulf %1079, %1078 : vector<8x128xf32>
    %1081 = math.tanh %1080 : vector<8x128xf32>
    %cst_595 = arith.constant 5.000000e-01 : f32
    %1082 = vector.broadcast %cst_595 : f32 to vector<8x128xf32>
    %1083 = arith.mulf %1082, %1081 : vector<8x128xf32>
    %cst_596 = arith.constant 5.000000e-01 : f32
    %1084 = vector.broadcast %cst_596 : f32 to vector<8x128xf32>
    %1085 = arith.addf %1083, %1084 : vector<8x128xf32>
    %1086 = vector.extract_strided_slice %1069 {offsets = [0, 256], sizes = [8, 128], strides = [1, 1]} : vector<8x512xf32> to vector<8x128xf32>
    %1087 = math.tanh %1086 : vector<8x128xf32>
    %1088 = vector.extract_strided_slice %1069 {offsets = [0, 384], sizes = [8, 128], strides = [1, 1]} : vector<8x512xf32> to vector<8x128xf32>
    %cst_597 = arith.constant 5.000000e-01 : f32
    %1089 = vector.broadcast %cst_597 : f32 to vector<8x128xf32>
    %1090 = arith.mulf %1089, %1088 : vector<8x128xf32>
    %1091 = math.tanh %1090 : vector<8x128xf32>
    %cst_598 = arith.constant 5.000000e-01 : f32
    %1092 = vector.broadcast %cst_598 : f32 to vector<8x128xf32>
    %1093 = arith.mulf %1092, %1091 : vector<8x128xf32>
    %cst_599 = arith.constant 5.000000e-01 : f32
    %1094 = vector.broadcast %cst_599 : f32 to vector<8x128xf32>
    %1095 = arith.addf %1093, %1094 : vector<8x128xf32>
    %1096 = arith.mulf %1085, %1064 : vector<8x128xf32>
    %1097 = arith.mulf %1077, %1087 : vector<8x128xf32>
    %1098 = arith.addf %1096, %1097 : vector<8x128xf32>
    %1099 = math.tanh %1098 : vector<8x128xf32>
    %1100 = arith.mulf %1095, %1099 : vector<8x128xf32>
    %c2_600 = arith.constant 2 : index
    %c0_601 = arith.constant 0 : index
    %c0_602 = arith.constant 0 : index
    %1101 = vector.load %arg15[%c2_600, %c0_601, %c0_602] : memref<3x8x128xf32, #tpu.memory_space<vmem>>, vector<1x8x128xf32>
    %1102 = vector.shape_cast %1101 : vector<1x8x128xf32> to vector<8x128xf32>
    %1103 = vector.shape_cast %1100 : vector<8x128xf32> to vector<1x8x128xf32>
    tpu.vector_store %arg15[%c2_600, %c0_601, %c0_602], %1103 {strides = array<i32>} : memref<3x8x128xf32, #tpu.memory_space<vmem>>, vector<1x8x128xf32>,
    %c2_603 = arith.constant 2 : index
    %c0_604 = arith.constant 0 : index
    %c0_605 = arith.constant 0 : index
    %1104 = vector.load %arg16[%c2_603, %c0_604, %c0_605] : memref<3x8x128xf32, #tpu.memory_space<vmem>>, vector<1x8x128xf32>
    %1105 = vector.shape_cast %1104 : vector<1x8x128xf32> to vector<8x128xf32>
    %1106 = vector.shape_cast %1098 : vector<8x128xf32> to vector<1x8x128xf32>
    tpu.vector_store %arg16[%c2_603, %c0_604, %c0_605], %1106 {strides = array<i32>} : memref<3x8x128xf32, #tpu.memory_space<vmem>>, vector<1x8x128xf32>,
    %1107 = arith.index_cast %1060 : i32 to index
    %c0_606 = arith.constant 0 : index
    %1108 = vector.load %arg17[%1107, %c0_606] : memref<64x128xf32, #tpu.memory_space<vmem>>, vector<8x128xf32>
    tpu.vector_store %arg17[%1107, %c0_606], %1100 {strides = array<i32>} : memref<64x128xf32, #tpu.memory_space<vmem>>, vector<8x128xf32>,
    %c5_i32_607 = arith.constant 5 : i32
    %c8_i32_608 = arith.constant 8 : i32
    %1109 = arith.muli %c5_i32_607, %c8_i32_608 : i32
    %1110 = tpu.assume_multiple %1109, 8 : i32
    %c2_609 = arith.constant 2 : index
    %c0_610 = arith.constant 0 : index
    %c0_611 = arith.constant 0 : index
    %1111 = vector.load %arg15[%c2_609, %c0_610, %c0_611] : memref<3x8x128xf32, #tpu.memory_space<vmem>>, vector<1x8x128xf32>
    %1112 = vector.shape_cast %1111 : vector<1x8x128xf32> to vector<8x128xf32>
    %c2_612 = arith.constant 2 : index
    %c0_613 = arith.constant 0 : index
    %c0_614 = arith.constant 0 : index
    %1113 = vector.load %arg16[%c2_612, %c0_613, %c0_614] : memref<3x8x128xf32, #tpu.memory_space<vmem>>, vector<1x8x128xf32>
    %1114 = vector.shape_cast %1113 : vector<1x8x128xf32> to vector<8x128xf32>
    %1115 = arith.index_cast %1110 : i32 to index
    %c0_615 = arith.constant 0 : index
    %1116 = vector.load %arg18[%1115, %c0_615] : memref<64x512xf32, #tpu.memory_space<vmem>>, vector<8x512xf32>
    %1117 = arith.truncf %1112 : vector<8x128xf32> to vector<8x128xbf16>
    %cst_616 = arith.constant dense<0.000000e+00> : vector<8x512xf32>
    %1118 = tpu.matmul %1117, %858, %cst_616 {dimension_numbers = #tpu.dot_dimension_numbers<[1], [0], [0], [1], [0, 0, 1, 1], [], []>} : vector<8x128xbf16>, vector<128x512xbf16>, vector<8x512xf32> -> vector<8x512xf32>
    %1119 = arith.addf %1116, %1118 : vector<8x512xf32>
    %1120 = vector.extract_strided_slice %1119 {offsets = [0, 0], sizes = [8, 128], strides = [1, 1]} : vector<8x512xf32> to vector<8x128xf32>
    %cst_617 = arith.constant 5.000000e-01 : f32
    %1121 = vector.broadcast %cst_617 : f32 to vector<8x128xf32>
    %1122 = arith.mulf %1121, %1120 : vector<8x128xf32>
    %1123 = math.tanh %1122 : vector<8x128xf32>
    %cst_618 = arith.constant 5.000000e-01 : f32
    %1124 = vector.broadcast %cst_618 : f32 to vector<8x128xf32>
    %1125 = arith.mulf %1124, %1123 : vector<8x128xf32>
    %cst_619 = arith.constant 5.000000e-01 : f32
    %1126 = vector.broadcast %cst_619 : f32 to vector<8x128xf32>
    %1127 = arith.addf %1125, %1126 : vector<8x128xf32>
    %1128 = vector.extract_strided_slice %1119 {offsets = [0, 128], sizes = [8, 128], strides = [1, 1]} : vector<8x512xf32> to vector<8x128xf32>
    %cst_620 = arith.constant 5.000000e-01 : f32
    %1129 = vector.broadcast %cst_620 : f32 to vector<8x128xf32>
    %1130 = arith.mulf %1129, %1128 : vector<8x128xf32>
    %1131 = math.tanh %1130 : vector<8x128xf32>
    %cst_621 = arith.constant 5.000000e-01 : f32
    %1132 = vector.broadcast %cst_621 : f32 to vector<8x128xf32>
    %1133 = arith.mulf %1132, %1131 : vector<8x128xf32>
    %cst_622 = arith.constant 5.000000e-01 : f32
    %1134 = vector.broadcast %cst_622 : f32 to vector<8x128xf32>
    %1135 = arith.addf %1133, %1134 : vector<8x128xf32>
    %1136 = vector.extract_strided_slice %1119 {offsets = [0, 256], sizes = [8, 128], strides = [1, 1]} : vector<8x512xf32> to vector<8x128xf32>
    %1137 = math.tanh %1136 : vector<8x128xf32>
    %1138 = vector.extract_strided_slice %1119 {offsets = [0, 384], sizes = [8, 128], strides = [1, 1]} : vector<8x512xf32> to vector<8x128xf32>
    %cst_623 = arith.constant 5.000000e-01 : f32
    %1139 = vector.broadcast %cst_623 : f32 to vector<8x128xf32>
    %1140 = arith.mulf %1139, %1138 : vector<8x128xf32>
    %1141 = math.tanh %1140 : vector<8x128xf32>
    %cst_624 = arith.constant 5.000000e-01 : f32
    %1142 = vector.broadcast %cst_624 : f32 to vector<8x128xf32>
    %1143 = arith.mulf %1142, %1141 : vector<8x128xf32>
    %cst_625 = arith.constant 5.000000e-01 : f32
    %1144 = vector.broadcast %cst_625 : f32 to vector<8x128xf32>
    %1145 = arith.addf %1143, %1144 : vector<8x128xf32>
    %1146 = arith.mulf %1135, %1114 : vector<8x128xf32>
    %1147 = arith.mulf %1127, %1137 : vector<8x128xf32>
    %1148 = arith.addf %1146, %1147 : vector<8x128xf32>
    %1149 = math.tanh %1148 : vector<8x128xf32>
    %1150 = arith.mulf %1145, %1149 : vector<8x128xf32>
    %c2_626 = arith.constant 2 : index
    %c0_627 = arith.constant 0 : index
    %c0_628 = arith.constant 0 : index
    %1151 = vector.load %arg15[%c2_626, %c0_627, %c0_628] : memref<3x8x128xf32, #tpu.memory_space<vmem>>, vector<1x8x128xf32>
    %1152 = vector.shape_cast %1151 : vector<1x8x128xf32> to vector<8x128xf32>
    %1153 = vector.shape_cast %1150 : vector<8x128xf32> to vector<1x8x128xf32>
    tpu.vector_store %arg15[%c2_626, %c0_627, %c0_628], %1153 {strides = array<i32>} : memref<3x8x128xf32, #tpu.memory_space<vmem>>, vector<1x8x128xf32>,
    %c2_629 = arith.constant 2 : index
    %c0_630 = arith.constant 0 : index
    %c0_631 = arith.constant 0 : index
    %1154 = vector.load %arg16[%c2_629, %c0_630, %c0_631] : memref<3x8x128xf32, #tpu.memory_space<vmem>>, vector<1x8x128xf32>
    %1155 = vector.shape_cast %1154 : vector<1x8x128xf32> to vector<8x128xf32>
    %1156 = vector.shape_cast %1148 : vector<8x128xf32> to vector<1x8x128xf32>
    tpu.vector_store %arg16[%c2_629, %c0_630, %c0_631], %1156 {strides = array<i32>} : memref<3x8x128xf32, #tpu.memory_space<vmem>>, vector<1x8x128xf32>,
    %1157 = arith.index_cast %1110 : i32 to index
    %c0_632 = arith.constant 0 : index
    %1158 = vector.load %arg17[%1157, %c0_632] : memref<64x128xf32, #tpu.memory_space<vmem>>, vector<8x128xf32>
    tpu.vector_store %arg17[%1157, %c0_632], %1150 {strides = array<i32>} : memref<64x128xf32, #tpu.memory_space<vmem>>, vector<8x128xf32>,
    %c6_i32_633 = arith.constant 6 : i32
    %c8_i32_634 = arith.constant 8 : i32
    %1159 = arith.muli %c6_i32_633, %c8_i32_634 : i32
    %1160 = tpu.assume_multiple %1159, 8 : i32
    %c2_635 = arith.constant 2 : index
    %c0_636 = arith.constant 0 : index
    %c0_637 = arith.constant 0 : index
    %1161 = vector.load %arg15[%c2_635, %c0_636, %c0_637] : memref<3x8x128xf32, #tpu.memory_space<vmem>>, vector<1x8x128xf32>
    %1162 = vector.shape_cast %1161 : vector<1x8x128xf32> to vector<8x128xf32>
    %c2_638 = arith.constant 2 : index
    %c0_639 = arith.constant 0 : index
    %c0_640 = arith.constant 0 : index
    %1163 = vector.load %arg16[%c2_638, %c0_639, %c0_640] : memref<3x8x128xf32, #tpu.memory_space<vmem>>, vector<1x8x128xf32>
    %1164 = vector.shape_cast %1163 : vector<1x8x128xf32> to vector<8x128xf32>
    %1165 = arith.index_cast %1160 : i32 to index
    %c0_641 = arith.constant 0 : index
    %1166 = vector.load %arg18[%1165, %c0_641] : memref<64x512xf32, #tpu.memory_space<vmem>>, vector<8x512xf32>
    %1167 = arith.truncf %1162 : vector<8x128xf32> to vector<8x128xbf16>
    %cst_642 = arith.constant dense<0.000000e+00> : vector<8x512xf32>
    %1168 = tpu.matmul %1167, %858, %cst_642 {dimension_numbers = #tpu.dot_dimension_numbers<[1], [0], [0], [1], [0, 0, 1, 1], [], []>} : vector<8x128xbf16>, vector<128x512xbf16>, vector<8x512xf32> -> vector<8x512xf32>
    %1169 = arith.addf %1166, %1168 : vector<8x512xf32>
    %1170 = vector.extract_strided_slice %1169 {offsets = [0, 0], sizes = [8, 128], strides = [1, 1]} : vector<8x512xf32> to vector<8x128xf32>
    %cst_643 = arith.constant 5.000000e-01 : f32
    %1171 = vector.broadcast %cst_643 : f32 to vector<8x128xf32>
    %1172 = arith.mulf %1171, %1170 : vector<8x128xf32>
    %1173 = math.tanh %1172 : vector<8x128xf32>
    %cst_644 = arith.constant 5.000000e-01 : f32
    %1174 = vector.broadcast %cst_644 : f32 to vector<8x128xf32>
    %1175 = arith.mulf %1174, %1173 : vector<8x128xf32>
    %cst_645 = arith.constant 5.000000e-01 : f32
    %1176 = vector.broadcast %cst_645 : f32 to vector<8x128xf32>
    %1177 = arith.addf %1175, %1176 : vector<8x128xf32>
    %1178 = vector.extract_strided_slice %1169 {offsets = [0, 128], sizes = [8, 128], strides = [1, 1]} : vector<8x512xf32> to vector<8x128xf32>
    %cst_646 = arith.constant 5.000000e-01 : f32
    %1179 = vector.broadcast %cst_646 : f32 to vector<8x128xf32>
    %1180 = arith.mulf %1179, %1178 : vector<8x128xf32>
    %1181 = math.tanh %1180 : vector<8x128xf32>
    %cst_647 = arith.constant 5.000000e-01 : f32
    %1182 = vector.broadcast %cst_647 : f32 to vector<8x128xf32>
    %1183 = arith.mulf %1182, %1181 : vector<8x128xf32>
    %cst_648 = arith.constant 5.000000e-01 : f32
    %1184 = vector.broadcast %cst_648 : f32 to vector<8x128xf32>
    %1185 = arith.addf %1183, %1184 : vector<8x128xf32>
    %1186 = vector.extract_strided_slice %1169 {offsets = [0, 256], sizes = [8, 128], strides = [1, 1]} : vector<8x512xf32> to vector<8x128xf32>
    %1187 = math.tanh %1186 : vector<8x128xf32>
    %1188 = vector.extract_strided_slice %1169 {offsets = [0, 384], sizes = [8, 128], strides = [1, 1]} : vector<8x512xf32> to vector<8x128xf32>
    %cst_649 = arith.constant 5.000000e-01 : f32
    %1189 = vector.broadcast %cst_649 : f32 to vector<8x128xf32>
    %1190 = arith.mulf %1189, %1188 : vector<8x128xf32>
    %1191 = math.tanh %1190 : vector<8x128xf32>
    %cst_650 = arith.constant 5.000000e-01 : f32
    %1192 = vector.broadcast %cst_650 : f32 to vector<8x128xf32>
    %1193 = arith.mulf %1192, %1191 : vector<8x128xf32>
    %cst_651 = arith.constant 5.000000e-01 : f32
    %1194 = vector.broadcast %cst_651 : f32 to vector<8x128xf32>
    %1195 = arith.addf %1193, %1194 : vector<8x128xf32>
    %1196 = arith.mulf %1185, %1164 : vector<8x128xf32>
    %1197 = arith.mulf %1177, %1187 : vector<8x128xf32>
    %1198 = arith.addf %1196, %1197 : vector<8x128xf32>
    %1199 = math.tanh %1198 : vector<8x128xf32>
    %1200 = arith.mulf %1195, %1199 : vector<8x128xf32>
    %c2_652 = arith.constant 2 : index
    %c0_653 = arith.constant 0 : index
    %c0_654 = arith.constant 0 : index
    %1201 = vector.load %arg15[%c2_652, %c0_653, %c0_654] : memref<3x8x128xf32, #tpu.memory_space<vmem>>, vector<1x8x128xf32>
    %1202 = vector.shape_cast %1201 : vector<1x8x128xf32> to vector<8x128xf32>
    %1203 = vector.shape_cast %1200 : vector<8x128xf32> to vector<1x8x128xf32>
    tpu.vector_store %arg15[%c2_652, %c0_653, %c0_654], %1203 {strides = array<i32>} : memref<3x8x128xf32, #tpu.memory_space<vmem>>, vector<1x8x128xf32>,
    %c2_655 = arith.constant 2 : index
    %c0_656 = arith.constant 0 : index
    %c0_657 = arith.constant 0 : index
    %1204 = vector.load %arg16[%c2_655, %c0_656, %c0_657] : memref<3x8x128xf32, #tpu.memory_space<vmem>>, vector<1x8x128xf32>
    %1205 = vector.shape_cast %1204 : vector<1x8x128xf32> to vector<8x128xf32>
    %1206 = vector.shape_cast %1198 : vector<8x128xf32> to vector<1x8x128xf32>
    tpu.vector_store %arg16[%c2_655, %c0_656, %c0_657], %1206 {strides = array<i32>} : memref<3x8x128xf32, #tpu.memory_space<vmem>>, vector<1x8x128xf32>,
    %1207 = arith.index_cast %1160 : i32 to index
    %c0_658 = arith.constant 0 : index
    %1208 = vector.load %arg17[%1207, %c0_658] : memref<64x128xf32, #tpu.memory_space<vmem>>, vector<8x128xf32>
    tpu.vector_store %arg17[%1207, %c0_658], %1200 {strides = array<i32>} : memref<64x128xf32, #tpu.memory_space<vmem>>, vector<8x128xf32>,
    %c7_i32_659 = arith.constant 7 : i32
    %c8_i32_660 = arith.constant 8 : i32
    %1209 = arith.muli %c7_i32_659, %c8_i32_660 : i32
    %1210 = tpu.assume_multiple %1209, 8 : i32
    %c2_661 = arith.constant 2 : index
    %c0_662 = arith.constant 0 : index
    %c0_663 = arith.constant 0 : index
    %1211 = vector.load %arg15[%c2_661, %c0_662, %c0_663] : memref<3x8x128xf32, #tpu.memory_space<vmem>>, vector<1x8x128xf32>
    %1212 = vector.shape_cast %1211 : vector<1x8x128xf32> to vector<8x128xf32>
    %c2_664 = arith.constant 2 : index
    %c0_665 = arith.constant 0 : index
    %c0_666 = arith.constant 0 : index
    %1213 = vector.load %arg16[%c2_664, %c0_665, %c0_666] : memref<3x8x128xf32, #tpu.memory_space<vmem>>, vector<1x8x128xf32>
    %1214 = vector.shape_cast %1213 : vector<1x8x128xf32> to vector<8x128xf32>
    %1215 = arith.index_cast %1210 : i32 to index
    %c0_667 = arith.constant 0 : index
    %1216 = vector.load %arg18[%1215, %c0_667] : memref<64x512xf32, #tpu.memory_space<vmem>>, vector<8x512xf32>
    %1217 = arith.truncf %1212 : vector<8x128xf32> to vector<8x128xbf16>
    %cst_668 = arith.constant dense<0.000000e+00> : vector<8x512xf32>
    %1218 = tpu.matmul %1217, %858, %cst_668 {dimension_numbers = #tpu.dot_dimension_numbers<[1], [0], [0], [1], [0, 0, 1, 1], [], []>} : vector<8x128xbf16>, vector<128x512xbf16>, vector<8x512xf32> -> vector<8x512xf32>
    %1219 = arith.addf %1216, %1218 : vector<8x512xf32>
    %1220 = vector.extract_strided_slice %1219 {offsets = [0, 0], sizes = [8, 128], strides = [1, 1]} : vector<8x512xf32> to vector<8x128xf32>
    %cst_669 = arith.constant 5.000000e-01 : f32
    %1221 = vector.broadcast %cst_669 : f32 to vector<8x128xf32>
    %1222 = arith.mulf %1221, %1220 : vector<8x128xf32>
    %1223 = math.tanh %1222 : vector<8x128xf32>
    %cst_670 = arith.constant 5.000000e-01 : f32
    %1224 = vector.broadcast %cst_670 : f32 to vector<8x128xf32>
    %1225 = arith.mulf %1224, %1223 : vector<8x128xf32>
    %cst_671 = arith.constant 5.000000e-01 : f32
    %1226 = vector.broadcast %cst_671 : f32 to vector<8x128xf32>
    %1227 = arith.addf %1225, %1226 : vector<8x128xf32>
    %1228 = vector.extract_strided_slice %1219 {offsets = [0, 128], sizes = [8, 128], strides = [1, 1]} : vector<8x512xf32> to vector<8x128xf32>
    %cst_672 = arith.constant 5.000000e-01 : f32
    %1229 = vector.broadcast %cst_672 : f32 to vector<8x128xf32>
    %1230 = arith.mulf %1229, %1228 : vector<8x128xf32>
    %1231 = math.tanh %1230 : vector<8x128xf32>
    %cst_673 = arith.constant 5.000000e-01 : f32
    %1232 = vector.broadcast %cst_673 : f32 to vector<8x128xf32>
    %1233 = arith.mulf %1232, %1231 : vector<8x128xf32>
    %cst_674 = arith.constant 5.000000e-01 : f32
    %1234 = vector.broadcast %cst_674 : f32 to vector<8x128xf32>
    %1235 = arith.addf %1233, %1234 : vector<8x128xf32>
    %1236 = vector.extract_strided_slice %1219 {offsets = [0, 256], sizes = [8, 128], strides = [1, 1]} : vector<8x512xf32> to vector<8x128xf32>
    %1237 = math.tanh %1236 : vector<8x128xf32>
    %1238 = vector.extract_strided_slice %1219 {offsets = [0, 384], sizes = [8, 128], strides = [1, 1]} : vector<8x512xf32> to vector<8x128xf32>
    %cst_675 = arith.constant 5.000000e-01 : f32
    %1239 = vector.broadcast %cst_675 : f32 to vector<8x128xf32>
    %1240 = arith.mulf %1239, %1238 : vector<8x128xf32>
    %1241 = math.tanh %1240 : vector<8x128xf32>
    %cst_676 = arith.constant 5.000000e-01 : f32
    %1242 = vector.broadcast %cst_676 : f32 to vector<8x128xf32>
    %1243 = arith.mulf %1242, %1241 : vector<8x128xf32>
    %cst_677 = arith.constant 5.000000e-01 : f32
    %1244 = vector.broadcast %cst_677 : f32 to vector<8x128xf32>
    %1245 = arith.addf %1243, %1244 : vector<8x128xf32>
    %1246 = arith.mulf %1235, %1214 : vector<8x128xf32>
    %1247 = arith.mulf %1227, %1237 : vector<8x128xf32>
    %1248 = arith.addf %1246, %1247 : vector<8x128xf32>
    %1249 = math.tanh %1248 : vector<8x128xf32>
    %1250 = arith.mulf %1245, %1249 : vector<8x128xf32>
    %c2_678 = arith.constant 2 : index
    %c0_679 = arith.constant 0 : index
    %c0_680 = arith.constant 0 : index
    %1251 = vector.load %arg15[%c2_678, %c0_679, %c0_680] : memref<3x8x128xf32, #tpu.memory_space<vmem>>, vector<1x8x128xf32>
    %1252 = vector.shape_cast %1251 : vector<1x8x128xf32> to vector<8x128xf32>
    %1253 = vector.shape_cast %1250 : vector<8x128xf32> to vector<1x8x128xf32>
    tpu.vector_store %arg15[%c2_678, %c0_679, %c0_680], %1253 {strides = array<i32>} : memref<3x8x128xf32, #tpu.memory_space<vmem>>, vector<1x8x128xf32>,
    %c2_681 = arith.constant 2 : index
    %c0_682 = arith.constant 0 : index
    %c0_683 = arith.constant 0 : index
    %1254 = vector.load %arg16[%c2_681, %c0_682, %c0_683] : memref<3x8x128xf32, #tpu.memory_space<vmem>>, vector<1x8x128xf32>
    %1255 = vector.shape_cast %1254 : vector<1x8x128xf32> to vector<8x128xf32>
    %1256 = vector.shape_cast %1248 : vector<8x128xf32> to vector<1x8x128xf32>
    tpu.vector_store %arg16[%c2_681, %c0_682, %c0_683], %1256 {strides = array<i32>} : memref<3x8x128xf32, #tpu.memory_space<vmem>>, vector<1x8x128xf32>,
    %1257 = arith.index_cast %1210 : i32 to index
    %c0_684 = arith.constant 0 : index
    %1258 = vector.load %arg17[%1257, %c0_684] : memref<64x128xf32, #tpu.memory_space<vmem>>, vector<8x128xf32>
    tpu.vector_store %arg17[%1257, %c0_684], %1250 {strides = array<i32>} : memref<64x128xf32, #tpu.memory_space<vmem>>, vector<8x128xf32>,
    %c8_i32_685 = arith.constant 8 : i32
    %c0_686 = arith.constant 0 : index
    %c0_687 = arith.constant 0 : index
    %1259 = vector.load %arg19[%c0_686, %c0_687] : memref<64x128xf32, #tpu.memory_space<vmem>>, vector<64x128xf32>
    %c0_688 = arith.constant 0 : index
    %c0_689 = arith.constant 0 : index
    %1260 = vector.load %arg17[%c0_688, %c0_689] : memref<64x128xf32, #tpu.memory_space<vmem>>, vector<64x128xf32>
    %1261 = arith.addf %1259, %1260 : vector<64x128xf32>
    %1262 = arith.truncf %1261 : vector<64x128xf32> to vector<64x128xbf16>
    %c0_690 = arith.constant 0 : index
    %c0_691 = arith.constant 0 : index
    %1263 = vector.load %arg10[%c0_690, %c0_691] : memref<128x128xbf16, #tpu.memory_space<vmem>>, vector<128x128xbf16>
    %cst_692 = arith.constant dense<0.000000e+00> : vector<64x128xf32>
    %1264 = tpu.matmul %1262, %1263, %cst_692 {dimension_numbers = #tpu.dot_dimension_numbers<[1], [0], [0], [1], [0, 0, 1, 1], [], []>} : vector<64x128xbf16>, vector<128x128xbf16>, vector<64x128xf32> -> vector<64x128xf32>
    %c0_693 = arith.constant 0 : index
    %c0_694 = arith.constant 0 : index
    %1265 = vector.load %arg11[%c0_693, %c0_694] : memref<1x128xf32, #tpu.memory_space<vmem>>, vector<1x128xf32>
    %1266 = vector.broadcast %1265 : vector<1x128xf32> to vector<64x128xf32>
    %1267 = arith.addf %1264, %1266 : vector<64x128xf32>
    %1268 = math.tanh %1267 : vector<64x128xf32>
    %c0_695 = arith.constant 0 : index
    %c0_696 = arith.constant 0 : index
    %1269 = vector.load %arg12[%c0_695, %c0_696] : memref<64x128xf32, #tpu.memory_space<vmem>>, vector<64x128xf32>
    tpu.vector_store %arg12[%c0_695, %c0_696], %1268 {strides = array<i32>} : memref<64x128xf32, #tpu.memory_space<vmem>>, vector<64x128xf32>,
    %c0_697 = arith.constant 0 : index
    %c0_698 = arith.constant 0 : index
    %c0_699 = arith.constant 0 : index
    %1270 = vector.load %arg15[%c0_697, %c0_698, %c0_699] : memref<3x8x128xf32, #tpu.memory_space<vmem>>, vector<3x8x128xf32>
    %c0_700 = arith.constant 0 : index
    %c0_701 = arith.constant 0 : index
    %c0_702 = arith.constant 0 : index
    %1271 = vector.load %arg13[%c0_700, %c0_701, %c0_702] : memref<3x8x128xf32, #tpu.memory_space<vmem>>, vector<3x8x128xf32>
    tpu.vector_store %arg13[%c0_700, %c0_701, %c0_702], %1270 {strides = array<i32>} : memref<3x8x128xf32, #tpu.memory_space<vmem>>, vector<3x8x128xf32>,
    %c0_703 = arith.constant 0 : index
    %c0_704 = arith.constant 0 : index
    %c0_705 = arith.constant 0 : index
    %1272 = vector.load %arg16[%c0_703, %c0_704, %c0_705] : memref<3x8x128xf32, #tpu.memory_space<vmem>>, vector<3x8x128xf32>
    %c0_706 = arith.constant 0 : index
    %c0_707 = arith.constant 0 : index
    %c0_708 = arith.constant 0 : index
    %1273 = vector.load %arg14[%c0_706, %c0_707, %c0_708] : memref<3x8x128xf32, #tpu.memory_space<vmem>>, vector<3x8x128xf32>
    tpu.vector_store %arg14[%c0_706, %c0_707, %c0_708], %1272 {strides = array<i32>} : memref<3x8x128xf32, #tpu.memory_space<vmem>>, vector<3x8x128xf32>,
    return
  }
}

</mosaic_0001>

<llo_original>
// kernel: rnn_pg_forward.1
$region0: #{rnn_pg_forward.1}
  #allocation0 [shape = 'u32[]', space=smem, size = 0x4, offset = 0x4, fixed_abs, tag = 'smem constant byte address 0x4 - core index']
  #allocation1 [shape = 'u32[144,128]{1,0:T(1,128)}', space=vmem, size = 0x12000, scoped, tag = 'internal scratch']
  #allocation2 [shape = 'f32[3,8,128]{2,1,0:T(8,128)}', space=vmem, size = 0x3000, scoped, tag = 'scratch operand']
  #allocation3 [shape = 'f32[3,8,128]{2,1,0:T(8,128)}', space=vmem, size = 0x3000, scoped, tag = 'scratch operand']
  #allocation4 [shape = 'f32[64,128]{1,0:T(8,128)}', space=vmem, size = 0x8000, scoped, tag = 'scratch operand']
  #allocation5 [shape = 'f32[64,512]{1,0:T(8,128)}', space=vmem, size = 0x20000, scoped, tag = 'scratch operand']
  #allocation6 [shape = 'f32[64,128]{1,0:T(8,128)}', space=vmem, size = 0x8000, scoped, tag = 'scratch operand']
  %s0 = inlined_call_operand.vmem [shape: bf16[64,16], index: 0, kind: input, shape index: {}]
  %s1 = inlined_call_operand.vmem [shape: f32[3,8,128], index: 1, kind: input, shape index: {}, may-alias: {1,13}]
  %s2 = inlined_call_operand.vmem [shape: f32[3,8,128], index: 2, kind: input, shape index: {}, may-alias: {2,14}]
  %s3 = inlined_call_operand.vmem [shape: bf16[16,128], index: 3, kind: input, shape index: {}]
  %s4 = inlined_call_operand.vmem [shape: f32[1,128], index: 4, kind: input, shape index: {}]
  %s5 = inlined_call_operand.hbm [shape: bf16[3,128,512], index: 5, kind: input, shape index: {}]
  %s6 = inlined_call_operand.hbm [shape: bf16[3,128,512], index: 6, kind: input, shape index: {}]
  %s7 = inlined_call_operand.vmem [shape: f32[3,1,512], index: 7, kind: input, shape index: {}]
  %s8 = inlined_call_operand.vmem [shape: bf16[16,128], index: 8, kind: input, shape index: {}]
  %s9 = inlined_call_operand.vmem [shape: f32[1,128], index: 9, kind: input, shape index: {}]
  %s10 = inlined_call_operand.vmem [shape: bf16[128,128], index: 10, kind: input, shape index: {}]
  %s11 = inlined_call_operand.vmem [shape: f32[1,128], index: 11, kind: input, shape index: {}]
  %s12 = inlined_call_operand.vmem [shape: f32[64,128], index: 12, kind: output, shape index: {0}]
  %s13 = inlined_call_operand.vmem [shape: f32[3,8,128], index: 13, kind: output, shape index: {1}, may-alias: {1,13}]
  %s14 = inlined_call_operand.vmem [shape: f32[3,8,128], index: 14, kind: output, shape index: {2}, may-alias: {2,14}]
  %15 = xla_tuple %s12, %s13, %s14
  %s16 = sld [smem:[#allocation0]]
  $region82: #{rnn_pg_forward.1} parent=0
    _
  %s18 = ssub.s32 1, %s16
  %s19 = scalar_select 0, %s18, %s16
  $region1: #{rnn_pg_forward.1} parent=0
    #allocation7 [shape = 'u8[393216]{0}', space=vmem, size = 0x60000, scoped, tag = 'input window, operand 5, single buffered']
    #allocation8 [shape = 's32[1]{0}', space=sflag, size = 0x4, scoped, tag = 'scoped memory for rnn_pg_forward.1']
    #allocation9 [shape = 'u8[393216]{0}', space=vmem, size = 0x60000, scoped, tag = 'input window, operand 6, single buffered']
    #allocation10 [shape = 's32[1]{0}', space=sflag, size = 0x4, scoped, tag = 'scoped memory for rnn_pg_forward.1']
    %20 = vsyncpa [#allocation8], 0
    %21 = vsyncpa [#allocation10], 0
    // Predicated region
    $region2: #{rnn_pg_forward.1} parent=1 // pred_check
      _
    $region3: #{rnn_pg_forward.1} parent=1 // pred_check_branch
      %23 = sbr.rel (0) target = $region5
    $region4: #{rnn_pg_forward.1} parent=1 // pred_region
      _
    $region5: #{rnn_pg_forward.1} parent=1 // pred_fallthru
      _
    // Predicated region
    $region6: #{rnn_pg_forward.1} parent=1 // pred_check
      _
    $region7: #{rnn_pg_forward.1} parent=1 // pred_check_branch
      %25 = sbr.rel (0) target = $region9
    $region8: #{rnn_pg_forward.1} parent=1 // pred_region
      _
    $region9: #{rnn_pg_forward.1} parent=1 // pred_fallthru
      _
    // Predicated region
    $region10: #{rnn_pg_forward.1} parent=1 // pred_check
      _
    $region11: #{rnn_pg_forward.1} parent=1 // pred_check_branch
      %27 = sbr.rel (0) target = $region13
    $region12: #{rnn_pg_forward.1} parent=1 // pred_region
      _
    $region13: #{rnn_pg_forward.1} parent=1 // pred_fallthru
      _
    // Predicated region
    $region14: #{rnn_pg_forward.1} parent=1 // pred_check
      _
    $region15: #{rnn_pg_forward.1} parent=1 // pred_check_branch
      %29 = sbr.rel (0) target = $region17
    $region16: #{rnn_pg_forward.1} parent=1 // pred_region
      _
    $region17: #{rnn_pg_forward.1} parent=1 // pred_fallthru
      _
    // Predicated region
    $region18: #{rnn_pg_forward.1} parent=1 // pred_check
      _
    $region19: #{rnn_pg_forward.1} parent=1 // pred_check_branch
      %31 = sbr.rel (0) target = $region21
    $region20: #{rnn_pg_forward.1} parent=1 // pred_region
      _
    $region21: #{rnn_pg_forward.1} parent=1 // pred_fallthru
      _
    // Predicated region
    $region22: #{rnn_pg_forward.1} parent=1 // pred_check
      _
    $region23: #{rnn_pg_forward.1} parent=1 // pred_check_branch
      %33 = sbr.rel (0) target = $region25
    $region24: #{rnn_pg_forward.1} parent=1 // pred_region
      %s35 = ssub.s32 12288, 12288
      %36 = vsyncadd [#allocation8], %s35
      %s37 = sshll.u32 [#allocation7], 4
      %s38 = int_to_ptr.vmem [resolvable:$true] %s37
      %43 = dma.hbm_to_vmem [thread:$0]  %s5, 12288, %s38, [#allocation8], 256, 256, 16
    $region25: #{rnn_pg_forward.1} parent=1 // pred_fallthru
      _
    // Predicated region
    $region26: #{rnn_pg_forward.1} parent=1 // pred_check
      _
    $region27: #{rnn_pg_forward.1} parent=1 // pred_check_branch
      %45 = sbr.rel (0) target = $region29
    $region28: #{rnn_pg_forward.1} parent=1 // pred_region
      %s47 = ssub.s32 12288, 12288
      %48 = vsyncadd [#allocation10], %s47
      %s49 = sshll.u32 [#allocation9], 4
      %s50 = int_to_ptr.vmem [resolvable:$true] %s49
      %55 = dma.hbm_to_vmem [thread:$0]  %s6, 12288, %s50, [#allocation10], 256, 256, 16
    $region29: #{rnn_pg_forward.1} parent=1 // pred_fallthru
      _
    // Predicated region
    $region30: #{rnn_pg_forward.1} parent=1 // pred_check
      _
    $region31: #{rnn_pg_forward.1} parent=1 // pred_check_branch
      %57 = sbr.rel (0) target = $region33
    $region32: #{rnn_pg_forward.1} parent=1 // pred_region
      _
    $region33: #{rnn_pg_forward.1} parent=1 // pred_fallthru
      _
    // Predicated region
    $region34: #{rnn_pg_forward.1} parent=1 // pred_check
      _
    $region35: #{rnn_pg_forward.1} parent=1 // pred_check_branch
      %59 = sbr.rel (0) target = $region37
    $region36: #{rnn_pg_forward.1} parent=1 // pred_region
      _
    $region37: #{rnn_pg_forward.1} parent=1 // pred_fallthru
      _
    // Predicated region
    $region38: #{rnn_pg_forward.1} parent=1 // pred_check
      _
    $region39: #{rnn_pg_forward.1} parent=1 // pred_check_branch
      %61 = sbr.rel (0) target = $region41
    $region40: #{rnn_pg_forward.1} parent=1 // pred_region
      _
    $region41: #{rnn_pg_forward.1} parent=1 // pred_fallthru
      _
    // Predicated region
    $region42: #{rnn_pg_forward.1} parent=1 // pred_check
      _
    $region43: #{rnn_pg_forward.1} parent=1 // pred_check_branch
      %63 = sbr.rel (0) target = $region45
    $region44: #{rnn_pg_forward.1} parent=1 // pred_region
      _
    $region45: #{rnn_pg_forward.1} parent=1 // pred_fallthru
      _
    // Predicated region
    $region46: #{rnn_pg_forward.1} parent=1 // pred_check
      _
    $region47: #{rnn_pg_forward.1} parent=1 // pred_check_branch
      %65 = sbr.rel (0) target = $region49
    $region48: #{rnn_pg_forward.1} parent=1 // pred_region
      _
    $region49: #{rnn_pg_forward.1} parent=1 // pred_fallthru
      _
    // Predicated region
    $region50: #{rnn_pg_forward.1} parent=1 // pred_check
      _
    $region51: #{rnn_pg_forward.1} parent=1 // pred_check_branch
      %67 = sbr.rel (0) target = $region53
    $region52: #{rnn_pg_forward.1} parent=1 // pred_region
      %68 = dma.done [#allocation8], 12288
    $region53: #{rnn_pg_forward.1} parent=1 // pred_fallthru
      _
    // Predicated region
    $region54: #{rnn_pg_forward.1} parent=1 // pred_check
      _
    $region55: #{rnn_pg_forward.1} parent=1 // pred_check_branch
      %70 = sbr.rel (0) target = $region57
    $region56: #{rnn_pg_forward.1} parent=1 // pred_region
      %71 = dma.done [#allocation10], 12288
    $region57: #{rnn_pg_forward.1} parent=1 // pred_fallthru
      _
    %v73 = vld [vmem:[%s1] sm:$0xff]
    %v74 = vld [vmem:[%s1 + $0x8] sm:$0xff]
    %v75 = vld [vmem:[%s1 + $0x10] sm:$0xff]
    %76 = vst [vmem:[#allocation2] sm:$0xff] %v73
    %77 = vst [vmem:[#allocation2 + $0x8] sm:$0xff] %v74
    %78 = vst [vmem:[#allocation2 + $0x10] sm:$0xff] %v75
    %v79 = vld [vmem:[%s2] sm:$0xff]
    %v80 = vld [vmem:[%s2 + $0x8] sm:$0xff]
    %v81 = vld [vmem:[%s2 + $0x10] sm:$0xff]
    %82 = vst [vmem:[#allocation3] sm:$0xff] %v79
    %83 = vst [vmem:[#allocation3 + $0x8] sm:$0xff] %v80
    %84 = vst [vmem:[#allocation3 + $0x10] sm:$0xff] %v81
    %v85 = vld [vmem:[%s0] sm:$0xf]
    %v86 = vld [vmem:[%s0 + $0x4] sm:$0xf]
    %v87 = vld [vmem:[%s0 + $0x8] sm:$0xf]
    %v88 = vld [vmem:[%s0 + $0xc] sm:$0xf]
    %v89 = vld [vmem:[%s0 + $0x10] sm:$0xf]
    %v90 = vld [vmem:[%s0 + $0x14] sm:$0xf]
    %v91 = vld [vmem:[%s0 + $0x18] sm:$0xf]
    %v92 = vld [vmem:[%s0 + $0x1c] sm:$0xf]
    %v93 = vld [vmem:[%s3] sm:$0xf]
    %v94 = vld [vmem:[%s3 + $0x4] sm:$0xf]
    %v95 = vld [vmem:[%s4] sm:$0x1]
    %v97 = vlaneseq
    %v98 = vshrl.u32 %v97, 7
    %v99 = vsub.s32 0, %v98
    %v100 = vrot.slane %v95, %v99
    %v110 = vunpack.c.l.b16 %v85
    %v111 = vunpack.c.l.b16 %v86
    %v112 = vunpack.c.l.b16 %v87
    %v113 = vunpack.c.l.b16 %v88
    %v114 = vunpack.c.l.b16 %v89
    %v115 = vunpack.c.l.b16 %v90
    %v116 = vunpack.c.l.b16 %v91
    %v117 = vunpack.c.l.b16 %v92
    %v118 = vpack.c.b16 %v111, %v110
    %v119 = vpack.c.b16 %v113, %v112
    %v120 = vpack.c.b16 %v115, %v114
    %v121 = vpack.c.b16 %v117, %v116
    %v124 = vunpack.c.l.b16 %v93
    %v125 = vunpack.c.l.b16 %v94
    %v126 = vpack.c.b16 %v125, %v124
    %vm128 = vcmask 130048
    %v130 = vsel %vm128, %v118, 0
    %v133 = vsel %vm128, %v119, 0
    %v136 = vsel %vm128, %v120, 0
    %v139 = vsel %vm128, %v121, 0
    %141 = vmatprep.subr.bf16.mxu0 0
    %142 = vmatpush1.bf16.msra.mxu0 %v126
    %143 = vmatprep.subr.bf16.mxu0 0
    %144 = vmatpush1.bf16.msra.mxu0 0
    %145 = vmatprep.subr.bf16.mxu0 0
    %146 = vmatpush1.bf16.msra.mxu0 0
    %147 = vmatprep.subr.bf16.mxu0 0
    %148 = vmatpush1.bf16.msra.mxu0 0
    %149 = vmatprep.subr.bf16.mxu0 0
    %150 = vmatpush1.bf16.msra.mxu0 0
    %151 = vmatprep.subr.bf16.mxu0 0
    %152 = vmatpush1.bf16.msra.mxu0 0
    %153 = vmatprep.subr.bf16.mxu0 0
    %154 = vmatpush1.bf16.msra.mxu0 0
    %155 = vmatprep.subr.bf16.mxu0 0
    %156 = vmatpush1.bf16.msra.mxu0 0
    %157 = vmatprep.subr.bf16.mxu0 0
    %158 = vmatpush1.bf16.msra.mxu0 0
    %159 = vmatprep.subr.bf16.mxu0 0
    %160 = vmatpush1.bf16.msra.mxu0 0
    %161 = vmatprep.subr.bf16.mxu0 0
    %162 = vmatpush1.bf16.msra.mxu0 0
    %163 = vmatprep.subr.bf16.mxu0 0
    %164 = vmatpush1.bf16.msra.mxu0 0
    %165 = vmatprep.subr.bf16.mxu0 0
    %166 = vmatpush1.bf16.msra.mxu0 0
    %167 = vmatprep.subr.bf16.mxu0 0
    %168 = vmatpush1.bf16.msra.mxu0 0
    %169 = vmatprep.subr.bf16.mxu0 0
    %170 = vmatpush1.bf16.msra.mxu0 0
    %171 = vmatprep.subr.bf16.mxu0 0
    %172 = vmatpush1.bf16.msra.mxu0 0
    %173 = vmatprep.mubr.bf16.mxu0 0
    %174 = vmatmul.mubr.bf16.gmra.mrb[0].mxu0 %v130
    %v175 = vpop.f32.mrb[0].mxu0
    %v176 = vadd.f32 %v100, %v175
    %v177 = vpop.f32.mrb[0].mxu0
    %v178 = vpop.f32.mrb[0].mxu0
    %v179 = vadd.f32 %v100, %v178
    %v180 = vpop.f32.mrb[0].mxu0
    %181 = vmatprep.mubr.bf16.mxu0 0
    %182 = vmatmul.mubr.bf16.gmra.mrb[0].mxu0 %v133
    %v183 = vpop.f32.mrb[0].mxu0
    %v184 = vadd.f32 %v100, %v183
    %v185 = vpop.f32.mrb[0].mxu0
    %v186 = vpop.f32.mrb[0].mxu0
    %v187 = vadd.f32 %v100, %v186
    %v188 = vpop.f32.mrb[0].mxu0
    %189 = vmatprep.mubr.bf16.mxu0 0
    %190 = vmatmul.mubr.bf16.gmra.mrb[0].mxu0 %v136
    %v191 = vpop.f32.mrb[0].mxu0
    %v192 = vadd.f32 %v100, %v191
    %v193 = vpop.f32.mrb[0].mxu0
    %v194 = vpop.f32.mrb[0].mxu0
    %v195 = vadd.f32 %v100, %v194
    %v196 = vpop.f32.mrb[0].mxu0
    %197 = vmatprep.mubr.bf16.mxu0 0
    %198 = vmatmul.mubr.bf16.gmra.mrb[0].mxu0 %v139
    %v199 = vpop.f32.mrb[0].mxu0
    %v200 = vadd.f32 %v100, %v199
    %v201 = vpop.f32.mrb[0].mxu0
    %v202 = vpop.f32.mrb[0].mxu0
    %v203 = vadd.f32 %v100, %v202
    %v204 = vpop.f32.mrb[0].mxu0
    %205 = vdwg.mxu0
    %vm206 = vcmp.ge.f32.partialorder %v176, 0.0
    %vm207 = vcmp.ge.f32.partialorder %v179, 0.0
    %vm208 = vcmp.ge.f32.partialorder %v184, 0.0
    %vm209 = vcmp.ge.f32.partialorder %v187, 0.0
    %vm210 = vcmp.ge.f32.partialorder %v192, 0.0
    %vm211 = vcmp.ge.f32.partialorder %v195, 0.0
    %vm212 = vcmp.ge.f32.partialorder %v200, 0.0
    %vm213 = vcmp.ge.f32.partialorder %v203, 0.0
    %v214 = vmul.f32 %v176, 0.01
    %v215 = vmul.f32 %v179, 0.01
    %v216 = vmul.f32 %v184, 0.01
    %v217 = vmul.f32 %v187, 0.01
    %v218 = vmul.f32 %v192, 0.01
    %v219 = vmul.f32 %v195, 0.01
    %v220 = vmul.f32 %v200, 0.01
    %v221 = vmul.f32 %v203, 0.01
    %v222 = vsel %vm206, %v176, %v214
    %v223 = vsel %vm207, %v179, %v215
    %v224 = vsel %vm208, %v184, %v216
    %v225 = vsel %vm209, %v187, %v217
    %v226 = vsel %vm210, %v192, %v218
    %v227 = vsel %vm211, %v195, %v219
    %v228 = vsel %vm212, %v200, %v220
    %v229 = vsel %vm213, %v203, %v221
    %230 = vst [vmem:[#allocation4] sm:$0xff] %v222
    %231 = vst [vmem:[#allocation4 + $0x8] sm:$0xff] %v223
    %232 = vst [vmem:[#allocation4 + $0x10] sm:$0xff] %v224
    %233 = vst [vmem:[#allocation4 + $0x18] sm:$0xff] %v225
    %234 = vst [vmem:[#allocation4 + $0x20] sm:$0xff] %v226
    %235 = vst [vmem:[#allocation4 + $0x28] sm:$0xff] %v227
    %236 = vst [vmem:[#allocation4 + $0x30] sm:$0xff] %v228
    %237 = vst [vmem:[#allocation4 + $0x38] sm:$0xff] %v229
    %v238 = vld [vmem:[%s8] sm:$0xf]
    %v239 = vld [vmem:[%s8 + $0x4] sm:$0xf]
    %v240 = vld [vmem:[%s9] sm:$0x1]
    %v242 = vlaneseq
    %v243 = vshrl.u32 %v242, 7
    %v244 = vsub.s32 0, %v243
    %v245 = vrot.slane %v240, %v244
    %v249 = vunpack.c.l.b16 %v238
    %v250 = vunpack.c.l.b16 %v239
    %v251 = vpack.c.b16 %v250, %v249
    %253 = vmatprep.subr.bf16.mxu0 0
    %254 = vmatpush1.bf16.msra.mxu0 %v251
    %255 = vmatprep.subr.bf16.mxu0 0
    %256 = vmatpush1.bf16.msra.mxu0 0
    %257 = vmatprep.subr.bf16.mxu0 0
    %258 = vmatpush1.bf16.msra.mxu0 0
    %259 = vmatprep.subr.bf16.mxu0 0
    %260 = vmatpush1.bf16.msra.mxu0 0
    %261 = vmatprep.subr.bf16.mxu0 0
    %262 = vmatpush1.bf16.msra.mxu0 0
    %263 = vmatprep.subr.bf16.mxu0 0
    %264 = vmatpush1.bf16.msra.mxu0 0
    %265 = vmatprep.subr.bf16.mxu0 0
    %266 = vmatpush1.bf16.msra.mxu0 0
    %267 = vmatprep.subr.bf16.mxu0 0
    %268 = vmatpush1.bf16.msra.mxu0 0
    %269 = vmatprep.subr.bf16.mxu0 0
    %270 = vmatpush1.bf16.msra.mxu0 0
    %271 = vmatprep.subr.bf16.mxu0 0
    %272 = vmatpush1.bf16.msra.mxu0 0
    %273 = vmatprep.subr.bf16.mxu0 0
    %274 = vmatpush1.bf16.msra.mxu0 0
    %275 = vmatprep.subr.bf16.mxu0 0
    %276 = vmatpush1.bf16.msra.mxu0 0
    %277 = vmatprep.subr.bf16.mxu0 0
    %278 = vmatpush1.bf16.msra.mxu0 0
    %279 = vmatprep.subr.bf16.mxu0 0
    %280 = vmatpush1.bf16.msra.mxu0 0
    %281 = vmatprep.subr.bf16.mxu0 0
    %282 = vmatpush1.bf16.msra.mxu0 0
    %283 = vmatprep.subr.bf16.mxu0 0
    %284 = vmatpush1.bf16.msra.mxu0 0
    %285 = vmatprep.mubr.bf16.mxu0 0
    %286 = vmatmul.mubr.bf16.gmra.mrb[0].mxu0 %v130
    %v287 = vpop.f32.mrb[0].mxu0
    %v288 = vadd.f32 %v245, %v287
    %v289 = vpop.f32.mrb[0].mxu0
    %v290 = vpop.f32.mrb[0].mxu0
    %v291 = vadd.f32 %v245, %v290
    %v292 = vpop.f32.mrb[0].mxu0
    %293 = vmatprep.mubr.bf16.mxu0 0
    %294 = vmatmul.mubr.bf16.gmra.mrb[0].mxu0 %v133
    %v295 = vpop.f32.mrb[0].mxu0
    %v296 = vadd.f32 %v245, %v295
    %v297 = vpop.f32.mrb[0].mxu0
    %v298 = vpop.f32.mrb[0].mxu0
    %v299 = vadd.f32 %v245, %v298
    %v300 = vpop.f32.mrb[0].mxu0
    %301 = vmatprep.mubr.bf16.mxu0 0
    %302 = vmatmul.mubr.bf16.gmra.mrb[0].mxu0 %v136
    %v303 = vpop.f32.mrb[0].mxu0
    %v304 = vadd.f32 %v245, %v303
    %v305 = vpop.f32.mrb[0].mxu0
    %v306 = vpop.f32.mrb[0].mxu0
    %v307 = vadd.f32 %v245, %v306
    %v308 = vpop.f32.mrb[0].mxu0
    %309 = vmatprep.mubr.bf16.mxu0 0
    %310 = vmatmul.mubr.bf16.gmra.mrb[0].mxu0 %v139
    %v311 = vpop.f32.mrb[0].mxu0
    %v312 = vadd.f32 %v245, %v311
    %v313 = vpop.f32.mrb[0].mxu0
    %v314 = vpop.f32.mrb[0].mxu0
    %v315 = vadd.f32 %v245, %v314
    %v316 = vpop.f32.mrb[0].mxu0
    %317 = vdwg.mxu0
    %v318 = vtanh.pop %v288
    %v319 = vtanh.pop %v291
    %v320 = vtanh.pop %v296
    %v321 = vtanh.pop %v299
    %v322 = vtanh.pop %v304
    %v323 = vtanh.pop %v307
    %v324 = vtanh.pop %v312
    %v325 = vtanh.pop %v315
    %326 = vst [vmem:[#allocation6] sm:$0xff] %v318
    %327 = vst [vmem:[#allocation6 + $0x8] sm:$0xff] %v319
    %328 = vst [vmem:[#allocation6 + $0x10] sm:$0xff] %v320
    %329 = vst [vmem:[#allocation6 + $0x18] sm:$0xff] %v321
    %330 = vst [vmem:[#allocation6 + $0x20] sm:$0xff] %v322
    %331 = vst [vmem:[#allocation6 + $0x28] sm:$0xff] %v323
    %332 = vst [vmem:[#allocation6 + $0x30] sm:$0xff] %v324
    %333 = vst [vmem:[#allocation6 + $0x38] sm:$0xff] %v325
    %v334 = vld [vmem:[#allocation4] sm:$0xff]
    %v335 = vld [vmem:[#allocation4 + $0x8] sm:$0xff]
    %v336 = vld [vmem:[#allocation4 + $0x10] sm:$0xff]
    %v337 = vld [vmem:[#allocation4 + $0x18] sm:$0xff]
    %v338 = vld [vmem:[#allocation4 + $0x20] sm:$0xff]
    %v339 = vld [vmem:[#allocation4 + $0x28] sm:$0xff]
    %v340 = vld [vmem:[#allocation4 + $0x30] sm:$0xff]
    %v341 = vld [vmem:[#allocation4 + $0x38] sm:$0xff]
    %v342 = vpack.c.bf16 %v335, %v334
    %v343 = vpack.c.bf16 %v337, %v336
    %v344 = vpack.c.bf16 %v339, %v338
    %v345 = vpack.c.bf16 %v341, %v340
    %v346 = vld [vmem:[#allocation7] sm:$0xff]
    %v347 = vld [vmem:[#allocation7 + $0x8] sm:$0xff]
    %v348 = vld [vmem:[#allocation7 + $0x10] sm:$0xff]
    %v349 = vld [vmem:[#allocation7 + $0x18] sm:$0xff]
    %v350 = vld [vmem:[#allocation7 + $0x20] sm:$0xff]
    %v351 = vld [vmem:[#allocation7 + $0x28] sm:$0xff]
    %v352 = vld [vmem:[#allocation7 + $0x30] sm:$0xff]
    %v353 = vld [vmem:[#allocation7 + $0x38] sm:$0xff]
    %v354 = vld [vmem:[#allocation7 + $0x40] sm:$0xff]
    %v355 = vld [vmem:[#allocation7 + $0x48] sm:$0xff]
    %v356 = vld [vmem:[#allocation7 + $0x50] sm:$0xff]
    %v357 = vld [vmem:[#allocation7 + $0x58] sm:$0xff]
    %v358 = vld [vmem:[#allocation7 + $0x60] sm:$0xff]
    %v359 = vld [vmem:[#allocation7 + $0x68] sm:$0xff]
    %v360 = vld [vmem:[#allocation7 + $0x70] sm:$0xff]
    %v361 = vld [vmem:[#allocation7 + $0x78] sm:$0xff]
    %v362 = vld [vmem:[#allocation7 + $0x80] sm:$0xff]
    %v363 = vld [vmem:[#allocation7 + $0x88] sm:$0xff]
    %v364 = vld [vmem:[#allocation7 + $0x90] sm:$0xff]
    %v365 = vld [vmem:[#allocation7 + $0x98] sm:$0xff]
    %v366 = vld [vmem:[#allocation7 + $0xa0] sm:$0xff]
    %v367 = vld [vmem:[#allocation7 + $0xa8] sm:$0xff]
    %v368 = vld [vmem:[#allocation7 + $0xb0] sm:$0xff]
    %v369 = vld [vmem:[#allocation7 + $0xb8] sm:$0xff]
    %v370 = vld [vmem:[#allocation7 + $0xc0] sm:$0xff]
    %v371 = vld [vmem:[#allocation7 + $0xc8] sm:$0xff]
    %v372 = vld [vmem:[#allocation7 + $0xd0] sm:$0xff]
    %v373 = vld [vmem:[#allocation7 + $0xd8] sm:$0xff]
    %v374 = vld [vmem:[#allocation7 + $0xe0] sm:$0xff]
    %v375 = vld [vmem:[#allocation7 + $0xe8] sm:$0xff]
    %v376 = vld [vmem:[#allocation7 + $0xf0] sm:$0xff]
    %v377 = vld [vmem:[#allocation7 + $0xf8] sm:$0xff]
    %v378 = vld [vmem:[%s7] sm:$0xf]
    %v380 = vlaneseq
    %v381 = vshrl.u32 %v380, 7
    %v382 = vsub.s32 0, %v381
    %v383 = vrot.slane %v378, %v382
    %v384 = vlaneseq
    %v385 = vshrl.u32 %v384, 7
    %v386 = vsub.s32 1, %v385
    %v387 = vrot.slane %v378, %v386
    %v388 = vlaneseq
    %v389 = vshrl.u32 %v388, 7
    %v390 = vsub.s32 2, %v389
    %v391 = vrot.slane %v378, %v390
    %v392 = vlaneseq
    %v393 = vshrl.u32 %v392, 7
    %v394 = vsub.s32 3, %v393
    %v395 = vrot.slane %v378, %v394
    %v432 = vunpack.c.l.b16 %v346
    %v433 = vunpack.c.h.b16 %v346
    %v434 = vunpack.c.l.b16 %v347
    %v435 = vunpack.c.h.b16 %v347
    %v436 = vunpack.c.l.b16 %v348
    %v437 = vunpack.c.h.b16 %v348
    %v438 = vunpack.c.l.b16 %v349
    %v439 = vunpack.c.h.b16 %v349
    %v440 = vunpack.c.l.b16 %v350
    %v441 = vunpack.c.h.b16 %v350
    %v442 = vunpack.c.l.b16 %v351
    %v443 = vunpack.c.h.b16 %v351
    %v444 = vunpack.c.l.b16 %v352
    %v445 = vunpack.c.h.b16 %v352
    %v446 = vunpack.c.l.b16 %v353
    %v447 = vunpack.c.h.b16 %v353
    %v448 = vunpack.c.l.b16 %v354
    %v449 = vunpack.c.h.b16 %v354
    %v450 = vunpack.c.l.b16 %v355
    %v451 = vunpack.c.h.b16 %v355
    %v452 = vunpack.c.l.b16 %v356
    %v453 = vunpack.c.h.b16 %v356
    %v454 = vunpack.c.l.b16 %v357
    %v455 = vunpack.c.h.b16 %v357
    %v456 = vunpack.c.l.b16 %v358
    %v457 = vunpack.c.h.b16 %v358
    %v458 = vunpack.c.l.b16 %v359
    %v459 = vunpack.c.h.b16 %v359
    %v460 = vunpack.c.l.b16 %v360
    %v461 = vunpack.c.h.b16 %v360
    %v462 = vunpack.c.l.b16 %v361
    %v463 = vunpack.c.h.b16 %v361
    %v464 = vunpack.c.l.b16 %v362
    %v465 = vunpack.c.h.b16 %v362
    %v466 = vunpack.c.l.b16 %v363
    %v467 = vunpack.c.h.b16 %v363
    %v468 = vunpack.c.l.b16 %v364
    %v469 = vunpack.c.h.b16 %v364
    %v470 = vunpack.c.l.b16 %v365
    %v471 = vunpack.c.h.b16 %v365
    %v472 = vunpack.c.l.b16 %v366
    %v473 = vunpack.c.h.b16 %v366
    %v474 = vunpack.c.l.b16 %v367
    %v475 = vunpack.c.h.b16 %v367
    %v476 = vunpack.c.l.b16 %v368
    %v477 = vunpack.c.h.b16 %v368
    %v478 = vunpack.c.l.b16 %v369
    %v479 = vunpack.c.h.b16 %v369
    %v480 = vunpack.c.l.b16 %v370
    %v481 = vunpack.c.h.b16 %v370
    %v482 = vunpack.c.l.b16 %v371
    %v483 = vunpack.c.h.b16 %v371
    %v484 = vunpack.c.l.b16 %v372
    %v485 = vunpack.c.h.b16 %v372
    %v486 = vunpack.c.l.b16 %v373
    %v487 = vunpack.c.h.b16 %v373
    %v488 = vunpack.c.l.b16 %v374
    %v489 = vunpack.c.h.b16 %v374
    %v490 = vunpack.c.l.b16 %v375
    %v491 = vunpack.c.h.b16 %v375
    %v492 = vunpack.c.l.b16 %v376
    %v493 = vunpack.c.h.b16 %v376
    %v494 = vunpack.c.l.b16 %v377
    %v495 = vunpack.c.h.b16 %v377
    %v496 = vpack.c.b16 %v436, %v432
    %v497 = vpack.c.b16 %v437, %v433
    %v498 = vpack.c.b16 %v438, %v434
    %v499 = vpack.c.b16 %v439, %v435
    %v500 = vpack.c.b16 %v444, %v440
    %v501 = vpack.c.b16 %v445, %v441
    %v502 = vpack.c.b16 %v446, %v442
    %v503 = vpack.c.b16 %v447, %v443
    %v504 = vpack.c.b16 %v452, %v448
    %v505 = vpack.c.b16 %v453, %v449
    %v506 = vpack.c.b16 %v454, %v450
    %v507 = vpack.c.b16 %v455, %v451
    %v508 = vpack.c.b16 %v460, %v456
    %v509 = vpack.c.b16 %v461, %v457
    %v510 = vpack.c.b16 %v462, %v458
    %v511 = vpack.c.b16 %v463, %v459
    %v512 = vpack.c.b16 %v468, %v464
    %v513 = vpack.c.b16 %v469, %v465
    %v514 = vpack.c.b16 %v470, %v466
    %v515 = vpack.c.b16 %v471, %v467
    %v516 = vpack.c.b16 %v476, %v472
    %v517 = vpack.c.b16 %v477, %v473
    %v518 = vpack.c.b16 %v478, %v474
    %v519 = vpack.c.b16 %v479, %v475
    %v520 = vpack.c.b16 %v484, %v480
    %v521 = vpack.c.b16 %v485, %v481
    %v522 = vpack.c.b16 %v486, %v482
    %v523 = vpack.c.b16 %v487, %v483
    %v524 = vpack.c.b16 %v492, %v488
    %v525 = vpack.c.b16 %v493, %v489
    %v526 = vpack.c.b16 %v494, %v490
    %v527 = vpack.c.b16 %v495, %v491
    %560 = vmatprep.subr.bf16.mxu0 %v497
    %561 = vmatpush1.bf16.msra.mxu0 %v496
    %562 = vmatprep.subr.bf16.mxu0 %v501
    %563 = vmatpush1.bf16.msra.mxu0 %v500
    %564 = vmatprep.subr.bf16.mxu0 %v505
    %565 = vmatpush1.bf16.msra.mxu0 %v504
    %566 = vmatprep.subr.bf16.mxu0 %v509
    %567 = vmatpush1.bf16.msra.mxu0 %v508
    %568 = vmatprep.subr.bf16.mxu0 %v513
    %569 = vmatpush1.bf16.msra.mxu0 %v512
    %570 = vmatprep.subr.bf16.mxu0 %v517
    %571 = vmatpush1.bf16.msra.mxu0 %v516
    %572 = vmatprep.subr.bf16.mxu0 %v521
    %573 = vmatpush1.bf16.msra.mxu0 %v520
    %574 = vmatprep.subr.bf16.mxu0 %v525
    %575 = vmatpush1.bf16.msra.mxu0 %v524
    %576 = vmatprep.subr.bf16.mxu0 0
    %577 = vmatpush1.bf16.msra.mxu0 0
    %578 = vmatprep.subr.bf16.mxu0 0
    %579 = vmatpush1.bf16.msra.mxu0 0
    %580 = vmatprep.subr.bf16.mxu0 0
    %581 = vmatpush1.bf16.msra.mxu0 0
    %582 = vmatprep.subr.bf16.mxu0 0
    %583 = vmatpush1.bf16.msra.mxu0 0
    %584 = vmatprep.subr.bf16.mxu0 0
    %585 = vmatpush1.bf16.msra.mxu0 0
    %586 = vmatprep.subr.bf16.mxu0 0
    %587 = vmatpush1.bf16.msra.mxu0 0
    %588 = vmatprep.subr.bf16.mxu0 0
    %589 = vmatpush1.bf16.msra.mxu0 0
    %590 = vmatprep.subr.bf16.mxu0 0
    %591 = vmatpush1.bf16.msra.mxu0 0
    %592 = vmatprep.mubr.bf16.mxu0 0
    %593 = vmatmul.mubr.bf16.gmra.mrb[0].mxu0 %v342
    %v594 = vpop.f32.mrb[0].mxu0
    %v595 = vadd.f32 %v383, %v594
    %v596 = vpop.f32.mrb[0].mxu0
    %v597 = vadd.f32 %v387, %v596
    %v598 = vpop.f32.mrb[0].mxu0
    %v599 = vadd.f32 %v383, %v598
    %v600 = vpop.f32.mrb[0].mxu0
    %v601 = vadd.f32 %v387, %v600
    %602 = vmatprep.mubr.bf16.mxu0 0
    %603 = vmatmul.mubr.bf16.gmra.mrb[0].mxu0 %v343
    %v604 = vpop.f32.mrb[0].mxu0
    %v605 = vadd.f32 %v383, %v604
    %v606 = vpop.f32.mrb[0].mxu0
    %v607 = vadd.f32 %v387, %v606
    %v608 = vpop.f32.mrb[0].mxu0
    %v609 = vadd.f32 %v383, %v608
    %v610 = vpop.f32.mrb[0].mxu0
    %v611 = vadd.f32 %v387, %v610
    %612 = vmatprep.mubr.bf16.mxu0 0
    %613 = vmatmul.mubr.bf16.gmra.mrb[0].mxu0 %v344
    %v614 = vpop.f32.mrb[0].mxu0
    %v615 = vadd.f32 %v383, %v614
    %v616 = vpop.f32.mrb[0].mxu0
    %v617 = vadd.f32 %v387, %v616
    %v618 = vpop.f32.mrb[0].mxu0
    %v619 = vadd.f32 %v383, %v618
    %v620 = vpop.f32.mrb[0].mxu0
    %v621 = vadd.f32 %v387, %v620
    %622 = vmatprep.mubr.bf16.mxu0 0
    %623 = vmatmul.mubr.bf16.gmra.mrb[0].mxu0 %v345
    %v624 = vpop.f32.mrb[0].mxu0
    %v625 = vadd.f32 %v383, %v624
    %v626 = vpop.f32.mrb[0].mxu0
    %v627 = vadd.f32 %v387, %v626
    %v628 = vpop.f32.mrb[0].mxu0
    %v629 = vadd.f32 %v383, %v628
    %v630 = vpop.f32.mrb[0].mxu0
    %v631 = vadd.f32 %v387, %v630
    %632 = vdwg.mxu0
    %633 = vmatprep.subr.bf16.mxu0 %v499
    %634 = vmatpush1.bf16.msra.mxu0 %v498
    %635 = vmatprep.subr.bf16.mxu0 %v503
    %636 = vmatpush1.bf16.msra.mxu0 %v502
    %637 = vmatprep.subr.bf16.mxu0 %v507
    %638 = vmatpush1.bf16.msra.mxu0 %v506
    %639 = vmatprep.subr.bf16.mxu0 %v511
    %640 = vmatpush1.bf16.msra.mxu0 %v510
    %641 = vmatprep.subr.bf16.mxu0 %v515
    %642 = vmatpush1.bf16.msra.mxu0 %v514
    %643 = vmatprep.subr.bf16.mxu0 %v519
    %644 = vmatpush1.bf16.msra.mxu0 %v518
    %645 = vmatprep.subr.bf16.mxu0 %v523
    %646 = vmatpush1.bf16.msra.mxu0 %v522
    %647 = vmatprep.subr.bf16.mxu0 %v527
    %648 = vmatpush1.bf16.msra.mxu0 %v526
    %649 = vmatprep.subr.bf16.mxu0 0
    %650 = vmatpush1.bf16.msra.mxu0 0
    %651 = vmatprep.subr.bf16.mxu0 0
    %652 = vmatpush1.bf16.msra.mxu0 0
    %653 = vmatprep.subr.bf16.mxu0 0
    %654 = vmatpush1.bf16.msra.mxu0 0
    %655 = vmatprep.subr.bf16.mxu0 0
    %656 = vmatpush1.bf16.msra.mxu0 0
    %657 = vmatprep.subr.bf16.mxu0 0
    %658 = vmatpush1.bf16.msra.mxu0 0
    %659 = vmatprep.subr.bf16.mxu0 0
    %660 = vmatpush1.bf16.msra.mxu0 0
    %661 = vmatprep.subr.bf16.mxu0 0
    %662 = vmatpush1.bf16.msra.mxu0 0
    %663 = vmatprep.subr.bf16.mxu0 0
    %664 = vmatpush1.bf16.msra.mxu0 0
    %665 = vmatprep.mubr.bf16.mxu0 0
    %666 = vmatmul.mubr.bf16.gmra.mrb[0].mxu0 %v342
    %v667 = vpop.f32.mrb[0].mxu0
    %v668 = vadd.f32 %v391, %v667
    %v669 = vpop.f32.mrb[0].mxu0
    %v670 = vadd.f32 %v395, %v669
    %v671 = vpop.f32.mrb[0].mxu0
    %v672 = vadd.f32 %v391, %v671
    %v673 = vpop.f32.mrb[0].mxu0
    %v674 = vadd.f32 %v395, %v673
    %675 = vmatprep.mubr.bf16.mxu0 0
    %676 = vmatmul.mubr.bf16.gmra.mrb[0].mxu0 %v343
    %v677 = vpop.f32.mrb[0].mxu0
    %v678 = vadd.f32 %v391, %v677
    %v679 = vpop.f32.mrb[0].mxu0
    %v680 = vadd.f32 %v395, %v679
    %v681 = vpop.f32.mrb[0].mxu0
    %v682 = vadd.f32 %v391, %v681
    %v683 = vpop.f32.mrb[0].mxu0
    %v684 = vadd.f32 %v395, %v683
    %685 = vmatprep.mubr.bf16.mxu0 0
    %686 = vmatmul.mubr.bf16.gmra.mrb[0].mxu0 %v344
    %v687 = vpop.f32.mrb[0].mxu0
    %v688 = vadd.f32 %v391, %v687
    %v689 = vpop.f32.mrb[0].mxu0
    %v690 = vadd.f32 %v395, %v689
    %v691 = vpop.f32.mrb[0].mxu0
    %v692 = vadd.f32 %v391, %v691
    %v693 = vpop.f32.mrb[0].mxu0
    %v694 = vadd.f32 %v395, %v693
    %695 = vmatprep.mubr.bf16.mxu0 0
    %696 = vmatmul.mubr.bf16.gmra.mrb[0].mxu0 %v345
    %v697 = vpop.f32.mrb[0].mxu0
    %v698 = vadd.f32 %v391, %v697
    %v699 = vpop.f32.mrb[0].mxu0
    %v700 = vadd.f32 %v395, %v699
    %v701 = vpop.f32.mrb[0].mxu0
    %v702 = vadd.f32 %v391, %v701
    %v703 = vpop.f32.mrb[0].mxu0
    %v704 = vadd.f32 %v395, %v703
    %705 = vdwg.mxu0
    %706 = vst [vmem:[#allocation5] sm:$0xff] %v595
    %707 = vst [vmem:[#allocation5 + $0x8] sm:$0xff] %v597
    %708 = vst [vmem:[#allocation5 + $0x10] sm:$0xff] %v668
    %709 = vst [vmem:[#allocation5 + $0x18] sm:$0xff] %v670
    %710 = vst [vmem:[#allocation5 + $0x20] sm:$0xff] %v599
    %711 = vst [vmem:[#allocation5 + $0x28] sm:$0xff] %v601
    %712 = vst [vmem:[#allocation5 + $0x30] sm:$0xff] %v672
    %713 = vst [vmem:[#allocation5 + $0x38] sm:$0xff] %v674
    %714 = vst [vmem:[#allocation5 + $0x40] sm:$0xff] %v605
    %715 = vst [vmem:[#allocation5 + $0x48] sm:$0xff] %v607
    %716 = vst [vmem:[#allocation5 + $0x50] sm:$0xff] %v678
    %717 = vst [vmem:[#allocation5 + $0x58] sm:$0xff] %v680
    %718 = vst [vmem:[#allocation5 + $0x60] sm:$0xff] %v609
    %719 = vst [vmem:[#allocation5 + $0x68] sm:$0xff] %v611
    %720 = vst [vmem:[#allocation5 + $0x70] sm:$0xff] %v682
    %721 = vst [vmem:[#allocation5 + $0x78] sm:$0xff] %v684
    %722 = vst [vmem:[#allocation5 + $0x80] sm:$0xff] %v615
    %723 = vst [vmem:[#allocation5 + $0x88] sm:$0xff] %v617
    %724 = vst [vmem:[#allocation5 + $0x90] sm:$0xff] %v688
    %725 = vst [vmem:[#allocation5 + $0x98] sm:$0xff] %v690
    %726 = vst [vmem:[#allocation5 + $0xa0] sm:$0xff] %v619
    %727 = vst [vmem:[#allocation5 + $0xa8] sm:$0xff] %v621
    %728 = vst [vmem:[#allocation5 + $0xb0] sm:$0xff] %v692
    %729 = vst [vmem:[#allocation5 + $0xb8] sm:$0xff] %v694
    %730 = vst [vmem:[#allocation5 + $0xc0] sm:$0xff] %v625
    %731 = vst [vmem:[#allocation5 + $0xc8] sm:$0xff] %v627
    %732 = vst [vmem:[#allocation5 + $0xd0] sm:$0xff] %v698
    %733 = vst [vmem:[#allocation5 + $0xd8] sm:$0xff] %v700
    %734 = vst [vmem:[#allocation5 + $0xe0] sm:$0xff] %v629
    %735 = vst [vmem:[#allocation5 + $0xe8] sm:$0xff] %v631
    %736 = vst [vmem:[#allocation5 + $0xf0] sm:$0xff] %v702
    %737 = vst [vmem:[#allocation5 + $0xf8] sm:$0xff] %v704
    %v738 = vld [vmem:[#allocation9] sm:$0xff]
    %v739 = vld [vmem:[#allocation9 + $0x8] sm:$0xff]
    %v740 = vld [vmem:[#allocation9 + $0x10] sm:$0xff]
    %v741 = vld [vmem:[#allocation9 + $0x18] sm:$0xff]
    %v742 = vld [vmem:[#allocation9 + $0x20] sm:$0xff]
    %v743 = vld [vmem:[#allocation9 + $0x28] sm:$0xff]
    %v744 = vld [vmem:[#allocation9 + $0x30] sm:$0xff]
    %v745 = vld [vmem:[#allocation9 + $0x38] sm:$0xff]
    %v746 = vld [vmem:[#allocation9 + $0x40] sm:$0xff]
    %v747 = vld [vmem:[#allocation9 + $0x48] sm:$0xff]
    %v748 = vld [vmem:[#allocation9 + $0x50] sm:$0xff]
    %v749 = vld [vmem:[#allocation9 + $0x58] sm:$0xff]
    %v750 = vld [vmem:[#allocation9 + $0x60] sm:$0xff]
    %v751 = vld [vmem:[#allocation9 + $0x68] sm:$0xff]
    %v752 = vld [vmem:[#allocation9 + $0x70] sm:$0xff]
    %v753 = vld [vmem:[#allocation9 + $0x78] sm:$0xff]
    %v754 = vld [vmem:[#allocation9 + $0x80] sm:$0xff]
    %v755 = vld [vmem:[#allocation9 + $0x88] sm:$0xff]
    %v756 = vld [vmem:[#allocation9 + $0x90] sm:$0xff]
    %v757 = vld [vmem:[#allocation9 + $0x98] sm:$0xff]
    %v758 = vld [vmem:[#allocation9 + $0xa0] sm:$0xff]
    %v759 = vld [vmem:[#allocation9 + $0xa8] sm:$0xff]
    %v760 = vld [vmem:[#allocation9 + $0xb0] sm:$0xff]
    %v761 = vld [vmem:[#allocation9 + $0xb8] sm:$0xff]
    %v762 = vld [vmem:[#allocation9 + $0xc0] sm:$0xff]
    %v763 = vld [vmem:[#allocation9 + $0xc8] sm:$0xff]
    %v764 = vld [vmem:[#allocation9 + $0xd0] sm:$0xff]
    %v765 = vld [vmem:[#allocation9 + $0xd8] sm:$0xff]
    %v766 = vld [vmem:[#allocation9 + $0xe0] sm:$0xff]
    %v767 = vld [vmem:[#allocation9 + $0xe8] sm:$0xff]
    %v768 = vld [vmem:[#allocation9 + $0xf0] sm:$0xff]
    %v769 = vld [vmem:[#allocation9 + $0xf8] sm:$0xff]
    %v770 = vld [vmem:[#allocation2] sm:$0xff]
    %v771 = vld [vmem:[#allocation3] sm:$0xff]
    %s772 = smul.u32 0, 4
    %s773 = smul.addr %s772, 8
    %s774 = scalar_lea.vmem [#allocation5], %s773
    %v775 = vld [vmem:[%s774] sm:$0xff]
    %v776 = vld [vmem:[%s774 + $0x8] sm:$0xff]
    %v777 = vld [vmem:[%s774 + $0x10] sm:$0xff]
    %v778 = vld [vmem:[%s774 + $0x18] sm:$0xff]
    %v779 = vpack.c.bf16 %v770, %v770
    %v812 = vunpack.c.l.b16 %v738
    %v813 = vunpack.c.h.b16 %v738
    %v814 = vunpack.c.l.b16 %v739
    %v815 = vunpack.c.h.b16 %v739
    %v816 = vunpack.c.l.b16 %v740
    %v817 = vunpack.c.h.b16 %v740
    %v818 = vunpack.c.l.b16 %v741
    %v819 = vunpack.c.h.b16 %v741
    %v820 = vunpack.c.l.b16 %v742
    %v821 = vunpack.c.h.b16 %v742
    %v822 = vunpack.c.l.b16 %v743
    %v823 = vunpack.c.h.b16 %v743
    %v824 = vunpack.c.l.b16 %v744
    %v825 = vunpack.c.h.b16 %v744
    %v826 = vunpack.c.l.b16 %v745
    %v827 = vunpack.c.h.b16 %v745
    %v828 = vunpack.c.l.b16 %v746
    %v829 = vunpack.c.h.b16 %v746
    %v830 = vunpack.c.l.b16 %v747
    %v831 = vunpack.c.h.b16 %v747
    %v832 = vunpack.c.l.b16 %v748
    %v833 = vunpack.c.h.b16 %v748
    %v834 = vunpack.c.l.b16 %v749
    %v835 = vunpack.c.h.b16 %v749
    %v836 = vunpack.c.l.b16 %v750
    %v837 = vunpack.c.h.b16 %v750
    %v838 = vunpack.c.l.b16 %v751
    %v839 = vunpack.c.h.b16 %v751
    %v840 = vunpack.c.l.b16 %v752
    %v841 = vunpack.c.h.b16 %v752
    %v842 = vunpack.c.l.b16 %v753
    %v843 = vunpack.c.h.b16 %v753
    %v844 = vunpack.c.l.b16 %v754
    %v845 = vunpack.c.h.b16 %v754
    %v846 = vunpack.c.l.b16 %v755
    %v847 = vunpack.c.h.b16 %v755
    %v848 = vunpack.c.l.b16 %v756
    %v849 = vunpack.c.h.b16 %v756
    %v850 = vunpack.c.l.b16 %v757
    %v851 = vunpack.c.h.b16 %v757
    %v852 = vunpack.c.l.b16 %v758
    %v853 = vunpack.c.h.b16 %v758
    %v854 = vunpack.c.l.b16 %v759
    %v855 = vunpack.c.h.b16 %v759
    %v856 = vunpack.c.l.b16 %v760
    %v857 = vunpack.c.h.b16 %v760
    %v858 = vunpack.c.l.b16 %v761
    %v859 = vunpack.c.h.b16 %v761
    %v860 = vunpack.c.l.b16 %v762
    %v861 = vunpack.c.h.b16 %v762
    %v862 = vunpack.c.l.b16 %v763
    %v863 = vunpack.c.h.b16 %v763
    %v864 = vunpack.c.l.b16 %v764
    %v865 = vunpack.c.h.b16 %v764
    %v866 = vunpack.c.l.b16 %v765
    %v867 = vunpack.c.h.b16 %v765
    %v868 = vunpack.c.l.b16 %v766
    %v869 = vunpack.c.h.b16 %v766
    %v870 = vunpack.c.l.b16 %v767
    %v871 = vunpack.c.h.b16 %v767
    %v872 = vunpack.c.l.b16 %v768
    %v873 = vunpack.c.h.b16 %v768
    %v874 = vunpack.c.l.b16 %v769
    %v875 = vunpack.c.h.b16 %v769
    %v876 = vpack.c.b16 %v816, %v812
    %v877 = vpack.c.b16 %v817, %v813
    %v878 = vpack.c.b16 %v818, %v814
    %v879 = vpack.c.b16 %v819, %v815
    %v880 = vpack.c.b16 %v824, %v820
    %v881 = vpack.c.b16 %v825, %v821
    %v882 = vpack.c.b16 %v826, %v822
    %v883 = vpack.c.b16 %v827, %v823
    %v884 = vpack.c.b16 %v832, %v828
    %v885 = vpack.c.b16 %v833, %v829
    %v886 = vpack.c.b16 %v834, %v830
    %v887 = vpack.c.b16 %v835, %v831
    %v888 = vpack.c.b16 %v840, %v836
    %v889 = vpack.c.b16 %v841, %v837
    %v890 = vpack.c.b16 %v842, %v838
    %v891 = vpack.c.b16 %v843, %v839
    %v892 = vpack.c.b16 %v848, %v844
    %v893 = vpack.c.b16 %v849, %v845
    %v894 = vpack.c.b16 %v850, %v846
    %v895 = vpack.c.b16 %v851, %v847
    %v896 = vpack.c.b16 %v856, %v852
    %v897 = vpack.c.b16 %v857, %v853
    %v898 = vpack.c.b16 %v858, %v854
    %v899 = vpack.c.b16 %v859, %v855
    %v900 = vpack.c.b16 %v864, %v860
    %v901 = vpack.c.b16 %v865, %v861
    %v902 = vpack.c.b16 %v866, %v862
    %v903 = vpack.c.b16 %v867, %v863
    %v904 = vpack.c.b16 %v872, %v868
    %v905 = vpack.c.b16 %v873, %v869
    %v906 = vpack.c.b16 %v874, %v870
    %v907 = vpack.c.b16 %v875, %v871
    %940 = vmatprep.subr.bf16.mxu0 %v877
    %941 = vmatpush1.bf16.msra.mxu0 %v876
    %942 = vmatprep.subr.bf16.mxu0 %v881
    %943 = vmatpush1.bf16.msra.mxu0 %v880
    %944 = vmatprep.subr.bf16.mxu0 %v885
    %945 = vmatpush1.bf16.msra.mxu0 %v884
    %946 = vmatprep.subr.bf16.mxu0 %v889
    %947 = vmatpush1.bf16.msra.mxu0 %v888
    %948 = vmatprep.subr.bf16.mxu0 %v893
    %949 = vmatpush1.bf16.msra.mxu0 %v892
    %950 = vmatprep.subr.bf16.mxu0 %v897
    %951 = vmatpush1.bf16.msra.mxu0 %v896
    %952 = vmatprep.subr.bf16.mxu0 %v901
    %953 = vmatpush1.bf16.msra.mxu0 %v900
    %954 = vmatprep.subr.bf16.mxu0 %v905
    %955 = vmatpush1.bf16.msra.mxu0 %v904
    %956 = vmatprep.subr.bf16.mxu0 0
    %957 = vmatpush1.bf16.msra.mxu0 0
    %958 = vmatprep.subr.bf16.mxu0 0
    %959 = vmatpush1.bf16.msra.mxu0 0
    %960 = vmatprep.subr.bf16.mxu0 0
    %961 = vmatpush1.bf16.msra.mxu0 0
    %962 = vmatprep.subr.bf16.mxu0 0
    %963 = vmatpush1.bf16.msra.mxu0 0
    %964 = vmatprep.subr.bf16.mxu0 0
    %965 = vmatpush1.bf16.msra.mxu0 0
    %966 = vmatprep.subr.bf16.mxu0 0
    %967 = vmatpush1.bf16.msra.mxu0 0
    %968 = vmatprep.subr.bf16.mxu0 0
    %969 = vmatpush1.bf16.msra.mxu0 0
    %970 = vmatprep.subr.bf16.mxu0 0
    %971 = vmatpush1.bf16.msra.mxu0 0
    %972 = vmatprep.mubr.bf16.mxu0 0
    %973 = vmatmul.mubr.bf16.gmra.mrb[0].mxu0 %v779
    %v974 = vpop.f32.mrb[0].mxu0
    %v975 = vadd.f32 0.0, %v974
    %v976 = vpop.f32.mrb[0].mxu0
    %v977 = vadd.f32 0.0, %v976
    %v978 = vpop.f32.mrb[0].mxu0
    %v979 = vpop.f32.mrb[0].mxu0
    %980 = vdwg.mxu0
    %981 = vmatprep.subr.bf16.mxu0 %v879
    %982 = vmatpush1.bf16.msra.mxu0 %v878
    %983 = vmatprep.subr.bf16.mxu0 %v883
    %984 = vmatpush1.bf16.msra.mxu0 %v882
    %985 = vmatprep.subr.bf16.mxu0 %v887
    %986 = vmatpush1.bf16.msra.mxu0 %v886
    %987 = vmatprep.subr.bf16.mxu0 %v891
    %988 = vmatpush1.bf16.msra.mxu0 %v890
    %989 = vmatprep.subr.bf16.mxu0 %v895
    %990 = vmatpush1.bf16.msra.mxu0 %v894
    %991 = vmatprep.subr.bf16.mxu0 %v899
    %992 = vmatpush1.bf16.msra.mxu0 %v898
    %993 = vmatprep.subr.bf16.mxu0 %v903
    %994 = vmatpush1.bf16.msra.mxu0 %v902
    %995 = vmatprep.subr.bf16.mxu0 %v907
    %996 = vmatpush1.bf16.msra.mxu0 %v906
    %997 = vmatprep.subr.bf16.mxu0 0
    %998 = vmatpush1.bf16.msra.mxu0 0
    %999 = vmatprep.subr.bf16.mxu0 0
    %1000 = vmatpush1.bf16.msra.mxu0 0
    %1001 = vmatprep.subr.bf16.mxu0 0
    %1002 = vmatpush1.bf16.msra.mxu0 0
    %1003 = vmatprep.subr.bf16.mxu0 0
    %1004 = vmatpush1.bf16.msra.mxu0 0
    %1005 = vmatprep.subr.bf16.mxu0 0
    %1006 = vmatpush1.bf16.msra.mxu0 0
    %1007 = vmatprep.subr.bf16.mxu0 0
    %1008 = vmatpush1.bf16.msra.mxu0 0
    %1009 = vmatprep.subr.bf16.mxu0 0
    %1010 = vmatpush1.bf16.msra.mxu0 0
    %1011 = vmatprep.subr.bf16.mxu0 0
    %1012 = vmatpush1.bf16.msra.mxu0 0
    %1013 = vmatprep.mubr.bf16.mxu0 0
    %1014 = vmatmul.mubr.bf16.gmra.mrb[0].mxu0 %v779
    %v1015 = vpop.f32.mrb[0].mxu0
    %v1016 = vadd.f32 0.0, %v1015
    %v1017 = vpop.f32.mrb[0].mxu0
    %v1018 = vadd.f32 0.0, %v1017
    %v1019 = vpop.f32.mrb[0].mxu0
    %v1020 = vpop.f32.mrb[0].mxu0
    %1021 = vdwg.mxu0
    %v1022 = vadd.f32 %v775, %v975
    %v1023 = vadd.f32 %v776, %v977
    %v1024 = vadd.f32 %v777, %v1016
    %v1025 = vadd.f32 %v778, %v1018
    %v1026 = vmul.f32 %v1022, 0.5
    %v1027 = vtanh.pop %v1026
    %v1028 = vmul.f32 %v1027, 0.5
    %v1029 = vadd.f32 %v1028, 0.5
    %v1030 = vmul.f32 %v1023, 0.5
    %v1031 = vtanh.pop %v1030
    %v1032 = vmul.f32 %v1031, 0.5
    %v1033 = vadd.f32 %v1032, 0.5
    %v1034 = vtanh.pop %v1024
    %v1035 = vmul.f32 %v1025, 0.5
    %v1036 = vtanh.pop %v1035
    %v1037 = vmul.f32 %v1036, 0.5
    %v1038 = vadd.f32 %v1037, 0.5
    %v1039 = vmul.f32 %v1033, %v771
    %v1040 = vmul.f32 %v1029, %v1034
    %v1041 = vadd.f32 %v1039, %v1040
    %v1042 = vtanh.pop %v1041
    %v1043 = vmul.f32 %v1038, %v1042
    %1044 = vst [vmem:[#allocation2] sm:$0xff] %v1043
    %1045 = vst [vmem:[#allocation3] sm:$0xff] %v1041
    %1046 = vst [vmem:[#allocation4] sm:$0xff] %v1043
    %v1047 = vld [vmem:[#allocation2] sm:$0xff]
    %v1048 = vld [vmem:[#allocation3] sm:$0xff]
    %s1049 = smul.u32 1, 4
    %s1050 = smul.addr %s1049, 8
    %s1051 = scalar_lea.vmem [#allocation5], %s1050
    %v1052 = vld [vmem:[%s1051] sm:$0xff]
    %v1053 = vld [vmem:[%s1051 + $0x8] sm:$0xff]
    %v1054 = vld [vmem:[%s1051 + $0x10] sm:$0xff]
    %v1055 = vld [vmem:[%s1051 + $0x18] sm:$0xff]
    %v1056 = vpack.c.bf16 %v1047, %v1047
    %1057 = vmatprep.subr.bf16.mxu0 %v877
    %1058 = vmatpush1.bf16.msra.mxu0 %v876
    %1059 = vmatprep.subr.bf16.mxu0 %v881
    %1060 = vmatpush1.bf16.msra.mxu0 %v880
    %1061 = vmatprep.subr.bf16.mxu0 %v885
    %1062 = vmatpush1.bf16.msra.mxu0 %v884
    %1063 = vmatprep.subr.bf16.mxu0 %v889
    %1064 = vmatpush1.bf16.msra.mxu0 %v888
    %1065 = vmatprep.subr.bf16.mxu0 %v893
    %1066 = vmatpush1.bf16.msra.mxu0 %v892
    %1067 = vmatprep.subr.bf16.mxu0 %v897
    %1068 = vmatpush1.bf16.msra.mxu0 %v896
    %1069 = vmatprep.subr.bf16.mxu0 %v901
    %1070 = vmatpush1.bf16.msra.mxu0 %v900
    %1071 = vmatprep.subr.bf16.mxu0 %v905
    %1072 = vmatpush1.bf16.msra.mxu0 %v904
    %1073 = vmatprep.subr.bf16.mxu0 0
    %1074 = vmatpush1.bf16.msra.mxu0 0
    %1075 = vmatprep.subr.bf16.mxu0 0
    %1076 = vmatpush1.bf16.msra.mxu0 0
    %1077 = vmatprep.subr.bf16.mxu0 0
    %1078 = vmatpush1.bf16.msra.mxu0 0
    %1079 = vmatprep.subr.bf16.mxu0 0
    %1080 = vmatpush1.bf16.msra.mxu0 0
    %1081 = vmatprep.subr.bf16.mxu0 0
    %1082 = vmatpush1.bf16.msra.mxu0 0
    %1083 = vmatprep.subr.bf16.mxu0 0
    %1084 = vmatpush1.bf16.msra.mxu0 0
    %1085 = vmatprep.subr.bf16.mxu0 0
    %1086 = vmatpush1.bf16.msra.mxu0 0
    %1087 = vmatprep.subr.bf16.mxu0 0
    %1088 = vmatpush1.bf16.msra.mxu0 0
    %1089 = vmatprep.mubr.bf16.mxu0 0
    %1090 = vmatmul.mubr.bf16.gmra.mrb[0].mxu0 %v1056
    %v1091 = vpop.f32.mrb[0].mxu0
    %v1092 = vadd.f32 0.0, %v1091
    %v1093 = vpop.f32.mrb[0].mxu0
    %v1094 = vadd.f32 0.0, %v1093
    %v1095 = vpop.f32.mrb[0].mxu0
    %v1096 = vpop.f32.mrb[0].mxu0
    %1097 = vdwg.mxu0
    %1098 = vmatprep.subr.bf16.mxu0 %v879
    %1099 = vmatpush1.bf16.msra.mxu0 %v878
    %1100 = vmatprep.subr.bf16.mxu0 %v883
    %1101 = vmatpush1.bf16.msra.mxu0 %v882
    %1102 = vmatprep.subr.bf16.mxu0 %v887
    %1103 = vmatpush1.bf16.msra.mxu0 %v886
    %1104 = vmatprep.subr.bf16.mxu0 %v891
    %1105 = vmatpush1.bf16.msra.mxu0 %v890
    %1106 = vmatprep.subr.bf16.mxu0 %v895
    %1107 = vmatpush1.bf16.msra.mxu0 %v894
    %1108 = vmatprep.subr.bf16.mxu0 %v899
    %1109 = vmatpush1.bf16.msra.mxu0 %v898
    %1110 = vmatprep.subr.bf16.mxu0 %v903
    %1111 = vmatpush1.bf16.msra.mxu0 %v902
    %1112 = vmatprep.subr.bf16.mxu0 %v907
    %1113 = vmatpush1.bf16.msra.mxu0 %v906
    %1114 = vmatprep.subr.bf16.mxu0 0
    %1115 = vmatpush1.bf16.msra.mxu0 0
    %1116 = vmatprep.subr.bf16.mxu0 0
    %1117 = vmatpush1.bf16.msra.mxu0 0
    %1118 = vmatprep.subr.bf16.mxu0 0
    %1119 = vmatpush1.bf16.msra.mxu0 0
    %1120 = vmatprep.subr.bf16.mxu0 0
    %1121 = vmatpush1.bf16.msra.mxu0 0
    %1122 = vmatprep.subr.bf16.mxu0 0
    %1123 = vmatpush1.bf16.msra.mxu0 0
    %1124 = vmatprep.subr.bf16.mxu0 0
    %1125 = vmatpush1.bf16.msra.mxu0 0
    %1126 = vmatprep.subr.bf16.mxu0 0
    %1127 = vmatpush1.bf16.msra.mxu0 0
    %1128 = vmatprep.subr.bf16.mxu0 0
    %1129 = vmatpush1.bf16.msra.mxu0 0
    %1130 = vmatprep.mubr.bf16.mxu0 0
    %1131 = vmatmul.mubr.bf16.gmra.mrb[0].mxu0 %v1056
    %v1132 = vpop.f32.mrb[0].mxu0
    %v1133 = vadd.f32 0.0, %v1132
    %v1134 = vpop.f32.mrb[0].mxu0
    %v1135 = vadd.f32 0.0, %v1134
    %v1136 = vpop.f32.mrb[0].mxu0
    %v1137 = vpop.f32.mrb[0].mxu0
    %1138 = vdwg.mxu0
    %v1139 = vadd.f32 %v1052, %v1092
    %v1140 = vadd.f32 %v1053, %v1094
    %v1141 = vadd.f32 %v1054, %v1133
    %v1142 = vadd.f32 %v1055, %v1135
    %v1143 = vmul.f32 %v1139, 0.5
    %v1144 = vtanh.pop %v1143
    %v1145 = vmul.f32 %v1144, 0.5
    %v1146 = vadd.f32 %v1145, 0.5
    %v1147 = vmul.f32 %v1140, 0.5
    %v1148 = vtanh.pop %v1147
    %v1149 = vmul.f32 %v1148, 0.5
    %v1150 = vadd.f32 %v1149, 0.5
    %v1151 = vtanh.pop %v1141
    %v1152 = vmul.f32 %v1142, 0.5
    %v1153 = vtanh.pop %v1152
    %v1154 = vmul.f32 %v1153, 0.5
    %v1155 = vadd.f32 %v1154, 0.5
    %v1156 = vmul.f32 %v1150, %v1048
    %v1157 = vmul.f32 %v1146, %v1151
    %v1158 = vadd.f32 %v1156, %v1157
    %v1159 = vtanh.pop %v1158
    %v1160 = vmul.f32 %v1155, %v1159
    %1161 = vst [vmem:[#allocation2] sm:$0xff] %v1160
    %1162 = vst [vmem:[#allocation3] sm:$0xff] %v1158
    %s1163 = scalar_lea.vmem [#allocation4], 8
    %1164 = vst [vmem:[%s1163] sm:$0xff] %v1160
    %v1165 = vld [vmem:[#allocation2] sm:$0xff]
    %v1166 = vld [vmem:[#allocation3] sm:$0xff]
    %s1167 = smul.u32 2, 4
    %s1168 = smul.addr %s1167, 8
    %s1169 = scalar_lea.vmem [#allocation5], %s1168
    %v1170 = vld [vmem:[%s1169] sm:$0xff]
    %v1171 = vld [vmem:[%s1169 + $0x8] sm:$0xff]
    %v1172 = vld [vmem:[%s1169 + $0x10] sm:$0xff]
    %v1173 = vld [vmem:[%s1169 + $0x18] sm:$0xff]
    %v1174 = vpack.c.bf16 %v1165, %v1165
    %1175 = vmatprep.subr.bf16.mxu0 %v877
    %1176 = vmatpush1.bf16.msra.mxu0 %v876
    %1177 = vmatprep.subr.bf16.mxu0 %v881
    %1178 = vmatpush1.bf16.msra.mxu0 %v880
    %1179 = vmatprep.subr.bf16.mxu0 %v885
    %1180 = vmatpush1.bf16.msra.mxu0 %v884
    %1181 = vmatprep.subr.bf16.mxu0 %v889
    %1182 = vmatpush1.bf16.msra.mxu0 %v888
    %1183 = vmatprep.subr.bf16.mxu0 %v893
    %1184 = vmatpush1.bf16.msra.mxu0 %v892
    %1185 = vmatprep.subr.bf16.mxu0 %v897
    %1186 = vmatpush1.bf16.msra.mxu0 %v896
    %1187 = vmatprep.subr.bf16.mxu0 %v901
    %1188 = vmatpush1.bf16.msra.mxu0 %v900
    %1189 = vmatprep.subr.bf16.mxu0 %v905
    %1190 = vmatpush1.bf16.msra.mxu0 %v904
    %1191 = vmatprep.subr.bf16.mxu0 0
    %1192 = vmatpush1.bf16.msra.mxu0 0
    %1193 = vmatprep.subr.bf16.mxu0 0
    %1194 = vmatpush1.bf16.msra.mxu0 0
    %1195 = vmatprep.subr.bf16.mxu0 0
    %1196 = vmatpush1.bf16.msra.mxu0 0
    %1197 = vmatprep.subr.bf16.mxu0 0
    %1198 = vmatpush1.bf16.msra.mxu0 0
    %1199 = vmatprep.subr.bf16.mxu0 0
    %1200 = vmatpush1.bf16.msra.mxu0 0
    %1201 = vmatprep.subr.bf16.mxu0 0
    %1202 = vmatpush1.bf16.msra.mxu0 0
    %1203 = vmatprep.subr.bf16.mxu0 0
    %1204 = vmatpush1.bf16.msra.mxu0 0
    %1205 = vmatprep.subr.bf16.mxu0 0
    %1206 = vmatpush1.bf16.msra.mxu0 0
    %1207 = vmatprep.mubr.bf16.mxu0 0
    %1208 = vmatmul.mubr.bf16.gmra.mrb[0].mxu0 %v1174
    %v1209 = vpop.f32.mrb[0].mxu0
    %v1210 = vadd.f32 0.0, %v1209
    %v1211 = vpop.f32.mrb[0].mxu0
    %v1212 = vadd.f32 0.0, %v1211
    %v1213 = vpop.f32.mrb[0].mxu0
    %v1214 = vpop.f32.mrb[0].mxu0
    %1215 = vdwg.mxu0
    %1216 = vmatprep.subr.bf16.mxu0 %v879
    %1217 = vmatpush1.bf16.msra.mxu0 %v878
    %1218 = vmatprep.subr.bf16.mxu0 %v883
    %1219 = vmatpush1.bf16.msra.mxu0 %v882
    %1220 = vmatprep.subr.bf16.mxu0 %v887
    %1221 = vmatpush1.bf16.msra.mxu0 %v886
    %1222 = vmatprep.subr.bf16.mxu0 %v891
    %1223 = vmatpush1.bf16.msra.mxu0 %v890
    %1224 = vmatprep.subr.bf16.mxu0 %v895
    %1225 = vmatpush1.bf16.msra.mxu0 %v894
    %1226 = vmatprep.subr.bf16.mxu0 %v899
    %1227 = vmatpush1.bf16.msra.mxu0 %v898
    %1228 = vmatprep.subr.bf16.mxu0 %v903
    %1229 = vmatpush1.bf16.msra.mxu0 %v902
    %1230 = vmatprep.subr.bf16.mxu0 %v907
    %1231 = vmatpush1.bf16.msra.mxu0 %v906
    %1232 = vmatprep.subr.bf16.mxu0 0
    %1233 = vmatpush1.bf16.msra.mxu0 0
    %1234 = vmatprep.subr.bf16.mxu0 0
    %1235 = vmatpush1.bf16.msra.mxu0 0
    %1236 = vmatprep.subr.bf16.mxu0 0
    %1237 = vmatpush1.bf16.msra.mxu0 0
    %1238 = vmatprep.subr.bf16.mxu0 0
    %1239 = vmatpush1.bf16.msra.mxu0 0
    %1240 = vmatprep.subr.bf16.mxu0 0
    %1241 = vmatpush1.bf16.msra.mxu0 0
    %1242 = vmatprep.subr.bf16.mxu0 0
    %1243 = vmatpush1.bf16.msra.mxu0 0
    %1244 = vmatprep.subr.bf16.mxu0 0
    %1245 = vmatpush1.bf16.msra.mxu0 0
    %1246 = vmatprep.subr.bf16.mxu0 0
    %1247 = vmatpush1.bf16.msra.mxu0 0
    %1248 = vmatprep.mubr.bf16.mxu0 0
    %1249 = vmatmul.mubr.bf16.gmra.mrb[0].mxu0 %v1174
    %v1250 = vpop.f32.mrb[0].mxu0
    %v1251 = vadd.f32 0.0, %v1250
    %v1252 = vpop.f32.mrb[0].mxu0
    %v1253 = vadd.f32 0.0, %v1252
    %v1254 = vpop.f32.mrb[0].mxu0
    %v1255 = vpop.f32.mrb[0].mxu0
    %1256 = vdwg.mxu0
    %v1257 = vadd.f32 %v1170, %v1210
    %v1258 = vadd.f32 %v1171, %v1212
    %v1259 = vadd.f32 %v1172, %v1251
    %v1260 = vadd.f32 %v1173, %v1253
    %v1261 = vmul.f32 %v1257, 0.5
    %v1262 = vtanh.pop %v1261
    %v1263 = vmul.f32 %v1262, 0.5
    %v1264 = vadd.f32 %v1263, 0.5
    %v1265 = vmul.f32 %v1258, 0.5
    %v1266 = vtanh.pop %v1265
    %v1267 = vmul.f32 %v1266, 0.5
    %v1268 = vadd.f32 %v1267, 0.5
    %v1269 = vtanh.pop %v1259
    %v1270 = vmul.f32 %v1260, 0.5
    %v1271 = vtanh.pop %v1270
    %v1272 = vmul.f32 %v1271, 0.5
    %v1273 = vadd.f32 %v1272, 0.5
    %v1274 = vmul.f32 %v1268, %v1166
    %v1275 = vmul.f32 %v1264, %v1269
    %v1276 = vadd.f32 %v1274, %v1275
    %v1277 = vtanh.pop %v1276
    %v1278 = vmul.f32 %v1273, %v1277
    %1279 = vst [vmem:[#allocation2] sm:$0xff] %v1278
    %1280 = vst [vmem:[#allocation3] sm:$0xff] %v1276
    %s1281 = scalar_lea.vmem [#allocation4], 16
    %1282 = vst [vmem:[%s1281] sm:$0xff] %v1278
    %v1283 = vld [vmem:[#allocation2] sm:$0xff]
    %v1284 = vld [vmem:[#allocation3] sm:$0xff]
    %s1285 = smul.u32 3, 4
    %s1286 = smul.addr %s1285, 8
    %s1287 = scalar_lea.vmem [#allocation5], %s1286
    %v1288 = vld [vmem:[%s1287] sm:$0xff]
    %v1289 = vld [vmem:[%s1287 + $0x8] sm:$0xff]
    %v1290 = vld [vmem:[%s1287 + $0x10] sm:$0xff]
    %v1291 = vld [vmem:[%s1287 + $0x18] sm:$0xff]
    %v1292 = vpack.c.bf16 %v1283, %v1283
    %1293 = vmatprep.subr.bf16.mxu0 %v877
    %1294 = vmatpush1.bf16.msra.mxu0 %v876
    %1295 = vmatprep.subr.bf16.mxu0 %v881
    %1296 = vmatpush1.bf16.msra.mxu0 %v880
    %1297 = vmatprep.subr.bf16.mxu0 %v885
    %1298 = vmatpush1.bf16.msra.mxu0 %v884
    %1299 = vmatprep.subr.bf16.mxu0 %v889
    %1300 = vmatpush1.bf16.msra.mxu0 %v888
    %1301 = vmatprep.subr.bf16.mxu0 %v893
    %1302 = vmatpush1.bf16.msra.mxu0 %v892
    %1303 = vmatprep.subr.bf16.mxu0 %v897
    %1304 = vmatpush1.bf16.msra.mxu0 %v896
    %1305 = vmatprep.subr.bf16.mxu0 %v901
    %1306 = vmatpush1.bf16.msra.mxu0 %v900
    %1307 = vmatprep.subr.bf16.mxu0 %v905
    %1308 = vmatpush1.bf16.msra.mxu0 %v904
    %1309 = vmatprep.subr.bf16.mxu0 0
    %1310 = vmatpush1.bf16.msra.mxu0 0
    %1311 = vmatprep.subr.bf16.mxu0 0
    %1312 = vmatpush1.bf16.msra.mxu0 0
    %1313 = vmatprep.subr.bf16.mxu0 0
    %1314 = vmatpush1.bf16.msra.mxu0 0
    %1315 = vmatprep.subr.bf16.mxu0 0
    %1316 = vmatpush1.bf16.msra.mxu0 0
    %1317 = vmatprep.subr.bf16.mxu0 0
    %1318 = vmatpush1.bf16.msra.mxu0 0
    %1319 = vmatprep.subr.bf16.mxu0 0
    %1320 = vmatpush1.bf16.msra.mxu0 0
    %1321 = vmatprep.subr.bf16.mxu0 0
    %1322 = vmatpush1.bf16.msra.mxu0 0
    %1323 = vmatprep.subr.bf16.mxu0 0
    %1324 = vmatpush1.bf16.msra.mxu0 0
    %1325 = vmatprep.mubr.bf16.mxu0 0
    %1326 = vmatmul.mubr.bf16.gmra.mrb[0].mxu0 %v1292
    %v1327 = vpop.f32.mrb[0].mxu0
    %v1328 = vadd.f32 0.0, %v1327
    %v1329 = vpop.f32.mrb[0].mxu0
    %v1330 = vadd.f32 0.0, %v1329
    %v1331 = vpop.f32.mrb[0].mxu0
    %v1332 = vpop.f32.mrb[0].mxu0
    %1333 = vdwg.mxu0
    %1334 = vmatprep.subr.bf16.mxu0 %v879
    %1335 = vmatpush1.bf16.msra.mxu0 %v878
    %1336 = vmatprep.subr.bf16.mxu0 %v883
    %1337 = vmatpush1.bf16.msra.mxu0 %v882
    %1338 = vmatprep.subr.bf16.mxu0 %v887
    %1339 = vmatpush1.bf16.msra.mxu0 %v886
    %1340 = vmatprep.subr.bf16.mxu0 %v891
    %1341 = vmatpush1.bf16.msra.mxu0 %v890
    %1342 = vmatprep.subr.bf16.mxu0 %v895
    %1343 = vmatpush1.bf16.msra.mxu0 %v894
    %1344 = vmatprep.subr.bf16.mxu0 %v899
    %1345 = vmatpush1.bf16.msra.mxu0 %v898
    %1346 = vmatprep.subr.bf16.mxu0 %v903
    %1347 = vmatpush1.bf16.msra.mxu0 %v902
    %1348 = vmatprep.subr.bf16.mxu0 %v907
    %1349 = vmatpush1.bf16.msra.mxu0 %v906
    %1350 = vmatprep.subr.bf16.mxu0 0
    %1351 = vmatpush1.bf16.msra.mxu0 0
    %1352 = vmatprep.subr.bf16.mxu0 0
    %1353 = vmatpush1.bf16.msra.mxu0 0
    %1354 = vmatprep.subr.bf16.mxu0 0
    %1355 = vmatpush1.bf16.msra.mxu0 0
    %1356 = vmatprep.subr.bf16.mxu0 0
    %1357 = vmatpush1.bf16.msra.mxu0 0
    %1358 = vmatprep.subr.bf16.mxu0 0
    %1359 = vmatpush1.bf16.msra.mxu0 0
    %1360 = vmatprep.subr.bf16.mxu0 0
    %1361 = vmatpush1.bf16.msra.mxu0 0
    %1362 = vmatprep.subr.bf16.mxu0 0
    %1363 = vmatpush1.bf16.msra.mxu0 0
    %1364 = vmatprep.subr.bf16.mxu0 0
    %1365 = vmatpush1.bf16.msra.mxu0 0
    %1366 = vmatprep.mubr.bf16.mxu0 0
    %1367 = vmatmul.mubr.bf16.gmra.mrb[0].mxu0 %v1292
    %v1368 = vpop.f32.mrb[0].mxu0
    %v1369 = vadd.f32 0.0, %v1368
    %v1370 = vpop.f32.mrb[0].mxu0
    %v1371 = vadd.f32 0.0, %v1370
    %v1372 = vpop.f32.mrb[0].mxu0
    %v1373 = vpop.f32.mrb[0].mxu0
    %1374 = vdwg.mxu0
    %v1375 = vadd.f32 %v1288, %v1328
    %v1376 = vadd.f32 %v1289, %v1330
    %v1377 = vadd.f32 %v1290, %v1369
    %v1378 = vadd.f32 %v1291, %v1371
    %v1379 = vmul.f32 %v1375, 0.5
    %v1380 = vtanh.pop %v1379
    %v1381 = vmul.f32 %v1380, 0.5
    %v1382 = vadd.f32 %v1381, 0.5
    %v1383 = vmul.f32 %v1376, 0.5
    %v1384 = vtanh.pop %v1383
    %v1385 = vmul.f32 %v1384, 0.5
    %v1386 = vadd.f32 %v1385, 0.5
    %v1387 = vtanh.pop %v1377
    %v1388 = vmul.f32 %v1378, 0.5
    %v1389 = vtanh.pop %v1388
    %v1390 = vmul.f32 %v1389, 0.5
    %v1391 = vadd.f32 %v1390, 0.5
    %v1392 = vmul.f32 %v1386, %v1284
    %v1393 = vmul.f32 %v1382, %v1387
    %v1394 = vadd.f32 %v1392, %v1393
    %v1395 = vtanh.pop %v1394
    %v1396 = vmul.f32 %v1391, %v1395
    %1397 = vst [vmem:[#allocation2] sm:$0xff] %v1396
    %1398 = vst [vmem:[#allocation3] sm:$0xff] %v1394
    %s1399 = scalar_lea.vmem [#allocation4], 24
    %1400 = vst [vmem:[%s1399] sm:$0xff] %v1396
    %v1401 = vld [vmem:[#allocation2] sm:$0xff]
    %v1402 = vld [vmem:[#allocation3] sm:$0xff]
    %s1403 = smul.u32 4, 4
    %s1404 = smul.addr %s1403, 8
    %s1405 = scalar_lea.vmem [#allocation5], %s1404
    %v1406 = vld [vmem:[%s1405] sm:$0xff]
    %v1407 = vld [vmem:[%s1405 + $0x8] sm:$0xff]
    %v1408 = vld [vmem:[%s1405 + $0x10] sm:$0xff]
    %v1409 = vld [vmem:[%s1405 + $0x18] sm:$0xff]
    %v1410 = vpack.c.bf16 %v1401, %v1401
    %1411 = vmatprep.subr.bf16.mxu0 %v877
    %1412 = vmatpush1.bf16.msra.mxu0 %v876
    %1413 = vmatprep.subr.bf16.mxu0 %v881
    %1414 = vmatpush1.bf16.msra.mxu0 %v880
    %1415 = vmatprep.subr.bf16.mxu0 %v885
    %1416 = vmatpush1.bf16.msra.mxu0 %v884
    %1417 = vmatprep.subr.bf16.mxu0 %v889
    %1418 = vmatpush1.bf16.msra.mxu0 %v888
    %1419 = vmatprep.subr.bf16.mxu0 %v893
    %1420 = vmatpush1.bf16.msra.mxu0 %v892
    %1421 = vmatprep.subr.bf16.mxu0 %v897
    %1422 = vmatpush1.bf16.msra.mxu0 %v896
    %1423 = vmatprep.subr.bf16.mxu0 %v901
    %1424 = vmatpush1.bf16.msra.mxu0 %v900
    %1425 = vmatprep.subr.bf16.mxu0 %v905
    %1426 = vmatpush1.bf16.msra.mxu0 %v904
    %1427 = vmatprep.subr.bf16.mxu0 0
    %1428 = vmatpush1.bf16.msra.mxu0 0
    %1429 = vmatprep.subr.bf16.mxu0 0
    %1430 = vmatpush1.bf16.msra.mxu0 0
    %1431 = vmatprep.subr.bf16.mxu0 0
    %1432 = vmatpush1.bf16.msra.mxu0 0
    %1433 = vmatprep.subr.bf16.mxu0 0
    %1434 = vmatpush1.bf16.msra.mxu0 0
    %1435 = vmatprep.subr.bf16.mxu0 0
    %1436 = vmatpush1.bf16.msra.mxu0 0
    %1437 = vmatprep.subr.bf16.mxu0 0
    %1438 = vmatpush1.bf16.msra.mxu0 0
    %1439 = vmatprep.subr.bf16.mxu0 0
    %1440 = vmatpush1.bf16.msra.mxu0 0
    %1441 = vmatprep.subr.bf16.mxu0 0
    %1442 = vmatpush1.bf16.msra.mxu0 0
    %1443 = vmatprep.mubr.bf16.mxu0 0
    %1444 = vmatmul.mubr.bf16.gmra.mrb[0].mxu0 %v1410
    %v1445 = vpop.f32.mrb[0].mxu0
    %v1446 = vadd.f32 0.0, %v1445
    %v1447 = vpop.f32.mrb[0].mxu0
    %v1448 = vadd.f32 0.0, %v1447
    %v1449 = vpop.f32.mrb[0].mxu0
    %v1450 = vpop.f32.mrb[0].mxu0
    %1451 = vdwg.mxu0
    %1452 = vmatprep.subr.bf16.mxu0 %v879
    %1453 = vmatpush1.bf16.msra.mxu0 %v878
    %1454 = vmatprep.subr.bf16.mxu0 %v883
    %1455 = vmatpush1.bf16.msra.mxu0 %v882
    %1456 = vmatprep.subr.bf16.mxu0 %v887
    %1457 = vmatpush1.bf16.msra.mxu0 %v886
    %1458 = vmatprep.subr.bf16.mxu0 %v891
    %1459 = vmatpush1.bf16.msra.mxu0 %v890
    %1460 = vmatprep.subr.bf16.mxu0 %v895
    %1461 = vmatpush1.bf16.msra.mxu0 %v894
    %1462 = vmatprep.subr.bf16.mxu0 %v899
    %1463 = vmatpush1.bf16.msra.mxu0 %v898
    %1464 = vmatprep.subr.bf16.mxu0 %v903
    %1465 = vmatpush1.bf16.msra.mxu0 %v902
    %1466 = vmatprep.subr.bf16.mxu0 %v907
    %1467 = vmatpush1.bf16.msra.mxu0 %v906
    %1468 = vmatprep.subr.bf16.mxu0 0
    %1469 = vmatpush1.bf16.msra.mxu0 0
    %1470 = vmatprep.subr.bf16.mxu0 0
    %1471 = vmatpush1.bf16.msra.mxu0 0
    %1472 = vmatprep.subr.bf16.mxu0 0
    %1473 = vmatpush1.bf16.msra.mxu0 0
    %1474 = vmatprep.subr.bf16.mxu0 0
    %1475 = vmatpush1.bf16.msra.mxu0 0
    %1476 = vmatprep.subr.bf16.mxu0 0
    %1477 = vmatpush1.bf16.msra.mxu0 0
    %1478 = vmatprep.subr.bf16.mxu0 0
    %1479 = vmatpush1.bf16.msra.mxu0 0
    %1480 = vmatprep.subr.bf16.mxu0 0
    %1481 = vmatpush1.bf16.msra.mxu0 0
    %1482 = vmatprep.subr.bf16.mxu0 0
    %1483 = vmatpush1.bf16.msra.mxu0 0
    %1484 = vmatprep.mubr.bf16.mxu0 0
    %1485 = vmatmul.mubr.bf16.gmra.mrb[0].mxu0 %v1410
    %v1486 = vpop.f32.mrb[0].mxu0
    %v1487 = vadd.f32 0.0, %v1486
    %v1488 = vpop.f32.mrb[0].mxu0
    %v1489 = vadd.f32 0.0, %v1488
    %v1490 = vpop.f32.mrb[0].mxu0
    %v1491 = vpop.f32.mrb[0].mxu0
    %1492 = vdwg.mxu0
    %v1493 = vadd.f32 %v1406, %v1446
    %v1494 = vadd.f32 %v1407, %v1448
    %v1495 = vadd.f32 %v1408, %v1487
    %v1496 = vadd.f32 %v1409, %v1489
    %v1497 = vmul.f32 %v1493, 0.5
    %v1498 = vtanh.pop %v1497
    %v1499 = vmul.f32 %v1498, 0.5
    %v1500 = vadd.f32 %v1499, 0.5
    %v1501 = vmul.f32 %v1494, 0.5
    %v1502 = vtanh.pop %v1501
    %v1503 = vmul.f32 %v1502, 0.5
    %v1504 = vadd.f32 %v1503, 0.5
    %v1505 = vtanh.pop %v1495
    %v1506 = vmul.f32 %v1496, 0.5
    %v1507 = vtanh.pop %v1506
    %v1508 = vmul.f32 %v1507, 0.5
    %v1509 = vadd.f32 %v1508, 0.5
    %v1510 = vmul.f32 %v1504, %v1402
    %v1511 = vmul.f32 %v1500, %v1505
    %v1512 = vadd.f32 %v1510, %v1511
    %v1513 = vtanh.pop %v1512
    %v1514 = vmul.f32 %v1509, %v1513
    %1515 = vst [vmem:[#allocation2] sm:$0xff] %v1514
    %1516 = vst [vmem:[#allocation3] sm:$0xff] %v1512
    %s1517 = scalar_lea.vmem [#allocation4], 32
    %1518 = vst [vmem:[%s1517] sm:$0xff] %v1514
    %v1519 = vld [vmem:[#allocation2] sm:$0xff]
    %v1520 = vld [vmem:[#allocation3] sm:$0xff]
    %s1521 = smul.u32 5, 4
    %s1522 = smul.addr %s1521, 8
    %s1523 = scalar_lea.vmem [#allocation5], %s1522
    %v1524 = vld [vmem:[%s1523] sm:$0xff]
    %v1525 = vld [vmem:[%s1523 + $0x8] sm:$0xff]
    %v1526 = vld [vmem:[%s1523 + $0x10] sm:$0xff]
    %v1527 = vld [vmem:[%s1523 + $0x18] sm:$0xff]
    %v1528 = vpack.c.bf16 %v1519, %v1519
    %1529 = vmatprep.subr.bf16.mxu0 %v877
    %1530 = vmatpush1.bf16.msra.mxu0 %v876
    %1531 = vmatprep.subr.bf16.mxu0 %v881
    %1532 = vmatpush1.bf16.msra.mxu0 %v880
    %1533 = vmatprep.subr.bf16.mxu0 %v885
    %1534 = vmatpush1.bf16.msra.mxu0 %v884
    %1535 = vmatprep.subr.bf16.mxu0 %v889
    %1536 = vmatpush1.bf16.msra.mxu0 %v888
    %1537 = vmatprep.subr.bf16.mxu0 %v893
    %1538 = vmatpush1.bf16.msra.mxu0 %v892
    %1539 = vmatprep.subr.bf16.mxu0 %v897
    %1540 = vmatpush1.bf16.msra.mxu0 %v896
    %1541 = vmatprep.subr.bf16.mxu0 %v901
    %1542 = vmatpush1.bf16.msra.mxu0 %v900
    %1543 = vmatprep.subr.bf16.mxu0 %v905
    %1544 = vmatpush1.bf16.msra.mxu0 %v904
    %1545 = vmatprep.subr.bf16.mxu0 0
    %1546 = vmatpush1.bf16.msra.mxu0 0
    %1547 = vmatprep.subr.bf16.mxu0 0
    %1548 = vmatpush1.bf16.msra.mxu0 0
    %1549 = vmatprep.subr.bf16.mxu0 0
    %1550 = vmatpush1.bf16.msra.mxu0 0
    %1551 = vmatprep.subr.bf16.mxu0 0
    %1552 = vmatpush1.bf16.msra.mxu0 0
    %1553 = vmatprep.subr.bf16.mxu0 0
    %1554 = vmatpush1.bf16.msra.mxu0 0
    %1555 = vmatprep.subr.bf16.mxu0 0
    %1556 = vmatpush1.bf16.msra.mxu0 0
    %1557 = vmatprep.subr.bf16.mxu0 0
    %1558 = vmatpush1.bf16.msra.mxu0 0
    %1559 = vmatprep.subr.bf16.mxu0 0
    %1560 = vmatpush1.bf16.msra.mxu0 0
    %1561 = vmatprep.mubr.bf16.mxu0 0
    %1562 = vmatmul.mubr.bf16.gmra.mrb[0].mxu0 %v1528
    %v1563 = vpop.f32.mrb[0].mxu0
    %v1564 = vadd.f32 0.0, %v1563
    %v1565 = vpop.f32.mrb[0].mxu0
    %v1566 = vadd.f32 0.0, %v1565
    %v1567 = vpop.f32.mrb[0].mxu0
    %v1568 = vpop.f32.mrb[0].mxu0
    %1569 = vdwg.mxu0
    %1570 = vmatprep.subr.bf16.mxu0 %v879
    %1571 = vmatpush1.bf16.msra.mxu0 %v878
    %1572 = vmatprep.subr.bf16.mxu0 %v883
    %1573 = vmatpush1.bf16.msra.mxu0 %v882
    %1574 = vmatprep.subr.bf16.mxu0 %v887
    %1575 = vmatpush1.bf16.msra.mxu0 %v886
    %1576 = vmatprep.subr.bf16.mxu0 %v891
    %1577 = vmatpush1.bf16.msra.mxu0 %v890
    %1578 = vmatprep.subr.bf16.mxu0 %v895
    %1579 = vmatpush1.bf16.msra.mxu0 %v894
    %1580 = vmatprep.subr.bf16.mxu0 %v899
    %1581 = vmatpush1.bf16.msra.mxu0 %v898
    %1582 = vmatprep.subr.bf16.mxu0 %v903
    %1583 = vmatpush1.bf16.msra.mxu0 %v902
    %1584 = vmatprep.subr.bf16.mxu0 %v907
    %1585 = vmatpush1.bf16.msra.mxu0 %v906
    %1586 = vmatprep.subr.bf16.mxu0 0
    %1587 = vmatpush1.bf16.msra.mxu0 0
    %1588 = vmatprep.subr.bf16.mxu0 0
    %1589 = vmatpush1.bf16.msra.mxu0 0
    %1590 = vmatprep.subr.bf16.mxu0 0
    %1591 = vmatpush1.bf16.msra.mxu0 0
    %1592 = vmatprep.subr.bf16.mxu0 0
    %1593 = vmatpush1.bf16.msra.mxu0 0
    %1594 = vmatprep.subr.bf16.mxu0 0
    %1595 = vmatpush1.bf16.msra.mxu0 0
    %1596 = vmatprep.subr.bf16.mxu0 0
    %1597 = vmatpush1.bf16.msra.mxu0 0
    %1598 = vmatprep.subr.bf16.mxu0 0
    %1599 = vmatpush1.bf16.msra.mxu0 0
    %1600 = vmatprep.subr.bf16.mxu0 0
    %1601 = vmatpush1.bf16.msra.mxu0 0
    %1602 = vmatprep.mubr.bf16.mxu0 0
    %1603 = vmatmul.mubr.bf16.gmra.mrb[0].mxu0 %v1528
    %v1604 = vpop.f32.mrb[0].mxu0
    %v1605 = vadd.f32 0.0, %v1604
    %v1606 = vpop.f32.mrb[0].mxu0
    %v1607 = vadd.f32 0.0, %v1606
    %v1608 = vpop.f32.mrb[0].mxu0
    %v1609 = vpop.f32.mrb[0].mxu0
    %1610 = vdwg.mxu0
    %v1611 = vadd.f32 %v1524, %v1564
    %v1612 = vadd.f32 %v1525, %v1566
    %v1613 = vadd.f32 %v1526, %v1605
    %v1614 = vadd.f32 %v1527, %v1607
    %v1615 = vmul.f32 %v1611, 0.5
    %v1616 = vtanh.pop %v1615
    %v1617 = vmul.f32 %v1616, 0.5
    %v1618 = vadd.f32 %v1617, 0.5
    %v1619 = vmul.f32 %v1612, 0.5
    %v1620 = vtanh.pop %v1619
    %v1621 = vmul.f32 %v1620, 0.5
    %v1622 = vadd.f32 %v1621, 0.5
    %v1623 = vtanh.pop %v1613
    %v1624 = vmul.f32 %v1614, 0.5
    %v1625 = vtanh.pop %v1624
    %v1626 = vmul.f32 %v1625, 0.5
    %v1627 = vadd.f32 %v1626, 0.5
    %v1628 = vmul.f32 %v1622, %v1520
    %v1629 = vmul.f32 %v1618, %v1623
    %v1630 = vadd.f32 %v1628, %v1629
    %v1631 = vtanh.pop %v1630
    %v1632 = vmul.f32 %v1627, %v1631
    %1633 = vst [vmem:[#allocation2] sm:$0xff] %v1632
    %1634 = vst [vmem:[#allocation3] sm:$0xff] %v1630
    %s1635 = scalar_lea.vmem [#allocation4], 40
    %1636 = vst [vmem:[%s1635] sm:$0xff] %v1632
    %v1637 = vld [vmem:[#allocation2] sm:$0xff]
    %v1638 = vld [vmem:[#allocation3] sm:$0xff]
    %s1639 = smul.u32 6, 4
    %s1640 = smul.addr %s1639, 8
    %s1641 = scalar_lea.vmem [#allocation5], %s1640
    %v1642 = vld [vmem:[%s1641] sm:$0xff]
    %v1643 = vld [vmem:[%s1641 + $0x8] sm:$0xff]
    %v1644 = vld [vmem:[%s1641 + $0x10] sm:$0xff]
    %v1645 = vld [vmem:[%s1641 + $0x18] sm:$0xff]
    %v1646 = vpack.c.bf16 %v1637, %v1637
    %1647 = vmatprep.subr.bf16.mxu0 %v877
    %1648 = vmatpush1.bf16.msra.mxu0 %v876
    %1649 = vmatprep.subr.bf16.mxu0 %v881
    %1650 = vmatpush1.bf16.msra.mxu0 %v880
    %1651 = vmatprep.subr.bf16.mxu0 %v885
    %1652 = vmatpush1.bf16.msra.mxu0 %v884
    %1653 = vmatprep.subr.bf16.mxu0 %v889
    %1654 = vmatpush1.bf16.msra.mxu0 %v888
    %1655 = vmatprep.subr.bf16.mxu0 %v893
    %1656 = vmatpush1.bf16.msra.mxu0 %v892
    %1657 = vmatprep.subr.bf16.mxu0 %v897
    %1658 = vmatpush1.bf16.msra.mxu0 %v896
    %1659 = vmatprep.subr.bf16.mxu0 %v901
    %1660 = vmatpush1.bf16.msra.mxu0 %v900
    %1661 = vmatprep.subr.bf16.mxu0 %v905
    %1662 = vmatpush1.bf16.msra.mxu0 %v904
    %1663 = vmatprep.subr.bf16.mxu0 0
    %1664 = vmatpush1.bf16.msra.mxu0 0
    %1665 = vmatprep.subr.bf16.mxu0 0
    %1666 = vmatpush1.bf16.msra.mxu0 0
    %1667 = vmatprep.subr.bf16.mxu0 0
    %1668 = vmatpush1.bf16.msra.mxu0 0
    %1669 = vmatprep.subr.bf16.mxu0 0
    %1670 = vmatpush1.bf16.msra.mxu0 0
    %1671 = vmatprep.subr.bf16.mxu0 0
    %1672 = vmatpush1.bf16.msra.mxu0 0
    %1673 = vmatprep.subr.bf16.mxu0 0
    %1674 = vmatpush1.bf16.msra.mxu0 0
    %1675 = vmatprep.subr.bf16.mxu0 0
    %1676 = vmatpush1.bf16.msra.mxu0 0
    %1677 = vmatprep.subr.bf16.mxu0 0
    %1678 = vmatpush1.bf16.msra.mxu0 0
    %1679 = vmatprep.mubr.bf16.mxu0 0
    %1680 = vmatmul.mubr.bf16.gmra.mrb[0].mxu0 %v1646
    %v1681 = vpop.f32.mrb[0].mxu0
    %v1682 = vadd.f32 0.0, %v1681
    %v1683 = vpop.f32.mrb[0].mxu0
    %v1684 = vadd.f32 0.0, %v1683
    %v1685 = vpop.f32.mrb[0].mxu0
    %v1686 = vpop.f32.mrb[0].mxu0
    %1687 = vdwg.mxu0
    %1688 = vmatprep.subr.bf16.mxu0 %v879
    %1689 = vmatpush1.bf16.msra.mxu0 %v878
    %1690 = vmatprep.subr.bf16.mxu0 %v883
    %1691 = vmatpush1.bf16.msra.mxu0 %v882
    %1692 = vmatprep.subr.bf16.mxu0 %v887
    %1693 = vmatpush1.bf16.msra.mxu0 %v886
    %1694 = vmatprep.subr.bf16.mxu0 %v891
    %1695 = vmatpush1.bf16.msra.mxu0 %v890
    %1696 = vmatprep.subr.bf16.mxu0 %v895
    %1697 = vmatpush1.bf16.msra.mxu0 %v894
    %1698 = vmatprep.subr.bf16.mxu0 %v899
    %1699 = vmatpush1.bf16.msra.mxu0 %v898
    %1700 = vmatprep.subr.bf16.mxu0 %v903
    %1701 = vmatpush1.bf16.msra.mxu0 %v902
    %1702 = vmatprep.subr.bf16.mxu0 %v907
    %1703 = vmatpush1.bf16.msra.mxu0 %v906
    %1704 = vmatprep.subr.bf16.mxu0 0
    %1705 = vmatpush1.bf16.msra.mxu0 0
    %1706 = vmatprep.subr.bf16.mxu0 0
    %1707 = vmatpush1.bf16.msra.mxu0 0
    %1708 = vmatprep.subr.bf16.mxu0 0
    %1709 = vmatpush1.bf16.msra.mxu0 0
    %1710 = vmatprep.subr.bf16.mxu0 0
    %1711 = vmatpush1.bf16.msra.mxu0 0
    %1712 = vmatprep.subr.bf16.mxu0 0
    %1713 = vmatpush1.bf16.msra.mxu0 0
    %1714 = vmatprep.subr.bf16.mxu0 0
    %1715 = vmatpush1.bf16.msra.mxu0 0
    %1716 = vmatprep.subr.bf16.mxu0 0
    %1717 = vmatpush1.bf16.msra.mxu0 0
    %1718 = vmatprep.subr.bf16.mxu0 0
    %1719 = vmatpush1.bf16.msra.mxu0 0
    %1720 = vmatprep.mubr.bf16.mxu0 0
    %1721 = vmatmul.mubr.bf16.gmra.mrb[0].mxu0 %v1646
    %v1722 = vpop.f32.mrb[0].mxu0
    %v1723 = vadd.f32 0.0, %v1722
    %v1724 = vpop.f32.mrb[0].mxu0
    %v1725 = vadd.f32 0.0, %v1724
    %v1726 = vpop.f32.mrb[0].mxu0
    %v1727 = vpop.f32.mrb[0].mxu0
    %1728 = vdwg.mxu0
    %v1729 = vadd.f32 %v1642, %v1682
    %v1730 = vadd.f32 %v1643, %v1684
    %v1731 = vadd.f32 %v1644, %v1723
    %v1732 = vadd.f32 %v1645, %v1725
    %v1733 = vmul.f32 %v1729, 0.5
    %v1734 = vtanh.pop %v1733
    %v1735 = vmul.f32 %v1734, 0.5
    %v1736 = vadd.f32 %v1735, 0.5
    %v1737 = vmul.f32 %v1730, 0.5
    %v1738 = vtanh.pop %v1737
    %v1739 = vmul.f32 %v1738, 0.5
    %v1740 = vadd.f32 %v1739, 0.5
    %v1741 = vtanh.pop %v1731
    %v1742 = vmul.f32 %v1732, 0.5
    %v1743 = vtanh.pop %v1742
    %v1744 = vmul.f32 %v1743, 0.5
    %v1745 = vadd.f32 %v1744, 0.5
    %v1746 = vmul.f32 %v1740, %v1638
    %v1747 = vmul.f32 %v1736, %v1741
    %v1748 = vadd.f32 %v1746, %v1747
    %v1749 = vtanh.pop %v1748
    %v1750 = vmul.f32 %v1745, %v1749
    %1751 = vst [vmem:[#allocation2] sm:$0xff] %v1750
    %1752 = vst [vmem:[#allocation3] sm:$0xff] %v1748
    %s1753 = scalar_lea.vmem [#allocation4], 48
    %1754 = vst [vmem:[%s1753] sm:$0xff] %v1750
    %v1755 = vld [vmem:[#allocation2] sm:$0xff]
    %v1756 = vld [vmem:[#allocation3] sm:$0xff]
    %s1757 = smul.u32 7, 4
    %s1758 = smul.addr %s1757, 8
    %s1759 = scalar_lea.vmem [#allocation5], %s1758
    %v1760 = vld [vmem:[%s1759] sm:$0xff]
    %v1761 = vld [vmem:[%s1759 + $0x8] sm:$0xff]
    %v1762 = vld [vmem:[%s1759 + $0x10] sm:$0xff]
    %v1763 = vld [vmem:[%s1759 + $0x18] sm:$0xff]
    %v1764 = vpack.c.bf16 %v1755, %v1755
    %1765 = vmatprep.subr.bf16.mxu0 %v877
    %1766 = vmatpush1.bf16.msra.mxu0 %v876
    %1767 = vmatprep.subr.bf16.mxu0 %v881
    %1768 = vmatpush1.bf16.msra.mxu0 %v880
    %1769 = vmatprep.subr.bf16.mxu0 %v885
    %1770 = vmatpush1.bf16.msra.mxu0 %v884
    %1771 = vmatprep.subr.bf16.mxu0 %v889
    %1772 = vmatpush1.bf16.msra.mxu0 %v888
    %1773 = vmatprep.subr.bf16.mxu0 %v893
    %1774 = vmatpush1.bf16.msra.mxu0 %v892
    %1775 = vmatprep.subr.bf16.mxu0 %v897
    %1776 = vmatpush1.bf16.msra.mxu0 %v896
    %1777 = vmatprep.subr.bf16.mxu0 %v901
    %1778 = vmatpush1.bf16.msra.mxu0 %v900
    %1779 = vmatprep.subr.bf16.mxu0 %v905
    %1780 = vmatpush1.bf16.msra.mxu0 %v904
    %1781 = vmatprep.subr.bf16.mxu0 0
    %1782 = vmatpush1.bf16.msra.mxu0 0
    %1783 = vmatprep.subr.bf16.mxu0 0
    %1784 = vmatpush1.bf16.msra.mxu0 0
    %1785 = vmatprep.subr.bf16.mxu0 0
    %1786 = vmatpush1.bf16.msra.mxu0 0
    %1787 = vmatprep.subr.bf16.mxu0 0
    %1788 = vmatpush1.bf16.msra.mxu0 0
    %1789 = vmatprep.subr.bf16.mxu0 0
    %1790 = vmatpush1.bf16.msra.mxu0 0
    %1791 = vmatprep.subr.bf16.mxu0 0
    %1792 = vmatpush1.bf16.msra.mxu0 0
    %1793 = vmatprep.subr.bf16.mxu0 0
    %1794 = vmatpush1.bf16.msra.mxu0 0
    %1795 = vmatprep.subr.bf16.mxu0 0
    %1796 = vmatpush1.bf16.msra.mxu0 0
    %1797 = vmatprep.mubr.bf16.mxu0 0
    %1798 = vmatmul.mubr.bf16.gmra.mrb[0].mxu0 %v1764
    %v1799 = vpop.f32.mrb[0].mxu0
    %v1800 = vadd.f32 0.0, %v1799
    %v1801 = vpop.f32.mrb[0].mxu0
    %v1802 = vadd.f32 0.0, %v1801
    %v1803 = vpop.f32.mrb[0].mxu0
    %v1804 = vpop.f32.mrb[0].mxu0
    %1805 = vdwg.mxu0
    %1806 = vmatprep.subr.bf16.mxu0 %v879
    %1807 = vmatpush1.bf16.msra.mxu0 %v878
    %1808 = vmatprep.subr.bf16.mxu0 %v883
    %1809 = vmatpush1.bf16.msra.mxu0 %v882
    %1810 = vmatprep.subr.bf16.mxu0 %v887
    %1811 = vmatpush1.bf16.msra.mxu0 %v886
    %1812 = vmatprep.subr.bf16.mxu0 %v891
    %1813 = vmatpush1.bf16.msra.mxu0 %v890
    %1814 = vmatprep.subr.bf16.mxu0 %v895
    %1815 = vmatpush1.bf16.msra.mxu0 %v894
    %1816 = vmatprep.subr.bf16.mxu0 %v899
    %1817 = vmatpush1.bf16.msra.mxu0 %v898
    %1818 = vmatprep.subr.bf16.mxu0 %v903
    %1819 = vmatpush1.bf16.msra.mxu0 %v902
    %1820 = vmatprep.subr.bf16.mxu0 %v907
    %1821 = vmatpush1.bf16.msra.mxu0 %v906
    %1822 = vmatprep.subr.bf16.mxu0 0
    %1823 = vmatpush1.bf16.msra.mxu0 0
    %1824 = vmatprep.subr.bf16.mxu0 0
    %1825 = vmatpush1.bf16.msra.mxu0 0
    %1826 = vmatprep.subr.bf16.mxu0 0
    %1827 = vmatpush1.bf16.msra.mxu0 0
    %1828 = vmatprep.subr.bf16.mxu0 0
    %1829 = vmatpush1.bf16.msra.mxu0 0
    %1830 = vmatprep.subr.bf16.mxu0 0
    %1831 = vmatpush1.bf16.msra.mxu0 0
    %1832 = vmatprep.subr.bf16.mxu0 0
    %1833 = vmatpush1.bf16.msra.mxu0 0
    %1834 = vmatprep.subr.bf16.mxu0 0
    %1835 = vmatpush1.bf16.msra.mxu0 0
    %1836 = vmatprep.subr.bf16.mxu0 0
    %1837 = vmatpush1.bf16.msra.mxu0 0
    %1838 = vmatprep.mubr.bf16.mxu0 0
    %1839 = vmatmul.mubr.bf16.gmra.mrb[0].mxu0 %v1764
    %v1840 = vpop.f32.mrb[0].mxu0
    %v1841 = vadd.f32 0.0, %v1840
    %v1842 = vpop.f32.mrb[0].mxu0
    %v1843 = vadd.f32 0.0, %v1842
    %v1844 = vpop.f32.mrb[0].mxu0
    %v1845 = vpop.f32.mrb[0].mxu0
    %1846 = vdwg.mxu0
    %v1847 = vadd.f32 %v1760, %v1800
    %v1848 = vadd.f32 %v1761, %v1802
    %v1849 = vadd.f32 %v1762, %v1841
    %v1850 = vadd.f32 %v1763, %v1843
    %v1851 = vmul.f32 %v1847, 0.5
    %v1852 = vtanh.pop %v1851
    %v1853 = vmul.f32 %v1852, 0.5
    %v1854 = vadd.f32 %v1853, 0.5
    %v1855 = vmul.f32 %v1848, 0.5
    %v1856 = vtanh.pop %v1855
    %v1857 = vmul.f32 %v1856, 0.5
    %v1858 = vadd.f32 %v1857, 0.5
    %v1859 = vtanh.pop %v1849
    %v1860 = vmul.f32 %v1850, 0.5
    %v1861 = vtanh.pop %v1860
    %v1862 = vmul.f32 %v1861, 0.5
    %v1863 = vadd.f32 %v1862, 0.5
    %v1864 = vmul.f32 %v1858, %v1756
    %v1865 = vmul.f32 %v1854, %v1859
    %v1866 = vadd.f32 %v1864, %v1865
    %v1867 = vtanh.pop %v1866
    %v1868 = vmul.f32 %v1863, %v1867
    %1869 = vst [vmem:[#allocation2] sm:$0xff] %v1868
    %1870 = vst [vmem:[#allocation3] sm:$0xff] %v1866
    %s1871 = scalar_lea.vmem [#allocation4], 56
    %1872 = vst [vmem:[%s1871] sm:$0xff] %v1868
    %v1873 = vld [vmem:[#allocation4] sm:$0xff]
    %v1874 = vld [vmem:[#allocation4 + $0x8] sm:$0xff]
    %v1875 = vld [vmem:[#allocation4 + $0x10] sm:$0xff]
    %v1876 = vld [vmem:[#allocation4 + $0x18] sm:$0xff]
    %v1877 = vld [vmem:[#allocation4 + $0x20] sm:$0xff]
    %v1878 = vld [vmem:[#allocation4 + $0x28] sm:$0xff]
    %v1879 = vld [vmem:[#allocation4 + $0x30] sm:$0xff]
    %v1880 = vld [vmem:[#allocation4 + $0x38] sm:$0xff]
    %v1881 = vpack.c.bf16 %v1874, %v1873
    %v1882 = vpack.c.bf16 %v1876, %v1875
    %v1883 = vpack.c.bf16 %v1878, %v1877
    %v1884 = vpack.c.bf16 %v1880, %v1879
    %s1885 = scalar_lea.vmem [#allocation7], 256
    %v1886 = vld [vmem:[%s1885] sm:$0xff]
    %v1887 = vld [vmem:[%s1885 + $0x8] sm:$0xff]
    %v1888 = vld [vmem:[%s1885 + $0x10] sm:$0xff]
    %v1889 = vld [vmem:[%s1885 + $0x18] sm:$0xff]
    %v1890 = vld [vmem:[%s1885 + $0x20] sm:$0xff]
    %v1891 = vld [vmem:[%s1885 + $0x28] sm:$0xff]
    %v1892 = vld [vmem:[%s1885 + $0x30] sm:$0xff]
    %v1893 = vld [vmem:[%s1885 + $0x38] sm:$0xff]
    %v1894 = vld [vmem:[%s1885 + $0x40] sm:$0xff]
    %v1895 = vld [vmem:[%s1885 + $0x48] sm:$0xff]
    %v1896 = vld [vmem:[%s1885 + $0x50] sm:$0xff]
    %v1897 = vld [vmem:[%s1885 + $0x58] sm:$0xff]
    %v1898 = vld [vmem:[%s1885 + $0x60] sm:$0xff]
    %v1899 = vld [vmem:[%s1885 + $0x68] sm:$0xff]
    %v1900 = vld [vmem:[%s1885 + $0x70] sm:$0xff]
    %v1901 = vld [vmem:[%s1885 + $0x78] sm:$0xff]
    %v1902 = vld [vmem:[%s1885 + $0x80] sm:$0xff]
    %v1903 = vld [vmem:[%s1885 + $0x88] sm:$0xff]
    %v1904 = vld [vmem:[%s1885 + $0x90] sm:$0xff]
    %v1905 = vld [vmem:[%s1885 + $0x98] sm:$0xff]
    %v1906 = vld [vmem:[%s1885 + $0xa0] sm:$0xff]
    %v1907 = vld [vmem:[%s1885 + $0xa8] sm:$0xff]
    %v1908 = vld [vmem:[%s1885 + $0xb0] sm:$0xff]
    %v1909 = vld [vmem:[%s1885 + $0xb8] sm:$0xff]
    %v1910 = vld [vmem:[%s1885 + $0xc0] sm:$0xff]
    %v1911 = vld [vmem:[%s1885 + $0xc8] sm:$0xff]
    %v1912 = vld [vmem:[%s1885 + $0xd0] sm:$0xff]
    %v1913 = vld [vmem:[%s1885 + $0xd8] sm:$0xff]
    %v1914 = vld [vmem:[%s1885 + $0xe0] sm:$0xff]
    %v1915 = vld [vmem:[%s1885 + $0xe8] sm:$0xff]
    %v1916 = vld [vmem:[%s1885 + $0xf0] sm:$0xff]
    %v1917 = vld [vmem:[%s1885 + $0xf8] sm:$0xff]
    %s1918 = scalar_lea.vmem %s7, 4
    %v1919 = vld [vmem:[%s1918] sm:$0xf]
    %v1921 = vlaneseq
    %v1922 = vshrl.u32 %v1921, 7
    %v1923 = vsub.s32 0, %v1922
    %v1924 = vrot.slane %v1919, %v1923
    %v1925 = vlaneseq
    %v1926 = vshrl.u32 %v1925, 7
    %v1927 = vsub.s32 1, %v1926
    %v1928 = vrot.slane %v1919, %v1927
    %v1929 = vlaneseq
    %v1930 = vshrl.u32 %v1929, 7
    %v1931 = vsub.s32 2, %v1930
    %v1932 = vrot.slane %v1919, %v1931
    %v1933 = vlaneseq
    %v1934 = vshrl.u32 %v1933, 7
    %v1935 = vsub.s32 3, %v1934
    %v1936 = vrot.slane %v1919, %v1935
    %v1973 = vunpack.c.l.b16 %v1886
    %v1974 = vunpack.c.h.b16 %v1886
    %v1975 = vunpack.c.l.b16 %v1887
    %v1976 = vunpack.c.h.b16 %v1887
    %v1977 = vunpack.c.l.b16 %v1888
    %v1978 = vunpack.c.h.b16 %v1888
    %v1979 = vunpack.c.l.b16 %v1889
    %v1980 = vunpack.c.h.b16 %v1889
    %v1981 = vunpack.c.l.b16 %v1890
    %v1982 = vunpack.c.h.b16 %v1890
    %v1983 = vunpack.c.l.b16 %v1891
    %v1984 = vunpack.c.h.b16 %v1891
    %v1985 = vunpack.c.l.b16 %v1892
    %v1986 = vunpack.c.h.b16 %v1892
    %v1987 = vunpack.c.l.b16 %v1893
    %v1988 = vunpack.c.h.b16 %v1893
    %v1989 = vunpack.c.l.b16 %v1894
    %v1990 = vunpack.c.h.b16 %v1894
    %v1991 = vunpack.c.l.b16 %v1895
    %v1992 = vunpack.c.h.b16 %v1895
    %v1993 = vunpack.c.l.b16 %v1896
    %v1994 = vunpack.c.h.b16 %v1896
    %v1995 = vunpack.c.l.b16 %v1897
    %v1996 = vunpack.c.h.b16 %v1897
    %v1997 = vunpack.c.l.b16 %v1898
    %v1998 = vunpack.c.h.b16 %v1898
    %v1999 = vunpack.c.l.b16 %v1899
    %v2000 = vunpack.c.h.b16 %v1899
    %v2001 = vunpack.c.l.b16 %v1900
    %v2002 = vunpack.c.h.b16 %v1900
    %v2003 = vunpack.c.l.b16 %v1901
    %v2004 = vunpack.c.h.b16 %v1901
    %v2005 = vunpack.c.l.b16 %v1902
    %v2006 = vunpack.c.h.b16 %v1902
    %v2007 = vunpack.c.l.b16 %v1903
    %v2008 = vunpack.c.h.b16 %v1903
    %v2009 = vunpack.c.l.b16 %v1904
    %v2010 = vunpack.c.h.b16 %v1904
    %v2011 = vunpack.c.l.b16 %v1905
    %v2012 = vunpack.c.h.b16 %v1905
    %v2013 = vunpack.c.l.b16 %v1906
    %v2014 = vunpack.c.h.b16 %v1906
    %v2015 = vunpack.c.l.b16 %v1907
    %v2016 = vunpack.c.h.b16 %v1907
    %v2017 = vunpack.c.l.b16 %v1908
    %v2018 = vunpack.c.h.b16 %v1908
    %v2019 = vunpack.c.l.b16 %v1909
    %v2020 = vunpack.c.h.b16 %v1909
    %v2021 = vunpack.c.l.b16 %v1910
    %v2022 = vunpack.c.h.b16 %v1910
    %v2023 = vunpack.c.l.b16 %v1911
    %v2024 = vunpack.c.h.b16 %v1911
    %v2025 = vunpack.c.l.b16 %v1912
    %v2026 = vunpack.c.h.b16 %v1912
    %v2027 = vunpack.c.l.b16 %v1913
    %v2028 = vunpack.c.h.b16 %v1913
    %v2029 = vunpack.c.l.b16 %v1914
    %v2030 = vunpack.c.h.b16 %v1914
    %v2031 = vunpack.c.l.b16 %v1915
    %v2032 = vunpack.c.h.b16 %v1915
    %v2033 = vunpack.c.l.b16 %v1916
    %v2034 = vunpack.c.h.b16 %v1916
    %v2035 = vunpack.c.l.b16 %v1917
    %v2036 = vunpack.c.h.b16 %v1917
    %v2037 = vpack.c.b16 %v1977, %v1973
    %v2038 = vpack.c.b16 %v1978, %v1974
    %v2039 = vpack.c.b16 %v1979, %v1975
    %v2040 = vpack.c.b16 %v1980, %v1976
    %v2041 = vpack.c.b16 %v1985, %v1981
    %v2042 = vpack.c.b16 %v1986, %v1982
    %v2043 = vpack.c.b16 %v1987, %v1983
    %v2044 = vpack.c.b16 %v1988, %v1984
    %v2045 = vpack.c.b16 %v1993, %v1989
    %v2046 = vpack.c.b16 %v1994, %v1990
    %v2047 = vpack.c.b16 %v1995, %v1991
    %v2048 = vpack.c.b16 %v1996, %v1992
    %v2049 = vpack.c.b16 %v2001, %v1997
    %v2050 = vpack.c.b16 %v2002, %v1998
    %v2051 = vpack.c.b16 %v2003, %v1999
    %v2052 = vpack.c.b16 %v2004, %v2000
    %v2053 = vpack.c.b16 %v2009, %v2005
    %v2054 = vpack.c.b16 %v2010, %v2006
    %v2055 = vpack.c.b16 %v2011, %v2007
    %v2056 = vpack.c.b16 %v2012, %v2008
    %v2057 = vpack.c.b16 %v2017, %v2013
    %v2058 = vpack.c.b16 %v2018, %v2014
    %v2059 = vpack.c.b16 %v2019, %v2015
    %v2060 = vpack.c.b16 %v2020, %v2016
    %v2061 = vpack.c.b16 %v2025, %v2021
    %v2062 = vpack.c.b16 %v2026, %v2022
    %v2063 = vpack.c.b16 %v2027, %v2023
    %v2064 = vpack.c.b16 %v2028, %v2024
    %v2065 = vpack.c.b16 %v2033, %v2029
    %v2066 = vpack.c.b16 %v2034, %v2030
    %v2067 = vpack.c.b16 %v2035, %v2031
    %v2068 = vpack.c.b16 %v2036, %v2032
    %2101 = vmatprep.subr.bf16.mxu0 %v2038
    %2102 = vmatpush1.bf16.msra.mxu0 %v2037
    %2103 = vmatprep.subr.bf16.mxu0 %v2042
    %2104 = vmatpush1.bf16.msra.mxu0 %v2041
    %2105 = vmatprep.subr.bf16.mxu0 %v2046
    %2106 = vmatpush1.bf16.msra.mxu0 %v2045
    %2107 = vmatprep.subr.bf16.mxu0 %v2050
    %2108 = vmatpush1.bf16.msra.mxu0 %v2049
    %2109 = vmatprep.subr.bf16.mxu0 %v2054
    %2110 = vmatpush1.bf16.msra.mxu0 %v2053
    %2111 = vmatprep.subr.bf16.mxu0 %v2058
    %2112 = vmatpush1.bf16.msra.mxu0 %v2057
    %2113 = vmatprep.subr.bf16.mxu0 %v2062
    %2114 = vmatpush1.bf16.msra.mxu0 %v2061
    %2115 = vmatprep.subr.bf16.mxu0 %v2066
    %2116 = vmatpush1.bf16.msra.mxu0 %v2065
    %2117 = vmatprep.subr.bf16.mxu0 0
    %2118 = vmatpush1.bf16.msra.mxu0 0
    %2119 = vmatprep.subr.bf16.mxu0 0
    %2120 = vmatpush1.bf16.msra.mxu0 0
    %2121 = vmatprep.subr.bf16.mxu0 0
    %2122 = vmatpush1.bf16.msra.mxu0 0
    %2123 = vmatprep.subr.bf16.mxu0 0
    %2124 = vmatpush1.bf16.msra.mxu0 0
    %2125 = vmatprep.subr.bf16.mxu0 0
    %2126 = vmatpush1.bf16.msra.mxu0 0
    %2127 = vmatprep.subr.bf16.mxu0 0
    %2128 = vmatpush1.bf16.msra.mxu0 0
    %2129 = vmatprep.subr.bf16.mxu0 0
    %2130 = vmatpush1.bf16.msra.mxu0 0
    %2131 = vmatprep.subr.bf16.mxu0 0
    %2132 = vmatpush1.bf16.msra.mxu0 0
    %2133 = vmatprep.mubr.bf16.mxu0 0
    %2134 = vmatmul.mubr.bf16.gmra.mrb[0].mxu0 %v1881
    %v2135 = vpop.f32.mrb[0].mxu0
    %v2136 = vadd.f32 %v1924, %v2135
    %v2137 = vpop.f32.mrb[0].mxu0
    %v2138 = vadd.f32 %v1928, %v2137
    %v2139 = vpop.f32.mrb[0].mxu0
    %v2140 = vadd.f32 %v1924, %v2139
    %v2141 = vpop.f32.mrb[0].mxu0
    %v2142 = vadd.f32 %v1928, %v2141
    %2143 = vmatprep.mubr.bf16.mxu0 0
    %2144 = vmatmul.mubr.bf16.gmra.mrb[0].mxu0 %v1882
    %v2145 = vpop.f32.mrb[0].mxu0
    %v2146 = vadd.f32 %v1924, %v2145
    %v2147 = vpop.f32.mrb[0].mxu0
    %v2148 = vadd.f32 %v1928, %v2147
    %v2149 = vpop.f32.mrb[0].mxu0
    %v2150 = vadd.f32 %v1924, %v2149
    %v2151 = vpop.f32.mrb[0].mxu0
    %v2152 = vadd.f32 %v1928, %v2151
    %2153 = vmatprep.mubr.bf16.mxu0 0
    %2154 = vmatmul.mubr.bf16.gmra.mrb[0].mxu0 %v1883
    %v2155 = vpop.f32.mrb[0].mxu0
    %v2156 = vadd.f32 %v1924, %v2155
    %v2157 = vpop.f32.mrb[0].mxu0
    %v2158 = vadd.f32 %v1928, %v2157
    %v2159 = vpop.f32.mrb[0].mxu0
    %v2160 = vadd.f32 %v1924, %v2159
    %v2161 = vpop.f32.mrb[0].mxu0
    %v2162 = vadd.f32 %v1928, %v2161
    %2163 = vmatprep.mubr.bf16.mxu0 0
    %2164 = vmatmul.mubr.bf16.gmra.mrb[0].mxu0 %v1884
    %v2165 = vpop.f32.mrb[0].mxu0
    %v2166 = vadd.f32 %v1924, %v2165
    %v2167 = vpop.f32.mrb[0].mxu0
    %v2168 = vadd.f32 %v1928, %v2167
    %v2169 = vpop.f32.mrb[0].mxu0
    %v2170 = vadd.f32 %v1924, %v2169
    %v2171 = vpop.f32.mrb[0].mxu0
    %v2172 = vadd.f32 %v1928, %v2171
    %2173 = vdwg.mxu0
    %2174 = vmatprep.subr.bf16.mxu0 %v2040
    %2175 = vmatpush1.bf16.msra.mxu0 %v2039
    %2176 = vmatprep.subr.bf16.mxu0 %v2044
    %2177 = vmatpush1.bf16.msra.mxu0 %v2043
    %2178 = vmatprep.subr.bf16.mxu0 %v2048
    %2179 = vmatpush1.bf16.msra.mxu0 %v2047
    %2180 = vmatprep.subr.bf16.mxu0 %v2052
    %2181 = vmatpush1.bf16.msra.mxu0 %v2051
    %2182 = vmatprep.subr.bf16.mxu0 %v2056
    %2183 = vmatpush1.bf16.msra.mxu0 %v2055
    %2184 = vmatprep.subr.bf16.mxu0 %v2060
    %2185 = vmatpush1.bf16.msra.mxu0 %v2059
    %2186 = vmatprep.subr.bf16.mxu0 %v2064
    %2187 = vmatpush1.bf16.msra.mxu0 %v2063
    %2188 = vmatprep.subr.bf16.mxu0 %v2068
    %2189 = vmatpush1.bf16.msra.mxu0 %v2067
    %2190 = vmatprep.subr.bf16.mxu0 0
    %2191 = vmatpush1.bf16.msra.mxu0 0
    %2192 = vmatprep.subr.bf16.mxu0 0
    %2193 = vmatpush1.bf16.msra.mxu0 0
    %2194 = vmatprep.subr.bf16.mxu0 0
    %2195 = vmatpush1.bf16.msra.mxu0 0
    %2196 = vmatprep.subr.bf16.mxu0 0
    %2197 = vmatpush1.bf16.msra.mxu0 0
    %2198 = vmatprep.subr.bf16.mxu0 0
    %2199 = vmatpush1.bf16.msra.mxu0 0
    %2200 = vmatprep.subr.bf16.mxu0 0
    %2201 = vmatpush1.bf16.msra.mxu0 0
    %2202 = vmatprep.subr.bf16.mxu0 0
    %2203 = vmatpush1.bf16.msra.mxu0 0
    %2204 = vmatprep.subr.bf16.mxu0 0
    %2205 = vmatpush1.bf16.msra.mxu0 0
    %2206 = vmatprep.mubr.bf16.mxu0 0
    %2207 = vmatmul.mubr.bf16.gmra.mrb[0].mxu0 %v1881
    %v2208 = vpop.f32.mrb[0].mxu0
    %v2209 = vadd.f32 %v1932, %v2208
    %v2210 = vpop.f32.mrb[0].mxu0
    %v2211 = vadd.f32 %v1936, %v2210
    %v2212 = vpop.f32.mrb[0].mxu0
    %v2213 = vadd.f32 %v1932, %v2212
    %v2214 = vpop.f32.mrb[0].mxu0
    %v2215 = vadd.f32 %v1936, %v2214
    %2216 = vmatprep.mubr.bf16.mxu0 0
    %2217 = vmatmul.mubr.bf16.gmra.mrb[0].mxu0 %v1882
    %v2218 = vpop.f32.mrb[0].mxu0
    %v2219 = vadd.f32 %v1932, %v2218
    %v2220 = vpop.f32.mrb[0].mxu0
    %v2221 = vadd.f32 %v1936, %v2220
    %v2222 = vpop.f32.mrb[0].mxu0
    %v2223 = vadd.f32 %v1932, %v2222
    %v2224 = vpop.f32.mrb[0].mxu0
    %v2225 = vadd.f32 %v1936, %v2224
    %2226 = vmatprep.mubr.bf16.mxu0 0
    %2227 = vmatmul.mubr.bf16.gmra.mrb[0].mxu0 %v1883
    %v2228 = vpop.f32.mrb[0].mxu0
    %v2229 = vadd.f32 %v1932, %v2228
    %v2230 = vpop.f32.mrb[0].mxu0
    %v2231 = vadd.f32 %v1936, %v2230
    %v2232 = vpop.f32.mrb[0].mxu0
    %v2233 = vadd.f32 %v1932, %v2232
    %v2234 = vpop.f32.mrb[0].mxu0
    %v2235 = vadd.f32 %v1936, %v2234
    %2236 = vmatprep.mubr.bf16.mxu0 0
    %2237 = vmatmul.mubr.bf16.gmra.mrb[0].mxu0 %v1884
    %v2238 = vpop.f32.mrb[0].mxu0
    %v2239 = vadd.f32 %v1932, %v2238
    %v2240 = vpop.f32.mrb[0].mxu0
    %v2241 = vadd.f32 %v1936, %v2240
    %v2242 = vpop.f32.mrb[0].mxu0
    %v2243 = vadd.f32 %v1932, %v2242
    %v2244 = vpop.f32.mrb[0].mxu0
    %v2245 = vadd.f32 %v1936, %v2244
    %2246 = vdwg.mxu0
    %2247 = vst [vmem:[#allocation5] sm:$0xff] %v2136
    %2248 = vst [vmem:[#allocation5 + $0x8] sm:$0xff] %v2138
    %2249 = vst [vmem:[#allocation5 + $0x10] sm:$0xff] %v2209
    %2250 = vst [vmem:[#allocation5 + $0x18] sm:$0xff] %v2211
    %2251 = vst [vmem:[#allocation5 + $0x20] sm:$0xff] %v2140
    %2252 = vst [vmem:[#allocation5 + $0x28] sm:$0xff] %v2142
    %2253 = vst [vmem:[#allocation5 + $0x30] sm:$0xff] %v2213
    %2254 = vst [vmem:[#allocation5 + $0x38] sm:$0xff] %v2215
    %2255 = vst [vmem:[#allocation5 + $0x40] sm:$0xff] %v2146
    %2256 = vst [vmem:[#allocation5 + $0x48] sm:$0xff] %v2148
    %2257 = vst [vmem:[#allocation5 + $0x50] sm:$0xff] %v2219
    %2258 = vst [vmem:[#allocation5 + $0x58] sm:$0xff] %v2221
    %2259 = vst [vmem:[#allocation5 + $0x60] sm:$0xff] %v2150
    %2260 = vst [vmem:[#allocation5 + $0x68] sm:$0xff] %v2152
    %2261 = vst [vmem:[#allocation5 + $0x70] sm:$0xff] %v2223
    %2262 = vst [vmem:[#allocation5 + $0x78] sm:$0xff] %v2225
    %2263 = vst [vmem:[#allocation5 + $0x80] sm:$0xff] %v2156
    %2264 = vst [vmem:[#allocation5 + $0x88] sm:$0xff] %v2158
    %2265 = vst [vmem:[#allocation5 + $0x90] sm:$0xff] %v2229
    %2266 = vst [vmem:[#allocation5 + $0x98] sm:$0xff] %v2231
    %2267 = vst [vmem:[#allocation5 + $0xa0] sm:$0xff] %v2160
    %2268 = vst [vmem:[#allocation5 + $0xa8] sm:$0xff] %v2162
    %2269 = vst [vmem:[#allocation5 + $0xb0] sm:$0xff] %v2233
    %2270 = vst [vmem:[#allocation5 + $0xb8] sm:$0xff] %v2235
    %2271 = vst [vmem:[#allocation5 + $0xc0] sm:$0xff] %v2166
    %2272 = vst [vmem:[#allocation5 + $0xc8] sm:$0xff] %v2168
    %2273 = vst [vmem:[#allocation5 + $0xd0] sm:$0xff] %v2239
    %2274 = vst [vmem:[#allocation5 + $0xd8] sm:$0xff] %v2241
    %2275 = vst [vmem:[#allocation5 + $0xe0] sm:$0xff] %v2170
    %2276 = vst [vmem:[#allocation5 + $0xe8] sm:$0xff] %v2172
    %2277 = vst [vmem:[#allocation5 + $0xf0] sm:$0xff] %v2243
    %2278 = vst [vmem:[#allocation5 + $0xf8] sm:$0xff] %v2245
    %s2279 = scalar_lea.vmem [#allocation9], 256
    %v2280 = vld [vmem:[%s2279] sm:$0xff]
    %v2281 = vld [vmem:[%s2279 + $0x8] sm:$0xff]
    %v2282 = vld [vmem:[%s2279 + $0x10] sm:$0xff]
    %v2283 = vld [vmem:[%s2279 + $0x18] sm:$0xff]
    %v2284 = vld [vmem:[%s2279 + $0x20] sm:$0xff]
    %v2285 = vld [vmem:[%s2279 + $0x28] sm:$0xff]
    %v2286 = vld [vmem:[%s2279 + $0x30] sm:$0xff]
    %v2287 = vld [vmem:[%s2279 + $0x38] sm:$0xff]
    %v2288 = vld [vmem:[%s2279 + $0x40] sm:$0xff]
    %v2289 = vld [vmem:[%s2279 + $0x48] sm:$0xff]
    %v2290 = vld [vmem:[%s2279 + $0x50] sm:$0xff]
    %v2291 = vld [vmem:[%s2279 + $0x58] sm:$0xff]
    %v2292 = vld [vmem:[%s2279 + $0x60] sm:$0xff]
    %v2293 = vld [vmem:[%s2279 + $0x68] sm:$0xff]
    %v2294 = vld [vmem:[%s2279 + $0x70] sm:$0xff]
    %v2295 = vld [vmem:[%s2279 + $0x78] sm:$0xff]
    %v2296 = vld [vmem:[%s2279 + $0x80] sm:$0xff]
    %v2297 = vld [vmem:[%s2279 + $0x88] sm:$0xff]
    %v2298 = vld [vmem:[%s2279 + $0x90] sm:$0xff]
    %v2299 = vld [vmem:[%s2279 + $0x98] sm:$0xff]
    %v2300 = vld [vmem:[%s2279 + $0xa0] sm:$0xff]
    %v2301 = vld [vmem:[%s2279 + $0xa8] sm:$0xff]
    %v2302 = vld [vmem:[%s2279 + $0xb0] sm:$0xff]
    %v2303 = vld [vmem:[%s2279 + $0xb8] sm:$0xff]
    %v2304 = vld [vmem:[%s2279 + $0xc0] sm:$0xff]
    %v2305 = vld [vmem:[%s2279 + $0xc8] sm:$0xff]
    %v2306 = vld [vmem:[%s2279 + $0xd0] sm:$0xff]
    %v2307 = vld [vmem:[%s2279 + $0xd8] sm:$0xff]
    %v2308 = vld [vmem:[%s2279 + $0xe0] sm:$0xff]
    %v2309 = vld [vmem:[%s2279 + $0xe8] sm:$0xff]
    %v2310 = vld [vmem:[%s2279 + $0xf0] sm:$0xff]
    %v2311 = vld [vmem:[%s2279 + $0xf8] sm:$0xff]
    %s2312 = scalar_lea.vmem [#allocation2], 8
    %v2313 = vld [vmem:[%s2312] sm:$0xff]
    %s2314 = scalar_lea.vmem [#allocation3], 8
    %v2315 = vld [vmem:[%s2314] sm:$0xff]
    %v2316 = vld [vmem:[%s774] sm:$0xff]
    %v2317 = vld [vmem:[%s774 + $0x8] sm:$0xff]
    %v2318 = vld [vmem:[%s774 + $0x10] sm:$0xff]
    %v2319 = vld [vmem:[%s774 + $0x18] sm:$0xff]
    %v2320 = vpack.c.bf16 %v2313, %v2313
    %v2353 = vunpack.c.l.b16 %v2280
    %v2354 = vunpack.c.h.b16 %v2280
    %v2355 = vunpack.c.l.b16 %v2281
    %v2356 = vunpack.c.h.b16 %v2281
    %v2357 = vunpack.c.l.b16 %v2282
    %v2358 = vunpack.c.h.b16 %v2282
    %v2359 = vunpack.c.l.b16 %v2283
    %v2360 = vunpack.c.h.b16 %v2283
    %v2361 = vunpack.c.l.b16 %v2284
    %v2362 = vunpack.c.h.b16 %v2284
    %v2363 = vunpack.c.l.b16 %v2285
    %v2364 = vunpack.c.h.b16 %v2285
    %v2365 = vunpack.c.l.b16 %v2286
    %v2366 = vunpack.c.h.b16 %v2286
    %v2367 = vunpack.c.l.b16 %v2287
    %v2368 = vunpack.c.h.b16 %v2287
    %v2369 = vunpack.c.l.b16 %v2288
    %v2370 = vunpack.c.h.b16 %v2288
    %v2371 = vunpack.c.l.b16 %v2289
    %v2372 = vunpack.c.h.b16 %v2289
    %v2373 = vunpack.c.l.b16 %v2290
    %v2374 = vunpack.c.h.b16 %v2290
    %v2375 = vunpack.c.l.b16 %v2291
    %v2376 = vunpack.c.h.b16 %v2291
    %v2377 = vunpack.c.l.b16 %v2292
    %v2378 = vunpack.c.h.b16 %v2292
    %v2379 = vunpack.c.l.b16 %v2293
    %v2380 = vunpack.c.h.b16 %v2293
    %v2381 = vunpack.c.l.b16 %v2294
    %v2382 = vunpack.c.h.b16 %v2294
    %v2383 = vunpack.c.l.b16 %v2295
    %v2384 = vunpack.c.h.b16 %v2295
    %v2385 = vunpack.c.l.b16 %v2296
    %v2386 = vunpack.c.h.b16 %v2296
    %v2387 = vunpack.c.l.b16 %v2297
    %v2388 = vunpack.c.h.b16 %v2297
    %v2389 = vunpack.c.l.b16 %v2298
    %v2390 = vunpack.c.h.b16 %v2298
    %v2391 = vunpack.c.l.b16 %v2299
    %v2392 = vunpack.c.h.b16 %v2299
    %v2393 = vunpack.c.l.b16 %v2300
    %v2394 = vunpack.c.h.b16 %v2300
    %v2395 = vunpack.c.l.b16 %v2301
    %v2396 = vunpack.c.h.b16 %v2301
    %v2397 = vunpack.c.l.b16 %v2302
    %v2398 = vunpack.c.h.b16 %v2302
    %v2399 = vunpack.c.l.b16 %v2303
    %v2400 = vunpack.c.h.b16 %v2303
    %v2401 = vunpack.c.l.b16 %v2304
    %v2402 = vunpack.c.h.b16 %v2304
    %v2403 = vunpack.c.l.b16 %v2305
    %v2404 = vunpack.c.h.b16 %v2305
    %v2405 = vunpack.c.l.b16 %v2306
    %v2406 = vunpack.c.h.b16 %v2306
    %v2407 = vunpack.c.l.b16 %v2307
    %v2408 = vunpack.c.h.b16 %v2307
    %v2409 = vunpack.c.l.b16 %v2308
    %v2410 = vunpack.c.h.b16 %v2308
    %v2411 = vunpack.c.l.b16 %v2309
    %v2412 = vunpack.c.h.b16 %v2309
    %v2413 = vunpack.c.l.b16 %v2310
    %v2414 = vunpack.c.h.b16 %v2310
    %v2415 = vunpack.c.l.b16 %v2311
    %v2416 = vunpack.c.h.b16 %v2311
    %v2417 = vpack.c.b16 %v2357, %v2353
    %v2418 = vpack.c.b16 %v2358, %v2354
    %v2419 = vpack.c.b16 %v2359, %v2355
    %v2420 = vpack.c.b16 %v2360, %v2356
    %v2421 = vpack.c.b16 %v2365, %v2361
    %v2422 = vpack.c.b16 %v2366, %v2362
    %v2423 = vpack.c.b16 %v2367, %v2363
    %v2424 = vpack.c.b16 %v2368, %v2364
    %v2425 = vpack.c.b16 %v2373, %v2369
    %v2426 = vpack.c.b16 %v2374, %v2370
    %v2427 = vpack.c.b16 %v2375, %v2371
    %v2428 = vpack.c.b16 %v2376, %v2372
    %v2429 = vpack.c.b16 %v2381, %v2377
    %v2430 = vpack.c.b16 %v2382, %v2378
    %v2431 = vpack.c.b16 %v2383, %v2379
    %v2432 = vpack.c.b16 %v2384, %v2380
    %v2433 = vpack.c.b16 %v2389, %v2385
    %v2434 = vpack.c.b16 %v2390, %v2386
    %v2435 = vpack.c.b16 %v2391, %v2387
    %v2436 = vpack.c.b16 %v2392, %v2388
    %v2437 = vpack.c.b16 %v2397, %v2393
    %v2438 = vpack.c.b16 %v2398, %v2394
    %v2439 = vpack.c.b16 %v2399, %v2395
    %v2440 = vpack.c.b16 %v2400, %v2396
    %v2441 = vpack.c.b16 %v2405, %v2401
    %v2442 = vpack.c.b16 %v2406, %v2402
    %v2443 = vpack.c.b16 %v2407, %v2403
    %v2444 = vpack.c.b16 %v2408, %v2404
    %v2445 = vpack.c.b16 %v2413, %v2409
    %v2446 = vpack.c.b16 %v2414, %v2410
    %v2447 = vpack.c.b16 %v2415, %v2411
    %v2448 = vpack.c.b16 %v2416, %v2412
    %2481 = vmatprep.subr.bf16.mxu0 %v2418
    %2482 = vmatpush1.bf16.msra.mxu0 %v2417
    %2483 = vmatprep.subr.bf16.mxu0 %v2422
    %2484 = vmatpush1.bf16.msra.mxu0 %v2421
    %2485 = vmatprep.subr.bf16.mxu0 %v2426
    %2486 = vmatpush1.bf16.msra.mxu0 %v2425
    %2487 = vmatprep.subr.bf16.mxu0 %v2430
    %2488 = vmatpush1.bf16.msra.mxu0 %v2429
    %2489 = vmatprep.subr.bf16.mxu0 %v2434
    %2490 = vmatpush1.bf16.msra.mxu0 %v2433
    %2491 = vmatprep.subr.bf16.mxu0 %v2438
    %2492 = vmatpush1.bf16.msra.mxu0 %v2437
    %2493 = vmatprep.subr.bf16.mxu0 %v2442
    %2494 = vmatpush1.bf16.msra.mxu0 %v2441
    %2495 = vmatprep.subr.bf16.mxu0 %v2446
    %2496 = vmatpush1.bf16.msra.mxu0 %v2445
    %2497 = vmatprep.subr.bf16.mxu0 0
    %2498 = vmatpush1.bf16.msra.mxu0 0
    %2499 = vmatprep.subr.bf16.mxu0 0
    %2500 = vmatpush1.bf16.msra.mxu0 0
    %2501 = vmatprep.subr.bf16.mxu0 0
    %2502 = vmatpush1.bf16.msra.mxu0 0
    %2503 = vmatprep.subr.bf16.mxu0 0
    %2504 = vmatpush1.bf16.msra.mxu0 0
    %2505 = vmatprep.subr.bf16.mxu0 0
    %2506 = vmatpush1.bf16.msra.mxu0 0
    %2507 = vmatprep.subr.bf16.mxu0 0
    %2508 = vmatpush1.bf16.msra.mxu0 0
    %2509 = vmatprep.subr.bf16.mxu0 0
    %2510 = vmatpush1.bf16.msra.mxu0 0
    %2511 = vmatprep.subr.bf16.mxu0 0
    %2512 = vmatpush1.bf16.msra.mxu0 0
    %2513 = vmatprep.mubr.bf16.mxu0 0
    %2514 = vmatmul.mubr.bf16.gmra.mrb[0].mxu0 %v2320
    %v2515 = vpop.f32.mrb[0].mxu0
    %v2516 = vadd.f32 0.0, %v2515
    %v2517 = vpop.f32.mrb[0].mxu0
    %v2518 = vadd.f32 0.0, %v2517
    %v2519 = vpop.f32.mrb[0].mxu0
    %v2520 = vpop.f32.mrb[0].mxu0
    %2521 = vdwg.mxu0
    %2522 = vmatprep.subr.bf16.mxu0 %v2420
    %2523 = vmatpush1.bf16.msra.mxu0 %v2419
    %2524 = vmatprep.subr.bf16.mxu0 %v2424
    %2525 = vmatpush1.bf16.msra.mxu0 %v2423
    %2526 = vmatprep.subr.bf16.mxu0 %v2428
    %2527 = vmatpush1.bf16.msra.mxu0 %v2427
    %2528 = vmatprep.subr.bf16.mxu0 %v2432
    %2529 = vmatpush1.bf16.msra.mxu0 %v2431
    %2530 = vmatprep.subr.bf16.mxu0 %v2436
    %2531 = vmatpush1.bf16.msra.mxu0 %v2435
    %2532 = vmatprep.subr.bf16.mxu0 %v2440
    %2533 = vmatpush1.bf16.msra.mxu0 %v2439
    %2534 = vmatprep.subr.bf16.mxu0 %v2444
    %2535 = vmatpush1.bf16.msra.mxu0 %v2443
    %2536 = vmatprep.subr.bf16.mxu0 %v2448
    %2537 = vmatpush1.bf16.msra.mxu0 %v2447
    %2538 = vmatprep.subr.bf16.mxu0 0
    %2539 = vmatpush1.bf16.msra.mxu0 0
    %2540 = vmatprep.subr.bf16.mxu0 0
    %2541 = vmatpush1.bf16.msra.mxu0 0
    %2542 = vmatprep.subr.bf16.mxu0 0
    %2543 = vmatpush1.bf16.msra.mxu0 0
    %2544 = vmatprep.subr.bf16.mxu0 0
    %2545 = vmatpush1.bf16.msra.mxu0 0
    %2546 = vmatprep.subr.bf16.mxu0 0
    %2547 = vmatpush1.bf16.msra.mxu0 0
    %2548 = vmatprep.subr.bf16.mxu0 0
    %2549 = vmatpush1.bf16.msra.mxu0 0
    %2550 = vmatprep.subr.bf16.mxu0 0
    %2551 = vmatpush1.bf16.msra.mxu0 0
    %2552 = vmatprep.subr.bf16.mxu0 0
    %2553 = vmatpush1.bf16.msra.mxu0 0
    %2554 = vmatprep.mubr.bf16.mxu0 0
    %2555 = vmatmul.mubr.bf16.gmra.mrb[0].mxu0 %v2320
    %v2556 = vpop.f32.mrb[0].mxu0
    %v2557 = vadd.f32 0.0, %v2556
    %v2558 = vpop.f32.mrb[0].mxu0
    %v2559 = vadd.f32 0.0, %v2558
    %v2560 = vpop.f32.mrb[0].mxu0
    %v2561 = vpop.f32.mrb[0].mxu0
    %2562 = vdwg.mxu0
    %v2563 = vadd.f32 %v2316, %v2516
    %v2564 = vadd.f32 %v2317, %v2518
    %v2565 = vadd.f32 %v2318, %v2557
    %v2566 = vadd.f32 %v2319, %v2559
    %v2567 = vmul.f32 %v2563, 0.5
    %v2568 = vtanh.pop %v2567
    %v2569 = vmul.f32 %v2568, 0.5
    %v2570 = vadd.f32 %v2569, 0.5
    %v2571 = vmul.f32 %v2564, 0.5
    %v2572 = vtanh.pop %v2571
    %v2573 = vmul.f32 %v2572, 0.5
    %v2574 = vadd.f32 %v2573, 0.5
    %v2575 = vtanh.pop %v2565
    %v2576 = vmul.f32 %v2566, 0.5
    %v2577 = vtanh.pop %v2576
    %v2578 = vmul.f32 %v2577, 0.5
    %v2579 = vadd.f32 %v2578, 0.5
    %v2580 = vmul.f32 %v2574, %v2315
    %v2581 = vmul.f32 %v2570, %v2575
    %v2582 = vadd.f32 %v2580, %v2581
    %v2583 = vtanh.pop %v2582
    %v2584 = vmul.f32 %v2579, %v2583
    %2585 = vst [vmem:[%s2312] sm:$0xff] %v2584
    %2586 = vst [vmem:[%s2314] sm:$0xff] %v2582
    %2587 = vst [vmem:[#allocation4] sm:$0xff] %v2584
    %v2588 = vld [vmem:[%s2312] sm:$0xff]
    %v2589 = vld [vmem:[%s2314] sm:$0xff]
    %v2590 = vld [vmem:[%s1051] sm:$0xff]
    %v2591 = vld [vmem:[%s1051 + $0x8] sm:$0xff]
    %v2592 = vld [vmem:[%s1051 + $0x10] sm:$0xff]
    %v2593 = vld [vmem:[%s1051 + $0x18] sm:$0xff]
    %v2594 = vpack.c.bf16 %v2588, %v2588
    %2595 = vmatprep.subr.bf16.mxu0 %v2418
    %2596 = vmatpush1.bf16.msra.mxu0 %v2417
    %2597 = vmatprep.subr.bf16.mxu0 %v2422
    %2598 = vmatpush1.bf16.msra.mxu0 %v2421
    %2599 = vmatprep.subr.bf16.mxu0 %v2426
    %2600 = vmatpush1.bf16.msra.mxu0 %v2425
    %2601 = vmatprep.subr.bf16.mxu0 %v2430
    %2602 = vmatpush1.bf16.msra.mxu0 %v2429
    %2603 = vmatprep.subr.bf16.mxu0 %v2434
    %2604 = vmatpush1.bf16.msra.mxu0 %v2433
    %2605 = vmatprep.subr.bf16.mxu0 %v2438
    %2606 = vmatpush1.bf16.msra.mxu0 %v2437
    %2607 = vmatprep.subr.bf16.mxu0 %v2442
    %2608 = vmatpush1.bf16.msra.mxu0 %v2441
    %2609 = vmatprep.subr.bf16.mxu0 %v2446
    %2610 = vmatpush1.bf16.msra.mxu0 %v2445
    %2611 = vmatprep.subr.bf16.mxu0 0
    %2612 = vmatpush1.bf16.msra.mxu0 0
    %2613 = vmatprep.subr.bf16.mxu0 0
    %2614 = vmatpush1.bf16.msra.mxu0 0
    %2615 = vmatprep.subr.bf16.mxu0 0
    %2616 = vmatpush1.bf16.msra.mxu0 0
    %2617 = vmatprep.subr.bf16.mxu0 0
    %2618 = vmatpush1.bf16.msra.mxu0 0
    %2619 = vmatprep.subr.bf16.mxu0 0
    %2620 = vmatpush1.bf16.msra.mxu0 0
    %2621 = vmatprep.subr.bf16.mxu0 0
    %2622 = vmatpush1.bf16.msra.mxu0 0
    %2623 = vmatprep.subr.bf16.mxu0 0
    %2624 = vmatpush1.bf16.msra.mxu0 0
    %2625 = vmatprep.subr.bf16.mxu0 0
    %2626 = vmatpush1.bf16.msra.mxu0 0
    %2627 = vmatprep.mubr.bf16.mxu0 0
    %2628 = vmatmul.mubr.bf16.gmra.mrb[0].mxu0 %v2594
    %v2629 = vpop.f32.mrb[0].mxu0
    %v2630 = vadd.f32 0.0, %v2629
    %v2631 = vpop.f32.mrb[0].mxu0
    %v2632 = vadd.f32 0.0, %v2631
    %v2633 = vpop.f32.mrb[0].mxu0
    %v2634 = vpop.f32.mrb[0].mxu0
    %2635 = vdwg.mxu0
    %2636 = vmatprep.subr.bf16.mxu0 %v2420
    %2637 = vmatpush1.bf16.msra.mxu0 %v2419
    %2638 = vmatprep.subr.bf16.mxu0 %v2424
    %2639 = vmatpush1.bf16.msra.mxu0 %v2423
    %2640 = vmatprep.subr.bf16.mxu0 %v2428
    %2641 = vmatpush1.bf16.msra.mxu0 %v2427
    %2642 = vmatprep.subr.bf16.mxu0 %v2432
    %2643 = vmatpush1.bf16.msra.mxu0 %v2431
    %2644 = vmatprep.subr.bf16.mxu0 %v2436
    %2645 = vmatpush1.bf16.msra.mxu0 %v2435
    %2646 = vmatprep.subr.bf16.mxu0 %v2440
    %2647 = vmatpush1.bf16.msra.mxu0 %v2439
    %2648 = vmatprep.subr.bf16.mxu0 %v2444
    %2649 = vmatpush1.bf16.msra.mxu0 %v2443
    %2650 = vmatprep.subr.bf16.mxu0 %v2448
    %2651 = vmatpush1.bf16.msra.mxu0 %v2447
    %2652 = vmatprep.subr.bf16.mxu0 0
    %2653 = vmatpush1.bf16.msra.mxu0 0
    %2654 = vmatprep.subr.bf16.mxu0 0
    %2655 = vmatpush1.bf16.msra.mxu0 0
    %2656 = vmatprep.subr.bf16.mxu0 0
    %2657 = vmatpush1.bf16.msra.mxu0 0
    %2658 = vmatprep.subr.bf16.mxu0 0
    %2659 = vmatpush1.bf16.msra.mxu0 0
    %2660 = vmatprep.subr.bf16.mxu0 0
    %2661 = vmatpush1.bf16.msra.mxu0 0
    %2662 = vmatprep.subr.bf16.mxu0 0
    %2663 = vmatpush1.bf16.msra.mxu0 0
    %2664 = vmatprep.subr.bf16.mxu0 0
    %2665 = vmatpush1.bf16.msra.mxu0 0
    %2666 = vmatprep.subr.bf16.mxu0 0
    %2667 = vmatpush1.bf16.msra.mxu0 0
    %2668 = vmatprep.mubr.bf16.mxu0 0
    %2669 = vmatmul.mubr.bf16.gmra.mrb[0].mxu0 %v2594
    %v2670 = vpop.f32.mrb[0].mxu0
    %v2671 = vadd.f32 0.0, %v2670
    %v2672 = vpop.f32.mrb[0].mxu0
    %v2673 = vadd.f32 0.0, %v2672
    %v2674 = vpop.f32.mrb[0].mxu0
    %v2675 = vpop.f32.mrb[0].mxu0
    %2676 = vdwg.mxu0
    %v2677 = vadd.f32 %v2590, %v2630
    %v2678 = vadd.f32 %v2591, %v2632
    %v2679 = vadd.f32 %v2592, %v2671
    %v2680 = vadd.f32 %v2593, %v2673
    %v2681 = vmul.f32 %v2677, 0.5
    %v2682 = vtanh.pop %v2681
    %v2683 = vmul.f32 %v2682, 0.5
    %v2684 = vadd.f32 %v2683, 0.5
    %v2685 = vmul.f32 %v2678, 0.5
    %v2686 = vtanh.pop %v2685
    %v2687 = vmul.f32 %v2686, 0.5
    %v2688 = vadd.f32 %v2687, 0.5
    %v2689 = vtanh.pop %v2679
    %v2690 = vmul.f32 %v2680, 0.5
    %v2691 = vtanh.pop %v2690
    %v2692 = vmul.f32 %v2691, 0.5
    %v2693 = vadd.f32 %v2692, 0.5
    %v2694 = vmul.f32 %v2688, %v2589
    %v2695 = vmul.f32 %v2684, %v2689
    %v2696 = vadd.f32 %v2694, %v2695
    %v2697 = vtanh.pop %v2696
    %v2698 = vmul.f32 %v2693, %v2697
    %2699 = vst [vmem:[%s2312] sm:$0xff] %v2698
    %2700 = vst [vmem:[%s2314] sm:$0xff] %v2696
    %2701 = vst [vmem:[%s1163] sm:$0xff] %v2698
    %v2702 = vld [vmem:[%s2312] sm:$0xff]
    %v2703 = vld [vmem:[%s2314] sm:$0xff]
    %v2704 = vld [vmem:[%s1169] sm:$0xff]
    %v2705 = vld [vmem:[%s1169 + $0x8] sm:$0xff]
    %v2706 = vld [vmem:[%s1169 + $0x10] sm:$0xff]
    %v2707 = vld [vmem:[%s1169 + $0x18] sm:$0xff]
    %v2708 = vpack.c.bf16 %v2702, %v2702
    %2709 = vmatprep.subr.bf16.mxu0 %v2418
    %2710 = vmatpush1.bf16.msra.mxu0 %v2417
    %2711 = vmatprep.subr.bf16.mxu0 %v2422
    %2712 = vmatpush1.bf16.msra.mxu0 %v2421
    %2713 = vmatprep.subr.bf16.mxu0 %v2426
    %2714 = vmatpush1.bf16.msra.mxu0 %v2425
    %2715 = vmatprep.subr.bf16.mxu0 %v2430
    %2716 = vmatpush1.bf16.msra.mxu0 %v2429
    %2717 = vmatprep.subr.bf16.mxu0 %v2434
    %2718 = vmatpush1.bf16.msra.mxu0 %v2433
    %2719 = vmatprep.subr.bf16.mxu0 %v2438
    %2720 = vmatpush1.bf16.msra.mxu0 %v2437
    %2721 = vmatprep.subr.bf16.mxu0 %v2442
    %2722 = vmatpush1.bf16.msra.mxu0 %v2441
    %2723 = vmatprep.subr.bf16.mxu0 %v2446
    %2724 = vmatpush1.bf16.msra.mxu0 %v2445
    %2725 = vmatprep.subr.bf16.mxu0 0
    %2726 = vmatpush1.bf16.msra.mxu0 0
    %2727 = vmatprep.subr.bf16.mxu0 0
    %2728 = vmatpush1.bf16.msra.mxu0 0
    %2729 = vmatprep.subr.bf16.mxu0 0
    %2730 = vmatpush1.bf16.msra.mxu0 0
    %2731 = vmatprep.subr.bf16.mxu0 0
    %2732 = vmatpush1.bf16.msra.mxu0 0
    %2733 = vmatprep.subr.bf16.mxu0 0
    %2734 = vmatpush1.bf16.msra.mxu0 0
    %2735 = vmatprep.subr.bf16.mxu0 0
    %2736 = vmatpush1.bf16.msra.mxu0 0
    %2737 = vmatprep.subr.bf16.mxu0 0
    %2738 = vmatpush1.bf16.msra.mxu0 0
    %2739 = vmatprep.subr.bf16.mxu0 0
    %2740 = vmatpush1.bf16.msra.mxu0 0
    %2741 = vmatprep.mubr.bf16.mxu0 0
    %2742 = vmatmul.mubr.bf16.gmra.mrb[0].mxu0 %v2708
    %v2743 = vpop.f32.mrb[0].mxu0
    %v2744 = vadd.f32 0.0, %v2743
    %v2745 = vpop.f32.mrb[0].mxu0
    %v2746 = vadd.f32 0.0, %v2745
    %v2747 = vpop.f32.mrb[0].mxu0
    %v2748 = vpop.f32.mrb[0].mxu0
    %2749 = vdwg.mxu0
    %2750 = vmatprep.subr.bf16.mxu0 %v2420
    %2751 = vmatpush1.bf16.msra.mxu0 %v2419
    %2752 = vmatprep.subr.bf16.mxu0 %v2424
    %2753 = vmatpush1.bf16.msra.mxu0 %v2423
    %2754 = vmatprep.subr.bf16.mxu0 %v2428
    %2755 = vmatpush1.bf16.msra.mxu0 %v2427
    %2756 = vmatprep.subr.bf16.mxu0 %v2432
    %2757 = vmatpush1.bf16.msra.mxu0 %v2431
    %2758 = vmatprep.subr.bf16.mxu0 %v2436
    %2759 = vmatpush1.bf16.msra.mxu0 %v2435
    %2760 = vmatprep.subr.bf16.mxu0 %v2440
    %2761 = vmatpush1.bf16.msra.mxu0 %v2439
    %2762 = vmatprep.subr.bf16.mxu0 %v2444
    %2763 = vmatpush1.bf16.msra.mxu0 %v2443
    %2764 = vmatprep.subr.bf16.mxu0 %v2448
    %2765 = vmatpush1.bf16.msra.mxu0 %v2447
    %2766 = vmatprep.subr.bf16.mxu0 0
    %2767 = vmatpush1.bf16.msra.mxu0 0
    %2768 = vmatprep.subr.bf16.mxu0 0
    %2769 = vmatpush1.bf16.msra.mxu0 0
    %2770 = vmatprep.subr.bf16.mxu0 0
    %2771 = vmatpush1.bf16.msra.mxu0 0
    %2772 = vmatprep.subr.bf16.mxu0 0
    %2773 = vmatpush1.bf16.msra.mxu0 0
    %2774 = vmatprep.subr.bf16.mxu0 0
    %2775 = vmatpush1.bf16.msra.mxu0 0
    %2776 = vmatprep.subr.bf16.mxu0 0
    %2777 = vmatpush1.bf16.msra.mxu0 0
    %2778 = vmatprep.subr.bf16.mxu0 0
    %2779 = vmatpush1.bf16.msra.mxu0 0
    %2780 = vmatprep.subr.bf16.mxu0 0
    %2781 = vmatpush1.bf16.msra.mxu0 0
    %2782 = vmatprep.mubr.bf16.mxu0 0
    %2783 = vmatmul.mubr.bf16.gmra.mrb[0].mxu0 %v2708
    %v2784 = vpop.f32.mrb[0].mxu0
    %v2785 = vadd.f32 0.0, %v2784
    %v2786 = vpop.f32.mrb[0].mxu0
    %v2787 = vadd.f32 0.0, %v2786
    %v2788 = vpop.f32.mrb[0].mxu0
    %v2789 = vpop.f32.mrb[0].mxu0
    %2790 = vdwg.mxu0
    %v2791 = vadd.f32 %v2704, %v2744
    %v2792 = vadd.f32 %v2705, %v2746
    %v2793 = vadd.f32 %v2706, %v2785
    %v2794 = vadd.f32 %v2707, %v2787
    %v2795 = vmul.f32 %v2791, 0.5
    %v2796 = vtanh.pop %v2795
    %v2797 = vmul.f32 %v2796, 0.5
    %v2798 = vadd.f32 %v2797, 0.5
    %v2799 = vmul.f32 %v2792, 0.5
    %v2800 = vtanh.pop %v2799
    %v2801 = vmul.f32 %v2800, 0.5
    %v2802 = vadd.f32 %v2801, 0.5
    %v2803 = vtanh.pop %v2793
    %v2804 = vmul.f32 %v2794, 0.5
    %v2805 = vtanh.pop %v2804
    %v2806 = vmul.f32 %v2805, 0.5
    %v2807 = vadd.f32 %v2806, 0.5
    %v2808 = vmul.f32 %v2802, %v2703
    %v2809 = vmul.f32 %v2798, %v2803
    %v2810 = vadd.f32 %v2808, %v2809
    %v2811 = vtanh.pop %v2810
    %v2812 = vmul.f32 %v2807, %v2811
    %2813 = vst [vmem:[%s2312] sm:$0xff] %v2812
    %2814 = vst [vmem:[%s2314] sm:$0xff] %v2810
    %2815 = vst [vmem:[%s1281] sm:$0xff] %v2812
    %v2816 = vld [vmem:[%s2312] sm:$0xff]
    %v2817 = vld [vmem:[%s2314] sm:$0xff]
    %v2818 = vld [vmem:[%s1287] sm:$0xff]
    %v2819 = vld [vmem:[%s1287 + $0x8] sm:$0xff]
    %v2820 = vld [vmem:[%s1287 + $0x10] sm:$0xff]
    %v2821 = vld [vmem:[%s1287 + $0x18] sm:$0xff]
    %v2822 = vpack.c.bf16 %v2816, %v2816
    %2823 = vmatprep.subr.bf16.mxu0 %v2418
    %2824 = vmatpush1.bf16.msra.mxu0 %v2417
    %2825 = vmatprep.subr.bf16.mxu0 %v2422
    %2826 = vmatpush1.bf16.msra.mxu0 %v2421
    %2827 = vmatprep.subr.bf16.mxu0 %v2426
    %2828 = vmatpush1.bf16.msra.mxu0 %v2425
    %2829 = vmatprep.subr.bf16.mxu0 %v2430
    %2830 = vmatpush1.bf16.msra.mxu0 %v2429
    %2831 = vmatprep.subr.bf16.mxu0 %v2434
    %2832 = vmatpush1.bf16.msra.mxu0 %v2433
    %2833 = vmatprep.subr.bf16.mxu0 %v2438
    %2834 = vmatpush1.bf16.msra.mxu0 %v2437
    %2835 = vmatprep.subr.bf16.mxu0 %v2442
    %2836 = vmatpush1.bf16.msra.mxu0 %v2441
    %2837 = vmatprep.subr.bf16.mxu0 %v2446
    %2838 = vmatpush1.bf16.msra.mxu0 %v2445
    %2839 = vmatprep.subr.bf16.mxu0 0
    %2840 = vmatpush1.bf16.msra.mxu0 0
    %2841 = vmatprep.subr.bf16.mxu0 0
    %2842 = vmatpush1.bf16.msra.mxu0 0
    %2843 = vmatprep.subr.bf16.mxu0 0
    %2844 = vmatpush1.bf16.msra.mxu0 0
    %2845 = vmatprep.subr.bf16.mxu0 0
    %2846 = vmatpush1.bf16.msra.mxu0 0
    %2847 = vmatprep.subr.bf16.mxu0 0
    %2848 = vmatpush1.bf16.msra.mxu0 0
    %2849 = vmatprep.subr.bf16.mxu0 0
    %2850 = vmatpush1.bf16.msra.mxu0 0
    %2851 = vmatprep.subr.bf16.mxu0 0
    %2852 = vmatpush1.bf16.msra.mxu0 0
    %2853 = vmatprep.subr.bf16.mxu0 0
    %2854 = vmatpush1.bf16.msra.mxu0 0
    %2855 = vmatprep.mubr.bf16.mxu0 0
    %2856 = vmatmul.mubr.bf16.gmra.mrb[0].mxu0 %v2822
    %v2857 = vpop.f32.mrb[0].mxu0
    %v2858 = vadd.f32 0.0, %v2857
    %v2859 = vpop.f32.mrb[0].mxu0
    %v2860 = vadd.f32 0.0, %v2859
    %v2861 = vpop.f32.mrb[0].mxu0
    %v2862 = vpop.f32.mrb[0].mxu0
    %2863 = vdwg.mxu0
    %2864 = vmatprep.subr.bf16.mxu0 %v2420
    %2865 = vmatpush1.bf16.msra.mxu0 %v2419
    %2866 = vmatprep.subr.bf16.mxu0 %v2424
    %2867 = vmatpush1.bf16.msra.mxu0 %v2423
    %2868 = vmatprep.subr.bf16.mxu0 %v2428
    %2869 = vmatpush1.bf16.msra.mxu0 %v2427
    %2870 = vmatprep.subr.bf16.mxu0 %v2432
    %2871 = vmatpush1.bf16.msra.mxu0 %v2431
    %2872 = vmatprep.subr.bf16.mxu0 %v2436
    %2873 = vmatpush1.bf16.msra.mxu0 %v2435
    %2874 = vmatprep.subr.bf16.mxu0 %v2440
    %2875 = vmatpush1.bf16.msra.mxu0 %v2439
    %2876 = vmatprep.subr.bf16.mxu0 %v2444
    %2877 = vmatpush1.bf16.msra.mxu0 %v2443
    %2878 = vmatprep.subr.bf16.mxu0 %v2448
    %2879 = vmatpush1.bf16.msra.mxu0 %v2447
    %2880 = vmatprep.subr.bf16.mxu0 0
    %2881 = vmatpush1.bf16.msra.mxu0 0
    %2882 = vmatprep.subr.bf16.mxu0 0
    %2883 = vmatpush1.bf16.msra.mxu0 0
    %2884 = vmatprep.subr.bf16.mxu0 0
    %2885 = vmatpush1.bf16.msra.mxu0 0
    %2886 = vmatprep.subr.bf16.mxu0 0
    %2887 = vmatpush1.bf16.msra.mxu0 0
    %2888 = vmatprep.subr.bf16.mxu0 0
    %2889 = vmatpush1.bf16.msra.mxu0 0
    %2890 = vmatprep.subr.bf16.mxu0 0
    %2891 = vmatpush1.bf16.msra.mxu0 0
    %2892 = vmatprep.subr.bf16.mxu0 0
    %2893 = vmatpush1.bf16.msra.mxu0 0
    %2894 = vmatprep.subr.bf16.mxu0 0
    %2895 = vmatpush1.bf16.msra.mxu0 0
    %2896 = vmatprep.mubr.bf16.mxu0 0
    %2897 = vmatmul.mubr.bf16.gmra.mrb[0].mxu0 %v2822
    %v2898 = vpop.f32.mrb[0].mxu0
    %v2899 = vadd.f32 0.0, %v2898
    %v2900 = vpop.f32.mrb[0].mxu0
    %v2901 = vadd.f32 0.0, %v2900
    %v2902 = vpop.f32.mrb[0].mxu0
    %v2903 = vpop.f32.mrb[0].mxu0
    %2904 = vdwg.mxu0
    %v2905 = vadd.f32 %v2818, %v2858
    %v2906 = vadd.f32 %v2819, %v2860
    %v2907 = vadd.f32 %v2820, %v2899
    %v2908 = vadd.f32 %v2821, %v2901
    %v2909 = vmul.f32 %v2905, 0.5
    %v2910 = vtanh.pop %v2909
    %v2911 = vmul.f32 %v2910, 0.5
    %v2912 = vadd.f32 %v2911, 0.5
    %v2913 = vmul.f32 %v2906, 0.5
    %v2914 = vtanh.pop %v2913
    %v2915 = vmul.f32 %v2914, 0.5
    %v2916 = vadd.f32 %v2915, 0.5
    %v2917 = vtanh.pop %v2907
    %v2918 = vmul.f32 %v2908, 0.5
    %v2919 = vtanh.pop %v2918
    %v2920 = vmul.f32 %v2919, 0.5
    %v2921 = vadd.f32 %v2920, 0.5
    %v2922 = vmul.f32 %v2916, %v2817
    %v2923 = vmul.f32 %v2912, %v2917
    %v2924 = vadd.f32 %v2922, %v2923
    %v2925 = vtanh.pop %v2924
    %v2926 = vmul.f32 %v2921, %v2925
    %2927 = vst [vmem:[%s2312] sm:$0xff] %v2926
    %2928 = vst [vmem:[%s2314] sm:$0xff] %v2924
    %2929 = vst [vmem:[%s1399] sm:$0xff] %v2926
    %v2930 = vld [vmem:[%s2312] sm:$0xff]
    %v2931 = vld [vmem:[%s2314] sm:$0xff]
    %v2932 = vld [vmem:[%s1405] sm:$0xff]
    %v2933 = vld [vmem:[%s1405 + $0x8] sm:$0xff]
    %v2934 = vld [vmem:[%s1405 + $0x10] sm:$0xff]
    %v2935 = vld [vmem:[%s1405 + $0x18] sm:$0xff]
    %v2936 = vpack.c.bf16 %v2930, %v2930
    %2937 = vmatprep.subr.bf16.mxu0 %v2418
    %2938 = vmatpush1.bf16.msra.mxu0 %v2417
    %2939 = vmatprep.subr.bf16.mxu0 %v2422
    %2940 = vmatpush1.bf16.msra.mxu0 %v2421
    %2941 = vmatprep.subr.bf16.mxu0 %v2426
    %2942 = vmatpush1.bf16.msra.mxu0 %v2425
    %2943 = vmatprep.subr.bf16.mxu0 %v2430
    %2944 = vmatpush1.bf16.msra.mxu0 %v2429
    %2945 = vmatprep.subr.bf16.mxu0 %v2434
    %2946 = vmatpush1.bf16.msra.mxu0 %v2433
    %2947 = vmatprep.subr.bf16.mxu0 %v2438
    %2948 = vmatpush1.bf16.msra.mxu0 %v2437
    %2949 = vmatprep.subr.bf16.mxu0 %v2442
    %2950 = vmatpush1.bf16.msra.mxu0 %v2441
    %2951 = vmatprep.subr.bf16.mxu0 %v2446
    %2952 = vmatpush1.bf16.msra.mxu0 %v2445
    %2953 = vmatprep.subr.bf16.mxu0 0
    %2954 = vmatpush1.bf16.msra.mxu0 0
    %2955 = vmatprep.subr.bf16.mxu0 0
    %2956 = vmatpush1.bf16.msra.mxu0 0
    %2957 = vmatprep.subr.bf16.mxu0 0
    %2958 = vmatpush1.bf16.msra.mxu0 0
    %2959 = vmatprep.subr.bf16.mxu0 0
    %2960 = vmatpush1.bf16.msra.mxu0 0
    %2961 = vmatprep.subr.bf16.mxu0 0
    %2962 = vmatpush1.bf16.msra.mxu0 0
    %2963 = vmatprep.subr.bf16.mxu0 0
    %2964 = vmatpush1.bf16.msra.mxu0 0
    %2965 = vmatprep.subr.bf16.mxu0 0
    %2966 = vmatpush1.bf16.msra.mxu0 0
    %2967 = vmatprep.subr.bf16.mxu0 0
    %2968 = vmatpush1.bf16.msra.mxu0 0
    %2969 = vmatprep.mubr.bf16.mxu0 0
    %2970 = vmatmul.mubr.bf16.gmra.mrb[0].mxu0 %v2936
    %v2971 = vpop.f32.mrb[0].mxu0
    %v2972 = vadd.f32 0.0, %v2971
    %v2973 = vpop.f32.mrb[0].mxu0
    %v2974 = vadd.f32 0.0, %v2973
    %v2975 = vpop.f32.mrb[0].mxu0
    %v2976 = vpop.f32.mrb[0].mxu0
    %2977 = vdwg.mxu0
    %2978 = vmatprep.subr.bf16.mxu0 %v2420
    %2979 = vmatpush1.bf16.msra.mxu0 %v2419
    %2980 = vmatprep.subr.bf16.mxu0 %v2424
    %2981 = vmatpush1.bf16.msra.mxu0 %v2423
    %2982 = vmatprep.subr.bf16.mxu0 %v2428
    %2983 = vmatpush1.bf16.msra.mxu0 %v2427
    %2984 = vmatprep.subr.bf16.mxu0 %v2432
    %2985 = vmatpush1.bf16.msra.mxu0 %v2431
    %2986 = vmatprep.subr.bf16.mxu0 %v2436
    %2987 = vmatpush1.bf16.msra.mxu0 %v2435
    %2988 = vmatprep.subr.bf16.mxu0 %v2440
    %2989 = vmatpush1.bf16.msra.mxu0 %v2439
    %2990 = vmatprep.subr.bf16.mxu0 %v2444
    %2991 = vmatpush1.bf16.msra.mxu0 %v2443
    %2992 = vmatprep.subr.bf16.mxu0 %v2448
    %2993 = vmatpush1.bf16.msra.mxu0 %v2447
    %2994 = vmatprep.subr.bf16.mxu0 0
    %2995 = vmatpush1.bf16.msra.mxu0 0
    %2996 = vmatprep.subr.bf16.mxu0 0
    %2997 = vmatpush1.bf16.msra.mxu0 0
    %2998 = vmatprep.subr.bf16.mxu0 0
    %2999 = vmatpush1.bf16.msra.mxu0 0
    %3000 = vmatprep.subr.bf16.mxu0 0
    %3001 = vmatpush1.bf16.msra.mxu0 0
    %3002 = vmatprep.subr.bf16.mxu0 0
    %3003 = vmatpush1.bf16.msra.mxu0 0
    %3004 = vmatprep.subr.bf16.mxu0 0
    %3005 = vmatpush1.bf16.msra.mxu0 0
    %3006 = vmatprep.subr.bf16.mxu0 0
    %3007 = vmatpush1.bf16.msra.mxu0 0
    %3008 = vmatprep.subr.bf16.mxu0 0
    %3009 = vmatpush1.bf16.msra.mxu0 0
    %3010 = vmatprep.mubr.bf16.mxu0 0
    %3011 = vmatmul.mubr.bf16.gmra.mrb[0].mxu0 %v2936
    %v3012 = vpop.f32.mrb[0].mxu0
    %v3013 = vadd.f32 0.0, %v3012
    %v3014 = vpop.f32.mrb[0].mxu0
    %v3015 = vadd.f32 0.0, %v3014
    %v3016 = vpop.f32.mrb[0].mxu0
    %v3017 = vpop.f32.mrb[0].mxu0
    %3018 = vdwg.mxu0
    %v3019 = vadd.f32 %v2932, %v2972
    %v3020 = vadd.f32 %v2933, %v2974
    %v3021 = vadd.f32 %v2934, %v3013
    %v3022 = vadd.f32 %v2935, %v3015
    %v3023 = vmul.f32 %v3019, 0.5
    %v3024 = vtanh.pop %v3023
    %v3025 = vmul.f32 %v3024, 0.5
    %v3026 = vadd.f32 %v3025, 0.5
    %v3027 = vmul.f32 %v3020, 0.5
    %v3028 = vtanh.pop %v3027
    %v3029 = vmul.f32 %v3028, 0.5
    %v3030 = vadd.f32 %v3029, 0.5
    %v3031 = vtanh.pop %v3021
    %v3032 = vmul.f32 %v3022, 0.5
    %v3033 = vtanh.pop %v3032
    %v3034 = vmul.f32 %v3033, 0.5
    %v3035 = vadd.f32 %v3034, 0.5
    %v3036 = vmul.f32 %v3030, %v2931
    %v3037 = vmul.f32 %v3026, %v3031
    %v3038 = vadd.f32 %v3036, %v3037
    %v3039 = vtanh.pop %v3038
    %v3040 = vmul.f32 %v3035, %v3039
    %3041 = vst [vmem:[%s2312] sm:$0xff] %v3040
    %3042 = vst [vmem:[%s2314] sm:$0xff] %v3038
    %3043 = vst [vmem:[%s1517] sm:$0xff] %v3040
    %v3044 = vld [vmem:[%s2312] sm:$0xff]
    %v3045 = vld [vmem:[%s2314] sm:$0xff]
    %v3046 = vld [vmem:[%s1523] sm:$0xff]
    %v3047 = vld [vmem:[%s1523 + $0x8] sm:$0xff]
    %v3048 = vld [vmem:[%s1523 + $0x10] sm:$0xff]
    %v3049 = vld [vmem:[%s1523 + $0x18] sm:$0xff]
    %v3050 = vpack.c.bf16 %v3044, %v3044
    %3051 = vmatprep.subr.bf16.mxu0 %v2418
    %3052 = vmatpush1.bf16.msra.mxu0 %v2417
    %3053 = vmatprep.subr.bf16.mxu0 %v2422
    %3054 = vmatpush1.bf16.msra.mxu0 %v2421
    %3055 = vmatprep.subr.bf16.mxu0 %v2426
    %3056 = vmatpush1.bf16.msra.mxu0 %v2425
    %3057 = vmatprep.subr.bf16.mxu0 %v2430
    %3058 = vmatpush1.bf16.msra.mxu0 %v2429
    %3059 = vmatprep.subr.bf16.mxu0 %v2434
    %3060 = vmatpush1.bf16.msra.mxu0 %v2433
    %3061 = vmatprep.subr.bf16.mxu0 %v2438
    %3062 = vmatpush1.bf16.msra.mxu0 %v2437
    %3063 = vmatprep.subr.bf16.mxu0 %v2442
    %3064 = vmatpush1.bf16.msra.mxu0 %v2441
    %3065 = vmatprep.subr.bf16.mxu0 %v2446
    %3066 = vmatpush1.bf16.msra.mxu0 %v2445
    %3067 = vmatprep.subr.bf16.mxu0 0
    %3068 = vmatpush1.bf16.msra.mxu0 0
    %3069 = vmatprep.subr.bf16.mxu0 0
    %3070 = vmatpush1.bf16.msra.mxu0 0
    %3071 = vmatprep.subr.bf16.mxu0 0
    %3072 = vmatpush1.bf16.msra.mxu0 0
    %3073 = vmatprep.subr.bf16.mxu0 0
    %3074 = vmatpush1.bf16.msra.mxu0 0
    %3075 = vmatprep.subr.bf16.mxu0 0
    %3076 = vmatpush1.bf16.msra.mxu0 0
    %3077 = vmatprep.subr.bf16.mxu0 0
    %3078 = vmatpush1.bf16.msra.mxu0 0
    %3079 = vmatprep.subr.bf16.mxu0 0
    %3080 = vmatpush1.bf16.msra.mxu0 0
    %3081 = vmatprep.subr.bf16.mxu0 0
    %3082 = vmatpush1.bf16.msra.mxu0 0
    %3083 = vmatprep.mubr.bf16.mxu0 0
    %3084 = vmatmul.mubr.bf16.gmra.mrb[0].mxu0 %v3050
    %v3085 = vpop.f32.mrb[0].mxu0
    %v3086 = vadd.f32 0.0, %v3085
    %v3087 = vpop.f32.mrb[0].mxu0
    %v3088 = vadd.f32 0.0, %v3087
    %v3089 = vpop.f32.mrb[0].mxu0
    %v3090 = vpop.f32.mrb[0].mxu0
    %3091 = vdwg.mxu0
    %3092 = vmatprep.subr.bf16.mxu0 %v2420
    %3093 = vmatpush1.bf16.msra.mxu0 %v2419
    %3094 = vmatprep.subr.bf16.mxu0 %v2424
    %3095 = vmatpush1.bf16.msra.mxu0 %v2423
    %3096 = vmatprep.subr.bf16.mxu0 %v2428
    %3097 = vmatpush1.bf16.msra.mxu0 %v2427
    %3098 = vmatprep.subr.bf16.mxu0 %v2432
    %3099 = vmatpush1.bf16.msra.mxu0 %v2431
    %3100 = vmatprep.subr.bf16.mxu0 %v2436
    %3101 = vmatpush1.bf16.msra.mxu0 %v2435
    %3102 = vmatprep.subr.bf16.mxu0 %v2440
    %3103 = vmatpush1.bf16.msra.mxu0 %v2439
    %3104 = vmatprep.subr.bf16.mxu0 %v2444
    %3105 = vmatpush1.bf16.msra.mxu0 %v2443
    %3106 = vmatprep.subr.bf16.mxu0 %v2448
    %3107 = vmatpush1.bf16.msra.mxu0 %v2447
    %3108 = vmatprep.subr.bf16.mxu0 0
    %3109 = vmatpush1.bf16.msra.mxu0 0
    %3110 = vmatprep.subr.bf16.mxu0 0
    %3111 = vmatpush1.bf16.msra.mxu0 0
    %3112 = vmatprep.subr.bf16.mxu0 0
    %3113 = vmatpush1.bf16.msra.mxu0 0
    %3114 = vmatprep.subr.bf16.mxu0 0
    %3115 = vmatpush1.bf16.msra.mxu0 0
    %3116 = vmatprep.subr.bf16.mxu0 0
    %3117 = vmatpush1.bf16.msra.mxu0 0
    %3118 = vmatprep.subr.bf16.mxu0 0
    %3119 = vmatpush1.bf16.msra.mxu0 0
    %3120 = vmatprep.subr.bf16.mxu0 0
    %3121 = vmatpush1.bf16.msra.mxu0 0
    %3122 = vmatprep.subr.bf16.mxu0 0
    %3123 = vmatpush1.bf16.msra.mxu0 0
    %3124 = vmatprep.mubr.bf16.mxu0 0
    %3125 = vmatmul.mubr.bf16.gmra.mrb[0].mxu0 %v3050
    %v3126 = vpop.f32.mrb[0].mxu0
    %v3127 = vadd.f32 0.0, %v3126
    %v3128 = vpop.f32.mrb[0].mxu0
    %v3129 = vadd.f32 0.0, %v3128
    %v3130 = vpop.f32.mrb[0].mxu0
    %v3131 = vpop.f32.mrb[0].mxu0
    %3132 = vdwg.mxu0
    %v3133 = vadd.f32 %v3046, %v3086
    %v3134 = vadd.f32 %v3047, %v3088
    %v3135 = vadd.f32 %v3048, %v3127
    %v3136 = vadd.f32 %v3049, %v3129
    %v3137 = vmul.f32 %v3133, 0.5
    %v3138 = vtanh.pop %v3137
    %v3139 = vmul.f32 %v3138, 0.5
    %v3140 = vadd.f32 %v3139, 0.5
    %v3141 = vmul.f32 %v3134, 0.5
    %v3142 = vtanh.pop %v3141
    %v3143 = vmul.f32 %v3142, 0.5
    %v3144 = vadd.f32 %v3143, 0.5
    %v3145 = vtanh.pop %v3135
    %v3146 = vmul.f32 %v3136, 0.5
    %v3147 = vtanh.pop %v3146
    %v3148 = vmul.f32 %v3147, 0.5
    %v3149 = vadd.f32 %v3148, 0.5
    %v3150 = vmul.f32 %v3144, %v3045
    %v3151 = vmul.f32 %v3140, %v3145
    %v3152 = vadd.f32 %v3150, %v3151
    %v3153 = vtanh.pop %v3152
    %v3154 = vmul.f32 %v3149, %v3153
    %3155 = vst [vmem:[%s2312] sm:$0xff] %v3154
    %3156 = vst [vmem:[%s2314] sm:$0xff] %v3152
    %3157 = vst [vmem:[%s1635] sm:$0xff] %v3154
    %v3158 = vld [vmem:[%s2312] sm:$0xff]
    %v3159 = vld [vmem:[%s2314] sm:$0xff]
    %v3160 = vld [vmem:[%s1641] sm:$0xff]
    %v3161 = vld [vmem:[%s1641 + $0x8] sm:$0xff]
    %v3162 = vld [vmem:[%s1641 + $0x10] sm:$0xff]
    %v3163 = vld [vmem:[%s1641 + $0x18] sm:$0xff]
    %v3164 = vpack.c.bf16 %v3158, %v3158
    %3165 = vmatprep.subr.bf16.mxu0 %v2418
    %3166 = vmatpush1.bf16.msra.mxu0 %v2417
    %3167 = vmatprep.subr.bf16.mxu0 %v2422
    %3168 = vmatpush1.bf16.msra.mxu0 %v2421
    %3169 = vmatprep.subr.bf16.mxu0 %v2426
    %3170 = vmatpush1.bf16.msra.mxu0 %v2425
    %3171 = vmatprep.subr.bf16.mxu0 %v2430
    %3172 = vmatpush1.bf16.msra.mxu0 %v2429
    %3173 = vmatprep.subr.bf16.mxu0 %v2434
    %3174 = vmatpush1.bf16.msra.mxu0 %v2433
    %3175 = vmatprep.subr.bf16.mxu0 %v2438
    %3176 = vmatpush1.bf16.msra.mxu0 %v2437
    %3177 = vmatprep.subr.bf16.mxu0 %v2442
    %3178 = vmatpush1.bf16.msra.mxu0 %v2441
    %3179 = vmatprep.subr.bf16.mxu0 %v2446
    %3180 = vmatpush1.bf16.msra.mxu0 %v2445
    %3181 = vmatprep.subr.bf16.mxu0 0
    %3182 = vmatpush1.bf16.msra.mxu0 0
    %3183 = vmatprep.subr.bf16.mxu0 0
    %3184 = vmatpush1.bf16.msra.mxu0 0
    %3185 = vmatprep.subr.bf16.mxu0 0
    %3186 = vmatpush1.bf16.msra.mxu0 0
    %3187 = vmatprep.subr.bf16.mxu0 0
    %3188 = vmatpush1.bf16.msra.mxu0 0
    %3189 = vmatprep.subr.bf16.mxu0 0
    %3190 = vmatpush1.bf16.msra.mxu0 0
    %3191 = vmatprep.subr.bf16.mxu0 0
    %3192 = vmatpush1.bf16.msra.mxu0 0
    %3193 = vmatprep.subr.bf16.mxu0 0
    %3194 = vmatpush1.bf16.msra.mxu0 0
    %3195 = vmatprep.subr.bf16.mxu0 0
    %3196 = vmatpush1.bf16.msra.mxu0 0
    %3197 = vmatprep.mubr.bf16.mxu0 0
    %3198 = vmatmul.mubr.bf16.gmra.mrb[0].mxu0 %v3164
    %v3199 = vpop.f32.mrb[0].mxu0
    %v3200 = vadd.f32 0.0, %v3199
    %v3201 = vpop.f32.mrb[0].mxu0
    %v3202 = vadd.f32 0.0, %v3201
    %v3203 = vpop.f32.mrb[0].mxu0
    %v3204 = vpop.f32.mrb[0].mxu0
    %3205 = vdwg.mxu0
    %3206 = vmatprep.subr.bf16.mxu0 %v2420
    %3207 = vmatpush1.bf16.msra.mxu0 %v2419
    %3208 = vmatprep.subr.bf16.mxu0 %v2424
    %3209 = vmatpush1.bf16.msra.mxu0 %v2423
    %3210 = vmatprep.subr.bf16.mxu0 %v2428
    %3211 = vmatpush1.bf16.msra.mxu0 %v2427
    %3212 = vmatprep.subr.bf16.mxu0 %v2432
    %3213 = vmatpush1.bf16.msra.mxu0 %v2431
    %3214 = vmatprep.subr.bf16.mxu0 %v2436
    %3215 = vmatpush1.bf16.msra.mxu0 %v2435
    %3216 = vmatprep.subr.bf16.mxu0 %v2440
    %3217 = vmatpush1.bf16.msra.mxu0 %v2439
    %3218 = vmatprep.subr.bf16.mxu0 %v2444
    %3219 = vmatpush1.bf16.msra.mxu0 %v2443
    %3220 = vmatprep.subr.bf16.mxu0 %v2448
    %3221 = vmatpush1.bf16.msra.mxu0 %v2447
    %3222 = vmatprep.subr.bf16.mxu0 0
    %3223 = vmatpush1.bf16.msra.mxu0 0
    %3224 = vmatprep.subr.bf16.mxu0 0
    %3225 = vmatpush1.bf16.msra.mxu0 0
    %3226 = vmatprep.subr.bf16.mxu0 0
    %3227 = vmatpush1.bf16.msra.mxu0 0
    %3228 = vmatprep.subr.bf16.mxu0 0
    %3229 = vmatpush1.bf16.msra.mxu0 0
    %3230 = vmatprep.subr.bf16.mxu0 0
    %3231 = vmatpush1.bf16.msra.mxu0 0
    %3232 = vmatprep.subr.bf16.mxu0 0
    %3233 = vmatpush1.bf16.msra.mxu0 0
    %3234 = vmatprep.subr.bf16.mxu0 0
    %3235 = vmatpush1.bf16.msra.mxu0 0
    %3236 = vmatprep.subr.bf16.mxu0 0
    %3237 = vmatpush1.bf16.msra.mxu0 0
    %3238 = vmatprep.mubr.bf16.mxu0 0
    %3239 = vmatmul.mubr.bf16.gmra.mrb[0].mxu0 %v3164
    %v3240 = vpop.f32.mrb[0].mxu0
    %v3241 = vadd.f32 0.0, %v3240
    %v3242 = vpop.f32.mrb[0].mxu0
    %v3243 = vadd.f32 0.0, %v3242
    %v3244 = vpop.f32.mrb[0].mxu0
    %v3245 = vpop.f32.mrb[0].mxu0
    %3246 = vdwg.mxu0
    %v3247 = vadd.f32 %v3160, %v3200
    %v3248 = vadd.f32 %v3161, %v3202
    %v3249 = vadd.f32 %v3162, %v3241
    %v3250 = vadd.f32 %v3163, %v3243
    %v3251 = vmul.f32 %v3247, 0.5
    %v3252 = vtanh.pop %v3251
    %v3253 = vmul.f32 %v3252, 0.5
    %v3254 = vadd.f32 %v3253, 0.5
    %v3255 = vmul.f32 %v3248, 0.5
    %v3256 = vtanh.pop %v3255
    %v3257 = vmul.f32 %v3256, 0.5
    %v3258 = vadd.f32 %v3257, 0.5
    %v3259 = vtanh.pop %v3249
    %v3260 = vmul.f32 %v3250, 0.5
    %v3261 = vtanh.pop %v3260
    %v3262 = vmul.f32 %v3261, 0.5
    %v3263 = vadd.f32 %v3262, 0.5
    %v3264 = vmul.f32 %v3258, %v3159
    %v3265 = vmul.f32 %v3254, %v3259
    %v3266 = vadd.f32 %v3264, %v3265
    %v3267 = vtanh.pop %v3266
    %v3268 = vmul.f32 %v3263, %v3267
    %3269 = vst [vmem:[%s2312] sm:$0xff] %v3268
    %3270 = vst [vmem:[%s2314] sm:$0xff] %v3266
    %3271 = vst [vmem:[%s1753] sm:$0xff] %v3268
    %v3272 = vld [vmem:[%s2312] sm:$0xff]
    %v3273 = vld [vmem:[%s2314] sm:$0xff]
    %v3274 = vld [vmem:[%s1759] sm:$0xff]
    %v3275 = vld [vmem:[%s1759 + $0x8] sm:$0xff]
    %v3276 = vld [vmem:[%s1759 + $0x10] sm:$0xff]
    %v3277 = vld [vmem:[%s1759 + $0x18] sm:$0xff]
    %v3278 = vpack.c.bf16 %v3272, %v3272
    %3279 = vmatprep.subr.bf16.mxu0 %v2418
    %3280 = vmatpush1.bf16.msra.mxu0 %v2417
    %3281 = vmatprep.subr.bf16.mxu0 %v2422
    %3282 = vmatpush1.bf16.msra.mxu0 %v2421
    %3283 = vmatprep.subr.bf16.mxu0 %v2426
    %3284 = vmatpush1.bf16.msra.mxu0 %v2425
    %3285 = vmatprep.subr.bf16.mxu0 %v2430
    %3286 = vmatpush1.bf16.msra.mxu0 %v2429
    %3287 = vmatprep.subr.bf16.mxu0 %v2434
    %3288 = vmatpush1.bf16.msra.mxu0 %v2433
    %3289 = vmatprep.subr.bf16.mxu0 %v2438
    %3290 = vmatpush1.bf16.msra.mxu0 %v2437
    %3291 = vmatprep.subr.bf16.mxu0 %v2442
    %3292 = vmatpush1.bf16.msra.mxu0 %v2441
    %3293 = vmatprep.subr.bf16.mxu0 %v2446
    %3294 = vmatpush1.bf16.msra.mxu0 %v2445
    %3295 = vmatprep.subr.bf16.mxu0 0
    %3296 = vmatpush1.bf16.msra.mxu0 0
    %3297 = vmatprep.subr.bf16.mxu0 0
    %3298 = vmatpush1.bf16.msra.mxu0 0
    %3299 = vmatprep.subr.bf16.mxu0 0
    %3300 = vmatpush1.bf16.msra.mxu0 0
    %3301 = vmatprep.subr.bf16.mxu0 0
    %3302 = vmatpush1.bf16.msra.mxu0 0
    %3303 = vmatprep.subr.bf16.mxu0 0
    %3304 = vmatpush1.bf16.msra.mxu0 0
    %3305 = vmatprep.subr.bf16.mxu0 0
    %3306 = vmatpush1.bf16.msra.mxu0 0
    %3307 = vmatprep.subr.bf16.mxu0 0
    %3308 = vmatpush1.bf16.msra.mxu0 0
    %3309 = vmatprep.subr.bf16.mxu0 0
    %3310 = vmatpush1.bf16.msra.mxu0 0
    %3311 = vmatprep.mubr.bf16.mxu0 0
    %3312 = vmatmul.mubr.bf16.gmra.mrb[0].mxu0 %v3278
    %v3313 = vpop.f32.mrb[0].mxu0
    %v3314 = vadd.f32 0.0, %v3313
    %v3315 = vpop.f32.mrb[0].mxu0
    %v3316 = vadd.f32 0.0, %v3315
    %v3317 = vpop.f32.mrb[0].mxu0
    %v3318 = vpop.f32.mrb[0].mxu0
    %3319 = vdwg.mxu0
    %3320 = vmatprep.subr.bf16.mxu0 %v2420
    %3321 = vmatpush1.bf16.msra.mxu0 %v2419
    %3322 = vmatprep.subr.bf16.mxu0 %v2424
    %3323 = vmatpush1.bf16.msra.mxu0 %v2423
    %3324 = vmatprep.subr.bf16.mxu0 %v2428
    %3325 = vmatpush1.bf16.msra.mxu0 %v2427
    %3326 = vmatprep.subr.bf16.mxu0 %v2432
    %3327 = vmatpush1.bf16.msra.mxu0 %v2431
    %3328 = vmatprep.subr.bf16.mxu0 %v2436
    %3329 = vmatpush1.bf16.msra.mxu0 %v2435
    %3330 = vmatprep.subr.bf16.mxu0 %v2440
    %3331 = vmatpush1.bf16.msra.mxu0 %v2439
    %3332 = vmatprep.subr.bf16.mxu0 %v2444
    %3333 = vmatpush1.bf16.msra.mxu0 %v2443
    %3334 = vmatprep.subr.bf16.mxu0 %v2448
    %3335 = vmatpush1.bf16.msra.mxu0 %v2447
    %3336 = vmatprep.subr.bf16.mxu0 0
    %3337 = vmatpush1.bf16.msra.mxu0 0
    %3338 = vmatprep.subr.bf16.mxu0 0
    %3339 = vmatpush1.bf16.msra.mxu0 0
    %3340 = vmatprep.subr.bf16.mxu0 0
    %3341 = vmatpush1.bf16.msra.mxu0 0
    %3342 = vmatprep.subr.bf16.mxu0 0
    %3343 = vmatpush1.bf16.msra.mxu0 0
    %3344 = vmatprep.subr.bf16.mxu0 0
    %3345 = vmatpush1.bf16.msra.mxu0 0
    %3346 = vmatprep.subr.bf16.mxu0 0
    %3347 = vmatpush1.bf16.msra.mxu0 0
    %3348 = vmatprep.subr.bf16.mxu0 0
    %3349 = vmatpush1.bf16.msra.mxu0 0
    %3350 = vmatprep.subr.bf16.mxu0 0
    %3351 = vmatpush1.bf16.msra.mxu0 0
    %3352 = vmatprep.mubr.bf16.mxu0 0
    %3353 = vmatmul.mubr.bf16.gmra.mrb[0].mxu0 %v3278
    %v3354 = vpop.f32.mrb[0].mxu0
    %v3355 = vadd.f32 0.0, %v3354
    %v3356 = vpop.f32.mrb[0].mxu0
    %v3357 = vadd.f32 0.0, %v3356
    %v3358 = vpop.f32.mrb[0].mxu0
    %v3359 = vpop.f32.mrb[0].mxu0
    %3360 = vdwg.mxu0
    %v3361 = vadd.f32 %v3274, %v3314
    %v3362 = vadd.f32 %v3275, %v3316
    %v3363 = vadd.f32 %v3276, %v3355
    %v3364 = vadd.f32 %v3277, %v3357
    %v3365 = vmul.f32 %v3361, 0.5
    %v3366 = vtanh.pop %v3365
    %v3367 = vmul.f32 %v3366, 0.5
    %v3368 = vadd.f32 %v3367, 0.5
    %v3369 = vmul.f32 %v3362, 0.5
    %v3370 = vtanh.pop %v3369
    %v3371 = vmul.f32 %v3370, 0.5
    %v3372 = vadd.f32 %v3371, 0.5
    %v3373 = vtanh.pop %v3363
    %v3374 = vmul.f32 %v3364, 0.5
    %v3375 = vtanh.pop %v3374
    %v3376 = vmul.f32 %v3375, 0.5
    %v3377 = vadd.f32 %v3376, 0.5
    %v3378 = vmul.f32 %v3372, %v3273
    %v3379 = vmul.f32 %v3368, %v3373
    %v3380 = vadd.f32 %v3378, %v3379
    %v3381 = vtanh.pop %v3380
    %v3382 = vmul.f32 %v3377, %v3381
    %3383 = vst [vmem:[%s2312] sm:$0xff] %v3382
    %3384 = vst [vmem:[%s2314] sm:$0xff] %v3380
    %3385 = vst [vmem:[%s1871] sm:$0xff] %v3382
    %v3386 = vld [vmem:[#allocation4] sm:$0xff]
    %v3387 = vld [vmem:[#allocation4 + $0x8] sm:$0xff]
    %v3388 = vld [vmem:[#allocation4 + $0x10] sm:$0xff]
    %v3389 = vld [vmem:[#allocation4 + $0x18] sm:$0xff]
    %v3390 = vld [vmem:[#allocation4 + $0x20] sm:$0xff]
    %v3391 = vld [vmem:[#allocation4 + $0x28] sm:$0xff]
    %v3392 = vld [vmem:[#allocation4 + $0x30] sm:$0xff]
    %v3393 = vld [vmem:[#allocation4 + $0x38] sm:$0xff]
    %v3394 = vpack.c.bf16 %v3387, %v3386
    %v3395 = vpack.c.bf16 %v3389, %v3388
    %v3396 = vpack.c.bf16 %v3391, %v3390
    %v3397 = vpack.c.bf16 %v3393, %v3392
    %s3398 = scalar_lea.vmem [#allocation7], 512
    %v3399 = vld [vmem:[%s3398] sm:$0xff]
    %v3400 = vld [vmem:[%s3398 + $0x8] sm:$0xff]
    %v3401 = vld [vmem:[%s3398 + $0x10] sm:$0xff]
    %v3402 = vld [vmem:[%s3398 + $0x18] sm:$0xff]
    %v3403 = vld [vmem:[%s3398 + $0x20] sm:$0xff]
    %v3404 = vld [vmem:[%s3398 + $0x28] sm:$0xff]
    %v3405 = vld [vmem:[%s3398 + $0x30] sm:$0xff]
    %v3406 = vld [vmem:[%s3398 + $0x38] sm:$0xff]
    %v3407 = vld [vmem:[%s3398 + $0x40] sm:$0xff]
    %v3408 = vld [vmem:[%s3398 + $0x48] sm:$0xff]
    %v3409 = vld [vmem:[%s3398 + $0x50] sm:$0xff]
    %v3410 = vld [vmem:[%s3398 + $0x58] sm:$0xff]
    %v3411 = vld [vmem:[%s3398 + $0x60] sm:$0xff]
    %v3412 = vld [vmem:[%s3398 + $0x68] sm:$0xff]
    %v3413 = vld [vmem:[%s3398 + $0x70] sm:$0xff]
    %v3414 = vld [vmem:[%s3398 + $0x78] sm:$0xff]
    %v3415 = vld [vmem:[%s3398 + $0x80] sm:$0xff]
    %v3416 = vld [vmem:[%s3398 + $0x88] sm:$0xff]
    %v3417 = vld [vmem:[%s3398 + $0x90] sm:$0xff]
    %v3418 = vld [vmem:[%s3398 + $0x98] sm:$0xff]
    %v3419 = vld [vmem:[%s3398 + $0xa0] sm:$0xff]
    %v3420 = vld [vmem:[%s3398 + $0xa8] sm:$0xff]
    %v3421 = vld [vmem:[%s3398 + $0xb0] sm:$0xff]
    %v3422 = vld [vmem:[%s3398 + $0xb8] sm:$0xff]
    %v3423 = vld [vmem:[%s3398 + $0xc0] sm:$0xff]
    %v3424 = vld [vmem:[%s3398 + $0xc8] sm:$0xff]
    %v3425 = vld [vmem:[%s3398 + $0xd0] sm:$0xff]
    %v3426 = vld [vmem:[%s3398 + $0xd8] sm:$0xff]
    %v3427 = vld [vmem:[%s3398 + $0xe0] sm:$0xff]
    %v3428 = vld [vmem:[%s3398 + $0xe8] sm:$0xff]
    %v3429 = vld [vmem:[%s3398 + $0xf0] sm:$0xff]
    %v3430 = vld [vmem:[%s3398 + $0xf8] sm:$0xff]
    %s3431 = scalar_lea.vmem %s7, 8
    %v3432 = vld [vmem:[%s3431] sm:$0xf]
    %v3434 = vlaneseq
    %v3435 = vshrl.u32 %v3434, 7
    %v3436 = vsub.s32 0, %v3435
    %v3437 = vrot.slane %v3432, %v3436
    %v3438 = vlaneseq
    %v3439 = vshrl.u32 %v3438, 7
    %v3440 = vsub.s32 1, %v3439
    %v3441 = vrot.slane %v3432, %v3440
    %v3442 = vlaneseq
    %v3443 = vshrl.u32 %v3442, 7
    %v3444 = vsub.s32 2, %v3443
    %v3445 = vrot.slane %v3432, %v3444
    %v3446 = vlaneseq
    %v3447 = vshrl.u32 %v3446, 7
    %v3448 = vsub.s32 3, %v3447
    %v3449 = vrot.slane %v3432, %v3448
    %v3486 = vunpack.c.l.b16 %v3399
    %v3487 = vunpack.c.h.b16 %v3399
    %v3488 = vunpack.c.l.b16 %v3400
    %v3489 = vunpack.c.h.b16 %v3400
    %v3490 = vunpack.c.l.b16 %v3401
    %v3491 = vunpack.c.h.b16 %v3401
    %v3492 = vunpack.c.l.b16 %v3402
    %v3493 = vunpack.c.h.b16 %v3402
    %v3494 = vunpack.c.l.b16 %v3403
    %v3495 = vunpack.c.h.b16 %v3403
    %v3496 = vunpack.c.l.b16 %v3404
    %v3497 = vunpack.c.h.b16 %v3404
    %v3498 = vunpack.c.l.b16 %v3405
    %v3499 = vunpack.c.h.b16 %v3405
    %v3500 = vunpack.c.l.b16 %v3406
    %v3501 = vunpack.c.h.b16 %v3406
    %v3502 = vunpack.c.l.b16 %v3407
    %v3503 = vunpack.c.h.b16 %v3407
    %v3504 = vunpack.c.l.b16 %v3408
    %v3505 = vunpack.c.h.b16 %v3408
    %v3506 = vunpack.c.l.b16 %v3409
    %v3507 = vunpack.c.h.b16 %v3409
    %v3508 = vunpack.c.l.b16 %v3410
    %v3509 = vunpack.c.h.b16 %v3410
    %v3510 = vunpack.c.l.b16 %v3411
    %v3511 = vunpack.c.h.b16 %v3411
    %v3512 = vunpack.c.l.b16 %v3412
    %v3513 = vunpack.c.h.b16 %v3412
    %v3514 = vunpack.c.l.b16 %v3413
    %v3515 = vunpack.c.h.b16 %v3413
    %v3516 = vunpack.c.l.b16 %v3414
    %v3517 = vunpack.c.h.b16 %v3414
    %v3518 = vunpack.c.l.b16 %v3415
    %v3519 = vunpack.c.h.b16 %v3415
    %v3520 = vunpack.c.l.b16 %v3416
    %v3521 = vunpack.c.h.b16 %v3416
    %v3522 = vunpack.c.l.b16 %v3417
    %v3523 = vunpack.c.h.b16 %v3417
    %v3524 = vunpack.c.l.b16 %v3418
    %v3525 = vunpack.c.h.b16 %v3418
    %v3526 = vunpack.c.l.b16 %v3419
    %v3527 = vunpack.c.h.b16 %v3419
    %v3528 = vunpack.c.l.b16 %v3420
    %v3529 = vunpack.c.h.b16 %v3420
    %v3530 = vunpack.c.l.b16 %v3421
    %v3531 = vunpack.c.h.b16 %v3421
    %v3532 = vunpack.c.l.b16 %v3422
    %v3533 = vunpack.c.h.b16 %v3422
    %v3534 = vunpack.c.l.b16 %v3423
    %v3535 = vunpack.c.h.b16 %v3423
    %v3536 = vunpack.c.l.b16 %v3424
    %v3537 = vunpack.c.h.b16 %v3424
    %v3538 = vunpack.c.l.b16 %v3425
    %v3539 = vunpack.c.h.b16 %v3425
    %v3540 = vunpack.c.l.b16 %v3426
    %v3541 = vunpack.c.h.b16 %v3426
    %v3542 = vunpack.c.l.b16 %v3427
    %v3543 = vunpack.c.h.b16 %v3427
    %v3544 = vunpack.c.l.b16 %v3428
    %v3545 = vunpack.c.h.b16 %v3428
    %v3546 = vunpack.c.l.b16 %v3429
    %v3547 = vunpack.c.h.b16 %v3429
    %v3548 = vunpack.c.l.b16 %v3430
    %v3549 = vunpack.c.h.b16 %v3430
    %v3550 = vpack.c.b16 %v3490, %v3486
    %v3551 = vpack.c.b16 %v3491, %v3487
    %v3552 = vpack.c.b16 %v3492, %v3488
    %v3553 = vpack.c.b16 %v3493, %v3489
    %v3554 = vpack.c.b16 %v3498, %v3494
    %v3555 = vpack.c.b16 %v3499, %v3495
    %v3556 = vpack.c.b16 %v3500, %v3496
    %v3557 = vpack.c.b16 %v3501, %v3497
    %v3558 = vpack.c.b16 %v3506, %v3502
    %v3559 = vpack.c.b16 %v3507, %v3503
    %v3560 = vpack.c.b16 %v3508, %v3504
    %v3561 = vpack.c.b16 %v3509, %v3505
    %v3562 = vpack.c.b16 %v3514, %v3510
    %v3563 = vpack.c.b16 %v3515, %v3511
    %v3564 = vpack.c.b16 %v3516, %v3512
    %v3565 = vpack.c.b16 %v3517, %v3513
    %v3566 = vpack.c.b16 %v3522, %v3518
    %v3567 = vpack.c.b16 %v3523, %v3519
    %v3568 = vpack.c.b16 %v3524, %v3520
    %v3569 = vpack.c.b16 %v3525, %v3521
    %v3570 = vpack.c.b16 %v3530, %v3526
    %v3571 = vpack.c.b16 %v3531, %v3527
    %v3572 = vpack.c.b16 %v3532, %v3528
    %v3573 = vpack.c.b16 %v3533, %v3529
    %v3574 = vpack.c.b16 %v3538, %v3534
    %v3575 = vpack.c.b16 %v3539, %v3535
    %v3576 = vpack.c.b16 %v3540, %v3536
    %v3577 = vpack.c.b16 %v3541, %v3537
    %v3578 = vpack.c.b16 %v3546, %v3542
    %v3579 = vpack.c.b16 %v3547, %v3543
    %v3580 = vpack.c.b16 %v3548, %v3544
    %v3581 = vpack.c.b16 %v3549, %v3545
    %3614 = vmatprep.subr.bf16.mxu0 %v3551
    %3615 = vmatpush1.bf16.msra.mxu0 %v3550
    %3616 = vmatprep.subr.bf16.mxu0 %v3555
    %3617 = vmatpush1.bf16.msra.mxu0 %v3554
    %3618 = vmatprep.subr.bf16.mxu0 %v3559
    %3619 = vmatpush1.bf16.msra.mxu0 %v3558
    %3620 = vmatprep.subr.bf16.mxu0 %v3563
    %3621 = vmatpush1.bf16.msra.mxu0 %v3562
    %3622 = vmatprep.subr.bf16.mxu0 %v3567
    %3623 = vmatpush1.bf16.msra.mxu0 %v3566
    %3624 = vmatprep.subr.bf16.mxu0 %v3571
    %3625 = vmatpush1.bf16.msra.mxu0 %v3570
    %3626 = vmatprep.subr.bf16.mxu0 %v3575
    %3627 = vmatpush1.bf16.msra.mxu0 %v3574
    %3628 = vmatprep.subr.bf16.mxu0 %v3579
    %3629 = vmatpush1.bf16.msra.mxu0 %v3578
    %3630 = vmatprep.subr.bf16.mxu0 0
    %3631 = vmatpush1.bf16.msra.mxu0 0
    %3632 = vmatprep.subr.bf16.mxu0 0
    %3633 = vmatpush1.bf16.msra.mxu0 0
    %3634 = vmatprep.subr.bf16.mxu0 0
    %3635 = vmatpush1.bf16.msra.mxu0 0
    %3636 = vmatprep.subr.bf16.mxu0 0
    %3637 = vmatpush1.bf16.msra.mxu0 0
    %3638 = vmatprep.subr.bf16.mxu0 0
    %3639 = vmatpush1.bf16.msra.mxu0 0
    %3640 = vmatprep.subr.bf16.mxu0 0
    %3641 = vmatpush1.bf16.msra.mxu0 0
    %3642 = vmatprep.subr.bf16.mxu0 0
    %3643 = vmatpush1.bf16.msra.mxu0 0
    %3644 = vmatprep.subr.bf16.mxu0 0
    %3645 = vmatpush1.bf16.msra.mxu0 0
    %3646 = vmatprep.mubr.bf16.mxu0 0
    %3647 = vmatmul.mubr.bf16.gmra.mrb[0].mxu0 %v3394
    %v3648 = vpop.f32.mrb[0].mxu0
    %v3649 = vadd.f32 %v3437, %v3648
    %v3650 = vpop.f32.mrb[0].mxu0
    %v3651 = vadd.f32 %v3441, %v3650
    %v3652 = vpop.f32.mrb[0].mxu0
    %v3653 = vadd.f32 %v3437, %v3652
    %v3654 = vpop.f32.mrb[0].mxu0
    %v3655 = vadd.f32 %v3441, %v3654
    %3656 = vmatprep.mubr.bf16.mxu0 0
    %3657 = vmatmul.mubr.bf16.gmra.mrb[0].mxu0 %v3395
    %v3658 = vpop.f32.mrb[0].mxu0
    %v3659 = vadd.f32 %v3437, %v3658
    %v3660 = vpop.f32.mrb[0].mxu0
    %v3661 = vadd.f32 %v3441, %v3660
    %v3662 = vpop.f32.mrb[0].mxu0
    %v3663 = vadd.f32 %v3437, %v3662
    %v3664 = vpop.f32.mrb[0].mxu0
    %v3665 = vadd.f32 %v3441, %v3664
    %3666 = vmatprep.mubr.bf16.mxu0 0
    %3667 = vmatmul.mubr.bf16.gmra.mrb[0].mxu0 %v3396
    %v3668 = vpop.f32.mrb[0].mxu0
    %v3669 = vadd.f32 %v3437, %v3668
    %v3670 = vpop.f32.mrb[0].mxu0
    %v3671 = vadd.f32 %v3441, %v3670
    %v3672 = vpop.f32.mrb[0].mxu0
    %v3673 = vadd.f32 %v3437, %v3672
    %v3674 = vpop.f32.mrb[0].mxu0
    %v3675 = vadd.f32 %v3441, %v3674
    %3676 = vmatprep.mubr.bf16.mxu0 0
    %3677 = vmatmul.mubr.bf16.gmra.mrb[0].mxu0 %v3397
    %v3678 = vpop.f32.mrb[0].mxu0
    %v3679 = vadd.f32 %v3437, %v3678
    %v3680 = vpop.f32.mrb[0].mxu0
    %v3681 = vadd.f32 %v3441, %v3680
    %v3682 = vpop.f32.mrb[0].mxu0
    %v3683 = vadd.f32 %v3437, %v3682
    %v3684 = vpop.f32.mrb[0].mxu0
    %v3685 = vadd.f32 %v3441, %v3684
    %3686 = vdwg.mxu0
    %3687 = vmatprep.subr.bf16.mxu0 %v3553
    %3688 = vmatpush1.bf16.msra.mxu0 %v3552
    %3689 = vmatprep.subr.bf16.mxu0 %v3557
    %3690 = vmatpush1.bf16.msra.mxu0 %v3556
    %3691 = vmatprep.subr.bf16.mxu0 %v3561
    %3692 = vmatpush1.bf16.msra.mxu0 %v3560
    %3693 = vmatprep.subr.bf16.mxu0 %v3565
    %3694 = vmatpush1.bf16.msra.mxu0 %v3564
    %3695 = vmatprep.subr.bf16.mxu0 %v3569
    %3696 = vmatpush1.bf16.msra.mxu0 %v3568
    %3697 = vmatprep.subr.bf16.mxu0 %v3573
    %3698 = vmatpush1.bf16.msra.mxu0 %v3572
    %3699 = vmatprep.subr.bf16.mxu0 %v3577
    %3700 = vmatpush1.bf16.msra.mxu0 %v3576
    %3701 = vmatprep.subr.bf16.mxu0 %v3581
    %3702 = vmatpush1.bf16.msra.mxu0 %v3580
    %3703 = vmatprep.subr.bf16.mxu0 0
    %3704 = vmatpush1.bf16.msra.mxu0 0
    %3705 = vmatprep.subr.bf16.mxu0 0
    %3706 = vmatpush1.bf16.msra.mxu0 0
    %3707 = vmatprep.subr.bf16.mxu0 0
    %3708 = vmatpush1.bf16.msra.mxu0 0
    %3709 = vmatprep.subr.bf16.mxu0 0
    %3710 = vmatpush1.bf16.msra.mxu0 0
    %3711 = vmatprep.subr.bf16.mxu0 0
    %3712 = vmatpush1.bf16.msra.mxu0 0
    %3713 = vmatprep.subr.bf16.mxu0 0
    %3714 = vmatpush1.bf16.msra.mxu0 0
    %3715 = vmatprep.subr.bf16.mxu0 0
    %3716 = vmatpush1.bf16.msra.mxu0 0
    %3717 = vmatprep.subr.bf16.mxu0 0
    %3718 = vmatpush1.bf16.msra.mxu0 0
    %3719 = vmatprep.mubr.bf16.mxu0 0
    %3720 = vmatmul.mubr.bf16.gmra.mrb[0].mxu0 %v3394
    %v3721 = vpop.f32.mrb[0].mxu0
    %v3722 = vadd.f32 %v3445, %v3721
    %v3723 = vpop.f32.mrb[0].mxu0
    %v3724 = vadd.f32 %v3449, %v3723
    %v3725 = vpop.f32.mrb[0].mxu0
    %v3726 = vadd.f32 %v3445, %v3725
    %v3727 = vpop.f32.mrb[0].mxu0
    %v3728 = vadd.f32 %v3449, %v3727
    %3729 = vmatprep.mubr.bf16.mxu0 0
    %3730 = vmatmul.mubr.bf16.gmra.mrb[0].mxu0 %v3395
    %v3731 = vpop.f32.mrb[0].mxu0
    %v3732 = vadd.f32 %v3445, %v3731
    %v3733 = vpop.f32.mrb[0].mxu0
    %v3734 = vadd.f32 %v3449, %v3733
    %v3735 = vpop.f32.mrb[0].mxu0
    %v3736 = vadd.f32 %v3445, %v3735
    %v3737 = vpop.f32.mrb[0].mxu0
    %v3738 = vadd.f32 %v3449, %v3737
    %3739 = vmatprep.mubr.bf16.mxu0 0
    %3740 = vmatmul.mubr.bf16.gmra.mrb[0].mxu0 %v3396
    %v3741 = vpop.f32.mrb[0].mxu0
    %v3742 = vadd.f32 %v3445, %v3741
    %v3743 = vpop.f32.mrb[0].mxu0
    %v3744 = vadd.f32 %v3449, %v3743
    %v3745 = vpop.f32.mrb[0].mxu0
    %v3746 = vadd.f32 %v3445, %v3745
    %v3747 = vpop.f32.mrb[0].mxu0
    %v3748 = vadd.f32 %v3449, %v3747
    %3749 = vmatprep.mubr.bf16.mxu0 0
    %3750 = vmatmul.mubr.bf16.gmra.mrb[0].mxu0 %v3397
    %v3751 = vpop.f32.mrb[0].mxu0
    %v3752 = vadd.f32 %v3445, %v3751
    %v3753 = vpop.f32.mrb[0].mxu0
    %v3754 = vadd.f32 %v3449, %v3753
    %v3755 = vpop.f32.mrb[0].mxu0
    %v3756 = vadd.f32 %v3445, %v3755
    %v3757 = vpop.f32.mrb[0].mxu0
    %v3758 = vadd.f32 %v3449, %v3757
    %3759 = vdwg.mxu0
    %3760 = vst [vmem:[#allocation5] sm:$0xff] %v3649
    %3761 = vst [vmem:[#allocation5 + $0x8] sm:$0xff] %v3651
    %3762 = vst [vmem:[#allocation5 + $0x10] sm:$0xff] %v3722
    %3763 = vst [vmem:[#allocation5 + $0x18] sm:$0xff] %v3724
    %3764 = vst [vmem:[#allocation5 + $0x20] sm:$0xff] %v3653
    %3765 = vst [vmem:[#allocation5 + $0x28] sm:$0xff] %v3655
    %3766 = vst [vmem:[#allocation5 + $0x30] sm:$0xff] %v3726
    %3767 = vst [vmem:[#allocation5 + $0x38] sm:$0xff] %v3728
    %3768 = vst [vmem:[#allocation5 + $0x40] sm:$0xff] %v3659
    %3769 = vst [vmem:[#allocation5 + $0x48] sm:$0xff] %v3661
    %3770 = vst [vmem:[#allocation5 + $0x50] sm:$0xff] %v3732
    %3771 = vst [vmem:[#allocation5 + $0x58] sm:$0xff] %v3734
    %3772 = vst [vmem:[#allocation5 + $0x60] sm:$0xff] %v3663
    %3773 = vst [vmem:[#allocation5 + $0x68] sm:$0xff] %v3665
    %3774 = vst [vmem:[#allocation5 + $0x70] sm:$0xff] %v3736
    %3775 = vst [vmem:[#allocation5 + $0x78] sm:$0xff] %v3738
    %3776 = vst [vmem:[#allocation5 + $0x80] sm:$0xff] %v3669
    %3777 = vst [vmem:[#allocation5 + $0x88] sm:$0xff] %v3671
    %3778 = vst [vmem:[#allocation5 + $0x90] sm:$0xff] %v3742
    %3779 = vst [vmem:[#allocation5 + $0x98] sm:$0xff] %v3744
    %3780 = vst [vmem:[#allocation5 + $0xa0] sm:$0xff] %v3673
    %3781 = vst [vmem:[#allocation5 + $0xa8] sm:$0xff] %v3675
    %3782 = vst [vmem:[#allocation5 + $0xb0] sm:$0xff] %v3746
    %3783 = vst [vmem:[#allocation5 + $0xb8] sm:$0xff] %v3748
    %3784 = vst [vmem:[#allocation5 + $0xc0] sm:$0xff] %v3679
    %3785 = vst [vmem:[#allocation5 + $0xc8] sm:$0xff] %v3681
    %3786 = vst [vmem:[#allocation5 + $0xd0] sm:$0xff] %v3752
    %3787 = vst [vmem:[#allocation5 + $0xd8] sm:$0xff] %v3754
    %3788 = vst [vmem:[#allocation5 + $0xe0] sm:$0xff] %v3683
    %3789 = vst [vmem:[#allocation5 + $0xe8] sm:$0xff] %v3685
    %3790 = vst [vmem:[#allocation5 + $0xf0] sm:$0xff] %v3756
    %3791 = vst [vmem:[#allocation5 + $0xf8] sm:$0xff] %v3758
    %s3792 = scalar_lea.vmem [#allocation9], 512
    %v3793 = vld [vmem:[%s3792] sm:$0xff]
    %v3794 = vld [vmem:[%s3792 + $0x8] sm:$0xff]
    %v3795 = vld [vmem:[%s3792 + $0x10] sm:$0xff]
    %v3796 = vld [vmem:[%s3792 + $0x18] sm:$0xff]
    %v3797 = vld [vmem:[%s3792 + $0x20] sm:$0xff]
    %v3798 = vld [vmem:[%s3792 + $0x28] sm:$0xff]
    %v3799 = vld [vmem:[%s3792 + $0x30] sm:$0xff]
    %v3800 = vld [vmem:[%s3792 + $0x38] sm:$0xff]
    %v3801 = vld [vmem:[%s3792 + $0x40] sm:$0xff]
    %v3802 = vld [vmem:[%s3792 + $0x48] sm:$0xff]
    %v3803 = vld [vmem:[%s3792 + $0x50] sm:$0xff]
    %v3804 = vld [vmem:[%s3792 + $0x58] sm:$0xff]
    %v3805 = vld [vmem:[%s3792 + $0x60] sm:$0xff]
    %v3806 = vld [vmem:[%s3792 + $0x68] sm:$0xff]
    %v3807 = vld [vmem:[%s3792 + $0x70] sm:$0xff]
    %v3808 = vld [vmem:[%s3792 + $0x78] sm:$0xff]
    %v3809 = vld [vmem:[%s3792 + $0x80] sm:$0xff]
    %v3810 = vld [vmem:[%s3792 + $0x88] sm:$0xff]
    %v3811 = vld [vmem:[%s3792 + $0x90] sm:$0xff]
    %v3812 = vld [vmem:[%s3792 + $0x98] sm:$0xff]
    %v3813 = vld [vmem:[%s3792 + $0xa0] sm:$0xff]
    %v3814 = vld [vmem:[%s3792 + $0xa8] sm:$0xff]
    %v3815 = vld [vmem:[%s3792 + $0xb0] sm:$0xff]
    %v3816 = vld [vmem:[%s3792 + $0xb8] sm:$0xff]
    %v3817 = vld [vmem:[%s3792 + $0xc0] sm:$0xff]
    %v3818 = vld [vmem:[%s3792 + $0xc8] sm:$0xff]
    %v3819 = vld [vmem:[%s3792 + $0xd0] sm:$0xff]
    %v3820 = vld [vmem:[%s3792 + $0xd8] sm:$0xff]
    %v3821 = vld [vmem:[%s3792 + $0xe0] sm:$0xff]
    %v3822 = vld [vmem:[%s3792 + $0xe8] sm:$0xff]
    %v3823 = vld [vmem:[%s3792 + $0xf0] sm:$0xff]
    %v3824 = vld [vmem:[%s3792 + $0xf8] sm:$0xff]
    %s3825 = scalar_lea.vmem [#allocation2], 16
    %v3826 = vld [vmem:[%s3825] sm:$0xff]
    %s3827 = scalar_lea.vmem [#allocation3], 16
    %v3828 = vld [vmem:[%s3827] sm:$0xff]
    %v3829 = vld [vmem:[%s774] sm:$0xff]
    %v3830 = vld [vmem:[%s774 + $0x8] sm:$0xff]
    %v3831 = vld [vmem:[%s774 + $0x10] sm:$0xff]
    %v3832 = vld [vmem:[%s774 + $0x18] sm:$0xff]
    %v3833 = vpack.c.bf16 %v3826, %v3826
    %v3866 = vunpack.c.l.b16 %v3793
    %v3867 = vunpack.c.h.b16 %v3793
    %v3868 = vunpack.c.l.b16 %v3794
    %v3869 = vunpack.c.h.b16 %v3794
    %v3870 = vunpack.c.l.b16 %v3795
    %v3871 = vunpack.c.h.b16 %v3795
    %v3872 = vunpack.c.l.b16 %v3796
    %v3873 = vunpack.c.h.b16 %v3796
    %v3874 = vunpack.c.l.b16 %v3797
    %v3875 = vunpack.c.h.b16 %v3797
    %v3876 = vunpack.c.l.b16 %v3798
    %v3877 = vunpack.c.h.b16 %v3798
    %v3878 = vunpack.c.l.b16 %v3799
    %v3879 = vunpack.c.h.b16 %v3799
    %v3880 = vunpack.c.l.b16 %v3800
    %v3881 = vunpack.c.h.b16 %v3800
    %v3882 = vunpack.c.l.b16 %v3801
    %v3883 = vunpack.c.h.b16 %v3801
    %v3884 = vunpack.c.l.b16 %v3802
    %v3885 = vunpack.c.h.b16 %v3802
    %v3886 = vunpack.c.l.b16 %v3803
    %v3887 = vunpack.c.h.b16 %v3803
    %v3888 = vunpack.c.l.b16 %v3804
    %v3889 = vunpack.c.h.b16 %v3804
    %v3890 = vunpack.c.l.b16 %v3805
    %v3891 = vunpack.c.h.b16 %v3805
    %v3892 = vunpack.c.l.b16 %v3806
    %v3893 = vunpack.c.h.b16 %v3806
    %v3894 = vunpack.c.l.b16 %v3807
    %v3895 = vunpack.c.h.b16 %v3807
    %v3896 = vunpack.c.l.b16 %v3808
    %v3897 = vunpack.c.h.b16 %v3808
    %v3898 = vunpack.c.l.b16 %v3809
    %v3899 = vunpack.c.h.b16 %v3809
    %v3900 = vunpack.c.l.b16 %v3810
    %v3901 = vunpack.c.h.b16 %v3810
    %v3902 = vunpack.c.l.b16 %v3811
    %v3903 = vunpack.c.h.b16 %v3811
    %v3904 = vunpack.c.l.b16 %v3812
    %v3905 = vunpack.c.h.b16 %v3812
    %v3906 = vunpack.c.l.b16 %v3813
    %v3907 = vunpack.c.h.b16 %v3813
    %v3908 = vunpack.c.l.b16 %v3814
    %v3909 = vunpack.c.h.b16 %v3814
    %v3910 = vunpack.c.l.b16 %v3815
    %v3911 = vunpack.c.h.b16 %v3815
    %v3912 = vunpack.c.l.b16 %v3816
    %v3913 = vunpack.c.h.b16 %v3816
    %v3914 = vunpack.c.l.b16 %v3817
    %v3915 = vunpack.c.h.b16 %v3817
    %v3916 = vunpack.c.l.b16 %v3818
    %v3917 = vunpack.c.h.b16 %v3818
    %v3918 = vunpack.c.l.b16 %v3819
    %v3919 = vunpack.c.h.b16 %v3819
    %v3920 = vunpack.c.l.b16 %v3820
    %v3921 = vunpack.c.h.b16 %v3820
    %v3922 = vunpack.c.l.b16 %v3821
    %v3923 = vunpack.c.h.b16 %v3821
    %v3924 = vunpack.c.l.b16 %v3822
    %v3925 = vunpack.c.h.b16 %v3822
    %v3926 = vunpack.c.l.b16 %v3823
    %v3927 = vunpack.c.h.b16 %v3823
    %v3928 = vunpack.c.l.b16 %v3824
    %v3929 = vunpack.c.h.b16 %v3824
    %v3930 = vpack.c.b16 %v3870, %v3866
    %v3931 = vpack.c.b16 %v3871, %v3867
    %v3932 = vpack.c.b16 %v3872, %v3868
    %v3933 = vpack.c.b16 %v3873, %v3869
    %v3934 = vpack.c.b16 %v3878, %v3874
    %v3935 = vpack.c.b16 %v3879, %v3875
    %v3936 = vpack.c.b16 %v3880, %v3876
    %v3937 = vpack.c.b16 %v3881, %v3877
    %v3938 = vpack.c.b16 %v3886, %v3882
    %v3939 = vpack.c.b16 %v3887, %v3883
    %v3940 = vpack.c.b16 %v3888, %v3884
    %v3941 = vpack.c.b16 %v3889, %v3885
    %v3942 = vpack.c.b16 %v3894, %v3890
    %v3943 = vpack.c.b16 %v3895, %v3891
    %v3944 = vpack.c.b16 %v3896, %v3892
    %v3945 = vpack.c.b16 %v3897, %v3893
    %v3946 = vpack.c.b16 %v3902, %v3898
    %v3947 = vpack.c.b16 %v3903, %v3899
    %v3948 = vpack.c.b16 %v3904, %v3900
    %v3949 = vpack.c.b16 %v3905, %v3901
    %v3950 = vpack.c.b16 %v3910, %v3906
    %v3951 = vpack.c.b16 %v3911, %v3907
    %v3952 = vpack.c.b16 %v3912, %v3908
    %v3953 = vpack.c.b16 %v3913, %v3909
    %v3954 = vpack.c.b16 %v3918, %v3914
    %v3955 = vpack.c.b16 %v3919, %v3915
    %v3956 = vpack.c.b16 %v3920, %v3916
    %v3957 = vpack.c.b16 %v3921, %v3917
    %v3958 = vpack.c.b16 %v3926, %v3922
    %v3959 = vpack.c.b16 %v3927, %v3923
    %v3960 = vpack.c.b16 %v3928, %v3924
    %v3961 = vpack.c.b16 %v3929, %v3925
    %3994 = vmatprep.subr.bf16.mxu0 %v3931
    %3995 = vmatpush1.bf16.msra.mxu0 %v3930
    %3996 = vmatprep.subr.bf16.mxu0 %v3935
    %3997 = vmatpush1.bf16.msra.mxu0 %v3934
    %3998 = vmatprep.subr.bf16.mxu0 %v3939
    %3999 = vmatpush1.bf16.msra.mxu0 %v3938
    %4000 = vmatprep.subr.bf16.mxu0 %v3943
    %4001 = vmatpush1.bf16.msra.mxu0 %v3942
    %4002 = vmatprep.subr.bf16.mxu0 %v3947
    %4003 = vmatpush1.bf16.msra.mxu0 %v3946
    %4004 = vmatprep.subr.bf16.mxu0 %v3951
    %4005 = vmatpush1.bf16.msra.mxu0 %v3950
    %4006 = vmatprep.subr.bf16.mxu0 %v3955
    %4007 = vmatpush1.bf16.msra.mxu0 %v3954
    %4008 = vmatprep.subr.bf16.mxu0 %v3959
    %4009 = vmatpush1.bf16.msra.mxu0 %v3958
    %4010 = vmatprep.subr.bf16.mxu0 0
    %4011 = vmatpush1.bf16.msra.mxu0 0
    %4012 = vmatprep.subr.bf16.mxu0 0
    %4013 = vmatpush1.bf16.msra.mxu0 0
    %4014 = vmatprep.subr.bf16.mxu0 0
    %4015 = vmatpush1.bf16.msra.mxu0 0
    %4016 = vmatprep.subr.bf16.mxu0 0
    %4017 = vmatpush1.bf16.msra.mxu0 0
    %4018 = vmatprep.subr.bf16.mxu0 0
    %4019 = vmatpush1.bf16.msra.mxu0 0
    %4020 = vmatprep.subr.bf16.mxu0 0
    %4021 = vmatpush1.bf16.msra.mxu0 0
    %4022 = vmatprep.subr.bf16.mxu0 0
    %4023 = vmatpush1.bf16.msra.mxu0 0
    %4024 = vmatprep.subr.bf16.mxu0 0
    %4025 = vmatpush1.bf16.msra.mxu0 0
    %4026 = vmatprep.mubr.bf16.mxu0 0
    %4027 = vmatmul.mubr.bf16.gmra.mrb[0].mxu0 %v3833
    %v4028 = vpop.f32.mrb[0].mxu0
    %v4029 = vadd.f32 0.0, %v4028
    %v4030 = vpop.f32.mrb[0].mxu0
    %v4031 = vadd.f32 0.0, %v4030
    %v4032 = vpop.f32.mrb[0].mxu0
    %v4033 = vpop.f32.mrb[0].mxu0
    %4034 = vdwg.mxu0
    %4035 = vmatprep.subr.bf16.mxu0 %v3933
    %4036 = vmatpush1.bf16.msra.mxu0 %v3932
    %4037 = vmatprep.subr.bf16.mxu0 %v3937
    %4038 = vmatpush1.bf16.msra.mxu0 %v3936
    %4039 = vmatprep.subr.bf16.mxu0 %v3941
    %4040 = vmatpush1.bf16.msra.mxu0 %v3940
    %4041 = vmatprep.subr.bf16.mxu0 %v3945
    %4042 = vmatpush1.bf16.msra.mxu0 %v3944
    %4043 = vmatprep.subr.bf16.mxu0 %v3949
    %4044 = vmatpush1.bf16.msra.mxu0 %v3948
    %4045 = vmatprep.subr.bf16.mxu0 %v3953
    %4046 = vmatpush1.bf16.msra.mxu0 %v3952
    %4047 = vmatprep.subr.bf16.mxu0 %v3957
    %4048 = vmatpush1.bf16.msra.mxu0 %v3956
    %4049 = vmatprep.subr.bf16.mxu0 %v3961
    %4050 = vmatpush1.bf16.msra.mxu0 %v3960
    %4051 = vmatprep.subr.bf16.mxu0 0
    %4052 = vmatpush1.bf16.msra.mxu0 0
    %4053 = vmatprep.subr.bf16.mxu0 0
    %4054 = vmatpush1.bf16.msra.mxu0 0
    %4055 = vmatprep.subr.bf16.mxu0 0
    %4056 = vmatpush1.bf16.msra.mxu0 0
    %4057 = vmatprep.subr.bf16.mxu0 0
    %4058 = vmatpush1.bf16.msra.mxu0 0
    %4059 = vmatprep.subr.bf16.mxu0 0
    %4060 = vmatpush1.bf16.msra.mxu0 0
    %4061 = vmatprep.subr.bf16.mxu0 0
    %4062 = vmatpush1.bf16.msra.mxu0 0
    %4063 = vmatprep.subr.bf16.mxu0 0
    %4064 = vmatpush1.bf16.msra.mxu0 0
    %4065 = vmatprep.subr.bf16.mxu0 0
    %4066 = vmatpush1.bf16.msra.mxu0 0
    %4067 = vmatprep.mubr.bf16.mxu0 0
    %4068 = vmatmul.mubr.bf16.gmra.mrb[0].mxu0 %v3833
    %v4069 = vpop.f32.mrb[0].mxu0
    %v4070 = vadd.f32 0.0, %v4069
    %v4071 = vpop.f32.mrb[0].mxu0
    %v4072 = vadd.f32 0.0, %v4071
    %v4073 = vpop.f32.mrb[0].mxu0
    %v4074 = vpop.f32.mrb[0].mxu0
    %4075 = vdwg.mxu0
    %v4076 = vadd.f32 %v3829, %v4029
    %v4077 = vadd.f32 %v3830, %v4031
    %v4078 = vadd.f32 %v3831, %v4070
    %v4079 = vadd.f32 %v3832, %v4072
    %v4080 = vmul.f32 %v4076, 0.5
    %v4081 = vtanh.pop %v4080
    %v4082 = vmul.f32 %v4081, 0.5
    %v4083 = vadd.f32 %v4082, 0.5
    %v4084 = vmul.f32 %v4077, 0.5
    %v4085 = vtanh.pop %v4084
    %v4086 = vmul.f32 %v4085, 0.5
    %v4087 = vadd.f32 %v4086, 0.5
    %v4088 = vtanh.pop %v4078
    %v4089 = vmul.f32 %v4079, 0.5
    %v4090 = vtanh.pop %v4089
    %v4091 = vmul.f32 %v4090, 0.5
    %v4092 = vadd.f32 %v4091, 0.5
    %v4093 = vmul.f32 %v4087, %v3828
    %v4094 = vmul.f32 %v4083, %v4088
    %v4095 = vadd.f32 %v4093, %v4094
    %v4096 = vtanh.pop %v4095
    %v4097 = vmul.f32 %v4092, %v4096
    %4098 = vst [vmem:[%s3825] sm:$0xff] %v4097
    %4099 = vst [vmem:[%s3827] sm:$0xff] %v4095
    %4100 = vst [vmem:[#allocation4] sm:$0xff] %v4097
    %v4101 = vld [vmem:[%s3825] sm:$0xff]
    %v4102 = vld [vmem:[%s3827] sm:$0xff]
    %v4103 = vld [vmem:[%s1051] sm:$0xff]
    %v4104 = vld [vmem:[%s1051 + $0x8] sm:$0xff]
    %v4105 = vld [vmem:[%s1051 + $0x10] sm:$0xff]
    %v4106 = vld [vmem:[%s1051 + $0x18] sm:$0xff]
    %v4107 = vpack.c.bf16 %v4101, %v4101
    %4108 = vmatprep.subr.bf16.mxu0 %v3931
    %4109 = vmatpush1.bf16.msra.mxu0 %v3930
    %4110 = vmatprep.subr.bf16.mxu0 %v3935
    %4111 = vmatpush1.bf16.msra.mxu0 %v3934
    %4112 = vmatprep.subr.bf16.mxu0 %v3939
    %4113 = vmatpush1.bf16.msra.mxu0 %v3938
    %4114 = vmatprep.subr.bf16.mxu0 %v3943
    %4115 = vmatpush1.bf16.msra.mxu0 %v3942
    %4116 = vmatprep.subr.bf16.mxu0 %v3947
    %4117 = vmatpush1.bf16.msra.mxu0 %v3946
    %4118 = vmatprep.subr.bf16.mxu0 %v3951
    %4119 = vmatpush1.bf16.msra.mxu0 %v3950
    %4120 = vmatprep.subr.bf16.mxu0 %v3955
    %4121 = vmatpush1.bf16.msra.mxu0 %v3954
    %4122 = vmatprep.subr.bf16.mxu0 %v3959
    %4123 = vmatpush1.bf16.msra.mxu0 %v3958
    %4124 = vmatprep.subr.bf16.mxu0 0
    %4125 = vmatpush1.bf16.msra.mxu0 0
    %4126 = vmatprep.subr.bf16.mxu0 0
    %4127 = vmatpush1.bf16.msra.mxu0 0
    %4128 = vmatprep.subr.bf16.mxu0 0
    %4129 = vmatpush1.bf16.msra.mxu0 0
    %4130 = vmatprep.subr.bf16.mxu0 0
    %4131 = vmatpush1.bf16.msra.mxu0 0
    %4132 = vmatprep.subr.bf16.mxu0 0
    %4133 = vmatpush1.bf16.msra.mxu0 0
    %4134 = vmatprep.subr.bf16.mxu0 0
    %4135 = vmatpush1.bf16.msra.mxu0 0
    %4136 = vmatprep.subr.bf16.mxu0 0
    %4137 = vmatpush1.bf16.msra.mxu0 0
    %4138 = vmatprep.subr.bf16.mxu0 0
    %4139 = vmatpush1.bf16.msra.mxu0 0
    %4140 = vmatprep.mubr.bf16.mxu0 0
    %4141 = vmatmul.mubr.bf16.gmra.mrb[0].mxu0 %v4107
    %v4142 = vpop.f32.mrb[0].mxu0
    %v4143 = vadd.f32 0.0, %v4142
    %v4144 = vpop.f32.mrb[0].mxu0
    %v4145 = vadd.f32 0.0, %v4144
    %v4146 = vpop.f32.mrb[0].mxu0
    %v4147 = vpop.f32.mrb[0].mxu0
    %4148 = vdwg.mxu0
    %4149 = vmatprep.subr.bf16.mxu0 %v3933
    %4150 = vmatpush1.bf16.msra.mxu0 %v3932
    %4151 = vmatprep.subr.bf16.mxu0 %v3937
    %4152 = vmatpush1.bf16.msra.mxu0 %v3936
    %4153 = vmatprep.subr.bf16.mxu0 %v3941
    %4154 = vmatpush1.bf16.msra.mxu0 %v3940
    %4155 = vmatprep.subr.bf16.mxu0 %v3945
    %4156 = vmatpush1.bf16.msra.mxu0 %v3944
    %4157 = vmatprep.subr.bf16.mxu0 %v3949
    %4158 = vmatpush1.bf16.msra.mxu0 %v3948
    %4159 = vmatprep.subr.bf16.mxu0 %v3953
    %4160 = vmatpush1.bf16.msra.mxu0 %v3952
    %4161 = vmatprep.subr.bf16.mxu0 %v3957
    %4162 = vmatpush1.bf16.msra.mxu0 %v3956
    %4163 = vmatprep.subr.bf16.mxu0 %v3961
    %4164 = vmatpush1.bf16.msra.mxu0 %v3960
    %4165 = vmatprep.subr.bf16.mxu0 0
    %4166 = vmatpush1.bf16.msra.mxu0 0
    %4167 = vmatprep.subr.bf16.mxu0 0
    %4168 = vmatpush1.bf16.msra.mxu0 0
    %4169 = vmatprep.subr.bf16.mxu0 0
    %4170 = vmatpush1.bf16.msra.mxu0 0
    %4171 = vmatprep.subr.bf16.mxu0 0
    %4172 = vmatpush1.bf16.msra.mxu0 0
    %4173 = vmatprep.subr.bf16.mxu0 0
    %4174 = vmatpush1.bf16.msra.mxu0 0
    %4175 = vmatprep.subr.bf16.mxu0 0
    %4176 = vmatpush1.bf16.msra.mxu0 0
    %4177 = vmatprep.subr.bf16.mxu0 0
    %4178 = vmatpush1.bf16.msra.mxu0 0
    %4179 = vmatprep.subr.bf16.mxu0 0
    %4180 = vmatpush1.bf16.msra.mxu0 0
    %4181 = vmatprep.mubr.bf16.mxu0 0
    %4182 = vmatmul.mubr.bf16.gmra.mrb[0].mxu0 %v4107
    %v4183 = vpop.f32.mrb[0].mxu0
    %v4184 = vadd.f32 0.0, %v4183
    %v4185 = vpop.f32.mrb[0].mxu0
    %v4186 = vadd.f32 0.0, %v4185
    %v4187 = vpop.f32.mrb[0].mxu0
    %v4188 = vpop.f32.mrb[0].mxu0
    %4189 = vdwg.mxu0
    %v4190 = vadd.f32 %v4103, %v4143
    %v4191 = vadd.f32 %v4104, %v4145
    %v4192 = vadd.f32 %v4105, %v4184
    %v4193 = vadd.f32 %v4106, %v4186
    %v4194 = vmul.f32 %v4190, 0.5
    %v4195 = vtanh.pop %v4194
    %v4196 = vmul.f32 %v4195, 0.5
    %v4197 = vadd.f32 %v4196, 0.5
    %v4198 = vmul.f32 %v4191, 0.5
    %v4199 = vtanh.pop %v4198
    %v4200 = vmul.f32 %v4199, 0.5
    %v4201 = vadd.f32 %v4200, 0.5
    %v4202 = vtanh.pop %v4192
    %v4203 = vmul.f32 %v4193, 0.5
    %v4204 = vtanh.pop %v4203
    %v4205 = vmul.f32 %v4204, 0.5
    %v4206 = vadd.f32 %v4205, 0.5
    %v4207 = vmul.f32 %v4201, %v4102
    %v4208 = vmul.f32 %v4197, %v4202
    %v4209 = vadd.f32 %v4207, %v4208
    %v4210 = vtanh.pop %v4209
    %v4211 = vmul.f32 %v4206, %v4210
    %4212 = vst [vmem:[%s3825] sm:$0xff] %v4211
    %4213 = vst [vmem:[%s3827] sm:$0xff] %v4209
    %4214 = vst [vmem:[%s1163] sm:$0xff] %v4211
    %v4215 = vld [vmem:[%s3825] sm:$0xff]
    %v4216 = vld [vmem:[%s3827] sm:$0xff]
    %v4217 = vld [vmem:[%s1169] sm:$0xff]
    %v4218 = vld [vmem:[%s1169 + $0x8] sm:$0xff]
    %v4219 = vld [vmem:[%s1169 + $0x10] sm:$0xff]
    %v4220 = vld [vmem:[%s1169 + $0x18] sm:$0xff]
    %v4221 = vpack.c.bf16 %v4215, %v4215
    %4222 = vmatprep.subr.bf16.mxu0 %v3931
    %4223 = vmatpush1.bf16.msra.mxu0 %v3930
    %4224 = vmatprep.subr.bf16.mxu0 %v3935
    %4225 = vmatpush1.bf16.msra.mxu0 %v3934
    %4226 = vmatprep.subr.bf16.mxu0 %v3939
    %4227 = vmatpush1.bf16.msra.mxu0 %v3938
    %4228 = vmatprep.subr.bf16.mxu0 %v3943
    %4229 = vmatpush1.bf16.msra.mxu0 %v3942
    %4230 = vmatprep.subr.bf16.mxu0 %v3947
    %4231 = vmatpush1.bf16.msra.mxu0 %v3946
    %4232 = vmatprep.subr.bf16.mxu0 %v3951
    %4233 = vmatpush1.bf16.msra.mxu0 %v3950
    %4234 = vmatprep.subr.bf16.mxu0 %v3955
    %4235 = vmatpush1.bf16.msra.mxu0 %v3954
    %4236 = vmatprep.subr.bf16.mxu0 %v3959
    %4237 = vmatpush1.bf16.msra.mxu0 %v3958
    %4238 = vmatprep.subr.bf16.mxu0 0
    %4239 = vmatpush1.bf16.msra.mxu0 0
    %4240 = vmatprep.subr.bf16.mxu0 0
    %4241 = vmatpush1.bf16.msra.mxu0 0
    %4242 = vmatprep.subr.bf16.mxu0 0
    %4243 = vmatpush1.bf16.msra.mxu0 0
    %4244 = vmatprep.subr.bf16.mxu0 0
    %4245 = vmatpush1.bf16.msra.mxu0 0
    %4246 = vmatprep.subr.bf16.mxu0 0
    %4247 = vmatpush1.bf16.msra.mxu0 0
    %4248 = vmatprep.subr.bf16.mxu0 0
    %4249 = vmatpush1.bf16.msra.mxu0 0
    %4250 = vmatprep.subr.bf16.mxu0 0
    %4251 = vmatpush1.bf16.msra.mxu0 0
    %4252 = vmatprep.subr.bf16.mxu0 0
    %4253 = vmatpush1.bf16.msra.mxu0 0
    %4254 = vmatprep.mubr.bf16.mxu0 0
    %4255 = vmatmul.mubr.bf16.gmra.mrb[0].mxu0 %v4221
    %v4256 = vpop.f32.mrb[0].mxu0
    %v4257 = vadd.f32 0.0, %v4256
    %v4258 = vpop.f32.mrb[0].mxu0
    %v4259 = vadd.f32 0.0, %v4258
    %v4260 = vpop.f32.mrb[0].mxu0
    %v4261 = vpop.f32.mrb[0].mxu0
    %4262 = vdwg.mxu0
    %4263 = vmatprep.subr.bf16.mxu0 %v3933
    %4264 = vmatpush1.bf16.msra.mxu0 %v3932
    %4265 = vmatprep.subr.bf16.mxu0 %v3937
    %4266 = vmatpush1.bf16.msra.mxu0 %v3936
    %4267 = vmatprep.subr.bf16.mxu0 %v3941
    %4268 = vmatpush1.bf16.msra.mxu0 %v3940
    %4269 = vmatprep.subr.bf16.mxu0 %v3945
    %4270 = vmatpush1.bf16.msra.mxu0 %v3944
    %4271 = vmatprep.subr.bf16.mxu0 %v3949
    %4272 = vmatpush1.bf16.msra.mxu0 %v3948
    %4273 = vmatprep.subr.bf16.mxu0 %v3953
    %4274 = vmatpush1.bf16.msra.mxu0 %v3952
    %4275 = vmatprep.subr.bf16.mxu0 %v3957
    %4276 = vmatpush1.bf16.msra.mxu0 %v3956
    %4277 = vmatprep.subr.bf16.mxu0 %v3961
    %4278 = vmatpush1.bf16.msra.mxu0 %v3960
    %4279 = vmatprep.subr.bf16.mxu0 0
    %4280 = vmatpush1.bf16.msra.mxu0 0
    %4281 = vmatprep.subr.bf16.mxu0 0
    %4282 = vmatpush1.bf16.msra.mxu0 0
    %4283 = vmatprep.subr.bf16.mxu0 0
    %4284 = vmatpush1.bf16.msra.mxu0 0
    %4285 = vmatprep.subr.bf16.mxu0 0
    %4286 = vmatpush1.bf16.msra.mxu0 0
    %4287 = vmatprep.subr.bf16.mxu0 0
    %4288 = vmatpush1.bf16.msra.mxu0 0
    %4289 = vmatprep.subr.bf16.mxu0 0
    %4290 = vmatpush1.bf16.msra.mxu0 0
    %4291 = vmatprep.subr.bf16.mxu0 0
    %4292 = vmatpush1.bf16.msra.mxu0 0
    %4293 = vmatprep.subr.bf16.mxu0 0
    %4294 = vmatpush1.bf16.msra.mxu0 0
    %4295 = vmatprep.mubr.bf16.mxu0 0
    %4296 = vmatmul.mubr.bf16.gmra.mrb[0].mxu0 %v4221
    %v4297 = vpop.f32.mrb[0].mxu0
    %v4298 = vadd.f32 0.0, %v4297
    %v4299 = vpop.f32.mrb[0].mxu0
    %v4300 = vadd.f32 0.0, %v4299
    %v4301 = vpop.f32.mrb[0].mxu0
    %v4302 = vpop.f32.mrb[0].mxu0
    %4303 = vdwg.mxu0
    %v4304 = vadd.f32 %v4217, %v4257
    %v4305 = vadd.f32 %v4218, %v4259
    %v4306 = vadd.f32 %v4219, %v4298
    %v4307 = vadd.f32 %v4220, %v4300
    %v4308 = vmul.f32 %v4304, 0.5
    %v4309 = vtanh.pop %v4308
    %v4310 = vmul.f32 %v4309, 0.5
    %v4311 = vadd.f32 %v4310, 0.5
    %v4312 = vmul.f32 %v4305, 0.5
    %v4313 = vtanh.pop %v4312
    %v4314 = vmul.f32 %v4313, 0.5
    %v4315 = vadd.f32 %v4314, 0.5
    %v4316 = vtanh.pop %v4306
    %v4317 = vmul.f32 %v4307, 0.5
    %v4318 = vtanh.pop %v4317
    %v4319 = vmul.f32 %v4318, 0.5
    %v4320 = vadd.f32 %v4319, 0.5
    %v4321 = vmul.f32 %v4315, %v4216
    %v4322 = vmul.f32 %v4311, %v4316
    %v4323 = vadd.f32 %v4321, %v4322
    %v4324 = vtanh.pop %v4323
    %v4325 = vmul.f32 %v4320, %v4324
    %4326 = vst [vmem:[%s3825] sm:$0xff] %v4325
    %4327 = vst [vmem:[%s3827] sm:$0xff] %v4323
    %4328 = vst [vmem:[%s1281] sm:$0xff] %v4325
    %v4329 = vld [vmem:[%s3825] sm:$0xff]
    %v4330 = vld [vmem:[%s3827] sm:$0xff]
    %v4331 = vld [vmem:[%s1287] sm:$0xff]
    %v4332 = vld [vmem:[%s1287 + $0x8] sm:$0xff]
    %v4333 = vld [vmem:[%s1287 + $0x10] sm:$0xff]
    %v4334 = vld [vmem:[%s1287 + $0x18] sm:$0xff]
    %v4335 = vpack.c.bf16 %v4329, %v4329
    %4336 = vmatprep.subr.bf16.mxu0 %v3931
    %4337 = vmatpush1.bf16.msra.mxu0 %v3930
    %4338 = vmatprep.subr.bf16.mxu0 %v3935
    %4339 = vmatpush1.bf16.msra.mxu0 %v3934
    %4340 = vmatprep.subr.bf16.mxu0 %v3939
    %4341 = vmatpush1.bf16.msra.mxu0 %v3938
    %4342 = vmatprep.subr.bf16.mxu0 %v3943
    %4343 = vmatpush1.bf16.msra.mxu0 %v3942
    %4344 = vmatprep.subr.bf16.mxu0 %v3947
    %4345 = vmatpush1.bf16.msra.mxu0 %v3946
    %4346 = vmatprep.subr.bf16.mxu0 %v3951
    %4347 = vmatpush1.bf16.msra.mxu0 %v3950
    %4348 = vmatprep.subr.bf16.mxu0 %v3955
    %4349 = vmatpush1.bf16.msra.mxu0 %v3954
    %4350 = vmatprep.subr.bf16.mxu0 %v3959
    %4351 = vmatpush1.bf16.msra.mxu0 %v3958
    %4352 = vmatprep.subr.bf16.mxu0 0
    %4353 = vmatpush1.bf16.msra.mxu0 0
    %4354 = vmatprep.subr.bf16.mxu0 0
    %4355 = vmatpush1.bf16.msra.mxu0 0
    %4356 = vmatprep.subr.bf16.mxu0 0
    %4357 = vmatpush1.bf16.msra.mxu0 0
    %4358 = vmatprep.subr.bf16.mxu0 0
    %4359 = vmatpush1.bf16.msra.mxu0 0
    %4360 = vmatprep.subr.bf16.mxu0 0
    %4361 = vmatpush1.bf16.msra.mxu0 0
    %4362 = vmatprep.subr.bf16.mxu0 0
    %4363 = vmatpush1.bf16.msra.mxu0 0
    %4364 = vmatprep.subr.bf16.mxu0 0
    %4365 = vmatpush1.bf16.msra.mxu0 0
    %4366 = vmatprep.subr.bf16.mxu0 0
    %4367 = vmatpush1.bf16.msra.mxu0 0
    %4368 = vmatprep.mubr.bf16.mxu0 0
    %4369 = vmatmul.mubr.bf16.gmra.mrb[0].mxu0 %v4335
    %v4370 = vpop.f32.mrb[0].mxu0
    %v4371 = vadd.f32 0.0, %v4370
    %v4372 = vpop.f32.mrb[0].mxu0
    %v4373 = vadd.f32 0.0, %v4372
    %v4374 = vpop.f32.mrb[0].mxu0
    %v4375 = vpop.f32.mrb[0].mxu0
    %4376 = vdwg.mxu0
    %4377 = vmatprep.subr.bf16.mxu0 %v3933
    %4378 = vmatpush1.bf16.msra.mxu0 %v3932
    %4379 = vmatprep.subr.bf16.mxu0 %v3937
    %4380 = vmatpush1.bf16.msra.mxu0 %v3936
    %4381 = vmatprep.subr.bf16.mxu0 %v3941
    %4382 = vmatpush1.bf16.msra.mxu0 %v3940
    %4383 = vmatprep.subr.bf16.mxu0 %v3945
    %4384 = vmatpush1.bf16.msra.mxu0 %v3944
    %4385 = vmatprep.subr.bf16.mxu0 %v3949
    %4386 = vmatpush1.bf16.msra.mxu0 %v3948
    %4387 = vmatprep.subr.bf16.mxu0 %v3953
    %4388 = vmatpush1.bf16.msra.mxu0 %v3952
    %4389 = vmatprep.subr.bf16.mxu0 %v3957
    %4390 = vmatpush1.bf16.msra.mxu0 %v3956
    %4391 = vmatprep.subr.bf16.mxu0 %v3961
    %4392 = vmatpush1.bf16.msra.mxu0 %v3960
    %4393 = vmatprep.subr.bf16.mxu0 0
    %4394 = vmatpush1.bf16.msra.mxu0 0
    %4395 = vmatprep.subr.bf16.mxu0 0
    %4396 = vmatpush1.bf16.msra.mxu0 0
    %4397 = vmatprep.subr.bf16.mxu0 0
    %4398 = vmatpush1.bf16.msra.mxu0 0
    %4399 = vmatprep.subr.bf16.mxu0 0
    %4400 = vmatpush1.bf16.msra.mxu0 0
    %4401 = vmatprep.subr.bf16.mxu0 0
    %4402 = vmatpush1.bf16.msra.mxu0 0
    %4403 = vmatprep.subr.bf16.mxu0 0
    %4404 = vmatpush1.bf16.msra.mxu0 0
    %4405 = vmatprep.subr.bf16.mxu0 0
    %4406 = vmatpush1.bf16.msra.mxu0 0
    %4407 = vmatprep.subr.bf16.mxu0 0
    %4408 = vmatpush1.bf16.msra.mxu0 0
    %4409 = vmatprep.mubr.bf16.mxu0 0
    %4410 = vmatmul.mubr.bf16.gmra.mrb[0].mxu0 %v4335
    %v4411 = vpop.f32.mrb[0].mxu0
    %v4412 = vadd.f32 0.0, %v4411
    %v4413 = vpop.f32.mrb[0].mxu0
    %v4414 = vadd.f32 0.0, %v4413
    %v4415 = vpop.f32.mrb[0].mxu0
    %v4416 = vpop.f32.mrb[0].mxu0
    %4417 = vdwg.mxu0
    %v4418 = vadd.f32 %v4331, %v4371
    %v4419 = vadd.f32 %v4332, %v4373
    %v4420 = vadd.f32 %v4333, %v4412
    %v4421 = vadd.f32 %v4334, %v4414
    %v4422 = vmul.f32 %v4418, 0.5
    %v4423 = vtanh.pop %v4422
    %v4424 = vmul.f32 %v4423, 0.5
    %v4425 = vadd.f32 %v4424, 0.5
    %v4426 = vmul.f32 %v4419, 0.5
    %v4427 = vtanh.pop %v4426
    %v4428 = vmul.f32 %v4427, 0.5
    %v4429 = vadd.f32 %v4428, 0.5
    %v4430 = vtanh.pop %v4420
    %v4431 = vmul.f32 %v4421, 0.5
    %v4432 = vtanh.pop %v4431
    %v4433 = vmul.f32 %v4432, 0.5
    %v4434 = vadd.f32 %v4433, 0.5
    %v4435 = vmul.f32 %v4429, %v4330
    %v4436 = vmul.f32 %v4425, %v4430
    %v4437 = vadd.f32 %v4435, %v4436
    %v4438 = vtanh.pop %v4437
    %v4439 = vmul.f32 %v4434, %v4438
    %4440 = vst [vmem:[%s3825] sm:$0xff] %v4439
    %4441 = vst [vmem:[%s3827] sm:$0xff] %v4437
    %4442 = vst [vmem:[%s1399] sm:$0xff] %v4439
    %v4443 = vld [vmem:[%s3825] sm:$0xff]
    %v4444 = vld [vmem:[%s3827] sm:$0xff]
    %v4445 = vld [vmem:[%s1405] sm:$0xff]
    %v4446 = vld [vmem:[%s1405 + $0x8] sm:$0xff]
    %v4447 = vld [vmem:[%s1405 + $0x10] sm:$0xff]
    %v4448 = vld [vmem:[%s1405 + $0x18] sm:$0xff]
    %v4449 = vpack.c.bf16 %v4443, %v4443
    %4450 = vmatprep.subr.bf16.mxu0 %v3931
    %4451 = vmatpush1.bf16.msra.mxu0 %v3930
    %4452 = vmatprep.subr.bf16.mxu0 %v3935
    %4453 = vmatpush1.bf16.msra.mxu0 %v3934
    %4454 = vmatprep.subr.bf16.mxu0 %v3939
    %4455 = vmatpush1.bf16.msra.mxu0 %v3938
    %4456 = vmatprep.subr.bf16.mxu0 %v3943
    %4457 = vmatpush1.bf16.msra.mxu0 %v3942
    %4458 = vmatprep.subr.bf16.mxu0 %v3947
    %4459 = vmatpush1.bf16.msra.mxu0 %v3946
    %4460 = vmatprep.subr.bf16.mxu0 %v3951
    %4461 = vmatpush1.bf16.msra.mxu0 %v3950
    %4462 = vmatprep.subr.bf16.mxu0 %v3955
    %4463 = vmatpush1.bf16.msra.mxu0 %v3954
    %4464 = vmatprep.subr.bf16.mxu0 %v3959
    %4465 = vmatpush1.bf16.msra.mxu0 %v3958
    %4466 = vmatprep.subr.bf16.mxu0 0
    %4467 = vmatpush1.bf16.msra.mxu0 0
    %4468 = vmatprep.subr.bf16.mxu0 0
    %4469 = vmatpush1.bf16.msra.mxu0 0
    %4470 = vmatprep.subr.bf16.mxu0 0
    %4471 = vmatpush1.bf16.msra.mxu0 0
    %4472 = vmatprep.subr.bf16.mxu0 0
    %4473 = vmatpush1.bf16.msra.mxu0 0
    %4474 = vmatprep.subr.bf16.mxu0 0
    %4475 = vmatpush1.bf16.msra.mxu0 0
    %4476 = vmatprep.subr.bf16.mxu0 0
    %4477 = vmatpush1.bf16.msra.mxu0 0
    %4478 = vmatprep.subr.bf16.mxu0 0
    %4479 = vmatpush1.bf16.msra.mxu0 0
    %4480 = vmatprep.subr.bf16.mxu0 0
    %4481 = vmatpush1.bf16.msra.mxu0 0
    %4482 = vmatprep.mubr.bf16.mxu0 0
    %4483 = vmatmul.mubr.bf16.gmra.mrb[0].mxu0 %v4449
    %v4484 = vpop.f32.mrb[0].mxu0
    %v4485 = vadd.f32 0.0, %v4484
    %v4486 = vpop.f32.mrb[0].mxu0
    %v4487 = vadd.f32 0.0, %v4486
    %v4488 = vpop.f32.mrb[0].mxu0
    %v4489 = vpop.f32.mrb[0].mxu0
    %4490 = vdwg.mxu0
    %4491 = vmatprep.subr.bf16.mxu0 %v3933
    %4492 = vmatpush1.bf16.msra.mxu0 %v3932
    %4493 = vmatprep.subr.bf16.mxu0 %v3937
    %4494 = vmatpush1.bf16.msra.mxu0 %v3936
    %4495 = vmatprep.subr.bf16.mxu0 %v3941
    %4496 = vmatpush1.bf16.msra.mxu0 %v3940
    %4497 = vmatprep.subr.bf16.mxu0 %v3945
    %4498 = vmatpush1.bf16.msra.mxu0 %v3944
    %4499 = vmatprep.subr.bf16.mxu0 %v3949
    %4500 = vmatpush1.bf16.msra.mxu0 %v3948
    %4501 = vmatprep.subr.bf16.mxu0 %v3953
    %4502 = vmatpush1.bf16.msra.mxu0 %v3952
    %4503 = vmatprep.subr.bf16.mxu0 %v3957
    %4504 = vmatpush1.bf16.msra.mxu0 %v3956
    %4505 = vmatprep.subr.bf16.mxu0 %v3961
    %4506 = vmatpush1.bf16.msra.mxu0 %v3960
    %4507 = vmatprep.subr.bf16.mxu0 0
    %4508 = vmatpush1.bf16.msra.mxu0 0
    %4509 = vmatprep.subr.bf16.mxu0 0
    %4510 = vmatpush1.bf16.msra.mxu0 0
    %4511 = vmatprep.subr.bf16.mxu0 0
    %4512 = vmatpush1.bf16.msra.mxu0 0
    %4513 = vmatprep.subr.bf16.mxu0 0
    %4514 = vmatpush1.bf16.msra.mxu0 0
    %4515 = vmatprep.subr.bf16.mxu0 0
    %4516 = vmatpush1.bf16.msra.mxu0 0
    %4517 = vmatprep.subr.bf16.mxu0 0
    %4518 = vmatpush1.bf16.msra.mxu0 0
    %4519 = vmatprep.subr.bf16.mxu0 0
    %4520 = vmatpush1.bf16.msra.mxu0 0
    %4521 = vmatprep.subr.bf16.mxu0 0
    %4522 = vmatpush1.bf16.msra.mxu0 0
    %4523 = vmatprep.mubr.bf16.mxu0 0
    %4524 = vmatmul.mubr.bf16.gmra.mrb[0].mxu0 %v4449
    %v4525 = vpop.f32.mrb[0].mxu0
    %v4526 = vadd.f32 0.0, %v4525
    %v4527 = vpop.f32.mrb[0].mxu0
    %v4528 = vadd.f32 0.0, %v4527
    %v4529 = vpop.f32.mrb[0].mxu0
    %v4530 = vpop.f32.mrb[0].mxu0
    %4531 = vdwg.mxu0
    %v4532 = vadd.f32 %v4445, %v4485
    %v4533 = vadd.f32 %v4446, %v4487
    %v4534 = vadd.f32 %v4447, %v4526
    %v4535 = vadd.f32 %v4448, %v4528
    %v4536 = vmul.f32 %v4532, 0.5
    %v4537 = vtanh.pop %v4536
    %v4538 = vmul.f32 %v4537, 0.5
    %v4539 = vadd.f32 %v4538, 0.5
    %v4540 = vmul.f32 %v4533, 0.5
    %v4541 = vtanh.pop %v4540
    %v4542 = vmul.f32 %v4541, 0.5
    %v4543 = vadd.f32 %v4542, 0.5
    %v4544 = vtanh.pop %v4534
    %v4545 = vmul.f32 %v4535, 0.5
    %v4546 = vtanh.pop %v4545
    %v4547 = vmul.f32 %v4546, 0.5
    %v4548 = vadd.f32 %v4547, 0.5
    %v4549 = vmul.f32 %v4543, %v4444
    %v4550 = vmul.f32 %v4539, %v4544
    %v4551 = vadd.f32 %v4549, %v4550
    %v4552 = vtanh.pop %v4551
    %v4553 = vmul.f32 %v4548, %v4552
    %4554 = vst [vmem:[%s3825] sm:$0xff] %v4553
    %4555 = vst [vmem:[%s3827] sm:$0xff] %v4551
    %4556 = vst [vmem:[%s1517] sm:$0xff] %v4553
    %v4557 = vld [vmem:[%s3825] sm:$0xff]
    %v4558 = vld [vmem:[%s3827] sm:$0xff]
    %v4559 = vld [vmem:[%s1523] sm:$0xff]
    %v4560 = vld [vmem:[%s1523 + $0x8] sm:$0xff]
    %v4561 = vld [vmem:[%s1523 + $0x10] sm:$0xff]
    %v4562 = vld [vmem:[%s1523 + $0x18] sm:$0xff]
    %v4563 = vpack.c.bf16 %v4557, %v4557
    %4564 = vmatprep.subr.bf16.mxu0 %v3931
    %4565 = vmatpush1.bf16.msra.mxu0 %v3930
    %4566 = vmatprep.subr.bf16.mxu0 %v3935
    %4567 = vmatpush1.bf16.msra.mxu0 %v3934
    %4568 = vmatprep.subr.bf16.mxu0 %v3939
    %4569 = vmatpush1.bf16.msra.mxu0 %v3938
    %4570 = vmatprep.subr.bf16.mxu0 %v3943
    %4571 = vmatpush1.bf16.msra.mxu0 %v3942
    %4572 = vmatprep.subr.bf16.mxu0 %v3947
    %4573 = vmatpush1.bf16.msra.mxu0 %v3946
    %4574 = vmatprep.subr.bf16.mxu0 %v3951
    %4575 = vmatpush1.bf16.msra.mxu0 %v3950
    %4576 = vmatprep.subr.bf16.mxu0 %v3955
    %4577 = vmatpush1.bf16.msra.mxu0 %v3954
    %4578 = vmatprep.subr.bf16.mxu0 %v3959
    %4579 = vmatpush1.bf16.msra.mxu0 %v3958
    %4580 = vmatprep.subr.bf16.mxu0 0
    %4581 = vmatpush1.bf16.msra.mxu0 0
    %4582 = vmatprep.subr.bf16.mxu0 0
    %4583 = vmatpush1.bf16.msra.mxu0 0
    %4584 = vmatprep.subr.bf16.mxu0 0
    %4585 = vmatpush1.bf16.msra.mxu0 0
    %4586 = vmatprep.subr.bf16.mxu0 0
    %4587 = vmatpush1.bf16.msra.mxu0 0
    %4588 = vmatprep.subr.bf16.mxu0 0
    %4589 = vmatpush1.bf16.msra.mxu0 0
    %4590 = vmatprep.subr.bf16.mxu0 0
    %4591 = vmatpush1.bf16.msra.mxu0 0
    %4592 = vmatprep.subr.bf16.mxu0 0
    %4593 = vmatpush1.bf16.msra.mxu0 0
    %4594 = vmatprep.subr.bf16.mxu0 0
    %4595 = vmatpush1.bf16.msra.mxu0 0
    %4596 = vmatprep.mubr.bf16.mxu0 0
    %4597 = vmatmul.mubr.bf16.gmra.mrb[0].mxu0 %v4563
    %v4598 = vpop.f32.mrb[0].mxu0
    %v4599 = vadd.f32 0.0, %v4598
    %v4600 = vpop.f32.mrb[0].mxu0
    %v4601 = vadd.f32 0.0, %v4600
    %v4602 = vpop.f32.mrb[0].mxu0
    %v4603 = vpop.f32.mrb[0].mxu0
    %4604 = vdwg.mxu0
    %4605 = vmatprep.subr.bf16.mxu0 %v3933
    %4606 = vmatpush1.bf16.msra.mxu0 %v3932
    %4607 = vmatprep.subr.bf16.mxu0 %v3937
    %4608 = vmatpush1.bf16.msra.mxu0 %v3936
    %4609 = vmatprep.subr.bf16.mxu0 %v3941
    %4610 = vmatpush1.bf16.msra.mxu0 %v3940
    %4611 = vmatprep.subr.bf16.mxu0 %v3945
    %4612 = vmatpush1.bf16.msra.mxu0 %v3944
    %4613 = vmatprep.subr.bf16.mxu0 %v3949
    %4614 = vmatpush1.bf16.msra.mxu0 %v3948
    %4615 = vmatprep.subr.bf16.mxu0 %v3953
    %4616 = vmatpush1.bf16.msra.mxu0 %v3952
    %4617 = vmatprep.subr.bf16.mxu0 %v3957
    %4618 = vmatpush1.bf16.msra.mxu0 %v3956
    %4619 = vmatprep.subr.bf16.mxu0 %v3961
    %4620 = vmatpush1.bf16.msra.mxu0 %v3960
    %4621 = vmatprep.subr.bf16.mxu0 0
    %4622 = vmatpush1.bf16.msra.mxu0 0
    %4623 = vmatprep.subr.bf16.mxu0 0
    %4624 = vmatpush1.bf16.msra.mxu0 0
    %4625 = vmatprep.subr.bf16.mxu0 0
    %4626 = vmatpush1.bf16.msra.mxu0 0
    %4627 = vmatprep.subr.bf16.mxu0 0
    %4628 = vmatpush1.bf16.msra.mxu0 0
    %4629 = vmatprep.subr.bf16.mxu0 0
    %4630 = vmatpush1.bf16.msra.mxu0 0
    %4631 = vmatprep.subr.bf16.mxu0 0
    %4632 = vmatpush1.bf16.msra.mxu0 0
    %4633 = vmatprep.subr.bf16.mxu0 0
    %4634 = vmatpush1.bf16.msra.mxu0 0
    %4635 = vmatprep.subr.bf16.mxu0 0
    %4636 = vmatpush1.bf16.msra.mxu0 0
    %4637 = vmatprep.mubr.bf16.mxu0 0
    %4638 = vmatmul.mubr.bf16.gmra.mrb[0].mxu0 %v4563
    %v4639 = vpop.f32.mrb[0].mxu0
    %v4640 = vadd.f32 0.0, %v4639
    %v4641 = vpop.f32.mrb[0].mxu0
    %v4642 = vadd.f32 0.0, %v4641
    %v4643 = vpop.f32.mrb[0].mxu0
    %v4644 = vpop.f32.mrb[0].mxu0
    %4645 = vdwg.mxu0
    %v4646 = vadd.f32 %v4559, %v4599
    %v4647 = vadd.f32 %v4560, %v4601
    %v4648 = vadd.f32 %v4561, %v4640
    %v4649 = vadd.f32 %v4562, %v4642
    %v4650 = vmul.f32 %v4646, 0.5
    %v4651 = vtanh.pop %v4650
    %v4652 = vmul.f32 %v4651, 0.5
    %v4653 = vadd.f32 %v4652, 0.5
    %v4654 = vmul.f32 %v4647, 0.5
    %v4655 = vtanh.pop %v4654
    %v4656 = vmul.f32 %v4655, 0.5
    %v4657 = vadd.f32 %v4656, 0.5
    %v4658 = vtanh.pop %v4648
    %v4659 = vmul.f32 %v4649, 0.5
    %v4660 = vtanh.pop %v4659
    %v4661 = vmul.f32 %v4660, 0.5
    %v4662 = vadd.f32 %v4661, 0.5
    %v4663 = vmul.f32 %v4657, %v4558
    %v4664 = vmul.f32 %v4653, %v4658
    %v4665 = vadd.f32 %v4663, %v4664
    %v4666 = vtanh.pop %v4665
    %v4667 = vmul.f32 %v4662, %v4666
    %4668 = vst [vmem:[%s3825] sm:$0xff] %v4667
    %4669 = vst [vmem:[%s3827] sm:$0xff] %v4665
    %4670 = vst [vmem:[%s1635] sm:$0xff] %v4667
    %v4671 = vld [vmem:[%s3825] sm:$0xff]
    %v4672 = vld [vmem:[%s3827] sm:$0xff]
    %v4673 = vld [vmem:[%s1641] sm:$0xff]
    %v4674 = vld [vmem:[%s1641 + $0x8] sm:$0xff]
    %v4675 = vld [vmem:[%s1641 + $0x10] sm:$0xff]
    %v4676 = vld [vmem:[%s1641 + $0x18] sm:$0xff]
    %v4677 = vpack.c.bf16 %v4671, %v4671
    %4678 = vmatprep.subr.bf16.mxu0 %v3931
    %4679 = vmatpush1.bf16.msra.mxu0 %v3930
    %4680 = vmatprep.subr.bf16.mxu0 %v3935
    %4681 = vmatpush1.bf16.msra.mxu0 %v3934
    %4682 = vmatprep.subr.bf16.mxu0 %v3939
    %4683 = vmatpush1.bf16.msra.mxu0 %v3938
    %4684 = vmatprep.subr.bf16.mxu0 %v3943
    %4685 = vmatpush1.bf16.msra.mxu0 %v3942
    %4686 = vmatprep.subr.bf16.mxu0 %v3947
    %4687 = vmatpush1.bf16.msra.mxu0 %v3946
    %4688 = vmatprep.subr.bf16.mxu0 %v3951
    %4689 = vmatpush1.bf16.msra.mxu0 %v3950
    %4690 = vmatprep.subr.bf16.mxu0 %v3955
    %4691 = vmatpush1.bf16.msra.mxu0 %v3954
    %4692 = vmatprep.subr.bf16.mxu0 %v3959
    %4693 = vmatpush1.bf16.msra.mxu0 %v3958
    %4694 = vmatprep.subr.bf16.mxu0 0
    %4695 = vmatpush1.bf16.msra.mxu0 0
    %4696 = vmatprep.subr.bf16.mxu0 0
    %4697 = vmatpush1.bf16.msra.mxu0 0
    %4698 = vmatprep.subr.bf16.mxu0 0
    %4699 = vmatpush1.bf16.msra.mxu0 0
    %4700 = vmatprep.subr.bf16.mxu0 0
    %4701 = vmatpush1.bf16.msra.mxu0 0
    %4702 = vmatprep.subr.bf16.mxu0 0
    %4703 = vmatpush1.bf16.msra.mxu0 0
    %4704 = vmatprep.subr.bf16.mxu0 0
    %4705 = vmatpush1.bf16.msra.mxu0 0
    %4706 = vmatprep.subr.bf16.mxu0 0
    %4707 = vmatpush1.bf16.msra.mxu0 0
    %4708 = vmatprep.subr.bf16.mxu0 0
    %4709 = vmatpush1.bf16.msra.mxu0 0
    %4710 = vmatprep.mubr.bf16.mxu0 0
    %4711 = vmatmul.mubr.bf16.gmra.mrb[0].mxu0 %v4677
    %v4712 = vpop.f32.mrb[0].mxu0
    %v4713 = vadd.f32 0.0, %v4712
    %v4714 = vpop.f32.mrb[0].mxu0
    %v4715 = vadd.f32 0.0, %v4714
    %v4716 = vpop.f32.mrb[0].mxu0
    %v4717 = vpop.f32.mrb[0].mxu0
    %4718 = vdwg.mxu0
    %4719 = vmatprep.subr.bf16.mxu0 %v3933
    %4720 = vmatpush1.bf16.msra.mxu0 %v3932
    %4721 = vmatprep.subr.bf16.mxu0 %v3937
    %4722 = vmatpush1.bf16.msra.mxu0 %v3936
    %4723 = vmatprep.subr.bf16.mxu0 %v3941
    %4724 = vmatpush1.bf16.msra.mxu0 %v3940
    %4725 = vmatprep.subr.bf16.mxu0 %v3945
    %4726 = vmatpush1.bf16.msra.mxu0 %v3944
    %4727 = vmatprep.subr.bf16.mxu0 %v3949
    %4728 = vmatpush1.bf16.msra.mxu0 %v3948
    %4729 = vmatprep.subr.bf16.mxu0 %v3953
    %4730 = vmatpush1.bf16.msra.mxu0 %v3952
    %4731 = vmatprep.subr.bf16.mxu0 %v3957
    %4732 = vmatpush1.bf16.msra.mxu0 %v3956
    %4733 = vmatprep.subr.bf16.mxu0 %v3961
    %4734 = vmatpush1.bf16.msra.mxu0 %v3960
    %4735 = vmatprep.subr.bf16.mxu0 0
    %4736 = vmatpush1.bf16.msra.mxu0 0
    %4737 = vmatprep.subr.bf16.mxu0 0
    %4738 = vmatpush1.bf16.msra.mxu0 0
    %4739 = vmatprep.subr.bf16.mxu0 0
    %4740 = vmatpush1.bf16.msra.mxu0 0
    %4741 = vmatprep.subr.bf16.mxu0 0
    %4742 = vmatpush1.bf16.msra.mxu0 0
    %4743 = vmatprep.subr.bf16.mxu0 0
    %4744 = vmatpush1.bf16.msra.mxu0 0
    %4745 = vmatprep.subr.bf16.mxu0 0
    %4746 = vmatpush1.bf16.msra.mxu0 0
    %4747 = vmatprep.subr.bf16.mxu0 0
    %4748 = vmatpush1.bf16.msra.mxu0 0
    %4749 = vmatprep.subr.bf16.mxu0 0
    %4750 = vmatpush1.bf16.msra.mxu0 0
    %4751 = vmatprep.mubr.bf16.mxu0 0
    %4752 = vmatmul.mubr.bf16.gmra.mrb[0].mxu0 %v4677
    %v4753 = vpop.f32.mrb[0].mxu0
    %v4754 = vadd.f32 0.0, %v4753
    %v4755 = vpop.f32.mrb[0].mxu0
    %v4756 = vadd.f32 0.0, %v4755
    %v4757 = vpop.f32.mrb[0].mxu0
    %v4758 = vpop.f32.mrb[0].mxu0
    %4759 = vdwg.mxu0
    %v4760 = vadd.f32 %v4673, %v4713
    %v4761 = vadd.f32 %v4674, %v4715
    %v4762 = vadd.f32 %v4675, %v4754
    %v4763 = vadd.f32 %v4676, %v4756
    %v4764 = vmul.f32 %v4760, 0.5
    %v4765 = vtanh.pop %v4764
    %v4766 = vmul.f32 %v4765, 0.5
    %v4767 = vadd.f32 %v4766, 0.5
    %v4768 = vmul.f32 %v4761, 0.5
    %v4769 = vtanh.pop %v4768
    %v4770 = vmul.f32 %v4769, 0.5
    %v4771 = vadd.f32 %v4770, 0.5
    %v4772 = vtanh.pop %v4762
    %v4773 = vmul.f32 %v4763, 0.5
    %v4774 = vtanh.pop %v4773
    %v4775 = vmul.f32 %v4774, 0.5
    %v4776 = vadd.f32 %v4775, 0.5
    %v4777 = vmul.f32 %v4771, %v4672
    %v4778 = vmul.f32 %v4767, %v4772
    %v4779 = vadd.f32 %v4777, %v4778
    %v4780 = vtanh.pop %v4779
    %v4781 = vmul.f32 %v4776, %v4780
    %4782 = vst [vmem:[%s3825] sm:$0xff] %v4781
    %4783 = vst [vmem:[%s3827] sm:$0xff] %v4779
    %4784 = vst [vmem:[%s1753] sm:$0xff] %v4781
    %v4785 = vld [vmem:[%s3825] sm:$0xff]
    %v4786 = vld [vmem:[%s3827] sm:$0xff]
    %v4787 = vld [vmem:[%s1759] sm:$0xff]
    %v4788 = vld [vmem:[%s1759 + $0x8] sm:$0xff]
    %v4789 = vld [vmem:[%s1759 + $0x10] sm:$0xff]
    %v4790 = vld [vmem:[%s1759 + $0x18] sm:$0xff]
    %v4791 = vpack.c.bf16 %v4785, %v4785
    %4792 = vmatprep.subr.bf16.mxu0 %v3931
    %4793 = vmatpush1.bf16.msra.mxu0 %v3930
    %4794 = vmatprep.subr.bf16.mxu0 %v3935
    %4795 = vmatpush1.bf16.msra.mxu0 %v3934
    %4796 = vmatprep.subr.bf16.mxu0 %v3939
    %4797 = vmatpush1.bf16.msra.mxu0 %v3938
    %4798 = vmatprep.subr.bf16.mxu0 %v3943
    %4799 = vmatpush1.bf16.msra.mxu0 %v3942
    %4800 = vmatprep.subr.bf16.mxu0 %v3947
    %4801 = vmatpush1.bf16.msra.mxu0 %v3946
    %4802 = vmatprep.subr.bf16.mxu0 %v3951
    %4803 = vmatpush1.bf16.msra.mxu0 %v3950
    %4804 = vmatprep.subr.bf16.mxu0 %v3955
    %4805 = vmatpush1.bf16.msra.mxu0 %v3954
    %4806 = vmatprep.subr.bf16.mxu0 %v3959
    %4807 = vmatpush1.bf16.msra.mxu0 %v3958
    %4808 = vmatprep.subr.bf16.mxu0 0
    %4809 = vmatpush1.bf16.msra.mxu0 0
    %4810 = vmatprep.subr.bf16.mxu0 0
    %4811 = vmatpush1.bf16.msra.mxu0 0
    %4812 = vmatprep.subr.bf16.mxu0 0
    %4813 = vmatpush1.bf16.msra.mxu0 0
    %4814 = vmatprep.subr.bf16.mxu0 0
    %4815 = vmatpush1.bf16.msra.mxu0 0
    %4816 = vmatprep.subr.bf16.mxu0 0
    %4817 = vmatpush1.bf16.msra.mxu0 0
    %4818 = vmatprep.subr.bf16.mxu0 0
    %4819 = vmatpush1.bf16.msra.mxu0 0
    %4820 = vmatprep.subr.bf16.mxu0 0
    %4821 = vmatpush1.bf16.msra.mxu0 0
    %4822 = vmatprep.subr.bf16.mxu0 0
    %4823 = vmatpush1.bf16.msra.mxu0 0
    %4824 = vmatprep.mubr.bf16.mxu0 0
    %4825 = vmatmul.mubr.bf16.gmra.mrb[0].mxu0 %v4791
    %v4826 = vpop.f32.mrb[0].mxu0
    %v4827 = vadd.f32 0.0, %v4826
    %v4828 = vpop.f32.mrb[0].mxu0
    %v4829 = vadd.f32 0.0, %v4828
    %v4830 = vpop.f32.mrb[0].mxu0
    %v4831 = vpop.f32.mrb[0].mxu0
    %4832 = vdwg.mxu0
    %4833 = vmatprep.subr.bf16.mxu0 %v3933
    %4834 = vmatpush1.bf16.msra.mxu0 %v3932
    %4835 = vmatprep.subr.bf16.mxu0 %v3937
    %4836 = vmatpush1.bf16.msra.mxu0 %v3936
    %4837 = vmatprep.subr.bf16.mxu0 %v3941
    %4838 = vmatpush1.bf16.msra.mxu0 %v3940
    %4839 = vmatprep.subr.bf16.mxu0 %v3945
    %4840 = vmatpush1.bf16.msra.mxu0 %v3944
    %4841 = vmatprep.subr.bf16.mxu0 %v3949
    %4842 = vmatpush1.bf16.msra.mxu0 %v3948
    %4843 = vmatprep.subr.bf16.mxu0 %v3953
    %4844 = vmatpush1.bf16.msra.mxu0 %v3952
    %4845 = vmatprep.subr.bf16.mxu0 %v3957
    %4846 = vmatpush1.bf16.msra.mxu0 %v3956
    %4847 = vmatprep.subr.bf16.mxu0 %v3961
    %4848 = vmatpush1.bf16.msra.mxu0 %v3960
    %4849 = vmatprep.subr.bf16.mxu0 0
    %4850 = vmatpush1.bf16.msra.mxu0 0
    %4851 = vmatprep.subr.bf16.mxu0 0
    %4852 = vmatpush1.bf16.msra.mxu0 0
    %4853 = vmatprep.subr.bf16.mxu0 0
    %4854 = vmatpush1.bf16.msra.mxu0 0
    %4855 = vmatprep.subr.bf16.mxu0 0
    %4856 = vmatpush1.bf16.msra.mxu0 0
    %4857 = vmatprep.subr.bf16.mxu0 0
    %4858 = vmatpush1.bf16.msra.mxu0 0
    %4859 = vmatprep.subr.bf16.mxu0 0
    %4860 = vmatpush1.bf16.msra.mxu0 0
    %4861 = vmatprep.subr.bf16.mxu0 0
    %4862 = vmatpush1.bf16.msra.mxu0 0
    %4863 = vmatprep.subr.bf16.mxu0 0
    %4864 = vmatpush1.bf16.msra.mxu0 0
    %4865 = vmatprep.mubr.bf16.mxu0 0
    %4866 = vmatmul.mubr.bf16.gmra.mrb[0].mxu0 %v4791
    %v4867 = vpop.f32.mrb[0].mxu0
    %v4868 = vadd.f32 0.0, %v4867
    %v4869 = vpop.f32.mrb[0].mxu0
    %v4870 = vadd.f32 0.0, %v4869
    %v4871 = vpop.f32.mrb[0].mxu0
    %v4872 = vpop.f32.mrb[0].mxu0
    %4873 = vdwg.mxu0
    %v4874 = vadd.f32 %v4787, %v4827
    %v4875 = vadd.f32 %v4788, %v4829
    %v4876 = vadd.f32 %v4789, %v4868
    %v4877 = vadd.f32 %v4790, %v4870
    %v4878 = vmul.f32 %v4874, 0.5
    %v4879 = vtanh.pop %v4878
    %v4880 = vmul.f32 %v4879, 0.5
    %v4881 = vadd.f32 %v4880, 0.5
    %v4882 = vmul.f32 %v4875, 0.5
    %v4883 = vtanh.pop %v4882
    %v4884 = vmul.f32 %v4883, 0.5
    %v4885 = vadd.f32 %v4884, 0.5
    %v4886 = vtanh.pop %v4876
    %v4887 = vmul.f32 %v4877, 0.5
    %v4888 = vtanh.pop %v4887
    %v4889 = vmul.f32 %v4888, 0.5
    %v4890 = vadd.f32 %v4889, 0.5
    %v4891 = vmul.f32 %v4885, %v4786
    %v4892 = vmul.f32 %v4881, %v4886
    %v4893 = vadd.f32 %v4891, %v4892
    %v4894 = vtanh.pop %v4893
    %v4895 = vmul.f32 %v4890, %v4894
    %4896 = vst [vmem:[%s3825] sm:$0xff] %v4895
    %4897 = vst [vmem:[%s3827] sm:$0xff] %v4893
    %4898 = vst [vmem:[%s1871] sm:$0xff] %v4895
    %v4899 = vld [vmem:[#allocation6] sm:$0xff]
    %v4900 = vld [vmem:[#allocation6 + $0x8] sm:$0xff]
    %v4901 = vld [vmem:[#allocation6 + $0x10] sm:$0xff]
    %v4902 = vld [vmem:[#allocation6 + $0x18] sm:$0xff]
    %v4903 = vld [vmem:[#allocation6 + $0x20] sm:$0xff]
    %v4904 = vld [vmem:[#allocation6 + $0x28] sm:$0xff]
    %v4905 = vld [vmem:[#allocation6 + $0x30] sm:$0xff]
    %v4906 = vld [vmem:[#allocation6 + $0x38] sm:$0xff]
    %v4907 = vld [vmem:[#allocation4] sm:$0xff]
    %v4908 = vld [vmem:[#allocation4 + $0x8] sm:$0xff]
    %v4909 = vld [vmem:[#allocation4 + $0x10] sm:$0xff]
    %v4910 = vld [vmem:[#allocation4 + $0x18] sm:$0xff]
    %v4911 = vld [vmem:[#allocation4 + $0x20] sm:$0xff]
    %v4912 = vld [vmem:[#allocation4 + $0x28] sm:$0xff]
    %v4913 = vld [vmem:[#allocation4 + $0x30] sm:$0xff]
    %v4914 = vld [vmem:[#allocation4 + $0x38] sm:$0xff]
    %v4915 = vadd.f32 %v4899, %v4907
    %v4916 = vadd.f32 %v4900, %v4908
    %v4917 = vadd.f32 %v4901, %v4909
    %v4918 = vadd.f32 %v4902, %v4910
    %v4919 = vadd.f32 %v4903, %v4911
    %v4920 = vadd.f32 %v4904, %v4912
    %v4921 = vadd.f32 %v4905, %v4913
    %v4922 = vadd.f32 %v4906, %v4914
    %v4923 = vpack.c.bf16 %v4916, %v4915
    %v4924 = vpack.c.bf16 %v4918, %v4917
    %v4925 = vpack.c.bf16 %v4920, %v4919
    %v4926 = vpack.c.bf16 %v4922, %v4921
    %v4927 = vld [vmem:[%s10] sm:$0xf]
    %v4928 = vld [vmem:[%s10 + $0x4] sm:$0xf]
    %v4929 = vld [vmem:[%s10 + $0x8] sm:$0xf]
    %v4930 = vld [vmem:[%s10 + $0xc] sm:$0xf]
    %v4931 = vld [vmem:[%s10 + $0x10] sm:$0xf]
    %v4932 = vld [vmem:[%s10 + $0x14] sm:$0xf]
    %v4933 = vld [vmem:[%s10 + $0x18] sm:$0xf]
    %v4934 = vld [vmem:[%s10 + $0x1c] sm:$0xf]
    %v4935 = vld [vmem:[%s10 + $0x20] sm:$0xf]
    %v4936 = vld [vmem:[%s10 + $0x24] sm:$0xf]
    %v4937 = vld [vmem:[%s10 + $0x28] sm:$0xf]
    %v4938 = vld [vmem:[%s10 + $0x2c] sm:$0xf]
    %v4939 = vld [vmem:[%s10 + $0x30] sm:$0xf]
    %v4940 = vld [vmem:[%s10 + $0x34] sm:$0xf]
    %v4941 = vld [vmem:[%s10 + $0x38] sm:$0xf]
    %v4942 = vld [vmem:[%s10 + $0x3c] sm:$0xf]
    %v4943 = vld [vmem:[%s11] sm:$0x1]
    %v4945 = vlaneseq
    %v4946 = vshrl.u32 %v4945, 7
    %v4947 = vsub.s32 0, %v4946
    %v4948 = vrot.slane %v4943, %v4947
    %v4966 = vunpack.c.l.b16 %v4927
    %v4967 = vunpack.c.l.b16 %v4928
    %v4968 = vunpack.c.l.b16 %v4929
    %v4969 = vunpack.c.l.b16 %v4930
    %v4970 = vunpack.c.l.b16 %v4931
    %v4971 = vunpack.c.l.b16 %v4932
    %v4972 = vunpack.c.l.b16 %v4933
    %v4973 = vunpack.c.l.b16 %v4934
    %v4974 = vunpack.c.l.b16 %v4935
    %v4975 = vunpack.c.l.b16 %v4936
    %v4976 = vunpack.c.l.b16 %v4937
    %v4977 = vunpack.c.l.b16 %v4938
    %v4978 = vunpack.c.l.b16 %v4939
    %v4979 = vunpack.c.l.b16 %v4940
    %v4980 = vunpack.c.l.b16 %v4941
    %v4981 = vunpack.c.l.b16 %v4942
    %v4982 = vpack.c.b16 %v4967, %v4966
    %v4983 = vpack.c.b16 %v4969, %v4968
    %v4984 = vpack.c.b16 %v4971, %v4970
    %v4985 = vpack.c.b16 %v4973, %v4972
    %v4986 = vpack.c.b16 %v4975, %v4974
    %v4987 = vpack.c.b16 %v4977, %v4976
    %v4988 = vpack.c.b16 %v4979, %v4978
    %v4989 = vpack.c.b16 %v4981, %v4980
    %4998 = vmatprep.subr.bf16.mxu0 0
    %4999 = vmatpush1.bf16.msra.mxu0 %v4982
    %5000 = vmatprep.subr.bf16.mxu0 0
    %5001 = vmatpush1.bf16.msra.mxu0 %v4983
    %5002 = vmatprep.subr.bf16.mxu0 0
    %5003 = vmatpush1.bf16.msra.mxu0 %v4984
    %5004 = vmatprep.subr.bf16.mxu0 0
    %5005 = vmatpush1.bf16.msra.mxu0 %v4985
    %5006 = vmatprep.subr.bf16.mxu0 0
    %5007 = vmatpush1.bf16.msra.mxu0 %v4986
    %5008 = vmatprep.subr.bf16.mxu0 0
    %5009 = vmatpush1.bf16.msra.mxu0 %v4987
    %5010 = vmatprep.subr.bf16.mxu0 0
    %5011 = vmatpush1.bf16.msra.mxu0 %v4988
    %5012 = vmatprep.subr.bf16.mxu0 0
    %5013 = vmatpush1.bf16.msra.mxu0 %v4989
    %5014 = vmatprep.subr.bf16.mxu0 0
    %5015 = vmatpush1.bf16.msra.mxu0 0
    %5016 = vmatprep.subr.bf16.mxu0 0
    %5017 = vmatpush1.bf16.msra.mxu0 0
    %5018 = vmatprep.subr.bf16.mxu0 0
    %5019 = vmatpush1.bf16.msra.mxu0 0
    %5020 = vmatprep.subr.bf16.mxu0 0
    %5021 = vmatpush1.bf16.msra.mxu0 0
    %5022 = vmatprep.subr.bf16.mxu0 0
    %5023 = vmatpush1.bf16.msra.mxu0 0
    %5024 = vmatprep.subr.bf16.mxu0 0
    %5025 = vmatpush1.bf16.msra.mxu0 0
    %5026 = vmatprep.subr.bf16.mxu0 0
    %5027 = vmatpush1.bf16.msra.mxu0 0
    %5028 = vmatprep.subr.bf16.mxu0 0
    %5029 = vmatpush1.bf16.msra.mxu0 0
    %5030 = vmatprep.mubr.bf16.mxu0 0
    %5031 = vmatmul.mubr.bf16.gmra.mrb[0].mxu0 %v4923
    %v5032 = vpop.f32.mrb[0].mxu0
    %v5033 = vadd.f32 %v4948, %v5032
    %v5034 = vpop.f32.mrb[0].mxu0
    %v5035 = vpop.f32.mrb[0].mxu0
    %v5036 = vadd.f32 %v4948, %v5035
    %v5037 = vpop.f32.mrb[0].mxu0
    %5038 = vmatprep.mubr.bf16.mxu0 0
    %5039 = vmatmul.mubr.bf16.gmra.mrb[0].mxu0 %v4924
    %v5040 = vpop.f32.mrb[0].mxu0
    %v5041 = vadd.f32 %v4948, %v5040
    %v5042 = vpop.f32.mrb[0].mxu0
    %v5043 = vpop.f32.mrb[0].mxu0
    %v5044 = vadd.f32 %v4948, %v5043
    %v5045 = vpop.f32.mrb[0].mxu0
    %5046 = vmatprep.mubr.bf16.mxu0 0
    %5047 = vmatmul.mubr.bf16.gmra.mrb[0].mxu0 %v4925
    %v5048 = vpop.f32.mrb[0].mxu0
    %v5049 = vadd.f32 %v4948, %v5048
    %v5050 = vpop.f32.mrb[0].mxu0
    %v5051 = vpop.f32.mrb[0].mxu0
    %v5052 = vadd.f32 %v4948, %v5051
    %v5053 = vpop.f32.mrb[0].mxu0
    %5054 = vmatprep.mubr.bf16.mxu0 0
    %5055 = vmatmul.mubr.bf16.gmra.mrb[0].mxu0 %v4926
    %v5056 = vpop.f32.mrb[0].mxu0
    %v5057 = vadd.f32 %v4948, %v5056
    %v5058 = vpop.f32.mrb[0].mxu0
    %v5059 = vpop.f32.mrb[0].mxu0
    %v5060 = vadd.f32 %v4948, %v5059
    %v5061 = vpop.f32.mrb[0].mxu0
    %5062 = vdwg.mxu0
    %v5063 = vtanh.pop %v5033
    %v5064 = vtanh.pop %v5036
    %v5065 = vtanh.pop %v5041
    %v5066 = vtanh.pop %v5044
    %v5067 = vtanh.pop %v5049
    %v5068 = vtanh.pop %v5052
    %v5069 = vtanh.pop %v5057
    %v5070 = vtanh.pop %v5060
    %5071 = vst [vmem:[%s12] sm:$0xff] %v5063
    %5072 = vst [vmem:[%s12 + $0x8] sm:$0xff] %v5064
    %5073 = vst [vmem:[%s12 + $0x10] sm:$0xff] %v5065
    %5074 = vst [vmem:[%s12 + $0x18] sm:$0xff] %v5066
    %5075 = vst [vmem:[%s12 + $0x20] sm:$0xff] %v5067
    %5076 = vst [vmem:[%s12 + $0x28] sm:$0xff] %v5068
    %5077 = vst [vmem:[%s12 + $0x30] sm:$0xff] %v5069
    %5078 = vst [vmem:[%s12 + $0x38] sm:$0xff] %v5070
    %v5079 = vld [vmem:[#allocation2] sm:$0xff]
    %v5080 = vld [vmem:[#allocation2 + $0x8] sm:$0xff]
    %v5081 = vld [vmem:[#allocation2 + $0x10] sm:$0xff]
    %5082 = vst [vmem:[%s13] sm:$0xff] %v5079
    %5083 = vst [vmem:[%s13 + $0x8] sm:$0xff] %v5080
    %5084 = vst [vmem:[%s13 + $0x10] sm:$0xff] %v5081
    %v5085 = vld [vmem:[#allocation3] sm:$0xff]
    %v5086 = vld [vmem:[#allocation3 + $0x8] sm:$0xff]
    %v5087 = vld [vmem:[#allocation3 + $0x10] sm:$0xff]
    %5088 = vst [vmem:[%s14] sm:$0xff] %v5085
    %5089 = vst [vmem:[%s14 + $0x8] sm:$0xff] %v5086
    %5090 = vst [vmem:[%s14 + $0x10] sm:$0xff] %v5087
    // Predicated region
    $region58: #{rnn_pg_forward.1} parent=1 // pred_check
      _
    $region59: #{rnn_pg_forward.1} parent=1 // pred_check_branch
      %5092 = sbr.rel (0) target = $region61
    $region60: #{rnn_pg_forward.1} parent=1 // pred_region
      _
    $region61: #{rnn_pg_forward.1} parent=1 // pred_fallthru
      _
    // Predicated region
    $region62: #{rnn_pg_forward.1} parent=1 // pred_check
      _
    $region63: #{rnn_pg_forward.1} parent=1 // pred_check_branch
      %5094 = sbr.rel (0) target = $region65
    $region64: #{rnn_pg_forward.1} parent=1 // pred_region
      _
    $region65: #{rnn_pg_forward.1} parent=1 // pred_fallthru
      _
    // Predicated region
    $region66: #{rnn_pg_forward.1} parent=1 // pred_check
      _
    $region67: #{rnn_pg_forward.1} parent=1 // pred_check_branch
      %5096 = sbr.rel (0) target = $region69
    $region68: #{rnn_pg_forward.1} parent=1 // pred_region
      _
    $region69: #{rnn_pg_forward.1} parent=1 // pred_fallthru
      _
    // Predicated region
    $region70: #{rnn_pg_forward.1} parent=1 // pred_check
      _
    $region71: #{rnn_pg_forward.1} parent=1 // pred_check_branch
      %5098 = sbr.rel (0) target = $region73
    $region72: #{rnn_pg_forward.1} parent=1 // pred_region
      _
    $region73: #{rnn_pg_forward.1} parent=1 // pred_fallthru
      _
    // Predicated region
    $region74: #{rnn_pg_forward.1} parent=1 // pred_check
      _
    $region75: #{rnn_pg_forward.1} parent=1 // pred_check_branch
      %5100 = sbr.rel (0) target = $region77
    $region76: #{rnn_pg_forward.1} parent=1 // pred_region
      _
    $region77: #{rnn_pg_forward.1} parent=1 // pred_fallthru
      _
    // Predicated region
    $region78: #{rnn_pg_forward.1} parent=1 // pred_check
      _
    $region79: #{rnn_pg_forward.1} parent=1 // pred_check_branch
      %5102 = sbr.rel (0) target = $region81
    $region80: #{rnn_pg_forward.1} parent=1 // pred_region
      _
    $region81: #{rnn_pg_forward.1} parent=1 // pred_fallthru
      _
    %5103 = vsyncpa [#allocation8], 1
    %5104 = vsyncpa [#allocation10], 1

</llo_original>
